<compile_context>
chip_gen: v6e
topology: v6e:2x2x1
jax: 0.10.0
libtpu: 0.0.40
codegen_flags: <defaults>
</compile_context>

<pallas_src>
import functools

import jax
import jax.numpy as jnp
from jax.experimental import pallas as pl
from jax.experimental.pallas import tpu as pltpu

PRELU_ALPHA = 0.25          # nn.PReLU() default init (single shared parameter)
LANE = 128                  # channel width kept lane-dense end to end
NUM_CLASSES = 2
VMEM_LIMIT = 32 * 1024 * 1024   # explicit scoped-VMEM cap, safe on v5e / v6e / v7x


# --------------------------------------------------------------------------
# Kernel 1: matmul + fused BatchNorm (batch stats) + PReLU epilogue
# --------------------------------------------------------------------------

def _matmul_bn_act_kernel(x_ref, w_ref, g_ref, b_ref, o_ref, acc_ref,
                          *, m_rows, eps, alpha, prelu, bn):
    k = pl.program_id(0)

    @pl.when(k == 0)
    def _():
        acc_ref[...] = jnp.zeros_like(acc_ref)

    acc_ref[...] += jnp.dot(x_ref[...], w_ref[...],
                            preferred_element_type=jnp.float32)

    # Output store (and the whole BN/PReLU epilogue) only on the last K step.
    @pl.when(k == pl.num_programs(0) - 1)
    def _():
        y = acc_ref[...]
        if bn:
            s = jnp.sum(y, axis=0, keepdims=True)
            ss = jnp.sum(y * y, axis=0, keepdims=True)
            mean = s / m_rows
            var = jnp.maximum(ss / m_rows - mean * mean, 0.0)   # clamp f32 cancellation
            y = (y - mean) * jax.lax.rsqrt(var + eps) * g_ref[...] + b_ref[...]
        if prelu:
            y = jnp.where(y > 0, y, alpha * y)
        o_ref[...] = y.astype(o_ref.dtype)


def matmul_bn_act(x, w, gamma, beta, *, prelu, bn=True,
                  out_dtype=jnp.bfloat16, alpha=PRELU_ALPHA, eps=1e-5):
    """act(BN(x @ w)) with the epilogue fused behind the guarded last-K store."""
    M, K = x.shape
    K2, Np = w.shape
    assert K == K2 and M % 8 == 0 and Np % LANE == 0
    bk = K if K <= 512 else 512
    assert K % bk == 0  # TODO(synk): pad K for shapes needing >1 512-wide K tile
    kern = functools.partial(_matmul_bn_act_kernel, m_rows=float(M),
                             eps=eps, alpha=alpha, prelu=prelu, bn=bn)
    return pl.pallas_call(
        kern,
        out_shape=jax.ShapeDtypeStruct((M, Np), out_dtype),
        grid=(K // bk,),
        in_specs=[pl.BlockSpec((M, bk), lambda k: (0, k)),
                  pl.BlockSpec((bk, Np), lambda k: (k, 0)),
                  pl.BlockSpec((1, Np), lambda k: (0, 0)),
                  pl.BlockSpec((1, Np), lambda k: (0, 0))],
        out_specs=pl.BlockSpec((M, Np), lambda k: (0, 0)),
        scratch_shapes=[pltpu.VMEM((M, Np), jnp.float32)],
        compiler_params=pltpu.CompilerParams(
            dimension_semantics=("arbitrary",),
            vmem_limit_bytes=VMEM_LIMIT),
    )(x, w, gamma, beta)


# --------------------------------------------------------------------------
# Kernel 2: grouped dilated 3x3x3 conv -- 27 taps folded into the reduction
# --------------------------------------------------------------------------

def _dilated_conv_kernel(x_ref, w_ref, o_ref, pad_ref, *, D, H, W):
    """3x3x3 conv, stride=1, padding=2, dilation=2, for one sample.

    A zero-padded copy of the activation is kept flattened as (Dp*Hp*Wp, C) in VMEM.
    Because input and output share the same padded flattening, every tap is one
    *contiguous* shifted slab of that scratch, so the 27 taps become 27 accumulating
    matmuls -- no 27x im2col tensor is ever written to HBM.
    """
    Dp, Hp, Wp = D + 4, H + 4, W + 4
    C = x_ref.shape[-1]
    # contiguous row span that covers every valid output position
    R = (D - 1) * Hp * Wp + (H - 1) * Wp + W

    # scatter the compact (D*H*W, C) rows into the zero-padded spatial scratch
    pad_ref[...] = jnp.zeros_like(pad_ref)
    for d in range(D):
        for h in range(H):
            src = (d * H + h) * W
            dst = (d + 2) * Hp * Wp + (h + 2) * Wp + 2
            pad_ref[dst:dst + W, :] = x_ref[0, src:src + W, :]

    acc = jnp.zeros((R, C), jnp.float32)
    for kd in range(3):
        for kh in range(3):
            for kw in range(3):
                shift = 2 * kd * Hp * Wp + 2 * kh * Wp + 2 * kw
                t = (kd * 3 + kh) * 3 + kw
                acc = acc + jnp.dot(pad_ref[shift:shift + R, :], w_ref[t],
                                    preferred_element_type=jnp.float32)

    # gather the valid rows back into the compact (D*H*W, C) output layout
    for d in range(D):
        for h in range(H):
            src = d * Hp * Wp + h * Wp
            dst = (d * H + h) * W
            o_ref[0, dst:dst + W, :] = acc[src:src + W, :].astype(o_ref.dtype)


def dilated_grouped_conv(x, w2, D, H, W):
    N, Ms, C = x.shape
    assert Ms == D * H * W and C == LANE
    Q = (D + 4) * (H + 4) * (W + 4)
    kern = functools.partial(_dilated_conv_kernel, D=D, H=H, W=W)
    return pl.pallas_call(
        kern,
        out_shape=jax.ShapeDtypeStruct((N, Ms, C), jnp.bfloat16),
        grid=(N,),
        in_specs=[pl.BlockSpec((1, Ms, C), lambda n: (n, 0, 0)),
                  pl.BlockSpec((27, C, C), lambda n: (0, 0, 0))],   # weights resident
        out_specs=pl.BlockSpec((1, Ms, C), lambda n: (n, 0, 0)),
        scratch_shapes=[pltpu.VMEM((Q, C), jnp.bfloat16)],
        compiler_params=pltpu.CompilerParams(
            dimension_semantics=("parallel",),
            vmem_limit_bytes=VMEM_LIMIT),
    )(x, w2)


# --------------------------------------------------------------------------
# Kernel 3: fused block tail  (BN2+PReLU -> conv3 -> BN3 -> SE -> +res -> PReLU)
# --------------------------------------------------------------------------

def _block_tail_kernel(y2_ref, xr_ref, w3_ref, g2_ref, b2_ref, g3_ref, b3_ref,
                       sw1_ref, sb1_ref, sw2_ref, sb2_ref, o_ref, y3_ref,
                       *, n, ms, eps, alpha):
    C = y2_ref.shape[-1]
    cnt = float(n * ms)

    # BN2 batch statistics (over all samples x spatial positions)
    s2 = jnp.zeros((1, C), jnp.float32)
    q2 = jnp.zeros((1, C), jnp.float32)
    for i in range(n):
        a = y2_ref[i].astype(jnp.float32)
        s2 = s2 + jnp.sum(a, axis=0, keepdims=True)
        q2 = q2 + jnp.sum(a * a, axis=0, keepdims=True)
    mean2 = s2 / cnt
    var2 = jnp.maximum(q2 / cnt - mean2 * mean2, 0.0)
    inv2 = jax.lax.rsqrt(var2 + eps)

    # BN2 + PReLU + conv3(1x1x1), accumulating BN3 statistics on the fly
    s3 = jnp.zeros((1, C), jnp.float32)
    q3 = jnp.zeros((1, C), jnp.float32)
    for i in range(n):
        a = y2_ref[i].astype(jnp.float32)
        h = (a - mean2) * inv2 * g2_ref[...] + b2_ref[...]
        h = jnp.where(h > 0, h, alpha * h)
        y3 = jnp.dot(h.astype(jnp.bfloat16), w3_ref[...],
                     preferred_element_type=jnp.float32)
        y3_ref[i] = y3
        s3 = s3 + jnp.sum(y3, axis=0, keepdims=True)
        q3 = q3 + jnp.sum(y3 * y3, axis=0, keepdims=True)
    mean3 = s3 / cnt
    var3 = jnp.maximum(q3 / cnt - mean3 * mean3, 0.0)
    inv3 = jax.lax.rsqrt(var3 + eps)

    # BN3 + SE squeeze/excite + channel scale + residual + PReLU
    for i in range(n):
        z = (y3_ref[i] - mean3) * inv3 * g3_ref[...] + b3_ref[...]
        pooled = jnp.sum(z, axis=0, keepdims=True) / float(ms)           # (1, C)
        e = jnp.dot(pooled, sw1_ref[...], preferred_element_type=jnp.float32)
        e = jnp.maximum(e + sb1_ref[...], 0.0)
        gate = jnp.dot(e, sw2_ref[...], preferred_element_type=jnp.float32)
        gate = jax.nn.sigmoid(gate + sb2_ref[...])
        out = z * gate + xr_ref[i].astype(jnp.float32)
        o_ref[i] = jnp.where(out > 0, out, alpha * out).astype(o_ref.dtype)


def block_tail(y2, xres, p):
    N, Ms, C = y2.shape
    kern = functools.partial(_block_tail_kernel, n=N, ms=Ms,
                             eps=1e-5, alpha=PRELU_ALPHA)
    full3 = pl.BlockSpec((N, Ms, C), lambda i: (0, 0, 0))
    mat = pl.BlockSpec((C, C), lambda i: (0, 0))
    vec = pl.BlockSpec((1, C), lambda i: (0, 0))
    return pl.pallas_call(
        kern,
        out_shape=jax.ShapeDtypeStruct((N, Ms, C), jnp.bfloat16),
        grid=(1,),
        in_specs=[full3, full3, mat, vec, vec, vec, vec, mat, vec, mat, vec],
        out_specs=full3,
        scratch_shapes=[pltpu.VMEM((N, Ms, C), jnp.float32)],
        compiler_params=pltpu.CompilerParams(
            dimension_semantics=("arbitrary",),
            vmem_limit_bytes=VMEM_LIMIT),
    )(y2, xres, p["w3"], p["bn2_g"], p["bn2_b"], p["bn3_g"], p["bn3_b"],
      p["se_w1"], p["se_b1"], p["se_w2"], p["se_b2"])


# --------------------------------------------------------------------------
# Kernel 4: fused AdaptiveAvgPool3d(1) + fc head
# --------------------------------------------------------------------------

def _pool_fc_kernel(x_ref, w_ref, b_ref, o_ref, *, n, ms):
    for i in range(n):
        pooled = jnp.sum(x_ref[i].astype(jnp.float32), axis=0, keepdims=True) / float(ms)
        logit = jnp.dot(pooled, w_ref[...], preferred_element_type=jnp.float32) + b_ref[...]
        o_ref[i:i + 1, :] = logit.astype(o_ref.dtype)


def pool_fc(x, w, b):
    N, Ms, C = x.shape
    Np = w.shape[1]
    kern = functools.partial(_pool_fc_kernel, n=N, ms=Ms)
    return pl.pallas_call(
        kern,
        out_shape=jax.ShapeDtypeStruct((N, Np), jnp.float32),
        grid=(1,),
        in_specs=[pl.BlockSpec((N, Ms, C), lambda i: (0, 0, 0)),
                  pl.BlockSpec((C, Np), lambda i: (0, 0)),
                  pl.BlockSpec((1, Np), lambda i: (0, 0))],
        out_specs=pl.BlockSpec((N, Np), lambda i: (0, 0)),
        compiler_params=pltpu.CompilerParams(
            dimension_semantics=("arbitrary",),
            vmem_limit_bytes=VMEM_LIMIT),
    )(x, w, b)


# --------------------------------------------------------------------------
# Parameters (padded once to lane width, matmul weights stored as bf16)
# --------------------------------------------------------------------------

def _kaiming(key, shape, fan_out):
    return jax.random.normal(key, shape, jnp.float32) * jnp.sqrt(2.0 / fan_out)


def _pad2(a, rows, cols):
    return jnp.pad(a, ((0, rows - a.shape[0]), (0, cols - a.shape[1])))


def _padc(v):
    return jnp.pad(v, (0, LANE - v.shape[0])).reshape(1, LANE)


def init_block_params(key, inplanes=128, planes=64, cardinality=32,
                      expansion=2, reduction=16):
    k = jax.random.split(key, 5)
    cout = planes * expansion          # 128
    gsize = planes // cardinality      # 2
    hidden = max(cout // reduction, 1)

    w1 = _kaiming(k[0], (inplanes, planes), planes)
    # grouped conv densified to block-diagonal (tap-major).
    # TODO(synk): at group size 2, per-group matmuls would starve the MXU; the
    #             densified block-diagonal waste is bounded by lane padding anyway.
    wg = _kaiming(k[1], (cardinality, 3, 3, 3, gsize, gsize), gsize * 27)
    w2 = jnp.zeros((3, 3, 3, planes, planes), jnp.float32)
    for g in range(cardinality):
        w2 = w2.at[:, :, :, g * gsize:(g + 1) * gsize,
                   g * gsize:(g + 1) * gsize].set(wg[g])
    w2 = w2.reshape(27, planes, planes)
    w3 = _kaiming(k[2], (planes, cout), cout)

    return dict(
        w1=_pad2(w1, LANE, LANE).astype(jnp.bfloat16),
        w2=jnp.pad(w2, ((0, 0), (0, LANE - planes), (0, LANE - planes))
                   ).astype(jnp.bfloat16),
        w3=_pad2(w3, LANE, LANE).astype(jnp.bfloat16),
        bn1_g=_padc(jnp.ones(planes, jnp.float32)),
        bn1_b=_padc(jnp.zeros(planes, jnp.float32)),
        bn2_g=_padc(jnp.ones(planes, jnp.float32)),
        bn2_b=_padc(jnp.zeros(planes, jnp.float32)),
        bn3_g=_padc(jnp.ones(cout, jnp.float32)),
        bn3_b=_padc(jnp.zeros(cout, jnp.float32)),
        se_w1=_pad2(jax.random.normal(k[3], (cout, hidden), jnp.float32)
                    / jnp.sqrt(cout), LANE, LANE),
        se_b1=_padc(jnp.zeros(hidden, jnp.float32)),
        se_w2=_pad2(jax.random.normal(k[4], (hidden, cout), jnp.float32)
                    / jnp.sqrt(hidden), LANE, LANE),
        se_b2=_padc(jnp.zeros(cout, jnp.float32)),
    )


def init_resnet3d_params(key, planes=64, cardinality=32, layers=(1, 1, 1, 1)):
    stem_out = planes * 2   # 128 = LANE
    keys = jax.random.split(key, 2 + sum(layers))
    params = {
        "stem_w": _kaiming(keys[0], (4 * 4 * 4 * 3, stem_out),
                           stem_out * 64).astype(jnp.bfloat16),
        "stem_g": jnp.ones((1, stem_out), jnp.float32),
        "stem_b": jnp.zeros((1, stem_out), jnp.float32),
        "fc_w": jnp.pad(jax.random.normal(keys[1], (stem_out, NUM_CLASSES),
                                          jnp.float32) / jnp.sqrt(stem_out),
                        ((0, 0), (0, LANE - NUM_CLASSES))),
        "fc_b": jnp.zeros((1, LANE), jnp.float32),
    }
    ki = 2
    for li, nb in enumerate(layers, start=1):
        blocks = []
        for _ in range(nb):
            blocks.append(init_block_params(keys[ki], inplanes=stem_out,
                                            planes=planes, cardinality=cardinality))
            ki += 1
        params[f"layer{li}"] = blocks
    return params


# --------------------------------------------------------------------------
# Forward
# --------------------------------------------------------------------------

def senet_dilated_bottleneck(x, p, D, H, W):
    N, Ms, C = x.shape
    # conv1 (1x1x1) + BN1 + PReLU, fused
    h = matmul_bn_act(x.reshape(N * Ms, C), p["w1"], p["bn1_g"], p["bn1_b"],
                      prelu=True)
    h = h.reshape(N, Ms, C)
    # grouped dilated 3x3x3 conv (taps folded into the in-kernel reduction)
    y2 = dilated_grouped_conv(h, p["w2"], D, H, W)
    # BN2 + PReLU + conv3 + BN3 + SE + residual + PReLU, fused
    return block_tail(y2, x, p)


def resnet3d_forward(params, x_ncdhw):
    N, Cin, D0, H0, W0 = x_ncdhw.shape
    k = 4
    D, H, W = D0 // k, H0 // k, W0 // k
    x = jnp.transpose(x_ncdhw, (0, 2, 3, 4, 1)).astype(jnp.float32)
    # stem Conv3d(3,128,k=4,s=4): stride == kernel => exact space-to-depth reshape
    cols = x.reshape(N, D, k, H, k, W, k, Cin)
    cols = cols.transpose(0, 1, 3, 5, 2, 4, 6, 7).reshape(N * D * H * W,
                                                          k * k * k * Cin)
    h = matmul_bn_act(cols.astype(jnp.bfloat16), params["stem_w"],
                      params["stem_g"], params["stem_b"], prelu=True)
    x = h.reshape(N, D * H * W, LANE)
    for name in ("layer1", "layer2", "layer3", "layer4"):
        for bp in params[name]:
            x = senet_dilated_bottleneck(x, bp, D, H, W)
    logits = pool_fc(x, params["fc_w"], params["fc_b"])
    return logits[:, :NUM_CLASSES]


if __name__ == "__main__":
    key = jax.random.PRNGKey(0)
    pkey, xkey = jax.random.split(key)
    params = init_resnet3d_params(pkey, planes=64, cardinality=32,
                                  layers=(1, 1, 1, 1))
    # small NCDHW input: batch=2, 3 channels, depth=8, spatial=16
    x = jax.random.normal(xkey, (2, 3, 8, 16, 16), jnp.float32)
    fwd = jax.jit(resnet3d_forward)
    out = fwd(params, x)
    jax.block_until_ready(out)
    assert out.shape == (2, NUM_CLASSES)
    assert bool(jnp.all(jnp.isfinite(out)))
    print("KERNEL_OK")
</pallas_src>

<mosaic_0001>
module attributes {stable_mosaic.version = 11 : i64} {
  func.func @_matmul_bn_act_kernel(%arg0: i32, %arg1: memref<64x192xbf16, #tpu.memory_space<vmem>>, %arg2: memref<192x128xbf16, #tpu.memory_space<vmem>>, %arg3: memref<1x128xf32, #tpu.memory_space<vmem>>, %arg4: memref<1x128xf32, #tpu.memory_space<vmem>>, %arg5: memref<64x128xbf16, #tpu.memory_space<vmem>>, %arg6: memref<64x128xf32, #tpu.memory_space<vmem>>) attributes {dimension_semantics = [#tpu.dimension_semantics<arbitrary>], iteration_bounds = array<i64: 1>, scalar_prefetch = 0 : i64, scratch_operands = 1 : i64, tpu.core_type = #tpu.core_type<tc>, window_params = [{transform_indices = @transform_0, window_bounds = array<i64: 64, 192>}, {transform_indices = @transform_1, window_bounds = array<i64: 192, 128>}, {pipeline_mode = #tpu.pipeline_mode<synchronous>, transform_indices = @transform_2, window_bounds = array<i64: 1, 128>}, {pipeline_mode = #tpu.pipeline_mode<synchronous>, transform_indices = @transform_3, window_bounds = array<i64: 1, 128>}, {pipeline_mode = #tpu.pipeline_mode<synchronous>, transform_indices = @transform_4, window_bounds = array<i64: 64, 128>}]} {
    %c0_i32 = arith.constant 0 : i32
    %0 = arith.cmpi eq, %arg0, %c0_i32 : i32
    %1 = arith.extui %0 : i1 to i32
    %c0_i32_0 = arith.constant 0 : i32
    %2 = arith.cmpi ne, %1, %c0_i32_0 : i32
    scf.if %2 {
      %cst_10 = arith.constant 0.000000e+00 : f32
      %12 = vector.broadcast %cst_10 : f32 to vector<64x128xf32>
      %c0_11 = arith.constant 0 : index
      %c0_12 = arith.constant 0 : index
      %13 = vector.load %arg6[%c0_11, %c0_12] : memref<64x128xf32, #tpu.memory_space<vmem>>, vector<64x128xf32>
      tpu.vector_store %arg6[%c0_11, %c0_12], %12 {strides = array<i32>} : memref<64x128xf32, #tpu.memory_space<vmem>>, vector<64x128xf32>,
    } else {
    }
    %c0 = arith.constant 0 : index
    %c0_1 = arith.constant 0 : index
    %3 = vector.load %arg6[%c0, %c0_1] : memref<64x128xf32, #tpu.memory_space<vmem>>, vector<64x128xf32>
    %c0_2 = arith.constant 0 : index
    %c0_3 = arith.constant 0 : index
    %4 = vector.load %arg1[%c0_2, %c0_3] : memref<64x192xbf16, #tpu.memory_space<vmem>>, vector<64x192xbf16>
    %c0_4 = arith.constant 0 : index
    %c0_5 = arith.constant 0 : index
    %5 = vector.load %arg2[%c0_4, %c0_5] : memref<192x128xbf16, #tpu.memory_space<vmem>>, vector<192x128xbf16>
    %cst = arith.constant dense<0.000000e+00> : vector<64x128xf32>
    %6 = tpu.matmul %4, %5, %cst {dimension_numbers = #tpu.dot_dimension_numbers<[1], [0], [0], [1], [0, 0, 1, 1], [], []>} : vector<64x192xbf16>, vector<192x128xbf16>, vector<64x128xf32> -> vector<64x128xf32>
    %7 = arith.addf %3, %6 : vector<64x128xf32>
    %c0_6 = arith.constant 0 : index
    %c0_7 = arith.constant 0 : index
    %8 = vector.load %arg6[%c0_6, %c0_7] : memref<64x128xf32, #tpu.memory_space<vmem>>, vector<64x128xf32>
    tpu.vector_store %arg6[%c0_6, %c0_7], %7 {strides = array<i32>} : memref<64x128xf32, #tpu.memory_space<vmem>>, vector<64x128xf32>,
    %c0_i32_8 = arith.constant 0 : i32
    %9 = arith.cmpi eq, %arg0, %c0_i32_8 : i32
    %10 = arith.extui %9 : i1 to i32
    %c0_i32_9 = arith.constant 0 : i32
    %11 = arith.cmpi ne, %10, %c0_i32_9 : i32
    scf.if %11 {
      %c0_10 = arith.constant 0 : index
      %c0_11 = arith.constant 0 : index
      %12 = vector.load %arg6[%c0_10, %c0_11] : memref<64x128xf32, #tpu.memory_space<vmem>>, vector<64x128xf32>
      %cst_12 = arith.constant dense<0.000000e+00> : vector<128xf32>
      %13 = vector.multi_reduction <add>, %12, %cst_12 [0] : vector<64x128xf32> to vector<128xf32>
      %14 = vector.shape_cast %13 : vector<128xf32> to vector<1x128xf32>
      %15 = arith.mulf %12, %12 : vector<64x128xf32>
      %cst_13 = arith.constant dense<0.000000e+00> : vector<128xf32>
      %16 = vector.multi_reduction <add>, %15, %cst_13 [0] : vector<64x128xf32> to vector<128xf32>
      %17 = vector.shape_cast %16 : vector<128xf32> to vector<1x128xf32>
      %cst_14 = arith.constant 6.400000e+01 : f32
      %18 = vector.broadcast %cst_14 : f32 to vector<1x128xf32>
      %19 = arith.divf %14, %18 : vector<1x128xf32>
      %cst_15 = arith.constant 6.400000e+01 : f32
      %20 = vector.broadcast %cst_15 : f32 to vector<1x128xf32>
      %21 = arith.divf %17, %20 : vector<1x128xf32>
      %22 = arith.mulf %19, %19 : vector<1x128xf32>
      %23 = arith.subf %21, %22 : vector<1x128xf32>
      %cst_16 = arith.constant 0.000000e+00 : f32
      %24 = vector.broadcast %cst_16 : f32 to vector<1x128xf32>
      %25 = arith.maximumf %23, %24 : vector<1x128xf32>
      %26 = vector.broadcast %19 : vector<1x128xf32> to vector<64x128xf32>
      %27 = arith.subf %12, %26 : vector<64x128xf32>
      %cst_17 = arith.constant 9.99999974E-6 : f32
      %28 = vector.broadcast %cst_17 : f32 to vector<1x128xf32>
      %29 = arith.addf %25, %28 : vector<1x128xf32>
      %30 = math.rsqrt %29 : vector<1x128xf32>
      %31 = vector.broadcast %30 : vector<1x128xf32> to vector<64x128xf32>
      %32 = arith.mulf %27, %31 : vector<64x128xf32>
      %c0_18 = arith.constant 0 : index
      %c0_19 = arith.constant 0 : index
      %33 = vector.load %arg3[%c0_18, %c0_19] : memref<1x128xf32, #tpu.memory_space<vmem>>, vector<1x128xf32>
      %34 = vector.broadcast %33 : vector<1x128xf32> to vector<64x128xf32>
      %35 = arith.mulf %32, %34 : vector<64x128xf32>
      %c0_20 = arith.constant 0 : index
      %c0_21 = arith.constant 0 : index
      %36 = vector.load %arg4[%c0_20, %c0_21] : memref<1x128xf32, #tpu.memory_space<vmem>>, vector<1x128xf32>
      %37 = vector.broadcast %36 : vector<1x128xf32> to vector<64x128xf32>
      %38 = arith.addf %35, %37 : vector<64x128xf32>
      %cst_22 = arith.constant 0.000000e+00 : f32
      %39 = vector.broadcast %cst_22 : f32 to vector<64x128xf32>
      %40 = arith.cmpf ogt, %38, %39 : vector<64x128xf32>
      %cst_23 = arith.constant 2.500000e-01 : f32
      %41 = vector.broadcast %cst_23 : f32 to vector<64x128xf32>
      %42 = arith.mulf %41, %38 : vector<64x128xf32>
      %43 = arith.select %40, %38, %42 : vector<64x128xi1>, vector<64x128xf32>
      %44 = arith.truncf %43 : vector<64x128xf32> to vector<64x128xbf16>
      %c0_24 = arith.constant 0 : index
      %c0_25 = arith.constant 0 : index
      %45 = vector.load %arg5[%c0_24, %c0_25] : memref<64x128xbf16, #tpu.memory_space<vmem>>, vector<64x128xbf16>
      tpu.vector_store %arg5[%c0_24, %c0_25], %44 {strides = array<i32>} : memref<64x128xbf16, #tpu.memory_space<vmem>>, vector<64x128xbf16>,
    } else {
    }
    return
  }
  func.func @transform_0(%arg0: i32) -> (i32, i32) {
    %c0_i32 = arith.constant 0 : i32
    %c0_i32_0 = arith.constant 0 : i32
    return %c0_i32, %arg0 : i32, i32
  }
  func.func @transform_1(%arg0: i32) -> (i32, i32) {
    %c0_i32 = arith.constant 0 : i32
    %c0_i32_0 = arith.constant 0 : i32
    return %arg0, %c0_i32 : i32, i32
  }
  func.func @transform_2(%arg0: i32) -> (i32, i32) {
    %c0_i32 = arith.constant 0 : i32
    %c0_i32_0 = arith.constant 0 : i32
    %c0_i32_1 = arith.constant 0 : i32
    return %c0_i32, %c0_i32_0 : i32, i32
  }
  func.func @transform_3(%arg0: i32) -> (i32, i32) {
    %c0_i32 = arith.constant 0 : i32
    %c0_i32_0 = arith.constant 0 : i32
    %c0_i32_1 = arith.constant 0 : i32
    return %c0_i32, %c0_i32_0 : i32, i32
  }
  func.func @transform_4(%arg0: i32) -> (i32, i32) {
    %c0_i32 = arith.constant 0 : i32
    %c0_i32_0 = arith.constant 0 : i32
    %c0_i32_1 = arith.constant 0 : i32
    return %c0_i32, %c0_i32_0 : i32, i32
  }
}

module attributes {stable_mosaic.version = 11 : i64} {
  func.func @_matmul_bn_act_kernel(%arg0: i32, %arg1: memref<64x128xbf16, #tpu.memory_space<vmem>>, %arg2: memref<128x128xbf16, #tpu.memory_space<vmem>>, %arg3: memref<1x128xf32, #tpu.memory_space<vmem>>, %arg4: memref<1x128xf32, #tpu.memory_space<vmem>>, %arg5: memref<64x128xbf16, #tpu.memory_space<vmem>>, %arg6: memref<64x128xf32, #tpu.memory_space<vmem>>) attributes {dimension_semantics = [#tpu.dimension_semantics<arbitrary>], iteration_bounds = array<i64: 1>, scalar_prefetch = 0 : i64, scratch_operands = 1 : i64, tpu.core_type = #tpu.core_type<tc>, window_params = [{transform_indices = @transform_0, window_bounds = array<i64: 64, 128>}, {transform_indices = @transform_1, window_bounds = array<i64: 128, 128>}, {pipeline_mode = #tpu.pipeline_mode<synchronous>, transform_indices = @transform_2, window_bounds = array<i64: 1, 128>}, {pipeline_mode = #tpu.pipeline_mode<synchronous>, transform_indices = @transform_3, window_bounds = array<i64: 1, 128>}, {pipeline_mode = #tpu.pipeline_mode<synchronous>, transform_indices = @transform_4, window_bounds = array<i64: 64, 128>}]} {
    %c0_i32 = arith.constant 0 : i32
    %0 = arith.cmpi eq, %arg0, %c0_i32 : i32
    %1 = arith.extui %0 : i1 to i32
    %c0_i32_0 = arith.constant 0 : i32
    %2 = arith.cmpi ne, %1, %c0_i32_0 : i32
    scf.if %2 {
      %cst_10 = arith.constant 0.000000e+00 : f32
      %12 = vector.broadcast %cst_10 : f32 to vector<64x128xf32>
      %c0_11 = arith.constant 0 : index
      %c0_12 = arith.constant 0 : index
      %13 = vector.load %arg6[%c0_11, %c0_12] : memref<64x128xf32, #tpu.memory_space<vmem>>, vector<64x128xf32>
      tpu.vector_store %arg6[%c0_11, %c0_12], %12 {strides = array<i32>} : memref<64x128xf32, #tpu.memory_space<vmem>>, vector<64x128xf32>,
    } else {
    }
    %c0 = arith.constant 0 : index
    %c0_1 = arith.constant 0 : index
    %3 = vector.load %arg6[%c0, %c0_1] : memref<64x128xf32, #tpu.memory_space<vmem>>, vector<64x128xf32>
    %c0_2 = arith.constant 0 : index
    %c0_3 = arith.constant 0 : index
    %4 = vector.load %arg1[%c0_2, %c0_3] : memref<64x128xbf16, #tpu.memory_space<vmem>>, vector<64x128xbf16>
    %c0_4 = arith.constant 0 : index
    %c0_5 = arith.constant 0 : index
    %5 = vector.load %arg2[%c0_4, %c0_5] : memref<128x128xbf16, #tpu.memory_space<vmem>>, vector<128x128xbf16>
    %cst = arith.constant dense<0.000000e+00> : vector<64x128xf32>
    %6 = tpu.matmul %4, %5, %cst {dimension_numbers = #tpu.dot_dimension_numbers<[1], [0], [0], [1], [0, 0, 1, 1], [], []>} : vector<64x128xbf16>, vector<128x128xbf16>, vector<64x128xf32> -> vector<64x128xf32>
    %7 = arith.addf %3, %6 : vector<64x128xf32>
    %c0_6 = arith.constant 0 : index
    %c0_7 = arith.constant 0 : index
    %8 = vector.load %arg6[%c0_6, %c0_7] : memref<64x128xf32, #tpu.memory_space<vmem>>, vector<64x128xf32>
    tpu.vector_store %arg6[%c0_6, %c0_7], %7 {strides = array<i32>} : memref<64x128xf32, #tpu.memory_space<vmem>>, vector<64x128xf32>,
    %c0_i32_8 = arith.constant 0 : i32
    %9 = arith.cmpi eq, %arg0, %c0_i32_8 : i32
    %10 = arith.extui %9 : i1 to i32
    %c0_i32_9 = arith.constant 0 : i32
    %11 = arith.cmpi ne, %10, %c0_i32_9 : i32
    scf.if %11 {
      %c0_10 = arith.constant 0 : index
      %c0_11 = arith.constant 0 : index
      %12 = vector.load %arg6[%c0_10, %c0_11] : memref<64x128xf32, #tpu.memory_space<vmem>>, vector<64x128xf32>
      %cst_12 = arith.constant dense<0.000000e+00> : vector<128xf32>
      %13 = vector.multi_reduction <add>, %12, %cst_12 [0] : vector<64x128xf32> to vector<128xf32>
      %14 = vector.shape_cast %13 : vector<128xf32> to vector<1x128xf32>
      %15 = arith.mulf %12, %12 : vector<64x128xf32>
      %cst_13 = arith.constant dense<0.000000e+00> : vector<128xf32>
      %16 = vector.multi_reduction <add>, %15, %cst_13 [0] : vector<64x128xf32> to vector<128xf32>
      %17 = vector.shape_cast %16 : vector<128xf32> to vector<1x128xf32>
      %cst_14 = arith.constant 6.400000e+01 : f32
      %18 = vector.broadcast %cst_14 : f32 to vector<1x128xf32>
      %19 = arith.divf %14, %18 : vector<1x128xf32>
      %cst_15 = arith.constant 6.400000e+01 : f32
      %20 = vector.broadcast %cst_15 : f32 to vector<1x128xf32>
      %21 = arith.divf %17, %20 : vector<1x128xf32>
      %22 = arith.mulf %19, %19 : vector<1x128xf32>
      %23 = arith.subf %21, %22 : vector<1x128xf32>
      %cst_16 = arith.constant 0.000000e+00 : f32
      %24 = vector.broadcast %cst_16 : f32 to vector<1x128xf32>
      %25 = arith.maximumf %23, %24 : vector<1x128xf32>
      %26 = vector.broadcast %19 : vector<1x128xf32> to vector<64x128xf32>
      %27 = arith.subf %12, %26 : vector<64x128xf32>
      %cst_17 = arith.constant 9.99999974E-6 : f32
      %28 = vector.broadcast %cst_17 : f32 to vector<1x128xf32>
      %29 = arith.addf %25, %28 : vector<1x128xf32>
      %30 = math.rsqrt %29 : vector<1x128xf32>
      %31 = vector.broadcast %30 : vector<1x128xf32> to vector<64x128xf32>
      %32 = arith.mulf %27, %31 : vector<64x128xf32>
      %c0_18 = arith.constant 0 : index
      %c0_19 = arith.constant 0 : index
      %33 = vector.load %arg3[%c0_18, %c0_19] : memref<1x128xf32, #tpu.memory_space<vmem>>, vector<1x128xf32>
      %34 = vector.broadcast %33 : vector<1x128xf32> to vector<64x128xf32>
      %35 = arith.mulf %32, %34 : vector<64x128xf32>
      %c0_20 = arith.constant 0 : index
      %c0_21 = arith.constant 0 : index
      %36 = vector.load %arg4[%c0_20, %c0_21] : memref<1x128xf32, #tpu.memory_space<vmem>>, vector<1x128xf32>
      %37 = vector.broadcast %36 : vector<1x128xf32> to vector<64x128xf32>
      %38 = arith.addf %35, %37 : vector<64x128xf32>
      %cst_22 = arith.constant 0.000000e+00 : f32
      %39 = vector.broadcast %cst_22 : f32 to vector<64x128xf32>
      %40 = arith.cmpf ogt, %38, %39 : vector<64x128xf32>
      %cst_23 = arith.constant 2.500000e-01 : f32
      %41 = vector.broadcast %cst_23 : f32 to vector<64x128xf32>
      %42 = arith.mulf %41, %38 : vector<64x128xf32>
      %43 = arith.select %40, %38, %42 : vector<64x128xi1>, vector<64x128xf32>
      %44 = arith.truncf %43 : vector<64x128xf32> to vector<64x128xbf16>
      %c0_24 = arith.constant 0 : index
      %c0_25 = arith.constant 0 : index
      %45 = vector.load %arg5[%c0_24, %c0_25] : memref<64x128xbf16, #tpu.memory_space<vmem>>, vector<64x128xbf16>
      tpu.vector_store %arg5[%c0_24, %c0_25], %44 {strides = array<i32>} : memref<64x128xbf16, #tpu.memory_space<vmem>>, vector<64x128xbf16>,
    } else {
    }
    return
  }
  func.func @transform_0(%arg0: i32) -> (i32, i32) {
    %c0_i32 = arith.constant 0 : i32
    %c0_i32_0 = arith.constant 0 : i32
    return %c0_i32, %arg0 : i32, i32
  }
  func.func @transform_1(%arg0: i32) -> (i32, i32) {
    %c0_i32 = arith.constant 0 : i32
    %c0_i32_0 = arith.constant 0 : i32
    return %arg0, %c0_i32 : i32, i32
  }
  func.func @transform_2(%arg0: i32) -> (i32, i32) {
    %c0_i32 = arith.constant 0 : i32
    %c0_i32_0 = arith.constant 0 : i32
    %c0_i32_1 = arith.constant 0 : i32
    return %c0_i32, %c0_i32_0 : i32, i32
  }
  func.func @transform_3(%arg0: i32) -> (i32, i32) {
    %c0_i32 = arith.constant 0 : i32
    %c0_i32_0 = arith.constant 0 : i32
    %c0_i32_1 = arith.constant 0 : i32
    return %c0_i32, %c0_i32_0 : i32, i32
  }
  func.func @transform_4(%arg0: i32) -> (i32, i32) {
    %c0_i32 = arith.constant 0 : i32
    %c0_i32_0 = arith.constant 0 : i32
    %c0_i32_1 = arith.constant 0 : i32
    return %c0_i32, %c0_i32_0 : i32, i32
  }
}

module attributes {stable_mosaic.version = 11 : i64} {
  func.func @_dilated_conv_kernel(%arg0: i32, %arg1: memref<1x32x128xbf16, #tpu.memory_space<vmem>>, %arg2: memref<27x128x128xbf16, #tpu.memory_space<vmem>>, %arg3: memref<1x32x128xbf16, #tpu.memory_space<vmem>>, %arg4: memref<384x128xbf16, #tpu.memory_space<vmem>>) attributes {dimension_semantics = [#tpu.dimension_semantics<parallel>], iteration_bounds = array<i64: 2>, scalar_prefetch = 0 : i64, scratch_operands = 1 : i64, tpu.core_type = #tpu.core_type<tc>, window_params = [{transform_indices = @transform_0, window_bounds = array<i64: 1, 32, 128>}, {pipeline_mode = #tpu.pipeline_mode<synchronous>, transform_indices = @transform_1, window_bounds = array<i64: 27, 128, 128>}, {transform_indices = @transform_2, window_bounds = array<i64: 1, 32, 128>}]} {
    %cst = arith.constant 0.000000e+00 : bf16
    %0 = vector.broadcast %cst : bf16 to vector<384x128xbf16>
    %c0 = arith.constant 0 : index
    %c0_0 = arith.constant 0 : index
    %1 = vector.load %arg4[%c0, %c0_0] : memref<384x128xbf16, #tpu.memory_space<vmem>>, vector<384x128xbf16>
    tpu.vector_store %arg4[%c0, %c0_0], %0 {strides = array<i32>} : memref<384x128xbf16, #tpu.memory_space<vmem>>, vector<384x128xbf16>,
    %c0_1 = arith.constant 0 : index
    %c0_2 = arith.constant 0 : index
    %c0_3 = arith.constant 0 : index
    %2 = vector.load %arg1[%c0_1, %c0_2, %c0_3] : memref<1x32x128xbf16, #tpu.memory_space<vmem>>, vector<1x4x128xbf16>
    %3 = vector.shape_cast %2 : vector<1x4x128xbf16> to vector<4x128xbf16>
    %c146 = arith.constant 146 : index
    %c0_4 = arith.constant 0 : index
    %4 = vector.load %arg4[%c146, %c0_4] : memref<384x128xbf16, #tpu.memory_space<vmem>>, vector<4x128xbf16>
    tpu.vector_store %arg4[%c146, %c0_4], %3 {strides = array<i32>} : memref<384x128xbf16, #tpu.memory_space<vmem>>, vector<4x128xbf16>,
    %c0_5 = arith.constant 0 : index
    %c4 = arith.constant 4 : index
    %c0_6 = arith.constant 0 : index
    %5 = vector.load %arg1[%c0_5, %c4, %c0_6] : memref<1x32x128xbf16, #tpu.memory_space<vmem>>, vector<1x4x128xbf16>
    %6 = vector.shape_cast %5 : vector<1x4x128xbf16> to vector<4x128xbf16>
    %c154 = arith.constant 154 : index
    %c0_7 = arith.constant 0 : index
    %7 = vector.load %arg4[%c154, %c0_7] : memref<384x128xbf16, #tpu.memory_space<vmem>>, vector<4x128xbf16>
    tpu.vector_store %arg4[%c154, %c0_7], %6 {strides = array<i32>} : memref<384x128xbf16, #tpu.memory_space<vmem>>, vector<4x128xbf16>,
    %c0_8 = arith.constant 0 : index
    %c8 = arith.constant 8 : index
    %c0_9 = arith.constant 0 : index
    %8 = vector.load %arg1[%c0_8, %c8, %c0_9] : memref<1x32x128xbf16, #tpu.memory_space<vmem>>, vector<1x4x128xbf16>
    %9 = vector.shape_cast %8 : vector<1x4x128xbf16> to vector<4x128xbf16>
    %c162 = arith.constant 162 : index
    %c0_10 = arith.constant 0 : index
    %10 = vector.load %arg4[%c162, %c0_10] : memref<384x128xbf16, #tpu.memory_space<vmem>>, vector<4x128xbf16>
    tpu.vector_store %arg4[%c162, %c0_10], %9 {strides = array<i32>} : memref<384x128xbf16, #tpu.memory_space<vmem>>, vector<4x128xbf16>,
    %c0_11 = arith.constant 0 : index
    %c12 = arith.constant 12 : index
    %c0_12 = arith.constant 0 : index
    %11 = vector.load %arg1[%c0_11, %c12, %c0_12] : memref<1x32x128xbf16, #tpu.memory_space<vmem>>, vector<1x4x128xbf16>
    %12 = vector.shape_cast %11 : vector<1x4x128xbf16> to vector<4x128xbf16>
    %c170 = arith.constant 170 : index
    %c0_13 = arith.constant 0 : index
    %13 = vector.load %arg4[%c170, %c0_13] : memref<384x128xbf16, #tpu.memory_space<vmem>>, vector<4x128xbf16>
    tpu.vector_store %arg4[%c170, %c0_13], %12 {strides = array<i32>} : memref<384x128xbf16, #tpu.memory_space<vmem>>, vector<4x128xbf16>,
    %c0_14 = arith.constant 0 : index
    %c16 = arith.constant 16 : index
    %c0_15 = arith.constant 0 : index
    %14 = vector.load %arg1[%c0_14, %c16, %c0_15] : memref<1x32x128xbf16, #tpu.memory_space<vmem>>, vector<1x4x128xbf16>
    %15 = vector.shape_cast %14 : vector<1x4x128xbf16> to vector<4x128xbf16>
    %c210 = arith.constant 210 : index
    %c0_16 = arith.constant 0 : index
    %16 = vector.load %arg4[%c210, %c0_16] : memref<384x128xbf16, #tpu.memory_space<vmem>>, vector<4x128xbf16>
    tpu.vector_store %arg4[%c210, %c0_16], %15 {strides = array<i32>} : memref<384x128xbf16, #tpu.memory_space<vmem>>, vector<4x128xbf16>,
    %c0_17 = arith.constant 0 : index
    %c20 = arith.constant 20 : index
    %c0_18 = arith.constant 0 : index
    %17 = vector.load %arg1[%c0_17, %c20, %c0_18] : memref<1x32x128xbf16, #tpu.memory_space<vmem>>, vector<1x4x128xbf16>
    %18 = vector.shape_cast %17 : vector<1x4x128xbf16> to vector<4x128xbf16>
    %c218 = arith.constant 218 : index
    %c0_19 = arith.constant 0 : index
    %19 = vector.load %arg4[%c218, %c0_19] : memref<384x128xbf16, #tpu.memory_space<vmem>>, vector<4x128xbf16>
    tpu.vector_store %arg4[%c218, %c0_19], %18 {strides = array<i32>} : memref<384x128xbf16, #tpu.memory_space<vmem>>, vector<4x128xbf16>,
    %c0_20 = arith.constant 0 : index
    %c24 = arith.constant 24 : index
    %c0_21 = arith.constant 0 : index
    %20 = vector.load %arg1[%c0_20, %c24, %c0_21] : memref<1x32x128xbf16, #tpu.memory_space<vmem>>, vector<1x4x128xbf16>
    %21 = vector.shape_cast %20 : vector<1x4x128xbf16> to vector<4x128xbf16>
    %c226 = arith.constant 226 : index
    %c0_22 = arith.constant 0 : index
    %22 = vector.load %arg4[%c226, %c0_22] : memref<384x128xbf16, #tpu.memory_space<vmem>>, vector<4x128xbf16>
    tpu.vector_store %arg4[%c226, %c0_22], %21 {strides = array<i32>} : memref<384x128xbf16, #tpu.memory_space<vmem>>, vector<4x128xbf16>,
    %c0_23 = arith.constant 0 : index
    %c28 = arith.constant 28 : index
    %c0_24 = arith.constant 0 : index
    %23 = vector.load %arg1[%c0_23, %c28, %c0_24] : memref<1x32x128xbf16, #tpu.memory_space<vmem>>, vector<1x4x128xbf16>
    %24 = vector.shape_cast %23 : vector<1x4x128xbf16> to vector<4x128xbf16>
    %c234 = arith.constant 234 : index
    %c0_25 = arith.constant 0 : index
    %25 = vector.load %arg4[%c234, %c0_25] : memref<384x128xbf16, #tpu.memory_space<vmem>>, vector<4x128xbf16>
    tpu.vector_store %arg4[%c234, %c0_25], %24 {strides = array<i32>} : memref<384x128xbf16, #tpu.memory_space<vmem>>, vector<4x128xbf16>,
    %cst_26 = arith.constant 0.000000e+00 : f32
    %26 = vector.broadcast %cst_26 : f32 to vector<92x128xf32>
    %c0_27 = arith.constant 0 : index
    %c0_28 = arith.constant 0 : index
    %27 = vector.load %arg4[%c0_27, %c0_28] : memref<384x128xbf16, #tpu.memory_space<vmem>>, vector<92x128xbf16>
    %c0_29 = arith.constant 0 : index
    %c0_30 = arith.constant 0 : index
    %c0_31 = arith.constant 0 : index
    %28 = vector.load %arg2[%c0_29, %c0_30, %c0_31] : memref<27x128x128xbf16, #tpu.memory_space<vmem>>, vector<1x128x128xbf16>
    %29 = vector.shape_cast %28 : vector<1x128x128xbf16> to vector<128x128xbf16>
    %cst_32 = arith.constant dense<0.000000e+00> : vector<92x128xf32>
    %30 = tpu.matmul %27, %29, %cst_32 {dimension_numbers = #tpu.dot_dimension_numbers<[1], [0], [0], [1], [0, 0, 1, 1], [], []>} : vector<92x128xbf16>, vector<128x128xbf16>, vector<92x128xf32> -> vector<92x128xf32>
    %31 = arith.addf %26, %30 : vector<92x128xf32>
    %c2 = arith.constant 2 : index
    %c0_33 = arith.constant 0 : index
    %32 = vector.load %arg4[%c2, %c0_33] : memref<384x128xbf16, #tpu.memory_space<vmem>>, vector<92x128xbf16>
    %c1 = arith.constant 1 : index
    %c0_34 = arith.constant 0 : index
    %c0_35 = arith.constant 0 : index
    %33 = vector.load %arg2[%c1, %c0_34, %c0_35] : memref<27x128x128xbf16, #tpu.memory_space<vmem>>, vector<1x128x128xbf16>
    %34 = vector.shape_cast %33 : vector<1x128x128xbf16> to vector<128x128xbf16>
    %cst_36 = arith.constant dense<0.000000e+00> : vector<92x128xf32>
    %35 = tpu.matmul %32, %34, %cst_36 {dimension_numbers = #tpu.dot_dimension_numbers<[1], [0], [0], [1], [0, 0, 1, 1], [], []>} : vector<92x128xbf16>, vector<128x128xbf16>, vector<92x128xf32> -> vector<92x128xf32>
    %36 = arith.addf %31, %35 : vector<92x128xf32>
    %c4_37 = arith.constant 4 : index
    %c0_38 = arith.constant 0 : index
    %37 = vector.load %arg4[%c4_37, %c0_38] : memref<384x128xbf16, #tpu.memory_space<vmem>>, vector<92x128xbf16>
    %c2_39 = arith.constant 2 : index
    %c0_40 = arith.constant 0 : index
    %c0_41 = arith.constant 0 : index
    %38 = vector.load %arg2[%c2_39, %c0_40, %c0_41] : memref<27x128x128xbf16, #tpu.memory_space<vmem>>, vector<1x128x128xbf16>
    %39 = vector.shape_cast %38 : vector<1x128x128xbf16> to vector<128x128xbf16>
    %cst_42 = arith.constant dense<0.000000e+00> : vector<92x128xf32>
    %40 = tpu.matmul %37, %39, %cst_42 {dimension_numbers = #tpu.dot_dimension_numbers<[1], [0], [0], [1], [0, 0, 1, 1], [], []>} : vector<92x128xbf16>, vector<128x128xbf16>, vector<92x128xf32> -> vector<92x128xf32>
    %41 = arith.addf %36, %40 : vector<92x128xf32>
    %c16_43 = arith.constant 16 : index
    %c0_44 = arith.constant 0 : index
    %42 = vector.load %arg4[%c16_43, %c0_44] : memref<384x128xbf16, #tpu.memory_space<vmem>>, vector<92x128xbf16>
    %c3 = arith.constant 3 : index
    %c0_45 = arith.constant 0 : index
    %c0_46 = arith.constant 0 : index
    %43 = vector.load %arg2[%c3, %c0_45, %c0_46] : memref<27x128x128xbf16, #tpu.memory_space<vmem>>, vector<1x128x128xbf16>
    %44 = vector.shape_cast %43 : vector<1x128x128xbf16> to vector<128x128xbf16>
    %cst_47 = arith.constant dense<0.000000e+00> : vector<92x128xf32>
    %45 = tpu.matmul %42, %44, %cst_47 {dimension_numbers = #tpu.dot_dimension_numbers<[1], [0], [0], [1], [0, 0, 1, 1], [], []>} : vector<92x128xbf16>, vector<128x128xbf16>, vector<92x128xf32> -> vector<92x128xf32>
    %46 = arith.addf %41, %45 : vector<92x128xf32>
    %c18 = arith.constant 18 : index
    %c0_48 = arith.constant 0 : index
    %47 = vector.load %arg4[%c18, %c0_48] : memref<384x128xbf16, #tpu.memory_space<vmem>>, vector<92x128xbf16>
    %c4_49 = arith.constant 4 : index
    %c0_50 = arith.constant 0 : index
    %c0_51 = arith.constant 0 : index
    %48 = vector.load %arg2[%c4_49, %c0_50, %c0_51] : memref<27x128x128xbf16, #tpu.memory_space<vmem>>, vector<1x128x128xbf16>
    %49 = vector.shape_cast %48 : vector<1x128x128xbf16> to vector<128x128xbf16>
    %cst_52 = arith.constant dense<0.000000e+00> : vector<92x128xf32>
    %50 = tpu.matmul %47, %49, %cst_52 {dimension_numbers = #tpu.dot_dimension_numbers<[1], [0], [0], [1], [0, 0, 1, 1], [], []>} : vector<92x128xbf16>, vector<128x128xbf16>, vector<92x128xf32> -> vector<92x128xf32>
    %51 = arith.addf %46, %50 : vector<92x128xf32>
    %c20_53 = arith.constant 20 : index
    %c0_54 = arith.constant 0 : index
    %52 = vector.load %arg4[%c20_53, %c0_54] : memref<384x128xbf16, #tpu.memory_space<vmem>>, vector<92x128xbf16>
    %c5 = arith.constant 5 : index
    %c0_55 = arith.constant 0 : index
    %c0_56 = arith.constant 0 : index
    %53 = vector.load %arg2[%c5, %c0_55, %c0_56] : memref<27x128x128xbf16, #tpu.memory_space<vmem>>, vector<1x128x128xbf16>
    %54 = vector.shape_cast %53 : vector<1x128x128xbf16> to vector<128x128xbf16>
    %cst_57 = arith.constant dense<0.000000e+00> : vector<92x128xf32>
    %55 = tpu.matmul %52, %54, %cst_57 {dimension_numbers = #tpu.dot_dimension_numbers<[1], [0], [0], [1], [0, 0, 1, 1], [], []>} : vector<92x128xbf16>, vector<128x128xbf16>, vector<92x128xf32> -> vector<92x128xf32>
    %56 = arith.addf %51, %55 : vector<92x128xf32>
    %c32 = arith.constant 32 : index
    %c0_58 = arith.constant 0 : index
    %57 = vector.load %arg4[%c32, %c0_58] : memref<384x128xbf16, #tpu.memory_space<vmem>>, vector<92x128xbf16>
    %c6 = arith.constant 6 : index
    %c0_59 = arith.constant 0 : index
    %c0_60 = arith.constant 0 : index
    %58 = vector.load %arg2[%c6, %c0_59, %c0_60] : memref<27x128x128xbf16, #tpu.memory_space<vmem>>, vector<1x128x128xbf16>
    %59 = vector.shape_cast %58 : vector<1x128x128xbf16> to vector<128x128xbf16>
    %cst_61 = arith.constant dense<0.000000e+00> : vector<92x128xf32>
    %60 = tpu.matmul %57, %59, %cst_61 {dimension_numbers = #tpu.dot_dimension_numbers<[1], [0], [0], [1], [0, 0, 1, 1], [], []>} : vector<92x128xbf16>, vector<128x128xbf16>, vector<92x128xf32> -> vector<92x128xf32>
    %61 = arith.addf %56, %60 : vector<92x128xf32>
    %c34 = arith.constant 34 : index
    %c0_62 = arith.constant 0 : index
    %62 = vector.load %arg4[%c34, %c0_62] : memref<384x128xbf16, #tpu.memory_space<vmem>>, vector<92x128xbf16>
    %c7 = arith.constant 7 : index
    %c0_63 = arith.constant 0 : index
    %c0_64 = arith.constant 0 : index
    %63 = vector.load %arg2[%c7, %c0_63, %c0_64] : memref<27x128x128xbf16, #tpu.memory_space<vmem>>, vector<1x128x128xbf16>
    %64 = vector.shape_cast %63 : vector<1x128x128xbf16> to vector<128x128xbf16>
    %cst_65 = arith.constant dense<0.000000e+00> : vector<92x128xf32>
    %65 = tpu.matmul %62, %64, %cst_65 {dimension_numbers = #tpu.dot_dimension_numbers<[1], [0], [0], [1], [0, 0, 1, 1], [], []>} : vector<92x128xbf16>, vector<128x128xbf16>, vector<92x128xf32> -> vector<92x128xf32>
    %66 = arith.addf %61, %65 : vector<92x128xf32>
    %c36 = arith.constant 36 : index
    %c0_66 = arith.constant 0 : index
    %67 = vector.load %arg4[%c36, %c0_66] : memref<384x128xbf16, #tpu.memory_space<vmem>>, vector<92x128xbf16>
    %c8_67 = arith.constant 8 : index
    %c0_68 = arith.constant 0 : index
    %c0_69 = arith.constant 0 : index
    %68 = vector.load %arg2[%c8_67, %c0_68, %c0_69] : memref<27x128x128xbf16, #tpu.memory_space<vmem>>, vector<1x128x128xbf16>
    %69 = vector.shape_cast %68 : vector<1x128x128xbf16> to vector<128x128xbf16>
    %cst_70 = arith.constant dense<0.000000e+00> : vector<92x128xf32>
    %70 = tpu.matmul %67, %69, %cst_70 {dimension_numbers = #tpu.dot_dimension_numbers<[1], [0], [0], [1], [0, 0, 1, 1], [], []>} : vector<92x128xbf16>, vector<128x128xbf16>, vector<92x128xf32> -> vector<92x128xf32>
    %71 = arith.addf %66, %70 : vector<92x128xf32>
    %c128 = arith.constant 128 : index
    %c0_71 = arith.constant 0 : index
    %72 = vector.load %arg4[%c128, %c0_71] : memref<384x128xbf16, #tpu.memory_space<vmem>>, vector<92x128xbf16>
    %c9 = arith.constant 9 : index
    %c0_72 = arith.constant 0 : index
    %c0_73 = arith.constant 0 : index
    %73 = vector.load %arg2[%c9, %c0_72, %c0_73] : memref<27x128x128xbf16, #tpu.memory_space<vmem>>, vector<1x128x128xbf16>
    %74 = vector.shape_cast %73 : vector<1x128x128xbf16> to vector<128x128xbf16>
    %cst_74 = arith.constant dense<0.000000e+00> : vector<92x128xf32>
    %75 = tpu.matmul %72, %74, %cst_74 {dimension_numbers = #tpu.dot_dimension_numbers<[1], [0], [0], [1], [0, 0, 1, 1], [], []>} : vector<92x128xbf16>, vector<128x128xbf16>, vector<92x128xf32> -> vector<92x128xf32>
    %76 = arith.addf %71, %75 : vector<92x128xf32>
    %c130 = arith.constant 130 : index
    %c0_75 = arith.constant 0 : index
    %77 = vector.load %arg4[%c130, %c0_75] : memref<384x128xbf16, #tpu.memory_space<vmem>>, vector<92x128xbf16>
    %c10 = arith.constant 10 : index
    %c0_76 = arith.constant 0 : index
    %c0_77 = arith.constant 0 : index
    %78 = vector.load %arg2[%c10, %c0_76, %c0_77] : memref<27x128x128xbf16, #tpu.memory_space<vmem>>, vector<1x128x128xbf16>
    %79 = vector.shape_cast %78 : vector<1x128x128xbf16> to vector<128x128xbf16>
    %cst_78 = arith.constant dense<0.000000e+00> : vector<92x128xf32>
    %80 = tpu.matmul %77, %79, %cst_78 {dimension_numbers = #tpu.dot_dimension_numbers<[1], [0], [0], [1], [0, 0, 1, 1], [], []>} : vector<92x128xbf16>, vector<128x128xbf16>, vector<92x128xf32> -> vector<92x128xf32>
    %81 = arith.addf %76, %80 : vector<92x128xf32>
    %c132 = arith.constant 132 : index
    %c0_79 = arith.constant 0 : index
    %82 = vector.load %arg4[%c132, %c0_79] : memref<384x128xbf16, #tpu.memory_space<vmem>>, vector<92x128xbf16>
    %c11 = arith.constant 11 : index
    %c0_80 = arith.constant 0 : index
    %c0_81 = arith.constant 0 : index
    %83 = vector.load %arg2[%c11, %c0_80, %c0_81] : memref<27x128x128xbf16, #tpu.memory_space<vmem>>, vector<1x128x128xbf16>
    %84 = vector.shape_cast %83 : vector<1x128x128xbf16> to vector<128x128xbf16>
    %cst_82 = arith.constant dense<0.000000e+00> : vector<92x128xf32>
    %85 = tpu.matmul %82, %84, %cst_82 {dimension_numbers = #tpu.dot_dimension_numbers<[1], [0], [0], [1], [0, 0, 1, 1], [], []>} : vector<92x128xbf16>, vector<128x128xbf16>, vector<92x128xf32> -> vector<92x128xf32>
    %86 = arith.addf %81, %85 : vector<92x128xf32>
    %c144 = arith.constant 144 : index
    %c0_83 = arith.constant 0 : index
    %87 = vector.load %arg4[%c144, %c0_83] : memref<384x128xbf16, #tpu.memory_space<vmem>>, vector<92x128xbf16>
    %c12_84 = arith.constant 12 : index
    %c0_85 = arith.constant 0 : index
    %c0_86 = arith.constant 0 : index
    %88 = vector.load %arg2[%c12_84, %c0_85, %c0_86] : memref<27x128x128xbf16, #tpu.memory_space<vmem>>, vector<1x128x128xbf16>
    %89 = vector.shape_cast %88 : vector<1x128x128xbf16> to vector<128x128xbf16>
    %cst_87 = arith.constant dense<0.000000e+00> : vector<92x128xf32>
    %90 = tpu.matmul %87, %89, %cst_87 {dimension_numbers = #tpu.dot_dimension_numbers<[1], [0], [0], [1], [0, 0, 1, 1], [], []>} : vector<92x128xbf16>, vector<128x128xbf16>, vector<92x128xf32> -> vector<92x128xf32>
    %91 = arith.addf %86, %90 : vector<92x128xf32>
    %c146_88 = arith.constant 146 : index
    %c0_89 = arith.constant 0 : index
    %92 = vector.load %arg4[%c146_88, %c0_89] : memref<384x128xbf16, #tpu.memory_space<vmem>>, vector<92x128xbf16>
    %c13 = arith.constant 13 : index
    %c0_90 = arith.constant 0 : index
    %c0_91 = arith.constant 0 : index
    %93 = vector.load %arg2[%c13, %c0_90, %c0_91] : memref<27x128x128xbf16, #tpu.memory_space<vmem>>, vector<1x128x128xbf16>
    %94 = vector.shape_cast %93 : vector<1x128x128xbf16> to vector<128x128xbf16>
    %cst_92 = arith.constant dense<0.000000e+00> : vector<92x128xf32>
    %95 = tpu.matmul %92, %94, %cst_92 {dimension_numbers = #tpu.dot_dimension_numbers<[1], [0], [0], [1], [0, 0, 1, 1], [], []>} : vector<92x128xbf16>, vector<128x128xbf16>, vector<92x128xf32> -> vector<92x128xf32>
    %96 = arith.addf %91, %95 : vector<92x128xf32>
    %c148 = arith.constant 148 : index
    %c0_93 = arith.constant 0 : index
    %97 = vector.load %arg4[%c148, %c0_93] : memref<384x128xbf16, #tpu.memory_space<vmem>>, vector<92x128xbf16>
    %c14 = arith.constant 14 : index
    %c0_94 = arith.constant 0 : index
    %c0_95 = arith.constant 0 : index
    %98 = vector.load %arg2[%c14, %c0_94, %c0_95] : memref<27x128x128xbf16, #tpu.memory_space<vmem>>, vector<1x128x128xbf16>
    %99 = vector.shape_cast %98 : vector<1x128x128xbf16> to vector<128x128xbf16>
    %cst_96 = arith.constant dense<0.000000e+00> : vector<92x128xf32>
    %100 = tpu.matmul %97, %99, %cst_96 {dimension_numbers = #tpu.dot_dimension_numbers<[1], [0], [0], [1], [0, 0, 1, 1], [], []>} : vector<92x128xbf16>, vector<128x128xbf16>, vector<92x128xf32> -> vector<92x128xf32>
    %101 = arith.addf %96, %100 : vector<92x128xf32>
    %c160 = arith.constant 160 : index
    %c0_97 = arith.constant 0 : index
    %102 = vector.load %arg4[%c160, %c0_97] : memref<384x128xbf16, #tpu.memory_space<vmem>>, vector<92x128xbf16>
    %c15 = arith.constant 15 : index
    %c0_98 = arith.constant 0 : index
    %c0_99 = arith.constant 0 : index
    %103 = vector.load %arg2[%c15, %c0_98, %c0_99] : memref<27x128x128xbf16, #tpu.memory_space<vmem>>, vector<1x128x128xbf16>
    %104 = vector.shape_cast %103 : vector<1x128x128xbf16> to vector<128x128xbf16>
    %cst_100 = arith.constant dense<0.000000e+00> : vector<92x128xf32>
    %105 = tpu.matmul %102, %104, %cst_100 {dimension_numbers = #tpu.dot_dimension_numbers<[1], [0], [0], [1], [0, 0, 1, 1], [], []>} : vector<92x128xbf16>, vector<128x128xbf16>, vector<92x128xf32> -> vector<92x128xf32>
    %106 = arith.addf %101, %105 : vector<92x128xf32>
    %c162_101 = arith.constant 162 : index
    %c0_102 = arith.constant 0 : index
    %107 = vector.load %arg4[%c162_101, %c0_102] : memref<384x128xbf16, #tpu.memory_space<vmem>>, vector<92x128xbf16>
    %c16_103 = arith.constant 16 : index
    %c0_104 = arith.constant 0 : index
    %c0_105 = arith.constant 0 : index
    %108 = vector.load %arg2[%c16_103, %c0_104, %c0_105] : memref<27x128x128xbf16, #tpu.memory_space<vmem>>, vector<1x128x128xbf16>
    %109 = vector.shape_cast %108 : vector<1x128x128xbf16> to vector<128x128xbf16>
    %cst_106 = arith.constant dense<0.000000e+00> : vector<92x128xf32>
    %110 = tpu.matmul %107, %109, %cst_106 {dimension_numbers = #tpu.dot_dimension_numbers<[1], [0], [0], [1], [0, 0, 1, 1], [], []>} : vector<92x128xbf16>, vector<128x128xbf16>, vector<92x128xf32> -> vector<92x128xf32>
    %111 = arith.addf %106, %110 : vector<92x128xf32>
    %c164 = arith.constant 164 : index
    %c0_107 = arith.constant 0 : index
    %112 = vector.load %arg4[%c164, %c0_107] : memref<384x128xbf16, #tpu.memory_space<vmem>>, vector<92x128xbf16>
    %c17 = arith.constant 17 : index
    %c0_108 = arith.constant 0 : index
    %c0_109 = arith.constant 0 : index
    %113 = vector.load %arg2[%c17, %c0_108, %c0_109] : memref<27x128x128xbf16, #tpu.memory_space<vmem>>, vector<1x128x128xbf16>
    %114 = vector.shape_cast %113 : vector<1x128x128xbf16> to vector<128x128xbf16>
    %cst_110 = arith.constant dense<0.000000e+00> : vector<92x128xf32>
    %115 = tpu.matmul %112, %114, %cst_110 {dimension_numbers = #tpu.dot_dimension_numbers<[1], [0], [0], [1], [0, 0, 1, 1], [], []>} : vector<92x128xbf16>, vector<128x128xbf16>, vector<92x128xf32> -> vector<92x128xf32>
    %116 = arith.addf %111, %115 : vector<92x128xf32>
    %c256 = arith.constant 256 : index
    %c0_111 = arith.constant 0 : index
    %117 = vector.load %arg4[%c256, %c0_111] : memref<384x128xbf16, #tpu.memory_space<vmem>>, vector<92x128xbf16>
    %c18_112 = arith.constant 18 : index
    %c0_113 = arith.constant 0 : index
    %c0_114 = arith.constant 0 : index
    %118 = vector.load %arg2[%c18_112, %c0_113, %c0_114] : memref<27x128x128xbf16, #tpu.memory_space<vmem>>, vector<1x128x128xbf16>
    %119 = vector.shape_cast %118 : vector<1x128x128xbf16> to vector<128x128xbf16>
    %cst_115 = arith.constant dense<0.000000e+00> : vector<92x128xf32>
    %120 = tpu.matmul %117, %119, %cst_115 {dimension_numbers = #tpu.dot_dimension_numbers<[1], [0], [0], [1], [0, 0, 1, 1], [], []>} : vector<92x128xbf16>, vector<128x128xbf16>, vector<92x128xf32> -> vector<92x128xf32>
    %121 = arith.addf %116, %120 : vector<92x128xf32>
    %c258 = arith.constant 258 : index
    %c0_116 = arith.constant 0 : index
    %122 = vector.load %arg4[%c258, %c0_116] : memref<384x128xbf16, #tpu.memory_space<vmem>>, vector<92x128xbf16>
    %c19 = arith.constant 19 : index
    %c0_117 = arith.constant 0 : index
    %c0_118 = arith.constant 0 : index
    %123 = vector.load %arg2[%c19, %c0_117, %c0_118] : memref<27x128x128xbf16, #tpu.memory_space<vmem>>, vector<1x128x128xbf16>
    %124 = vector.shape_cast %123 : vector<1x128x128xbf16> to vector<128x128xbf16>
    %cst_119 = arith.constant dense<0.000000e+00> : vector<92x128xf32>
    %125 = tpu.matmul %122, %124, %cst_119 {dimension_numbers = #tpu.dot_dimension_numbers<[1], [0], [0], [1], [0, 0, 1, 1], [], []>} : vector<92x128xbf16>, vector<128x128xbf16>, vector<92x128xf32> -> vector<92x128xf32>
    %126 = arith.addf %121, %125 : vector<92x128xf32>
    %c260 = arith.constant 260 : index
    %c0_120 = arith.constant 0 : index
    %127 = vector.load %arg4[%c260, %c0_120] : memref<384x128xbf16, #tpu.memory_space<vmem>>, vector<92x128xbf16>
    %c20_121 = arith.constant 20 : index
    %c0_122 = arith.constant 0 : index
    %c0_123 = arith.constant 0 : index
    %128 = vector.load %arg2[%c20_121, %c0_122, %c0_123] : memref<27x128x128xbf16, #tpu.memory_space<vmem>>, vector<1x128x128xbf16>
    %129 = vector.shape_cast %128 : vector<1x128x128xbf16> to vector<128x128xbf16>
    %cst_124 = arith.constant dense<0.000000e+00> : vector<92x128xf32>
    %130 = tpu.matmul %127, %129, %cst_124 {dimension_numbers = #tpu.dot_dimension_numbers<[1], [0], [0], [1], [0, 0, 1, 1], [], []>} : vector<92x128xbf16>, vector<128x128xbf16>, vector<92x128xf32> -> vector<92x128xf32>
    %131 = arith.addf %126, %130 : vector<92x128xf32>
    %c272 = arith.constant 272 : index
    %c0_125 = arith.constant 0 : index
    %132 = vector.load %arg4[%c272, %c0_125] : memref<384x128xbf16, #tpu.memory_space<vmem>>, vector<92x128xbf16>
    %c21 = arith.constant 21 : index
    %c0_126 = arith.constant 0 : index
    %c0_127 = arith.constant 0 : index
    %133 = vector.load %arg2[%c21, %c0_126, %c0_127] : memref<27x128x128xbf16, #tpu.memory_space<vmem>>, vector<1x128x128xbf16>
    %134 = vector.shape_cast %133 : vector<1x128x128xbf16> to vector<128x128xbf16>
    %cst_128 = arith.constant dense<0.000000e+00> : vector<92x128xf32>
    %135 = tpu.matmul %132, %134, %cst_128 {dimension_numbers = #tpu.dot_dimension_numbers<[1], [0], [0], [1], [0, 0, 1, 1], [], []>} : vector<92x128xbf16>, vector<128x128xbf16>, vector<92x128xf32> -> vector<92x128xf32>
    %136 = arith.addf %131, %135 : vector<92x128xf32>
    %c274 = arith.constant 274 : index
    %c0_129 = arith.constant 0 : index
    %137 = vector.load %arg4[%c274, %c0_129] : memref<384x128xbf16, #tpu.memory_space<vmem>>, vector<92x128xbf16>
    %c22 = arith.constant 22 : index
    %c0_130 = arith.constant 0 : index
    %c0_131 = arith.constant 0 : index
    %138 = vector.load %arg2[%c22, %c0_130, %c0_131] : memref<27x128x128xbf16, #tpu.memory_space<vmem>>, vector<1x128x128xbf16>
    %139 = vector.shape_cast %138 : vector<1x128x128xbf16> to vector<128x128xbf16>
    %cst_132 = arith.constant dense<0.000000e+00> : vector<92x128xf32>
    %140 = tpu.matmul %137, %139, %cst_132 {dimension_numbers = #tpu.dot_dimension_numbers<[1], [0], [0], [1], [0, 0, 1, 1], [], []>} : vector<92x128xbf16>, vector<128x128xbf16>, vector<92x128xf32> -> vector<92x128xf32>
    %141 = arith.addf %136, %140 : vector<92x128xf32>
    %c276 = arith.constant 276 : index
    %c0_133 = arith.constant 0 : index
    %142 = vector.load %arg4[%c276, %c0_133] : memref<384x128xbf16, #tpu.memory_space<vmem>>, vector<92x128xbf16>
    %c23 = arith.constant 23 : index
    %c0_134 = arith.constant 0 : index
    %c0_135 = arith.constant 0 : index
    %143 = vector.load %arg2[%c23, %c0_134, %c0_135] : memref<27x128x128xbf16, #tpu.memory_space<vmem>>, vector<1x128x128xbf16>
    %144 = vector.shape_cast %143 : vector<1x128x128xbf16> to vector<128x128xbf16>
    %cst_136 = arith.constant dense<0.000000e+00> : vector<92x128xf32>
    %145 = tpu.matmul %142, %144, %cst_136 {dimension_numbers = #tpu.dot_dimension_numbers<[1], [0], [0], [1], [0, 0, 1, 1], [], []>} : vector<92x128xbf16>, vector<128x128xbf16>, vector<92x128xf32> -> vector<92x128xf32>
    %146 = arith.addf %141, %145 : vector<92x128xf32>
    %c288 = arith.constant 288 : index
    %c0_137 = arith.constant 0 : index
    %147 = vector.load %arg4[%c288, %c0_137] : memref<384x128xbf16, #tpu.memory_space<vmem>>, vector<92x128xbf16>
    %c24_138 = arith.constant 24 : index
    %c0_139 = arith.constant 0 : index
    %c0_140 = arith.constant 0 : index
    %148 = vector.load %arg2[%c24_138, %c0_139, %c0_140] : memref<27x128x128xbf16, #tpu.memory_space<vmem>>, vector<1x128x128xbf16>
    %149 = vector.shape_cast %148 : vector<1x128x128xbf16> to vector<128x128xbf16>
    %cst_141 = arith.constant dense<0.000000e+00> : vector<92x128xf32>
    %150 = tpu.matmul %147, %149, %cst_141 {dimension_numbers = #tpu.dot_dimension_numbers<[1], [0], [0], [1], [0, 0, 1, 1], [], []>} : vector<92x128xbf16>, vector<128x128xbf16>, vector<92x128xf32> -> vector<92x128xf32>
    %151 = arith.addf %146, %150 : vector<92x128xf32>
    %c290 = arith.constant 290 : index
    %c0_142 = arith.constant 0 : index
    %152 = vector.load %arg4[%c290, %c0_142] : memref<384x128xbf16, #tpu.memory_space<vmem>>, vector<92x128xbf16>
    %c25 = arith.constant 25 : index
    %c0_143 = arith.constant 0 : index
    %c0_144 = arith.constant 0 : index
    %153 = vector.load %arg2[%c25, %c0_143, %c0_144] : memref<27x128x128xbf16, #tpu.memory_space<vmem>>, vector<1x128x128xbf16>
    %154 = vector.shape_cast %153 : vector<1x128x128xbf16> to vector<128x128xbf16>
    %cst_145 = arith.constant dense<0.000000e+00> : vector<92x128xf32>
    %155 = tpu.matmul %152, %154, %cst_145 {dimension_numbers = #tpu.dot_dimension_numbers<[1], [0], [0], [1], [0, 0, 1, 1], [], []>} : vector<92x128xbf16>, vector<128x128xbf16>, vector<92x128xf32> -> vector<92x128xf32>
    %156 = arith.addf %151, %155 : vector<92x128xf32>
    %c292 = arith.constant 292 : index
    %c0_146 = arith.constant 0 : index
    %157 = vector.load %arg4[%c292, %c0_146] : memref<384x128xbf16, #tpu.memory_space<vmem>>, vector<92x128xbf16>
    %c26 = arith.constant 26 : index
    %c0_147 = arith.constant 0 : index
    %c0_148 = arith.constant 0 : index
    %158 = vector.load %arg2[%c26, %c0_147, %c0_148] : memref<27x128x128xbf16, #tpu.memory_space<vmem>>, vector<1x128x128xbf16>
    %159 = vector.shape_cast %158 : vector<1x128x128xbf16> to vector<128x128xbf16>
    %cst_149 = arith.constant dense<0.000000e+00> : vector<92x128xf32>
    %160 = tpu.matmul %157, %159, %cst_149 {dimension_numbers = #tpu.dot_dimension_numbers<[1], [0], [0], [1], [0, 0, 1, 1], [], []>} : vector<92x128xbf16>, vector<128x128xbf16>, vector<92x128xf32> -> vector<92x128xf32>
    %161 = arith.addf %156, %160 : vector<92x128xf32>
    %162 = vector.extract_strided_slice %161 {offsets = [0, 0], sizes = [4, 128], strides = [1, 1]} : vector<92x128xf32> to vector<4x128xf32>
    %163 = arith.truncf %162 : vector<4x128xf32> to vector<4x128xbf16>
    %c0_150 = arith.constant 0 : index
    %c0_151 = arith.constant 0 : index
    %c0_152 = arith.constant 0 : index
    %164 = vector.load %arg3[%c0_150, %c0_151, %c0_152] : memref<1x32x128xbf16, #tpu.memory_space<vmem>>, vector<1x4x128xbf16>
    %165 = vector.shape_cast %164 : vector<1x4x128xbf16> to vector<4x128xbf16>
    %166 = vector.shape_cast %163 : vector<4x128xbf16> to vector<1x4x128xbf16>
    tpu.vector_store %arg3[%c0_150, %c0_151, %c0_152], %166 {strides = array<i32>} : memref<1x32x128xbf16, #tpu.memory_space<vmem>>, vector<1x4x128xbf16>,
    %167 = vector.extract_strided_slice %161 {offsets = [8, 0], sizes = [4, 128], strides = [1, 1]} : vector<92x128xf32> to vector<4x128xf32>
    %168 = arith.truncf %167 : vector<4x128xf32> to vector<4x128xbf16>
    %c0_153 = arith.constant 0 : index
    %c4_154 = arith.constant 4 : index
    %c0_155 = arith.constant 0 : index
    %169 = vector.load %arg3[%c0_153, %c4_154, %c0_155] : memref<1x32x128xbf16, #tpu.memory_space<vmem>>, vector<1x4x128xbf16>
    %170 = vector.shape_cast %169 : vector<1x4x128xbf16> to vector<4x128xbf16>
    %171 = vector.shape_cast %168 : vector<4x128xbf16> to vector<1x4x128xbf16>
    tpu.vector_store %arg3[%c0_153, %c4_154, %c0_155], %171 {strides = array<i32>} : memref<1x32x128xbf16, #tpu.memory_space<vmem>>, vector<1x4x128xbf16>,
    %172 = vector.extract_strided_slice %161 {offsets = [16, 0], sizes = [4, 128], strides = [1, 1]} : vector<92x128xf32> to vector<4x128xf32>
    %173 = arith.truncf %172 : vector<4x128xf32> to vector<4x128xbf16>
    %c0_156 = arith.constant 0 : index
    %c8_157 = arith.constant 8 : index
    %c0_158 = arith.constant 0 : index
    %174 = vector.load %arg3[%c0_156, %c8_157, %c0_158] : memref<1x32x128xbf16, #tpu.memory_space<vmem>>, vector<1x4x128xbf16>
    %175 = vector.shape_cast %174 : vector<1x4x128xbf16> to vector<4x128xbf16>
    %176 = vector.shape_cast %173 : vector<4x128xbf16> to vector<1x4x128xbf16>
    tpu.vector_store %arg3[%c0_156, %c8_157, %c0_158], %176 {strides = array<i32>} : memref<1x32x128xbf16, #tpu.memory_space<vmem>>, vector<1x4x128xbf16>,
    %177 = vector.extract_strided_slice %161 {offsets = [24, 0], sizes = [4, 128], strides = [1, 1]} : vector<92x128xf32> to vector<4x128xf32>
    %178 = arith.truncf %177 : vector<4x128xf32> to vector<4x128xbf16>
    %c0_159 = arith.constant 0 : index
    %c12_160 = arith.constant 12 : index
    %c0_161 = arith.constant 0 : index
    %179 = vector.load %arg3[%c0_159, %c12_160, %c0_161] : memref<1x32x128xbf16, #tpu.memory_space<vmem>>, vector<1x4x128xbf16>
    %180 = vector.shape_cast %179 : vector<1x4x128xbf16> to vector<4x128xbf16>
    %181 = vector.shape_cast %178 : vector<4x128xbf16> to vector<1x4x128xbf16>
    tpu.vector_store %arg3[%c0_159, %c12_160, %c0_161], %181 {strides = array<i32>} : memref<1x32x128xbf16, #tpu.memory_space<vmem>>, vector<1x4x128xbf16>,
    %182 = vector.extract_strided_slice %161 {offsets = [64, 0], sizes = [4, 128], strides = [1, 1]} : vector<92x128xf32> to vector<4x128xf32>
    %183 = arith.truncf %182 : vector<4x128xf32> to vector<4x128xbf16>
    %c0_162 = arith.constant 0 : index
    %c16_163 = arith.constant 16 : index
    %c0_164 = arith.constant 0 : index
    %184 = vector.load %arg3[%c0_162, %c16_163, %c0_164] : memref<1x32x128xbf16, #tpu.memory_space<vmem>>, vector<1x4x128xbf16>
    %185 = vector.shape_cast %184 : vector<1x4x128xbf16> to vector<4x128xbf16>
    %186 = vector.shape_cast %183 : vector<4x128xbf16> to vector<1x4x128xbf16>
    tpu.vector_store %arg3[%c0_162, %c16_163, %c0_164], %186 {strides = array<i32>} : memref<1x32x128xbf16, #tpu.memory_space<vmem>>, vector<1x4x128xbf16>,
    %187 = vector.extract_strided_slice %161 {offsets = [72, 0], sizes = [4, 128], strides = [1, 1]} : vector<92x128xf32> to vector<4x128xf32>
    %188 = arith.truncf %187 : vector<4x128xf32> to vector<4x128xbf16>
    %c0_165 = arith.constant 0 : index
    %c20_166 = arith.constant 20 : index
    %c0_167 = arith.constant 0 : index
    %189 = vector.load %arg3[%c0_165, %c20_166, %c0_167] : memref<1x32x128xbf16, #tpu.memory_space<vmem>>, vector<1x4x128xbf16>
    %190 = vector.shape_cast %189 : vector<1x4x128xbf16> to vector<4x128xbf16>
    %191 = vector.shape_cast %188 : vector<4x128xbf16> to vector<1x4x128xbf16>
    tpu.vector_store %arg3[%c0_165, %c20_166, %c0_167], %191 {strides = array<i32>} : memref<1x32x128xbf16, #tpu.memory_space<vmem>>, vector<1x4x128xbf16>,
    %192 = vector.extract_strided_slice %161 {offsets = [80, 0], sizes = [4, 128], strides = [1, 1]} : vector<92x128xf32> to vector<4x128xf32>
    %193 = arith.truncf %192 : vector<4x128xf32> to vector<4x128xbf16>
    %c0_168 = arith.constant 0 : index
    %c24_169 = arith.constant 24 : index
    %c0_170 = arith.constant 0 : index
    %194 = vector.load %arg3[%c0_168, %c24_169, %c0_170] : memref<1x32x128xbf16, #tpu.memory_space<vmem>>, vector<1x4x128xbf16>
    %195 = vector.shape_cast %194 : vector<1x4x128xbf16> to vector<4x128xbf16>
    %196 = vector.shape_cast %193 : vector<4x128xbf16> to vector<1x4x128xbf16>
    tpu.vector_store %arg3[%c0_168, %c24_169, %c0_170], %196 {strides = array<i32>} : memref<1x32x128xbf16, #tpu.memory_space<vmem>>, vector<1x4x128xbf16>,
    %197 = vector.extract_strided_slice %161 {offsets = [88, 0], sizes = [4, 128], strides = [1, 1]} : vector<92x128xf32> to vector<4x128xf32>
    %198 = arith.truncf %197 : vector<4x128xf32> to vector<4x128xbf16>
    %c0_171 = arith.constant 0 : index
    %c28_172 = arith.constant 28 : index
    %c0_173 = arith.constant 0 : index
    %199 = vector.load %arg3[%c0_171, %c28_172, %c0_173] : memref<1x32x128xbf16, #tpu.memory_space<vmem>>, vector<1x4x128xbf16>
    %200 = vector.shape_cast %199 : vector<1x4x128xbf16> to vector<4x128xbf16>
    %201 = vector.shape_cast %198 : vector<4x128xbf16> to vector<1x4x128xbf16>
    tpu.vector_store %arg3[%c0_171, %c28_172, %c0_173], %201 {strides = array<i32>} : memref<1x32x128xbf16, #tpu.memory_space<vmem>>, vector<1x4x128xbf16>,
    return
  }
  func.func @transform_0(%arg0: i32) -> (i32, i32, i32) {
    %c0_i32 = arith.constant 0 : i32
    %c0_i32_0 = arith.constant 0 : i32
    %c0_i32_1 = arith.constant 0 : i32
    return %arg0, %c0_i32, %c0_i32_0 : i32, i32, i32
  }
  func.func @transform_1(%arg0: i32) -> (i32, i32, i32) {
    %c0_i32 = arith.constant 0 : i32
    %c0_i32_0 = arith.constant 0 : i32
    %c0_i32_1 = arith.constant 0 : i32
    %c0_i32_2 = arith.constant 0 : i32
    return %c0_i32, %c0_i32_0, %c0_i32_1 : i32, i32, i32
  }
  func.func @transform_2(%arg0: i32) -> (i32, i32, i32) {
    %c0_i32 = arith.constant 0 : i32
    %c0_i32_0 = arith.constant 0 : i32
    %c0_i32_1 = arith.constant 0 : i32
    return %arg0, %c0_i32, %c0_i32_0 : i32, i32, i32
  }
}

module attributes {stable_mosaic.version = 11 : i64} {
  func.func @_block_tail_kernel(%arg0: i32, %arg1: memref<2x32x128xbf16, #tpu.memory_space<vmem>>, %arg2: memref<2x32x128xbf16, #tpu.memory_space<vmem>>, %arg3: memref<128x128xbf16, #tpu.memory_space<vmem>>, %arg4: memref<1x128xf32, #tpu.memory_space<vmem>>, %arg5: memref<1x128xf32, #tpu.memory_space<vmem>>, %arg6: memref<1x128xf32, #tpu.memory_space<vmem>>, %arg7: memref<1x128xf32, #tpu.memory_space<vmem>>, %arg8: memref<128x128xf32, #tpu.memory_space<vmem>>, %arg9: memref<1x128xf32, #tpu.memory_space<vmem>>, %arg10: memref<128x128xf32, #tpu.memory_space<vmem>>, %arg11: memref<1x128xf32, #tpu.memory_space<vmem>>, %arg12: memref<2x32x128xbf16, #tpu.memory_space<vmem>>, %arg13: memref<2x32x128xf32, #tpu.memory_space<vmem>>) attributes {dimension_semantics = [#tpu.dimension_semantics<arbitrary>], iteration_bounds = array<i64: 1>, scalar_prefetch = 0 : i64, scratch_operands = 1 : i64, tpu.core_type = #tpu.core_type<tc>, window_params = [{pipeline_mode = #tpu.pipeline_mode<synchronous>, transform_indices = @transform_0, window_bounds = array<i64: 2, 32, 128>}, {pipeline_mode = #tpu.pipeline_mode<synchronous>, transform_indices = @transform_1, window_bounds = array<i64: 2, 32, 128>}, {pipeline_mode = #tpu.pipeline_mode<synchronous>, transform_indices = @transform_2, window_bounds = array<i64: 128, 128>}, {pipeline_mode = #tpu.pipeline_mode<synchronous>, transform_indices = @transform_3, window_bounds = array<i64: 1, 128>}, {pipeline_mode = #tpu.pipeline_mode<synchronous>, transform_indices = @transform_4, window_bounds = array<i64: 1, 128>}, {pipeline_mode = #tpu.pipeline_mode<synchronous>, transform_indices = @transform_5, window_bounds = array<i64: 1, 128>}, {pipeline_mode = #tpu.pipeline_mode<synchronous>, transform_indices = @transform_6, window_bounds = array<i64: 1, 128>}, {pipeline_mode = #tpu.pipeline_mode<synchronous>, transform_indices = @transform_7, window_bounds = array<i64: 128, 128>}, {pipeline_mode = #tpu.pipeline_mode<synchronous>, transform_indices = @transform_8, window_bounds = array<i64: 1, 128>}, {pipeline_mode = #tpu.pipeline_mode<synchronous>, transform_indices = @transform_9, window_bounds = array<i64: 128, 128>}, {pipeline_mode = #tpu.pipeline_mode<synchronous>, transform_indices = @transform_10, window_bounds = array<i64: 1, 128>}, {pipeline_mode = #tpu.pipeline_mode<synchronous>, transform_indices = @transform_11, window_bounds = array<i64: 2, 32, 128>}]} {
    %cst = arith.constant 0.000000e+00 : f32
    %0 = vector.broadcast %cst : f32 to vector<1x128xf32>
    %cst_0 = arith.constant 0.000000e+00 : f32
    %1 = vector.broadcast %cst_0 : f32 to vector<1x128xf32>
    %c0 = arith.constant 0 : index
    %c0_1 = arith.constant 0 : index
    %c0_2 = arith.constant 0 : index
    %2 = vector.load %arg1[%c0, %c0_1, %c0_2] : memref<2x32x128xbf16, #tpu.memory_space<vmem>>, vector<1x32x128xbf16>
    %3 = vector.shape_cast %2 : vector<1x32x128xbf16> to vector<32x128xbf16>
    %4 = arith.extf %3 : vector<32x128xbf16> to vector<32x128xf32>
    %cst_3 = arith.constant dense<0.000000e+00> : vector<128xf32>
    %5 = vector.multi_reduction <add>, %4, %cst_3 [0] : vector<32x128xf32> to vector<128xf32>
    %6 = vector.shape_cast %5 : vector<128xf32> to vector<1x128xf32>
    %7 = arith.addf %0, %6 : vector<1x128xf32>
    %8 = arith.mulf %4, %4 : vector<32x128xf32>
    %cst_4 = arith.constant dense<0.000000e+00> : vector<128xf32>
    %9 = vector.multi_reduction <add>, %8, %cst_4 [0] : vector<32x128xf32> to vector<128xf32>
    %10 = vector.shape_cast %9 : vector<128xf32> to vector<1x128xf32>
    %11 = arith.addf %1, %10 : vector<1x128xf32>
    %c1 = arith.constant 1 : index
    %c0_5 = arith.constant 0 : index
    %c0_6 = arith.constant 0 : index
    %12 = vector.load %arg1[%c1, %c0_5, %c0_6] : memref<2x32x128xbf16, #tpu.memory_space<vmem>>, vector<1x32x128xbf16>
    %13 = vector.shape_cast %12 : vector<1x32x128xbf16> to vector<32x128xbf16>
    %14 = arith.extf %13 : vector<32x128xbf16> to vector<32x128xf32>
    %cst_7 = arith.constant dense<0.000000e+00> : vector<128xf32>
    %15 = vector.multi_reduction <add>, %14, %cst_7 [0] : vector<32x128xf32> to vector<128xf32>
    %16 = vector.shape_cast %15 : vector<128xf32> to vector<1x128xf32>
    %17 = arith.addf %7, %16 : vector<1x128xf32>
    %18 = arith.mulf %14, %14 : vector<32x128xf32>
    %cst_8 = arith.constant dense<0.000000e+00> : vector<128xf32>
    %19 = vector.multi_reduction <add>, %18, %cst_8 [0] : vector<32x128xf32> to vector<128xf32>
    %20 = vector.shape_cast %19 : vector<128xf32> to vector<1x128xf32>
    %21 = arith.addf %11, %20 : vector<1x128xf32>
    %cst_9 = arith.constant 6.400000e+01 : f32
    %22 = vector.broadcast %cst_9 : f32 to vector<1x128xf32>
    %23 = arith.divf %17, %22 : vector<1x128xf32>
    %cst_10 = arith.constant 6.400000e+01 : f32
    %24 = vector.broadcast %cst_10 : f32 to vector<1x128xf32>
    %25 = arith.divf %21, %24 : vector<1x128xf32>
    %26 = arith.mulf %23, %23 : vector<1x128xf32>
    %27 = arith.subf %25, %26 : vector<1x128xf32>
    %cst_11 = arith.constant 0.000000e+00 : f32
    %28 = vector.broadcast %cst_11 : f32 to vector<1x128xf32>
    %29 = arith.maximumf %27, %28 : vector<1x128xf32>
    %cst_12 = arith.constant 9.99999974E-6 : f32
    %30 = vector.broadcast %cst_12 : f32 to vector<1x128xf32>
    %31 = arith.addf %29, %30 : vector<1x128xf32>
    %32 = math.rsqrt %31 : vector<1x128xf32>
    %cst_13 = arith.constant 0.000000e+00 : f32
    %33 = vector.broadcast %cst_13 : f32 to vector<1x128xf32>
    %cst_14 = arith.constant 0.000000e+00 : f32
    %34 = vector.broadcast %cst_14 : f32 to vector<1x128xf32>
    %c0_15 = arith.constant 0 : index
    %c0_16 = arith.constant 0 : index
    %c0_17 = arith.constant 0 : index
    %35 = vector.load %arg1[%c0_15, %c0_16, %c0_17] : memref<2x32x128xbf16, #tpu.memory_space<vmem>>, vector<1x32x128xbf16>
    %36 = vector.shape_cast %35 : vector<1x32x128xbf16> to vector<32x128xbf16>
    %37 = arith.extf %36 : vector<32x128xbf16> to vector<32x128xf32>
    %38 = vector.broadcast %23 : vector<1x128xf32> to vector<32x128xf32>
    %39 = arith.subf %37, %38 : vector<32x128xf32>
    %40 = vector.broadcast %32 : vector<1x128xf32> to vector<32x128xf32>
    %41 = arith.mulf %39, %40 : vector<32x128xf32>
    %c0_18 = arith.constant 0 : index
    %c0_19 = arith.constant 0 : index
    %42 = vector.load %arg4[%c0_18, %c0_19] : memref<1x128xf32, #tpu.memory_space<vmem>>, vector<1x128xf32>
    %43 = vector.broadcast %42 : vector<1x128xf32> to vector<32x128xf32>
    %44 = arith.mulf %41, %43 : vector<32x128xf32>
    %c0_20 = arith.constant 0 : index
    %c0_21 = arith.constant 0 : index
    %45 = vector.load %arg5[%c0_20, %c0_21] : memref<1x128xf32, #tpu.memory_space<vmem>>, vector<1x128xf32>
    %46 = vector.broadcast %45 : vector<1x128xf32> to vector<32x128xf32>
    %47 = arith.addf %44, %46 : vector<32x128xf32>
    %cst_22 = arith.constant 0.000000e+00 : f32
    %48 = vector.broadcast %cst_22 : f32 to vector<32x128xf32>
    %49 = arith.cmpf ogt, %47, %48 : vector<32x128xf32>
    %cst_23 = arith.constant 2.500000e-01 : f32
    %50 = vector.broadcast %cst_23 : f32 to vector<32x128xf32>
    %51 = arith.mulf %50, %47 : vector<32x128xf32>
    %52 = arith.select %49, %47, %51 : vector<32x128xi1>, vector<32x128xf32>
    %53 = arith.truncf %52 : vector<32x128xf32> to vector<32x128xbf16>
    %c0_24 = arith.constant 0 : index
    %c0_25 = arith.constant 0 : index
    %54 = vector.load %arg3[%c0_24, %c0_25] : memref<128x128xbf16, #tpu.memory_space<vmem>>, vector<128x128xbf16>
    %cst_26 = arith.constant dense<0.000000e+00> : vector<32x128xf32>
    %55 = tpu.matmul %53, %54, %cst_26 {dimension_numbers = #tpu.dot_dimension_numbers<[1], [0], [0], [1], [0, 0, 1, 1], [], []>} : vector<32x128xbf16>, vector<128x128xbf16>, vector<32x128xf32> -> vector<32x128xf32>
    %c0_27 = arith.constant 0 : index
    %c0_28 = arith.constant 0 : index
    %c0_29 = arith.constant 0 : index
    %56 = vector.load %arg13[%c0_27, %c0_28, %c0_29] : memref<2x32x128xf32, #tpu.memory_space<vmem>>, vector<1x32x128xf32>
    %57 = vector.shape_cast %56 : vector<1x32x128xf32> to vector<32x128xf32>
    %58 = vector.shape_cast %55 : vector<32x128xf32> to vector<1x32x128xf32>
    tpu.vector_store %arg13[%c0_27, %c0_28, %c0_29], %58 {strides = array<i32>} : memref<2x32x128xf32, #tpu.memory_space<vmem>>, vector<1x32x128xf32>,
    %cst_30 = arith.constant dense<0.000000e+00> : vector<128xf32>
    %59 = vector.multi_reduction <add>, %55, %cst_30 [0] : vector<32x128xf32> to vector<128xf32>
    %60 = vector.shape_cast %59 : vector<128xf32> to vector<1x128xf32>
    %61 = arith.addf %33, %60 : vector<1x128xf32>
    %62 = arith.mulf %55, %55 : vector<32x128xf32>
    %cst_31 = arith.constant dense<0.000000e+00> : vector<128xf32>
    %63 = vector.multi_reduction <add>, %62, %cst_31 [0] : vector<32x128xf32> to vector<128xf32>
    %64 = vector.shape_cast %63 : vector<128xf32> to vector<1x128xf32>
    %65 = arith.addf %34, %64 : vector<1x128xf32>
    %c1_32 = arith.constant 1 : index
    %c0_33 = arith.constant 0 : index
    %c0_34 = arith.constant 0 : index
    %66 = vector.load %arg1[%c1_32, %c0_33, %c0_34] : memref<2x32x128xbf16, #tpu.memory_space<vmem>>, vector<1x32x128xbf16>
    %67 = vector.shape_cast %66 : vector<1x32x128xbf16> to vector<32x128xbf16>
    %68 = arith.extf %67 : vector<32x128xbf16> to vector<32x128xf32>
    %69 = vector.broadcast %23 : vector<1x128xf32> to vector<32x128xf32>
    %70 = arith.subf %68, %69 : vector<32x128xf32>
    %71 = vector.broadcast %32 : vector<1x128xf32> to vector<32x128xf32>
    %72 = arith.mulf %70, %71 : vector<32x128xf32>
    %c0_35 = arith.constant 0 : index
    %c0_36 = arith.constant 0 : index
    %73 = vector.load %arg4[%c0_35, %c0_36] : memref<1x128xf32, #tpu.memory_space<vmem>>, vector<1x128xf32>
    %74 = vector.broadcast %73 : vector<1x128xf32> to vector<32x128xf32>
    %75 = arith.mulf %72, %74 : vector<32x128xf32>
    %c0_37 = arith.constant 0 : index
    %c0_38 = arith.constant 0 : index
    %76 = vector.load %arg5[%c0_37, %c0_38] : memref<1x128xf32, #tpu.memory_space<vmem>>, vector<1x128xf32>
    %77 = vector.broadcast %76 : vector<1x128xf32> to vector<32x128xf32>
    %78 = arith.addf %75, %77 : vector<32x128xf32>
    %cst_39 = arith.constant 0.000000e+00 : f32
    %79 = vector.broadcast %cst_39 : f32 to vector<32x128xf32>
    %80 = arith.cmpf ogt, %78, %79 : vector<32x128xf32>
    %cst_40 = arith.constant 2.500000e-01 : f32
    %81 = vector.broadcast %cst_40 : f32 to vector<32x128xf32>
    %82 = arith.mulf %81, %78 : vector<32x128xf32>
    %83 = arith.select %80, %78, %82 : vector<32x128xi1>, vector<32x128xf32>
    %84 = arith.truncf %83 : vector<32x128xf32> to vector<32x128xbf16>
    %c0_41 = arith.constant 0 : index
    %c0_42 = arith.constant 0 : index
    %85 = vector.load %arg3[%c0_41, %c0_42] : memref<128x128xbf16, #tpu.memory_space<vmem>>, vector<128x128xbf16>
    %cst_43 = arith.constant dense<0.000000e+00> : vector<32x128xf32>
    %86 = tpu.matmul %84, %85, %cst_43 {dimension_numbers = #tpu.dot_dimension_numbers<[1], [0], [0], [1], [0, 0, 1, 1], [], []>} : vector<32x128xbf16>, vector<128x128xbf16>, vector<32x128xf32> -> vector<32x128xf32>
    %c1_44 = arith.constant 1 : index
    %c0_45 = arith.constant 0 : index
    %c0_46 = arith.constant 0 : index
    %87 = vector.load %arg13[%c1_44, %c0_45, %c0_46] : memref<2x32x128xf32, #tpu.memory_space<vmem>>, vector<1x32x128xf32>
    %88 = vector.shape_cast %87 : vector<1x32x128xf32> to vector<32x128xf32>
    %89 = vector.shape_cast %86 : vector<32x128xf32> to vector<1x32x128xf32>
    tpu.vector_store %arg13[%c1_44, %c0_45, %c0_46], %89 {strides = array<i32>} : memref<2x32x128xf32, #tpu.memory_space<vmem>>, vector<1x32x128xf32>,
    %cst_47 = arith.constant dense<0.000000e+00> : vector<128xf32>
    %90 = vector.multi_reduction <add>, %86, %cst_47 [0] : vector<32x128xf32> to vector<128xf32>
    %91 = vector.shape_cast %90 : vector<128xf32> to vector<1x128xf32>
    %92 = arith.addf %61, %91 : vector<1x128xf32>
    %93 = arith.mulf %86, %86 : vector<32x128xf32>
    %cst_48 = arith.constant dense<0.000000e+00> : vector<128xf32>
    %94 = vector.multi_reduction <add>, %93, %cst_48 [0] : vector<32x128xf32> to vector<128xf32>
    %95 = vector.shape_cast %94 : vector<128xf32> to vector<1x128xf32>
    %96 = arith.addf %65, %95 : vector<1x128xf32>
    %cst_49 = arith.constant 6.400000e+01 : f32
    %97 = vector.broadcast %cst_49 : f32 to vector<1x128xf32>
    %98 = arith.divf %92, %97 : vector<1x128xf32>
    %cst_50 = arith.constant 6.400000e+01 : f32
    %99 = vector.broadcast %cst_50 : f32 to vector<1x128xf32>
    %100 = arith.divf %96, %99 : vector<1x128xf32>
    %101 = arith.mulf %98, %98 : vector<1x128xf32>
    %102 = arith.subf %100, %101 : vector<1x128xf32>
    %cst_51 = arith.constant 0.000000e+00 : f32
    %103 = vector.broadcast %cst_51 : f32 to vector<1x128xf32>
    %104 = arith.maximumf %102, %103 : vector<1x128xf32>
    %cst_52 = arith.constant 9.99999974E-6 : f32
    %105 = vector.broadcast %cst_52 : f32 to vector<1x128xf32>
    %106 = arith.addf %104, %105 : vector<1x128xf32>
    %107 = math.rsqrt %106 : vector<1x128xf32>
    %c0_53 = arith.constant 0 : index
    %c0_54 = arith.constant 0 : index
    %c0_55 = arith.constant 0 : index
    %108 = vector.load %arg13[%c0_53, %c0_54, %c0_55] : memref<2x32x128xf32, #tpu.memory_space<vmem>>, vector<1x32x128xf32>
    %109 = vector.shape_cast %108 : vector<1x32x128xf32> to vector<32x128xf32>
    %110 = vector.broadcast %98 : vector<1x128xf32> to vector<32x128xf32>
    %111 = arith.subf %109, %110 : vector<32x128xf32>
    %112 = vector.broadcast %107 : vector<1x128xf32> to vector<32x128xf32>
    %113 = arith.mulf %111, %112 : vector<32x128xf32>
    %c0_56 = arith.constant 0 : index
    %c0_57 = arith.constant 0 : index
    %114 = vector.load %arg6[%c0_56, %c0_57] : memref<1x128xf32, #tpu.memory_space<vmem>>, vector<1x128xf32>
    %115 = vector.broadcast %114 : vector<1x128xf32> to vector<32x128xf32>
    %116 = arith.mulf %113, %115 : vector<32x128xf32>
    %c0_58 = arith.constant 0 : index
    %c0_59 = arith.constant 0 : index
    %117 = vector.load %arg7[%c0_58, %c0_59] : memref<1x128xf32, #tpu.memory_space<vmem>>, vector<1x128xf32>
    %118 = vector.broadcast %117 : vector<1x128xf32> to vector<32x128xf32>
    %119 = arith.addf %116, %118 : vector<32x128xf32>
    %cst_60 = arith.constant dense<0.000000e+00> : vector<128xf32>
    %120 = vector.multi_reduction <add>, %119, %cst_60 [0] : vector<32x128xf32> to vector<128xf32>
    %121 = vector.shape_cast %120 : vector<128xf32> to vector<1x128xf32>
    %cst_61 = arith.constant 3.200000e+01 : f32
    %122 = vector.broadcast %cst_61 : f32 to vector<1x128xf32>
    %123 = arith.divf %121, %122 : vector<1x128xf32>
    %c0_62 = arith.constant 0 : index
    %c0_63 = arith.constant 0 : index
    %124 = vector.load %arg8[%c0_62, %c0_63] : memref<128x128xf32, #tpu.memory_space<vmem>>, vector<128x128xf32>
    %cst_64 = arith.constant dense<0.000000e+00> : vector<1x128xf32>
    %125 = tpu.matmul %123, %124, %cst_64 {dimension_numbers = #tpu.dot_dimension_numbers<[1], [0], [0], [1], [0, 0, 1, 1], [], []>} : vector<1x128xf32>, vector<128x128xf32>, vector<1x128xf32> -> vector<1x128xf32>
    %c0_65 = arith.constant 0 : index
    %c0_66 = arith.constant 0 : index
    %126 = vector.load %arg9[%c0_65, %c0_66] : memref<1x128xf32, #tpu.memory_space<vmem>>, vector<1x128xf32>
    %127 = arith.addf %125, %126 : vector<1x128xf32>
    %cst_67 = arith.constant 0.000000e+00 : f32
    %128 = vector.broadcast %cst_67 : f32 to vector<1x128xf32>
    %129 = arith.maximumf %127, %128 : vector<1x128xf32>
    %c0_68 = arith.constant 0 : index
    %c0_69 = arith.constant 0 : index
    %130 = vector.load %arg10[%c0_68, %c0_69] : memref<128x128xf32, #tpu.memory_space<vmem>>, vector<128x128xf32>
    %cst_70 = arith.constant dense<0.000000e+00> : vector<1x128xf32>
    %131 = tpu.matmul %129, %130, %cst_70 {dimension_numbers = #tpu.dot_dimension_numbers<[1], [0], [0], [1], [0, 0, 1, 1], [], []>} : vector<1x128xf32>, vector<128x128xf32>, vector<1x128xf32> -> vector<1x128xf32>
    %c0_71 = arith.constant 0 : index
    %c0_72 = arith.constant 0 : index
    %132 = vector.load %arg11[%c0_71, %c0_72] : memref<1x128xf32, #tpu.memory_space<vmem>>, vector<1x128xf32>
    %133 = arith.addf %131, %132 : vector<1x128xf32>
    %134 = arith.negf %133 : vector<1x128xf32>
    %135 = math.exp %134 : vector<1x128xf32>
    %cst_73 = arith.constant 1.000000e+00 : f32
    %136 = vector.broadcast %cst_73 : f32 to vector<1x128xf32>
    %137 = arith.addf %136, %135 : vector<1x128xf32>
    %138 = arith.divf %136, %137 : vector<1x128xf32>
    %139 = vector.broadcast %138 : vector<1x128xf32> to vector<32x128xf32>
    %140 = arith.mulf %119, %139 : vector<32x128xf32>
    %c0_74 = arith.constant 0 : index
    %c0_75 = arith.constant 0 : index
    %c0_76 = arith.constant 0 : index
    %141 = vector.load %arg2[%c0_74, %c0_75, %c0_76] : memref<2x32x128xbf16, #tpu.memory_space<vmem>>, vector<1x32x128xbf16>
    %142 = vector.shape_cast %141 : vector<1x32x128xbf16> to vector<32x128xbf16>
    %143 = arith.extf %142 : vector<32x128xbf16> to vector<32x128xf32>
    %144 = arith.addf %140, %143 : vector<32x128xf32>
    %cst_77 = arith.constant 0.000000e+00 : f32
    %145 = vector.broadcast %cst_77 : f32 to vector<32x128xf32>
    %146 = arith.cmpf ogt, %144, %145 : vector<32x128xf32>
    %cst_78 = arith.constant 2.500000e-01 : f32
    %147 = vector.broadcast %cst_78 : f32 to vector<32x128xf32>
    %148 = arith.mulf %147, %144 : vector<32x128xf32>
    %149 = arith.select %146, %144, %148 : vector<32x128xi1>, vector<32x128xf32>
    %150 = arith.truncf %149 : vector<32x128xf32> to vector<32x128xbf16>
    %c0_79 = arith.constant 0 : index
    %c0_80 = arith.constant 0 : index
    %c0_81 = arith.constant 0 : index
    %151 = vector.load %arg12[%c0_79, %c0_80, %c0_81] : memref<2x32x128xbf16, #tpu.memory_space<vmem>>, vector<1x32x128xbf16>
    %152 = vector.shape_cast %151 : vector<1x32x128xbf16> to vector<32x128xbf16>
    %153 = vector.shape_cast %150 : vector<32x128xbf16> to vector<1x32x128xbf16>
    tpu.vector_store %arg12[%c0_79, %c0_80, %c0_81], %153 {strides = array<i32>} : memref<2x32x128xbf16, #tpu.memory_space<vmem>>, vector<1x32x128xbf16>,
    %c1_82 = arith.constant 1 : index
    %c0_83 = arith.constant 0 : index
    %c0_84 = arith.constant 0 : index
    %154 = vector.load %arg13[%c1_82, %c0_83, %c0_84] : memref<2x32x128xf32, #tpu.memory_space<vmem>>, vector<1x32x128xf32>
    %155 = vector.shape_cast %154 : vector<1x32x128xf32> to vector<32x128xf32>
    %156 = vector.broadcast %98 : vector<1x128xf32> to vector<32x128xf32>
    %157 = arith.subf %155, %156 : vector<32x128xf32>
    %158 = vector.broadcast %107 : vector<1x128xf32> to vector<32x128xf32>
    %159 = arith.mulf %157, %158 : vector<32x128xf32>
    %c0_85 = arith.constant 0 : index
    %c0_86 = arith.constant 0 : index
    %160 = vector.load %arg6[%c0_85, %c0_86] : memref<1x128xf32, #tpu.memory_space<vmem>>, vector<1x128xf32>
    %161 = vector.broadcast %160 : vector<1x128xf32> to vector<32x128xf32>
    %162 = arith.mulf %159, %161 : vector<32x128xf32>
    %c0_87 = arith.constant 0 : index
    %c0_88 = arith.constant 0 : index
    %163 = vector.load %arg7[%c0_87, %c0_88] : memref<1x128xf32, #tpu.memory_space<vmem>>, vector<1x128xf32>
    %164 = vector.broadcast %163 : vector<1x128xf32> to vector<32x128xf32>
    %165 = arith.addf %162, %164 : vector<32x128xf32>
    %cst_89 = arith.constant dense<0.000000e+00> : vector<128xf32>
    %166 = vector.multi_reduction <add>, %165, %cst_89 [0] : vector<32x128xf32> to vector<128xf32>
    %167 = vector.shape_cast %166 : vector<128xf32> to vector<1x128xf32>
    %cst_90 = arith.constant 3.200000e+01 : f32
    %168 = vector.broadcast %cst_90 : f32 to vector<1x128xf32>
    %169 = arith.divf %167, %168 : vector<1x128xf32>
    %c0_91 = arith.constant 0 : index
    %c0_92 = arith.constant 0 : index
    %170 = vector.load %arg8[%c0_91, %c0_92] : memref<128x128xf32, #tpu.memory_space<vmem>>, vector<128x128xf32>
    %cst_93 = arith.constant dense<0.000000e+00> : vector<1x128xf32>
    %171 = tpu.matmul %169, %170, %cst_93 {dimension_numbers = #tpu.dot_dimension_numbers<[1], [0], [0], [1], [0, 0, 1, 1], [], []>} : vector<1x128xf32>, vector<128x128xf32>, vector<1x128xf32> -> vector<1x128xf32>
    %c0_94 = arith.constant 0 : index
    %c0_95 = arith.constant 0 : index
    %172 = vector.load %arg9[%c0_94, %c0_95] : memref<1x128xf32, #tpu.memory_space<vmem>>, vector<1x128xf32>
    %173 = arith.addf %171, %172 : vector<1x128xf32>
    %cst_96 = arith.constant 0.000000e+00 : f32
    %174 = vector.broadcast %cst_96 : f32 to vector<1x128xf32>
    %175 = arith.maximumf %173, %174 : vector<1x128xf32>
    %c0_97 = arith.constant 0 : index
    %c0_98 = arith.constant 0 : index
    %176 = vector.load %arg10[%c0_97, %c0_98] : memref<128x128xf32, #tpu.memory_space<vmem>>, vector<128x128xf32>
    %cst_99 = arith.constant dense<0.000000e+00> : vector<1x128xf32>
    %177 = tpu.matmul %175, %176, %cst_99 {dimension_numbers = #tpu.dot_dimension_numbers<[1], [0], [0], [1], [0, 0, 1, 1], [], []>} : vector<1x128xf32>, vector<128x128xf32>, vector<1x128xf32> -> vector<1x128xf32>
    %c0_100 = arith.constant 0 : index
    %c0_101 = arith.constant 0 : index
    %178 = vector.load %arg11[%c0_100, %c0_101] : memref<1x128xf32, #tpu.memory_space<vmem>>, vector<1x128xf32>
    %179 = arith.addf %177, %178 : vector<1x128xf32>
    %180 = arith.negf %179 : vector<1x128xf32>
    %181 = math.exp %180 : vector<1x128xf32>
    %cst_102 = arith.constant 1.000000e+00 : f32
    %182 = vector.broadcast %cst_102 : f32 to vector<1x128xf32>
    %183 = arith.addf %182, %181 : vector<1x128xf32>
    %184 = arith.divf %182, %183 : vector<1x128xf32>
    %185 = vector.broadcast %184 : vector<1x128xf32> to vector<32x128xf32>
    %186 = arith.mulf %165, %185 : vector<32x128xf32>
    %c1_103 = arith.constant 1 : index
    %c0_104 = arith.constant 0 : index
    %c0_105 = arith.constant 0 : index
    %187 = vector.load %arg2[%c1_103, %c0_104, %c0_105] : memref<2x32x128xbf16, #tpu.memory_space<vmem>>, vector<1x32x128xbf16>
    %188 = vector.shape_cast %187 : vector<1x32x128xbf16> to vector<32x128xbf16>
    %189 = arith.extf %188 : vector<32x128xbf16> to vector<32x128xf32>
    %190 = arith.addf %186, %189 : vector<32x128xf32>
    %cst_106 = arith.constant 0.000000e+00 : f32
    %191 = vector.broadcast %cst_106 : f32 to vector<32x128xf32>
    %192 = arith.cmpf ogt, %190, %191 : vector<32x128xf32>
    %cst_107 = arith.constant 2.500000e-01 : f32
    %193 = vector.broadcast %cst_107 : f32 to vector<32x128xf32>
    %194 = arith.mulf %193, %190 : vector<32x128xf32>
    %195 = arith.select %192, %190, %194 : vector<32x128xi1>, vector<32x128xf32>
    %196 = arith.truncf %195 : vector<32x128xf32> to vector<32x128xbf16>
    %c1_108 = arith.constant 1 : index
    %c0_109 = arith.constant 0 : index
    %c0_110 = arith.constant 0 : index
    %197 = vector.load %arg12[%c1_108, %c0_109, %c0_110] : memref<2x32x128xbf16, #tpu.memory_space<vmem>>, vector<1x32x128xbf16>
    %198 = vector.shape_cast %197 : vector<1x32x128xbf16> to vector<32x128xbf16>
    %199 = vector.shape_cast %196 : vector<32x128xbf16> to vector<1x32x128xbf16>
    tpu.vector_store %arg12[%c1_108, %c0_109, %c0_110], %199 {strides = array<i32>} : memref<2x32x128xbf16, #tpu.memory_space<vmem>>, vector<1x32x128xbf16>,
    return
  }
  func.func @transform_0(%arg0: i32) -> (i32, i32, i32) {
    %c0_i32 = arith.constant 0 : i32
    %c0_i32_0 = arith.constant 0 : i32
    %c0_i32_1 = arith.constant 0 : i32
    %c0_i32_2 = arith.constant 0 : i32
    return %c0_i32, %c0_i32_0, %c0_i32_1 : i32, i32, i32
  }
  func.func @transform_1(%arg0: i32) -> (i32, i32, i32) {
    %c0_i32 = arith.constant 0 : i32
    %c0_i32_0 = arith.constant 0 : i32
    %c0_i32_1 = arith.constant 0 : i32
    %c0_i32_2 = arith.constant 0 : i32
    return %c0_i32, %c0_i32_0, %c0_i32_1 : i32, i32, i32
  }
  func.func @transform_2(%arg0: i32) -> (i32, i32) {
    %c0_i32 = arith.constant 0 : i32
    %c0_i32_0 = arith.constant 0 : i32
    %c0_i32_1 = arith.constant 0 : i32
    return %c0_i32, %c0_i32_0 : i32, i32
  }
  func.func @transform_3(%arg0: i32) -> (i32, i32) {
    %c0_i32 = arith.constant 0 : i32
    %c0_i32_0 = arith.constant 0 : i32
    %c0_i32_1 = arith.constant 0 : i32
    return %c0_i32, %c0_i32_0 : i32, i32
  }
  func.func @transform_4(%arg0: i32) -> (i32, i32) {
    %c0_i32 = arith.constant 0 : i32
    %c0_i32_0 = arith.constant 0 : i32
    %c0_i32_1 = arith.constant 0 : i32
    return %c0_i32, %c0_i32_0 : i32, i32
  }
  func.func @transform_5(%arg0: i32) -> (i32, i32) {
    %c0_i32 = arith.constant 0 : i32
    %c0_i32_0 = arith.constant 0 : i32
    %c0_i32_1 = arith.constant 0 : i32
    return %c0_i32, %c0_i32_0 : i32, i32
  }
  func.func @transform_6(%arg0: i32) -> (i32, i32) {
    %c0_i32 = arith.constant 0 : i32
    %c0_i32_0 = arith.constant 0 : i32
    %c0_i32_1 = arith.constant 0 : i32
    return %c0_i32, %c0_i32_0 : i32, i32
  }
  func.func @transform_7(%arg0: i32) -> (i32, i32) {
    %c0_i32 = arith.constant 0 : i32
    %c0_i32_0 = arith.constant 0 : i32
    %c0_i32_1 = arith.constant 0 : i32
    return %c0_i32, %c0_i32_0 : i32, i32
  }
  func.func @transform_8(%arg0: i32) -> (i32, i32) {
    %c0_i32 = arith.constant 0 : i32
    %c0_i32_0 = arith.constant 0 : i32
    %c0_i32_1 = arith.constant 0 : i32
    return %c0_i32, %c0_i32_0 : i32, i32
  }
  func.func @transform_9(%arg0: i32) -> (i32, i32) {
    %c0_i32 = arith.constant 0 : i32
    %c0_i32_0 = arith.constant 0 : i32
    %c0_i32_1 = arith.constant 0 : i32
    return %c0_i32, %c0_i32_0 : i32, i32
  }
  func.func @transform_10(%arg0: i32) -> (i32, i32) {
    %c0_i32 = arith.constant 0 : i32
    %c0_i32_0 = arith.constant 0 : i32
    %c0_i32_1 = arith.constant 0 : i32
    return %c0_i32, %c0_i32_0 : i32, i32
  }
  func.func @transform_11(%arg0: i32) -> (i32, i32, i32) {
    %c0_i32 = arith.constant 0 : i32
    %c0_i32_0 = arith.constant 0 : i32
    %c0_i32_1 = arith.constant 0 : i32
    %c0_i32_2 = arith.constant 0 : i32
    return %c0_i32, %c0_i32_0, %c0_i32_1 : i32, i32, i32
  }
}

module attributes {stable_mosaic.version = 11 : i64} {
  func.func @_pool_fc_kernel(%arg0: i32, %arg1: memref<2x32x128xbf16, #tpu.memory_space<vmem>>, %arg2: memref<128x128xf32, #tpu.memory_space<vmem>>, %arg3: memref<1x128xf32, #tpu.memory_space<vmem>>, %arg4: memref<2x128xf32, #tpu.memory_space<vmem>>) attributes {dimension_semantics = [#tpu.dimension_semantics<arbitrary>], iteration_bounds = array<i64: 1>, scalar_prefetch = 0 : i64, scratch_operands = 0 : i64, tpu.core_type = #tpu.core_type<tc>, window_params = [{pipeline_mode = #tpu.pipeline_mode<synchronous>, transform_indices = @transform_0, window_bounds = array<i64: 2, 32, 128>}, {pipeline_mode = #tpu.pipeline_mode<synchronous>, transform_indices = @transform_1, window_bounds = array<i64: 128, 128>}, {pipeline_mode = #tpu.pipeline_mode<synchronous>, transform_indices = @transform_2, window_bounds = array<i64: 1, 128>}, {pipeline_mode = #tpu.pipeline_mode<synchronous>, transform_indices = @transform_3, window_bounds = array<i64: 2, 128>}]} {
    %c0 = arith.constant 0 : index
    %c0_0 = arith.constant 0 : index
    %c0_1 = arith.constant 0 : index
    %0 = vector.load %arg1[%c0, %c0_0, %c0_1] : memref<2x32x128xbf16, #tpu.memory_space<vmem>>, vector<1x32x128xbf16>
    %1 = vector.shape_cast %0 : vector<1x32x128xbf16> to vector<32x128xbf16>
    %2 = arith.extf %1 : vector<32x128xbf16> to vector<32x128xf32>
    %cst = arith.constant dense<0.000000e+00> : vector<128xf32>
    %3 = vector.multi_reduction <add>, %2, %cst [0] : vector<32x128xf32> to vector<128xf32>
    %4 = vector.shape_cast %3 : vector<128xf32> to vector<1x128xf32>
    %cst_2 = arith.constant 3.200000e+01 : f32
    %5 = vector.broadcast %cst_2 : f32 to vector<1x128xf32>
    %6 = arith.divf %4, %5 : vector<1x128xf32>
    %c0_3 = arith.constant 0 : index
    %c0_4 = arith.constant 0 : index
    %7 = vector.load %arg2[%c0_3, %c0_4] : memref<128x128xf32, #tpu.memory_space<vmem>>, vector<128x128xf32>
    %cst_5 = arith.constant dense<0.000000e+00> : vector<1x128xf32>
    %8 = tpu.matmul %6, %7, %cst_5 {dimension_numbers = #tpu.dot_dimension_numbers<[1], [0], [0], [1], [0, 0, 1, 1], [], []>} : vector<1x128xf32>, vector<128x128xf32>, vector<1x128xf32> -> vector<1x128xf32>
    %c0_6 = arith.constant 0 : index
    %c0_7 = arith.constant 0 : index
    %9 = vector.load %arg3[%c0_6, %c0_7] : memref<1x128xf32, #tpu.memory_space<vmem>>, vector<1x128xf32>
    %10 = arith.addf %8, %9 : vector<1x128xf32>
    %c0_8 = arith.constant 0 : index
    %c0_9 = arith.constant 0 : index
    %11 = vector.load %arg4[%c0_8, %c0_9] : memref<2x128xf32, #tpu.memory_space<vmem>>, vector<1x128xf32>
    tpu.vector_store %arg4[%c0_8, %c0_9], %10 {strides = array<i32>} : memref<2x128xf32, #tpu.memory_space<vmem>>, vector<1x128xf32>,
    %c1 = arith.constant 1 : index
    %c0_10 = arith.constant 0 : index
    %c0_11 = arith.constant 0 : index
    %12 = vector.load %arg1[%c1, %c0_10, %c0_11] : memref<2x32x128xbf16, #tpu.memory_space<vmem>>, vector<1x32x128xbf16>
    %13 = vector.shape_cast %12 : vector<1x32x128xbf16> to vector<32x128xbf16>
    %14 = arith.extf %13 : vector<32x128xbf16> to vector<32x128xf32>
    %cst_12 = arith.constant dense<0.000000e+00> : vector<128xf32>
    %15 = vector.multi_reduction <add>, %14, %cst_12 [0] : vector<32x128xf32> to vector<128xf32>
    %16 = vector.shape_cast %15 : vector<128xf32> to vector<1x128xf32>
    %cst_13 = arith.constant 3.200000e+01 : f32
    %17 = vector.broadcast %cst_13 : f32 to vector<1x128xf32>
    %18 = arith.divf %16, %17 : vector<1x128xf32>
    %c0_14 = arith.constant 0 : index
    %c0_15 = arith.constant 0 : index
    %19 = vector.load %arg2[%c0_14, %c0_15] : memref<128x128xf32, #tpu.memory_space<vmem>>, vector<128x128xf32>
    %cst_16 = arith.constant dense<0.000000e+00> : vector<1x128xf32>
    %20 = tpu.matmul %18, %19, %cst_16 {dimension_numbers = #tpu.dot_dimension_numbers<[1], [0], [0], [1], [0, 0, 1, 1], [], []>} : vector<1x128xf32>, vector<128x128xf32>, vector<1x128xf32> -> vector<1x128xf32>
    %c0_17 = arith.constant 0 : index
    %c0_18 = arith.constant 0 : index
    %21 = vector.load %arg3[%c0_17, %c0_18] : memref<1x128xf32, #tpu.memory_space<vmem>>, vector<1x128xf32>
    %22 = arith.addf %20, %21 : vector<1x128xf32>
    %c1_19 = arith.constant 1 : index
    %c0_20 = arith.constant 0 : index
    %23 = vector.load %arg4[%c1_19, %c0_20] : memref<2x128xf32, #tpu.memory_space<vmem>>, vector<1x128xf32>
    tpu.vector_store %arg4[%c1_19, %c0_20], %22 {strides = array<i32>} : memref<2x128xf32, #tpu.memory_space<vmem>>, vector<1x128xf32>,
    return
  }
  func.func @transform_0(%arg0: i32) -> (i32, i32, i32) {
    %c0_i32 = arith.constant 0 : i32
    %c0_i32_0 = arith.constant 0 : i32
    %c0_i32_1 = arith.constant 0 : i32
    %c0_i32_2 = arith.constant 0 : i32
    return %c0_i32, %c0_i32_0, %c0_i32_1 : i32, i32, i32
  }
  func.func @transform_1(%arg0: i32) -> (i32, i32) {
    %c0_i32 = arith.constant 0 : i32
    %c0_i32_0 = arith.constant 0 : i32
    %c0_i32_1 = arith.constant 0 : i32
    return %c0_i32, %c0_i32_0 : i32, i32
  }
  func.func @transform_2(%arg0: i32) -> (i32, i32) {
    %c0_i32 = arith.constant 0 : i32
    %c0_i32_0 = arith.constant 0 : i32
    %c0_i32_1 = arith.constant 0 : i32
    return %c0_i32, %c0_i32_0 : i32, i32
  }
  func.func @transform_3(%arg0: i32) -> (i32, i32) {
    %c0_i32 = arith.constant 0 : i32
    %c0_i32_0 = arith.constant 0 : i32
    %c0_i32_1 = arith.constant 0 : i32
    return %c0_i32, %c0_i32_0 : i32, i32
  }
}

</mosaic_0001>

<llo_original>
// kernel: resnet3d_forward.14
$region0: #{resnet3d_forward.14}
  #allocation0 [shape = 'u32[]', space=smem, size = 0x4, offset = 0x4, fixed_abs, tag = 'smem constant byte address 0x4 - core index']
  #allocation1 [shape = 'u32[144,128]{1,0:T(1,128)}', space=vmem, size = 0x12000, scoped, tag = 'internal scratch']
  #allocation2 [shape = 'f32[64,128]{1,0:T(8,128)}', space=vmem, size = 0x8000, scoped, tag = 'scratch operand']
  %s0 = inlined_call_operand.vmem [shape: bf16[64,192], index: 0, kind: input, shape index: {}]
  %s1 = inlined_call_operand.vmem [shape: bf16[192,128], index: 1, kind: input, shape index: {}]
  %s2 = inlined_call_operand.vmem [shape: f32[1,128], index: 2, kind: input, shape index: {}]
  %s3 = inlined_call_operand.vmem [shape: f32[1,128], index: 3, kind: input, shape index: {}]
  %s4 = inlined_call_operand.vmem [shape: bf16[64,128], index: 4, kind: output, shape index: {}]
  %s5 = sld [smem:[#allocation0]]
  $region34: #{resnet3d_forward.14} parent=0
    _
  %s7 = ssub.s32 1, %s5
  %s8 = scalar_select 0, %s7, %s5
  // Predicated region
  $region2: #{resnet3d_forward.14} parent=0 // pred_check
    _
  $region3: #{resnet3d_forward.14} parent=0 // pred_check_branch
    %10 = sbr.rel (0) target = $region5
  $region4: #{resnet3d_forward.14} parent=0 // pred_region
    _
  $region5: #{resnet3d_forward.14} parent=0 // pred_fallthru
    _
  // Predicated region
  $region6: #{resnet3d_forward.14} parent=0 // pred_check
    _
  $region7: #{resnet3d_forward.14} parent=0 // pred_check_branch
    %12 = sbr.rel (0) target = $region9
  $region8: #{resnet3d_forward.14} parent=0 // pred_region
    _
  $region9: #{resnet3d_forward.14} parent=0 // pred_fallthru
    _
  // Predicated region
  $region10: #{resnet3d_forward.14} parent=0 // pred_check
    _
  $region11: #{resnet3d_forward.14} parent=0 // pred_check_branch
    %14 = sbr.rel (0) target = $region13
  $region12: #{resnet3d_forward.14} parent=0 // pred_region
    _
  $region13: #{resnet3d_forward.14} parent=0 // pred_fallthru
    _
  // Predicated region
  $region14: #{resnet3d_forward.14} parent=0 // pred_check
    _
  $region15: #{resnet3d_forward.14} parent=0 // pred_check_branch
    %16 = sbr.rel (0) target = $region17
  $region16: #{resnet3d_forward.14} parent=0 // pred_region
    _
  $region17: #{resnet3d_forward.14} parent=0 // pred_fallthru
    _
  %p18 = scmp.eq.s32.totalorder 0, 0
  // Predicated region
  $region18: #{resnet3d_forward.14} parent=0 // pred_check
    %p19 = pneg %p18
  $region19: #{resnet3d_forward.14} parent=0 // pred_check_branch
    %21 = sbr.rel (%p19) target = $region21
  $region20: #{resnet3d_forward.14} parent=0 // pred_region
    %22 = vst [vmem:[#allocation2] sm:$0xff] 0.0
    %23 = vst [vmem:[#allocation2 + $0x8] sm:$0xff] 0.0
    %24 = vst [vmem:[#allocation2 + $0x10] sm:$0xff] 0.0
    %25 = vst [vmem:[#allocation2 + $0x18] sm:$0xff] 0.0
    %26 = vst [vmem:[#allocation2 + $0x20] sm:$0xff] 0.0
    %27 = vst [vmem:[#allocation2 + $0x28] sm:$0xff] 0.0
    %28 = vst [vmem:[#allocation2 + $0x30] sm:$0xff] 0.0
    %29 = vst [vmem:[#allocation2 + $0x38] sm:$0xff] 0.0
  $region21: #{resnet3d_forward.14} parent=0 // pred_fallthru
    _
  %v30 = vld [vmem:[#allocation2] sm:$0xff]
  %v31 = vld [vmem:[#allocation2 + $0x8] sm:$0xff]
  %v32 = vld [vmem:[#allocation2 + $0x10] sm:$0xff]
  %v33 = vld [vmem:[#allocation2 + $0x18] sm:$0xff]
  %v34 = vld [vmem:[#allocation2 + $0x20] sm:$0xff]
  %v35 = vld [vmem:[#allocation2 + $0x28] sm:$0xff]
  %v36 = vld [vmem:[#allocation2 + $0x30] sm:$0xff]
  %v37 = vld [vmem:[#allocation2 + $0x38] sm:$0xff]
  %v38 = vld [vmem:[%s0] sm:$0xff]
  %v39 = vld [vmem:[%s0 + $0x8] sm:$0xff]
  %v40 = vld [vmem:[%s0 + $0x10] sm:$0xff]
  %v41 = vld [vmem:[%s0 + $0x18] sm:$0xff]
  %v42 = vld [vmem:[%s0 + $0x20] sm:$0xff]
  %v43 = vld [vmem:[%s0 + $0x28] sm:$0xff]
  %v44 = vld [vmem:[%s0 + $0x30] sm:$0xff]
  %v45 = vld [vmem:[%s0 + $0x38] sm:$0xff]
  %v46 = vld [vmem:[%s1] sm:$0xf]
  %v47 = vld [vmem:[%s1 + $0x4] sm:$0xf]
  %v48 = vld [vmem:[%s1 + $0x8] sm:$0xf]
  %v49 = vld [vmem:[%s1 + $0xc] sm:$0xf]
  %v50 = vld [vmem:[%s1 + $0x10] sm:$0xf]
  %v51 = vld [vmem:[%s1 + $0x14] sm:$0xf]
  %v52 = vld [vmem:[%s1 + $0x18] sm:$0xf]
  %v53 = vld [vmem:[%s1 + $0x1c] sm:$0xf]
  %v54 = vld [vmem:[%s1 + $0x20] sm:$0xf]
  %v55 = vld [vmem:[%s1 + $0x24] sm:$0xf]
  %v56 = vld [vmem:[%s1 + $0x28] sm:$0xf]
  %v57 = vld [vmem:[%s1 + $0x2c] sm:$0xf]
  %v58 = vld [vmem:[%s1 + $0x30] sm:$0xf]
  %v59 = vld [vmem:[%s1 + $0x34] sm:$0xf]
  %v60 = vld [vmem:[%s1 + $0x38] sm:$0xf]
  %v61 = vld [vmem:[%s1 + $0x3c] sm:$0xf]
  %v62 = vld [vmem:[%s1 + $0x40] sm:$0xf]
  %v63 = vld [vmem:[%s1 + $0x44] sm:$0xf]
  %v64 = vld [vmem:[%s1 + $0x48] sm:$0xf]
  %v65 = vld [vmem:[%s1 + $0x4c] sm:$0xf]
  %v66 = vld [vmem:[%s1 + $0x50] sm:$0xf]
  %v67 = vld [vmem:[%s1 + $0x54] sm:$0xf]
  %v68 = vld [vmem:[%s1 + $0x58] sm:$0xf]
  %v69 = vld [vmem:[%s1 + $0x5c] sm:$0xf]
  %v78 = vunpack.c.l.b16 %v38
  %v79 = vunpack.c.h.b16 %v38
  %v80 = vunpack.c.l.b16 %v39
  %v81 = vunpack.c.h.b16 %v39
  %v82 = vunpack.c.l.b16 %v40
  %v83 = vunpack.c.h.b16 %v40
  %v84 = vunpack.c.l.b16 %v41
  %v85 = vunpack.c.h.b16 %v41
  %v86 = vunpack.c.l.b16 %v42
  %v87 = vunpack.c.h.b16 %v42
  %v88 = vunpack.c.l.b16 %v43
  %v89 = vunpack.c.h.b16 %v43
  %v90 = vunpack.c.l.b16 %v44
  %v91 = vunpack.c.h.b16 %v44
  %v92 = vunpack.c.l.b16 %v45
  %v93 = vunpack.c.h.b16 %v45
  %v94 = vpack.c.b16 %v80, %v78
  %v95 = vpack.c.b16 %v81, %v79
  %v96 = vpack.c.b16 %v84, %v82
  %v97 = vpack.c.b16 %v85, %v83
  %v98 = vpack.c.b16 %v88, %v86
  %v99 = vpack.c.b16 %v89, %v87
  %v100 = vpack.c.b16 %v92, %v90
  %v101 = vpack.c.b16 %v93, %v91
  %v130 = vunpack.c.l.b16 %v46
  %v131 = vunpack.c.l.b16 %v47
  %v132 = vunpack.c.l.b16 %v48
  %v133 = vunpack.c.l.b16 %v49
  %v134 = vunpack.c.l.b16 %v50
  %v135 = vunpack.c.l.b16 %v51
  %v136 = vunpack.c.l.b16 %v52
  %v137 = vunpack.c.l.b16 %v53
  %v138 = vunpack.c.l.b16 %v54
  %v139 = vunpack.c.l.b16 %v55
  %v140 = vunpack.c.l.b16 %v56
  %v141 = vunpack.c.l.b16 %v57
  %v142 = vunpack.c.l.b16 %v58
  %v143 = vunpack.c.l.b16 %v59
  %v144 = vunpack.c.l.b16 %v60
  %v145 = vunpack.c.l.b16 %v61
  %v146 = vunpack.c.l.b16 %v62
  %v147 = vunpack.c.l.b16 %v63
  %v148 = vunpack.c.l.b16 %v64
  %v149 = vunpack.c.l.b16 %v65
  %v150 = vunpack.c.l.b16 %v66
  %v151 = vunpack.c.l.b16 %v67
  %v152 = vunpack.c.l.b16 %v68
  %v153 = vunpack.c.l.b16 %v69
  %v154 = vpack.c.b16 %v131, %v130
  %v155 = vpack.c.b16 %v133, %v132
  %v156 = vpack.c.b16 %v135, %v134
  %v157 = vpack.c.b16 %v137, %v136
  %v158 = vpack.c.b16 %v139, %v138
  %v159 = vpack.c.b16 %v141, %v140
  %v160 = vpack.c.b16 %v143, %v142
  %v161 = vpack.c.b16 %v145, %v144
  %v162 = vpack.c.b16 %v147, %v146
  %v163 = vpack.c.b16 %v149, %v148
  %v164 = vpack.c.b16 %v151, %v150
  %v165 = vpack.c.b16 %v153, %v152
  %vm178 = vcmask 523264
  %v180 = vsel %vm178, %v95, 0
  %v183 = vsel %vm178, %v97, 0
  %v186 = vsel %vm178, %v99, 0
  %v189 = vsel %vm178, %v101, 0
  %191 = vmatprep.subr.bf16.mxu0 0
  %192 = vmatpush1.bf16.msra.mxu0 %v161
  %193 = vmatprep.subr.bf16.mxu0 0
  %194 = vmatpush1.bf16.msra.mxu0 %v160
  %195 = vmatprep.subr.bf16.mxu0 0
  %196 = vmatpush1.bf16.msra.mxu0 %v159
  %197 = vmatprep.subr.bf16.mxu0 0
  %198 = vmatpush1.bf16.msra.mxu0 %v158
  %199 = vmatprep.subr.bf16.mxu0 0
  %200 = vmatpush1.bf16.msra.mxu0 %v157
  %201 = vmatprep.subr.bf16.mxu0 0
  %202 = vmatpush1.bf16.msra.mxu0 %v156
  %203 = vmatprep.subr.bf16.mxu0 0
  %204 = vmatpush1.bf16.msra.mxu0 %v155
  %205 = vmatprep.subr.bf16.mxu0 0
  %206 = vmatpush1.bf16.msra.mxu0 %v154
  %207 = vmatprep.subr.bf16.mxu0 0
  %208 = vmatpush2.bf16.msra.mxu0 0
  %209 = vmatprep.subr.bf16.mxu0 0
  %210 = vmatpush2.bf16.msra.mxu0 0
  %211 = vmatprep.subr.bf16.mxu0 0
  %212 = vmatpush2.bf16.msra.mxu0 0
  %213 = vmatprep.subr.bf16.mxu0 0
  %214 = vmatpush2.bf16.msra.mxu0 0
  %215 = vmatprep.subr.bf16.mxu0 0
  %216 = vmatpush2.bf16.msra.mxu0 %v165
  %217 = vmatprep.subr.bf16.mxu0 0
  %218 = vmatpush2.bf16.msra.mxu0 %v164
  %219 = vmatprep.subr.bf16.mxu0 0
  %220 = vmatpush2.bf16.msra.mxu0 %v163
  %221 = vmatprep.subr.bf16.mxu0 0
  %222 = vmatpush2.bf16.msra.mxu0 %v162
  %223 = vmatprep.mubr.bf16.mxu0 %v180
  %224 = vmatmul.mubr.bf16.gmra.mxu0 %v94
  %v225 = vpop.f32.mrf.mxu0
  %v226 = vadd.f32 0.0, %v225
  %v227 = vpop.f32.mrf.mxu0
  %v228 = vpop.f32.mrf.mxu0
  %v229 = vadd.f32 0.0, %v228
  %v230 = vpop.f32.mrf.mxu0
  %231 = vmatprep.mubr.bf16.mxu0 %v183
  %232 = vmatmul.mubr.bf16.gmra.mxu0 %v96
  %v233 = vpop.f32.mrf.mxu0
  %v234 = vadd.f32 0.0, %v233
  %v235 = vpop.f32.mrf.mxu0
  %v236 = vpop.f32.mrf.mxu0
  %v237 = vadd.f32 0.0, %v236
  %v238 = vpop.f32.mrf.mxu0
  %239 = vmatprep.mubr.bf16.mxu0 %v186
  %240 = vmatmul.mubr.bf16.gmra.mxu0 %v98
  %v241 = vpop.f32.mrf.mxu0
  %v242 = vadd.f32 0.0, %v241
  %v243 = vpop.f32.mrf.mxu0
  %v244 = vpop.f32.mrf.mxu0
  %v245 = vadd.f32 0.0, %v244
  %v246 = vpop.f32.mrf.mxu0
  %247 = vmatprep.mubr.bf16.mxu0 %v189
  %248 = vmatmul.mubr.bf16.gmra.mxu0 %v100
  %v249 = vpop.f32.mrf.mxu0
  %v250 = vadd.f32 0.0, %v249
  %v251 = vpop.f32.mrf.mxu0
  %v252 = vpop.f32.mrf.mxu0
  %v253 = vadd.f32 0.0, %v252
  %v254 = vpop.f32.mrf.mxu0
  %255 = vdwg.mxu0
  %v256 = vadd.f32 %v30, %v226
  %v257 = vadd.f32 %v31, %v229
  %v258 = vadd.f32 %v32, %v234
  %v259 = vadd.f32 %v33, %v237
  %v260 = vadd.f32 %v34, %v242
  %v261 = vadd.f32 %v35, %v245
  %v262 = vadd.f32 %v36, %v250
  %v263 = vadd.f32 %v37, %v253
  %264 = vst [vmem:[#allocation2] sm:$0xff] %v256
  %265 = vst [vmem:[#allocation2 + $0x8] sm:$0xff] %v257
  %266 = vst [vmem:[#allocation2 + $0x10] sm:$0xff] %v258
  %267 = vst [vmem:[#allocation2 + $0x18] sm:$0xff] %v259
  %268 = vst [vmem:[#allocation2 + $0x20] sm:$0xff] %v260
  %269 = vst [vmem:[#allocation2 + $0x28] sm:$0xff] %v261
  %270 = vst [vmem:[#allocation2 + $0x30] sm:$0xff] %v262
  %271 = vst [vmem:[#allocation2 + $0x38] sm:$0xff] %v263
  // Predicated region
  $region22: #{resnet3d_forward.14} parent=0 // pred_check
    %p272 = pneg %p18
  $region23: #{resnet3d_forward.14} parent=0 // pred_check_branch
    %274 = sbr.rel (%p272) target = $region25
  $region24: #{resnet3d_forward.14} parent=0 // pred_region
    %v275 = vld [vmem:[#allocation2] sm:$0xff]
    %v276 = vld [vmem:[#allocation2 + $0x8] sm:$0xff]
    %v277 = vld [vmem:[#allocation2 + $0x10] sm:$0xff]
    %v278 = vld [vmem:[#allocation2 + $0x18] sm:$0xff]
    %v279 = vld [vmem:[#allocation2 + $0x20] sm:$0xff]
    %v280 = vld [vmem:[#allocation2 + $0x28] sm:$0xff]
    %v281 = vld [vmem:[#allocation2 + $0x30] sm:$0xff]
    %v282 = vld [vmem:[#allocation2 + $0x38] sm:$0xff]
    %v283 = vadd.f32 %v275, %v276
    %v284 = vadd.f32 %v283, %v277
    %v285 = vadd.f32 %v284, %v278
    %v286 = vadd.f32 %v285, %v279
    %v287 = vadd.f32 %v286, %v280
    %v288 = vadd.f32 %v287, %v281
    %v289 = vadd.f32 %v288, %v282
    %v290 = vrot.slane %v289, 4
    %v291 = vadd.f32 %v289, %v290
    %v292 = vrot.slane %v291, 2
    %v293 = vadd.f32 %v291, %v292
    %v294 = vrot.slane %v293, 1
    %v295 = vadd.f32 %v293, %v294
    %v296 = vmul.f32 %v275, %v275
    %v297 = vmul.f32 %v276, %v276
    %v298 = vmul.f32 %v277, %v277
    %v299 = vmul.f32 %v278, %v278
    %v300 = vmul.f32 %v279, %v279
    %v301 = vmul.f32 %v280, %v280
    %v302 = vmul.f32 %v281, %v281
    %v303 = vmul.f32 %v282, %v282
    %v304 = vadd.f32 %v296, %v297
    %v305 = vadd.f32 %v304, %v298
    %v306 = vadd.f32 %v305, %v299
    %v307 = vadd.f32 %v306, %v300
    %v308 = vadd.f32 %v307, %v301
    %v309 = vadd.f32 %v308, %v302
    %v310 = vadd.f32 %v309, %v303
    %v311 = vrot.slane %v310, 4
    %v312 = vadd.f32 %v310, %v311
    %v313 = vrot.slane %v312, 2
    %v314 = vadd.f32 %v312, %v313
    %v315 = vrot.slane %v314, 1
    %v316 = vadd.f32 %v314, %v315
    %v317 = vrcp.pop 64.0
    %v318 = vmul.f32 %v295, %v317
    %v319 = vmul.f32 %v316, %v317
    %v320 = vmul.f32 %v318, %v318
    %v321 = vsub.f32 %v319, %v320
    %v322 = vmax.f32 %v321, 0.0
    %v323 = vsub.f32 %v275, %v318
    %v324 = vsub.f32 %v276, %v318
    %v325 = vsub.f32 %v277, %v318
    %v326 = vsub.f32 %v278, %v318
    %v327 = vsub.f32 %v279, %v318
    %v328 = vsub.f32 %v280, %v318
    %v329 = vsub.f32 %v281, %v318
    %v330 = vsub.f32 %v282, %v318
    %v331 = vadd.f32 %v322, 1e-05
    %v332 = vrsqrt.pop %v331
    %v333 = vmul.f32 %v323, %v332
    %v334 = vmul.f32 %v324, %v332
    %v335 = vmul.f32 %v325, %v332
    %v336 = vmul.f32 %v326, %v332
    %v337 = vmul.f32 %v327, %v332
    %v338 = vmul.f32 %v328, %v332
    %v339 = vmul.f32 %v329, %v332
    %v340 = vmul.f32 %v330, %v332
    %v341 = vld [vmem:[%s2] sm:$0x1]
    %v343 = vlaneseq
    %v344 = vshrl.u32 %v343, 7
    %v345 = vsub.s32 0, %v344
    %v346 = vrot.slane %v341, %v345
    %v348 = vmul.f32 %v333, %v346
    %v349 = vmul.f32 %v334, %v346
    %v350 = vmul.f32 %v335, %v346
    %v351 = vmul.f32 %v336, %v346
    %v352 = vmul.f32 %v337, %v346
    %v353 = vmul.f32 %v338, %v346
    %v354 = vmul.f32 %v339, %v346
    %v355 = vmul.f32 %v340, %v346
    %v356 = vld [vmem:[%s3] sm:$0x1]
    %v358 = vlaneseq
    %v359 = vshrl.u32 %v358, 7
    %v360 = vsub.s32 0, %v359
    %v361 = vrot.slane %v356, %v360
    %v363 = vadd.f32 %v348, %v361
    %v364 = vadd.f32 %v349, %v361
    %v365 = vadd.f32 %v350, %v361
    %v366 = vadd.f32 %v351, %v361
    %v367 = vadd.f32 %v352, %v361
    %v368 = vadd.f32 %v353, %v361
    %v369 = vadd.f32 %v354, %v361
    %v370 = vadd.f32 %v355, %v361
    %vm371 = vcmp.gt.f32.partialorder %v363, 0.0
    %vm372 = vcmp.gt.f32.partialorder %v364, 0.0
    %vm373 = vcmp.gt.f32.partialorder %v365, 0.0
    %vm374 = vcmp.gt.f32.partialorder %v366, 0.0
    %vm375 = vcmp.gt.f32.partialorder %v367, 0.0
    %vm376 = vcmp.gt.f32.partialorder %v368, 0.0
    %vm377 = vcmp.gt.f32.partialorder %v369, 0.0
    %vm378 = vcmp.gt.f32.partialorder %v370, 0.0
    %v379 = vmul.f32 %v363, 0.25
    %v380 = vmul.f32 %v364, 0.25
    %v381 = vmul.f32 %v365, 0.25
    %v382 = vmul.f32 %v366, 0.25
    %v383 = vmul.f32 %v367, 0.25
    %v384 = vmul.f32 %v368, 0.25
    %v385 = vmul.f32 %v369, 0.25
    %v386 = vmul.f32 %v370, 0.25
    %v387 = vsel %vm371, %v363, %v379
    %v388 = vsel %vm372, %v364, %v380
    %v389 = vsel %vm373, %v365, %v381
    %v390 = vsel %vm374, %v366, %v382
    %v391 = vsel %vm375, %v367, %v383
    %v392 = vsel %vm376, %v368, %v384
    %v393 = vsel %vm377, %v369, %v385
    %v394 = vsel %vm378, %v370, %v386
    %v395 = vpack.c.bf16 %v388, %v387
    %v396 = vpack.c.bf16 %v390, %v389
    %v397 = vpack.c.bf16 %v392, %v391
    %v398 = vpack.c.bf16 %v394, %v393
    %v403 = vunpack.c.l.b16 %v395
    %v404 = vunpack.c.h.b16 %v395
    %v405 = vunpack.c.l.b16 %v396
    %v406 = vunpack.c.h.b16 %v396
    %v407 = vunpack.c.l.b16 %v397
    %v408 = vunpack.c.h.b16 %v397
    %v409 = vunpack.c.l.b16 %v398
    %v410 = vunpack.c.h.b16 %v398
    %v411 = vpack.c.b16 %v403, %v403
    %v412 = vpack.c.b16 %v404, %v404
    %v413 = vpack.c.b16 %v405, %v405
    %v414 = vpack.c.b16 %v406, %v406
    %v415 = vpack.c.b16 %v407, %v407
    %v416 = vpack.c.b16 %v408, %v408
    %v417 = vpack.c.b16 %v409, %v409
    %v418 = vpack.c.b16 %v410, %v410
    %427 = vst [vmem:[%s4] sm:$0xf] %v411
    %428 = vst [vmem:[%s4 + $0x4] sm:$0xf] %v412
    %429 = vst [vmem:[%s4 + $0x8] sm:$0xf] %v413
    %430 = vst [vmem:[%s4 + $0xc] sm:$0xf] %v414
    %431 = vst [vmem:[%s4 + $0x10] sm:$0xf] %v415
    %432 = vst [vmem:[%s4 + $0x14] sm:$0xf] %v416
    %433 = vst [vmem:[%s4 + $0x18] sm:$0xf] %v417
    %434 = vst [vmem:[%s4 + $0x1c] sm:$0xf] %v418
  $region25: #{resnet3d_forward.14} parent=0 // pred_fallthru
    _
  // Predicated region
  $region26: #{resnet3d_forward.14} parent=0 // pred_check
    _
  $region27: #{resnet3d_forward.14} parent=0 // pred_check_branch
    %436 = sbr.rel (0) target = $region29
  $region28: #{resnet3d_forward.14} parent=0 // pred_region
    _
  $region29: #{resnet3d_forward.14} parent=0 // pred_fallthru
    _
  // Predicated region
  $region30: #{resnet3d_forward.14} parent=0 // pred_check
    _
  $region31: #{resnet3d_forward.14} parent=0 // pred_check_branch
    %438 = sbr.rel (0) target = $region33
  $region32: #{resnet3d_forward.14} parent=0 // pred_region
    _
  $region33: #{resnet3d_forward.14} parent=0 // pred_fallthru
    _

// kernel: resnet3d_forward.15
$region0: #{resnet3d_forward.15}
  #allocation0 [shape = 'u32[]', space=smem, size = 0x4, offset = 0x4, fixed_abs, tag = 'smem constant byte address 0x4 - core index']
  #allocation1 [shape = 'u32[144,128]{1,0:T(1,128)}', space=vmem, size = 0x12000, scoped, tag = 'internal scratch']
  #allocation2 [shape = 'f32[64,128]{1,0:T(8,128)}', space=vmem, size = 0x8000, scoped, tag = 'scratch operand']
  %s0 = inlined_call_operand.vmem [shape: bf16[64,128], index: 0, kind: input, shape index: {}]
  %s1 = inlined_call_operand.vmem [shape: bf16[128,128], index: 1, kind: input, shape index: {}]
  %s2 = inlined_call_operand.vmem [shape: f32[1,128], index: 2, kind: input, shape index: {}]
  %s3 = inlined_call_operand.vmem [shape: f32[1,128], index: 3, kind: input, shape index: {}]
  %s4 = inlined_call_operand.vmem [shape: bf16[64,128], index: 4, kind: output, shape index: {}]
  %s5 = sld [smem:[#allocation0]]
  $region34: #{resnet3d_forward.15} parent=0
    _
  %s7 = ssub.s32 1, %s5
  %s8 = scalar_select 0, %s7, %s5
  // Predicated region
  $region2: #{resnet3d_forward.15} parent=0 // pred_check
    _
  $region3: #{resnet3d_forward.15} parent=0 // pred_check_branch
    %10 = sbr.rel (0) target = $region5
  $region4: #{resnet3d_forward.15} parent=0 // pred_region
    _
  $region5: #{resnet3d_forward.15} parent=0 // pred_fallthru
    _
  // Predicated region
  $region6: #{resnet3d_forward.15} parent=0 // pred_check
    _
  $region7: #{resnet3d_forward.15} parent=0 // pred_check_branch
    %12 = sbr.rel (0) target = $region9
  $region8: #{resnet3d_forward.15} parent=0 // pred_region
    _
  $region9: #{resnet3d_forward.15} parent=0 // pred_fallthru
    _
  // Predicated region
  $region10: #{resnet3d_forward.15} parent=0 // pred_check
    _
  $region11: #{resnet3d_forward.15} parent=0 // pred_check_branch
    %14 = sbr.rel (0) target = $region13
  $region12: #{resnet3d_forward.15} parent=0 // pred_region
    _
  $region13: #{resnet3d_forward.15} parent=0 // pred_fallthru
    _
  // Predicated region
  $region14: #{resnet3d_forward.15} parent=0 // pred_check
    _
  $region15: #{resnet3d_forward.15} parent=0 // pred_check_branch
    %16 = sbr.rel (0) target = $region17
  $region16: #{resnet3d_forward.15} parent=0 // pred_region
    _
  $region17: #{resnet3d_forward.15} parent=0 // pred_fallthru
    _
  %p18 = scmp.eq.s32.totalorder 0, 0
  // Predicated region
  $region18: #{resnet3d_forward.15} parent=0 // pred_check
    %p19 = pneg %p18
  $region19: #{resnet3d_forward.15} parent=0 // pred_check_branch
    %21 = sbr.rel (%p19) target = $region21
  $region20: #{resnet3d_forward.15} parent=0 // pred_region
    %22 = vst [vmem:[#allocation2] sm:$0xff] 0.0
    %23 = vst [vmem:[#allocation2 + $0x8] sm:$0xff] 0.0
    %24 = vst [vmem:[#allocation2 + $0x10] sm:$0xff] 0.0
    %25 = vst [vmem:[#allocation2 + $0x18] sm:$0xff] 0.0
    %26 = vst [vmem:[#allocation2 + $0x20] sm:$0xff] 0.0
    %27 = vst [vmem:[#allocation2 + $0x28] sm:$0xff] 0.0
    %28 = vst [vmem:[#allocation2 + $0x30] sm:$0xff] 0.0
    %29 = vst [vmem:[#allocation2 + $0x38] sm:$0xff] 0.0
  $region21: #{resnet3d_forward.15} parent=0 // pred_fallthru
    _
  %v30 = vld [vmem:[#allocation2] sm:$0xff]
  %v31 = vld [vmem:[#allocation2 + $0x8] sm:$0xff]
  %v32 = vld [vmem:[#allocation2 + $0x10] sm:$0xff]
  %v33 = vld [vmem:[#allocation2 + $0x18] sm:$0xff]
  %v34 = vld [vmem:[#allocation2 + $0x20] sm:$0xff]
  %v35 = vld [vmem:[#allocation2 + $0x28] sm:$0xff]
  %v36 = vld [vmem:[#allocation2 + $0x30] sm:$0xff]
  %v37 = vld [vmem:[#allocation2 + $0x38] sm:$0xff]
  %v38 = vld [vmem:[%s0] sm:$0xf]
  %v39 = vld [vmem:[%s0 + $0x4] sm:$0xf]
  %v40 = vld [vmem:[%s0 + $0x8] sm:$0xf]
  %v41 = vld [vmem:[%s0 + $0xc] sm:$0xf]
  %v42 = vld [vmem:[%s0 + $0x10] sm:$0xf]
  %v43 = vld [vmem:[%s0 + $0x14] sm:$0xf]
  %v44 = vld [vmem:[%s0 + $0x18] sm:$0xf]
  %v45 = vld [vmem:[%s0 + $0x1c] sm:$0xf]
  %v46 = vld [vmem:[%s1] sm:$0xf]
  %v47 = vld [vmem:[%s1 + $0x4] sm:$0xf]
  %v48 = vld [vmem:[%s1 + $0x8] sm:$0xf]
  %v49 = vld [vmem:[%s1 + $0xc] sm:$0xf]
  %v50 = vld [vmem:[%s1 + $0x10] sm:$0xf]
  %v51 = vld [vmem:[%s1 + $0x14] sm:$0xf]
  %v52 = vld [vmem:[%s1 + $0x18] sm:$0xf]
  %v53 = vld [vmem:[%s1 + $0x1c] sm:$0xf]
  %v54 = vld [vmem:[%s1 + $0x20] sm:$0xf]
  %v55 = vld [vmem:[%s1 + $0x24] sm:$0xf]
  %v56 = vld [vmem:[%s1 + $0x28] sm:$0xf]
  %v57 = vld [vmem:[%s1 + $0x2c] sm:$0xf]
  %v58 = vld [vmem:[%s1 + $0x30] sm:$0xf]
  %v59 = vld [vmem:[%s1 + $0x34] sm:$0xf]
  %v60 = vld [vmem:[%s1 + $0x38] sm:$0xf]
  %v61 = vld [vmem:[%s1 + $0x3c] sm:$0xf]
  %v70 = vunpack.c.l.b16 %v38
  %v71 = vunpack.c.l.b16 %v39
  %v72 = vunpack.c.l.b16 %v40
  %v73 = vunpack.c.l.b16 %v41
  %v74 = vunpack.c.l.b16 %v42
  %v75 = vunpack.c.l.b16 %v43
  %v76 = vunpack.c.l.b16 %v44
  %v77 = vunpack.c.l.b16 %v45
  %v78 = vpack.c.b16 %v71, %v70
  %v79 = vpack.c.b16 %v73, %v72
  %v80 = vpack.c.b16 %v75, %v74
  %v81 = vpack.c.b16 %v77, %v76
  %v102 = vunpack.c.l.b16 %v46
  %v103 = vunpack.c.l.b16 %v47
  %v104 = vunpack.c.l.b16 %v48
  %v105 = vunpack.c.l.b16 %v49
  %v106 = vunpack.c.l.b16 %v50
  %v107 = vunpack.c.l.b16 %v51
  %v108 = vunpack.c.l.b16 %v52
  %v109 = vunpack.c.l.b16 %v53
  %v110 = vunpack.c.l.b16 %v54
  %v111 = vunpack.c.l.b16 %v55
  %v112 = vunpack.c.l.b16 %v56
  %v113 = vunpack.c.l.b16 %v57
  %v114 = vunpack.c.l.b16 %v58
  %v115 = vunpack.c.l.b16 %v59
  %v116 = vunpack.c.l.b16 %v60
  %v117 = vunpack.c.l.b16 %v61
  %v118 = vpack.c.b16 %v103, %v102
  %v119 = vpack.c.b16 %v105, %v104
  %v120 = vpack.c.b16 %v107, %v106
  %v121 = vpack.c.b16 %v109, %v108
  %v122 = vpack.c.b16 %v111, %v110
  %v123 = vpack.c.b16 %v113, %v112
  %v124 = vpack.c.b16 %v115, %v114
  %v125 = vpack.c.b16 %v117, %v116
  %134 = vmatprep.subr.bf16.mxu0 0
  %135 = vmatpush1.bf16.msra.mxu0 %v125
  %136 = vmatprep.subr.bf16.mxu0 0
  %137 = vmatpush1.bf16.msra.mxu0 %v124
  %138 = vmatprep.subr.bf16.mxu0 0
  %139 = vmatpush1.bf16.msra.mxu0 %v123
  %140 = vmatprep.subr.bf16.mxu0 0
  %141 = vmatpush1.bf16.msra.mxu0 %v122
  %142 = vmatprep.subr.bf16.mxu0 0
  %143 = vmatpush1.bf16.msra.mxu0 %v121
  %144 = vmatprep.subr.bf16.mxu0 0
  %145 = vmatpush1.bf16.msra.mxu0 %v120
  %146 = vmatprep.subr.bf16.mxu0 0
  %147 = vmatpush1.bf16.msra.mxu0 %v119
  %148 = vmatprep.subr.bf16.mxu0 0
  %149 = vmatpush1.bf16.msra.mxu0 %v118
  %150 = vmatprep.subr.bf16.mxu0 0
  %151 = vmatpush2.bf16.msra.mxu0 0
  %152 = vmatprep.subr.bf16.mxu0 0
  %153 = vmatpush2.bf16.msra.mxu0 0
  %154 = vmatprep.subr.bf16.mxu0 0
  %155 = vmatpush2.bf16.msra.mxu0 0
  %156 = vmatprep.subr.bf16.mxu0 0
  %157 = vmatpush2.bf16.msra.mxu0 0
  %158 = vmatprep.subr.bf16.mxu0 0
  %159 = vmatpush2.bf16.msra.mxu0 0
  %160 = vmatprep.subr.bf16.mxu0 0
  %161 = vmatpush2.bf16.msra.mxu0 0
  %162 = vmatprep.subr.bf16.mxu0 0
  %163 = vmatpush2.bf16.msra.mxu0 0
  %164 = vmatprep.subr.bf16.mxu0 0
  %165 = vmatpush2.bf16.msra.mxu0 0
  %166 = vmatprep.mubr.bf16.mxu0 0
  %167 = vmatmul.mubr.bf16.gmra.mxu0 %v78
  %v168 = vpop.f32.mrf.mxu0
  %v169 = vadd.f32 0.0, %v168
  %v170 = vpop.f32.mrf.mxu0
  %v171 = vpop.f32.mrf.mxu0
  %v172 = vadd.f32 0.0, %v171
  %v173 = vpop.f32.mrf.mxu0
  %174 = vmatprep.mubr.bf16.mxu0 0
  %175 = vmatmul.mubr.bf16.gmra.mxu0 %v79
  %v176 = vpop.f32.mrf.mxu0
  %v177 = vadd.f32 0.0, %v176
  %v178 = vpop.f32.mrf.mxu0
  %v179 = vpop.f32.mrf.mxu0
  %v180 = vadd.f32 0.0, %v179
  %v181 = vpop.f32.mrf.mxu0
  %182 = vmatprep.mubr.bf16.mxu0 0
  %183 = vmatmul.mubr.bf16.gmra.mxu0 %v80
  %v184 = vpop.f32.mrf.mxu0
  %v185 = vadd.f32 0.0, %v184
  %v186 = vpop.f32.mrf.mxu0
  %v187 = vpop.f32.mrf.mxu0
  %v188 = vadd.f32 0.0, %v187
  %v189 = vpop.f32.mrf.mxu0
  %190 = vmatprep.mubr.bf16.mxu0 0
  %191 = vmatmul.mubr.bf16.gmra.mxu0 %v81
  %v192 = vpop.f32.mrf.mxu0
  %v193 = vadd.f32 0.0, %v192
  %v194 = vpop.f32.mrf.mxu0
  %v195 = vpop.f32.mrf.mxu0
  %v196 = vadd.f32 0.0, %v195
  %v197 = vpop.f32.mrf.mxu0
  %198 = vdwg.mxu0
  %v199 = vadd.f32 %v30, %v169
  %v200 = vadd.f32 %v31, %v172
  %v201 = vadd.f32 %v32, %v177
  %v202 = vadd.f32 %v33, %v180
  %v203 = vadd.f32 %v34, %v185
  %v204 = vadd.f32 %v35, %v188
  %v205 = vadd.f32 %v36, %v193
  %v206 = vadd.f32 %v37, %v196
  %207 = vst [vmem:[#allocation2] sm:$0xff] %v199
  %208 = vst [vmem:[#allocation2 + $0x8] sm:$0xff] %v200
  %209 = vst [vmem:[#allocation2 + $0x10] sm:$0xff] %v201
  %210 = vst [vmem:[#allocation2 + $0x18] sm:$0xff] %v202
  %211 = vst [vmem:[#allocation2 + $0x20] sm:$0xff] %v203
  %212 = vst [vmem:[#allocation2 + $0x28] sm:$0xff] %v204
  %213 = vst [vmem:[#allocation2 + $0x30] sm:$0xff] %v205
  %214 = vst [vmem:[#allocation2 + $0x38] sm:$0xff] %v206
  // Predicated region
  $region22: #{resnet3d_forward.15} parent=0 // pred_check
    %p215 = pneg %p18
  $region23: #{resnet3d_forward.15} parent=0 // pred_check_branch
    %217 = sbr.rel (%p215) target = $region25
  $region24: #{resnet3d_forward.15} parent=0 // pred_region
    %v218 = vld [vmem:[#allocation2] sm:$0xff]
    %v219 = vld [vmem:[#allocation2 + $0x8] sm:$0xff]
    %v220 = vld [vmem:[#allocation2 + $0x10] sm:$0xff]
    %v221 = vld [vmem:[#allocation2 + $0x18] sm:$0xff]
    %v222 = vld [vmem:[#allocation2 + $0x20] sm:$0xff]
    %v223 = vld [vmem:[#allocation2 + $0x28] sm:$0xff]
    %v224 = vld [vmem:[#allocation2 + $0x30] sm:$0xff]
    %v225 = vld [vmem:[#allocation2 + $0x38] sm:$0xff]
    %v226 = vadd.f32 %v218, %v219
    %v227 = vadd.f32 %v226, %v220
    %v228 = vadd.f32 %v227, %v221
    %v229 = vadd.f32 %v228, %v222
    %v230 = vadd.f32 %v229, %v223
    %v231 = vadd.f32 %v230, %v224
    %v232 = vadd.f32 %v231, %v225
    %v233 = vrot.slane %v232, 4
    %v234 = vadd.f32 %v232, %v233
    %v235 = vrot.slane %v234, 2
    %v236 = vadd.f32 %v234, %v235
    %v237 = vrot.slane %v236, 1
    %v238 = vadd.f32 %v236, %v237
    %v239 = vmul.f32 %v218, %v218
    %v240 = vmul.f32 %v219, %v219
    %v241 = vmul.f32 %v220, %v220
    %v242 = vmul.f32 %v221, %v221
    %v243 = vmul.f32 %v222, %v222
    %v244 = vmul.f32 %v223, %v223
    %v245 = vmul.f32 %v224, %v224
    %v246 = vmul.f32 %v225, %v225
    %v247 = vadd.f32 %v239, %v240
    %v248 = vadd.f32 %v247, %v241
    %v249 = vadd.f32 %v248, %v242
    %v250 = vadd.f32 %v249, %v243
    %v251 = vadd.f32 %v250, %v244
    %v252 = vadd.f32 %v251, %v245
    %v253 = vadd.f32 %v252, %v246
    %v254 = vrot.slane %v253, 4
    %v255 = vadd.f32 %v253, %v254
    %v256 = vrot.slane %v255, 2
    %v257 = vadd.f32 %v255, %v256
    %v258 = vrot.slane %v257, 1
    %v259 = vadd.f32 %v257, %v258
    %v260 = vrcp.pop 64.0
    %v261 = vmul.f32 %v238, %v260
    %v262 = vmul.f32 %v259, %v260
    %v263 = vmul.f32 %v261, %v261
    %v264 = vsub.f32 %v262, %v263
    %v265 = vmax.f32 %v264, 0.0
    %v266 = vsub.f32 %v218, %v261
    %v267 = vsub.f32 %v219, %v261
    %v268 = vsub.f32 %v220, %v261
    %v269 = vsub.f32 %v221, %v261
    %v270 = vsub.f32 %v222, %v261
    %v271 = vsub.f32 %v223, %v261
    %v272 = vsub.f32 %v224, %v261
    %v273 = vsub.f32 %v225, %v261
    %v274 = vadd.f32 %v265, 1e-05
    %v275 = vrsqrt.pop %v274
    %v276 = vmul.f32 %v266, %v275
    %v277 = vmul.f32 %v267, %v275
    %v278 = vmul.f32 %v268, %v275
    %v279 = vmul.f32 %v269, %v275
    %v280 = vmul.f32 %v270, %v275
    %v281 = vmul.f32 %v271, %v275
    %v282 = vmul.f32 %v272, %v275
    %v283 = vmul.f32 %v273, %v275
    %v284 = vld [vmem:[%s2] sm:$0x1]
    %v286 = vlaneseq
    %v287 = vshrl.u32 %v286, 7
    %v288 = vsub.s32 0, %v287
    %v289 = vrot.slane %v284, %v288
    %v291 = vmul.f32 %v276, %v289
    %v292 = vmul.f32 %v277, %v289
    %v293 = vmul.f32 %v278, %v289
    %v294 = vmul.f32 %v279, %v289
    %v295 = vmul.f32 %v280, %v289
    %v296 = vmul.f32 %v281, %v289
    %v297 = vmul.f32 %v282, %v289
    %v298 = vmul.f32 %v283, %v289
    %v299 = vld [vmem:[%s3] sm:$0x1]
    %v301 = vlaneseq
    %v302 = vshrl.u32 %v301, 7
    %v303 = vsub.s32 0, %v302
    %v304 = vrot.slane %v299, %v303
    %v306 = vadd.f32 %v291, %v304
    %v307 = vadd.f32 %v292, %v304
    %v308 = vadd.f32 %v293, %v304
    %v309 = vadd.f32 %v294, %v304
    %v310 = vadd.f32 %v295, %v304
    %v311 = vadd.f32 %v296, %v304
    %v312 = vadd.f32 %v297, %v304
    %v313 = vadd.f32 %v298, %v304
    %vm314 = vcmp.gt.f32.partialorder %v306, 0.0
    %vm315 = vcmp.gt.f32.partialorder %v307, 0.0
    %vm316 = vcmp.gt.f32.partialorder %v308, 0.0
    %vm317 = vcmp.gt.f32.partialorder %v309, 0.0
    %vm318 = vcmp.gt.f32.partialorder %v310, 0.0
    %vm319 = vcmp.gt.f32.partialorder %v311, 0.0
    %vm320 = vcmp.gt.f32.partialorder %v312, 0.0
    %vm321 = vcmp.gt.f32.partialorder %v313, 0.0
    %v322 = vmul.f32 %v306, 0.25
    %v323 = vmul.f32 %v307, 0.25
    %v324 = vmul.f32 %v308, 0.25
    %v325 = vmul.f32 %v309, 0.25
    %v326 = vmul.f32 %v310, 0.25
    %v327 = vmul.f32 %v311, 0.25
    %v328 = vmul.f32 %v312, 0.25
    %v329 = vmul.f32 %v313, 0.25
    %v330 = vsel %vm314, %v306, %v322
    %v331 = vsel %vm315, %v307, %v323
    %v332 = vsel %vm316, %v308, %v324
    %v333 = vsel %vm317, %v309, %v325
    %v334 = vsel %vm318, %v310, %v326
    %v335 = vsel %vm319, %v311, %v327
    %v336 = vsel %vm320, %v312, %v328
    %v337 = vsel %vm321, %v313, %v329
    %v338 = vpack.c.bf16 %v331, %v330
    %v339 = vpack.c.bf16 %v333, %v332
    %v340 = vpack.c.bf16 %v335, %v334
    %v341 = vpack.c.bf16 %v337, %v336
    %v346 = vunpack.c.l.b16 %v338
    %v347 = vunpack.c.h.b16 %v338
    %v348 = vunpack.c.l.b16 %v339
    %v349 = vunpack.c.h.b16 %v339
    %v350 = vunpack.c.l.b16 %v340
    %v351 = vunpack.c.h.b16 %v340
    %v352 = vunpack.c.l.b16 %v341
    %v353 = vunpack.c.h.b16 %v341
    %v354 = vpack.c.b16 %v346, %v346
    %v355 = vpack.c.b16 %v347, %v347
    %v356 = vpack.c.b16 %v348, %v348
    %v357 = vpack.c.b16 %v349, %v349
    %v358 = vpack.c.b16 %v350, %v350
    %v359 = vpack.c.b16 %v351, %v351
    %v360 = vpack.c.b16 %v352, %v352
    %v361 = vpack.c.b16 %v353, %v353
    %370 = vst [vmem:[%s4] sm:$0xf] %v354
    %371 = vst [vmem:[%s4 + $0x4] sm:$0xf] %v355
    %372 = vst [vmem:[%s4 + $0x8] sm:$0xf] %v356
    %373 = vst [vmem:[%s4 + $0xc] sm:$0xf] %v357
    %374 = vst [vmem:[%s4 + $0x10] sm:$0xf] %v358
    %375 = vst [vmem:[%s4 + $0x14] sm:$0xf] %v359
    %376 = vst [vmem:[%s4 + $0x18] sm:$0xf] %v360
    %377 = vst [vmem:[%s4 + $0x1c] sm:$0xf] %v361
  $region25: #{resnet3d_forward.15} parent=0 // pred_fallthru
    _
  // Predicated region
  $region26: #{resnet3d_forward.15} parent=0 // pred_check
    _
  $region27: #{resnet3d_forward.15} parent=0 // pred_check_branch
    %379 = sbr.rel (0) target = $region29
  $region28: #{resnet3d_forward.15} parent=0 // pred_region
    _
  $region29: #{resnet3d_forward.15} parent=0 // pred_fallthru
    _
  // Predicated region
  $region30: #{resnet3d_forward.15} parent=0 // pred_check
    _
  $region31: #{resnet3d_forward.15} parent=0 // pred_check_branch
    %381 = sbr.rel (0) target = $region33
  $region32: #{resnet3d_forward.15} parent=0 // pred_region
    _
  $region33: #{resnet3d_forward.15} parent=0 // pred_fallthru
    _

// kernel: resnet3d_forward.17
$region0: #{resnet3d_forward.17}
  #allocation0 [shape = 'u32[]', space=smem, size = 0x4, offset = 0x4, fixed_abs, tag = 'smem constant byte address 0x4 - core index']
  #allocation1 [shape = 'u32[144,128]{1,0:T(1,128)}', space=vmem, size = 0x12000, scoped, tag = 'internal scratch']
  #allocation2 [shape = 'f32[2,32,128]{2,1,0:T(8,128)}', space=vmem, size = 0x8000, scoped, tag = 'scratch operand']
  %s0 = inlined_call_operand.vmem [shape: bf16[2,32,128], index: 0, kind: input, shape index: {}]
  %s1 = inlined_call_operand.vmem [shape: bf16[2,32,128], index: 1, kind: input, shape index: {}]
  %s2 = inlined_call_operand.vmem [shape: bf16[128,128], index: 2, kind: input, shape index: {}]
  %s3 = inlined_call_operand.vmem [shape: f32[1,128], index: 3, kind: input, shape index: {}]
  %s4 = inlined_call_operand.vmem [shape: f32[1,128], index: 4, kind: input, shape index: {}]
  %s5 = inlined_call_operand.vmem [shape: f32[1,128], index: 5, kind: input, shape index: {}]
  %s6 = inlined_call_operand.vmem [shape: f32[1,128], index: 6, kind: input, shape index: {}]
  %s7 = inlined_call_operand.vmem [shape: f32[128,128], index: 7, kind: input, shape index: {}]
  %s8 = inlined_call_operand.vmem [shape: f32[1,128], index: 8, kind: input, shape index: {}]
  %s9 = inlined_call_operand.vmem [shape: f32[128,128], index: 9, kind: input, shape index: {}]
  %s10 = inlined_call_operand.vmem [shape: f32[1,128], index: 10, kind: input, shape index: {}]
  %s11 = inlined_call_operand.vmem [shape: bf16[2,32,128], index: 11, kind: output, shape index: {}]
  %s12 = sld [smem:[#allocation0]]
  $region54: #{resnet3d_forward.17} parent=0
    _
  %s14 = ssub.s32 1, %s12
  %s15 = scalar_select 0, %s14, %s12
  // Predicated region
  $region2: #{resnet3d_forward.17} parent=0 // pred_check
    _
  $region3: #{resnet3d_forward.17} parent=0 // pred_check_branch
    %17 = sbr.rel (0) target = $region5
  $region4: #{resnet3d_forward.17} parent=0 // pred_region
    _
  $region5: #{resnet3d_forward.17} parent=0 // pred_fallthru
    _
  // Predicated region
  $region6: #{resnet3d_forward.17} parent=0 // pred_check
    _
  $region7: #{resnet3d_forward.17} parent=0 // pred_check_branch
    %19 = sbr.rel (0) target = $region9
  $region8: #{resnet3d_forward.17} parent=0 // pred_region
    _
  $region9: #{resnet3d_forward.17} parent=0 // pred_fallthru
    _
  // Predicated region
  $region10: #{resnet3d_forward.17} parent=0 // pred_check
    _
  $region11: #{resnet3d_forward.17} parent=0 // pred_check_branch
    %21 = sbr.rel (0) target = $region13
  $region12: #{resnet3d_forward.17} parent=0 // pred_region
    _
  $region13: #{resnet3d_forward.17} parent=0 // pred_fallthru
    _
  // Predicated region
  $region14: #{resnet3d_forward.17} parent=0 // pred_check
    _
  $region15: #{resnet3d_forward.17} parent=0 // pred_check_branch
    %23 = sbr.rel (0) target = $region17
  $region16: #{resnet3d_forward.17} parent=0 // pred_region
    _
  $region17: #{resnet3d_forward.17} parent=0 // pred_fallthru
    _
  // Predicated region
  $region18: #{resnet3d_forward.17} parent=0 // pred_check
    _
  $region19: #{resnet3d_forward.17} parent=0 // pred_check_branch
    %25 = sbr.rel (0) target = $region21
  $region20: #{resnet3d_forward.17} parent=0 // pred_region
    _
  $region21: #{resnet3d_forward.17} parent=0 // pred_fallthru
    _
  // Predicated region
  $region22: #{resnet3d_forward.17} parent=0 // pred_check
    _
  $region23: #{resnet3d_forward.17} parent=0 // pred_check_branch
    %27 = sbr.rel (0) target = $region25
  $region24: #{resnet3d_forward.17} parent=0 // pred_region
    _
  $region25: #{resnet3d_forward.17} parent=0 // pred_fallthru
    _
  // Predicated region
  $region26: #{resnet3d_forward.17} parent=0 // pred_check
    _
  $region27: #{resnet3d_forward.17} parent=0 // pred_check_branch
    %29 = sbr.rel (0) target = $region29
  $region28: #{resnet3d_forward.17} parent=0 // pred_region
    _
  $region29: #{resnet3d_forward.17} parent=0 // pred_fallthru
    _
  // Predicated region
  $region30: #{resnet3d_forward.17} parent=0 // pred_check
    _
  $region31: #{resnet3d_forward.17} parent=0 // pred_check_branch
    %31 = sbr.rel (0) target = $region33
  $region32: #{resnet3d_forward.17} parent=0 // pred_region
    _
  $region33: #{resnet3d_forward.17} parent=0 // pred_fallthru
    _
  // Predicated region
  $region34: #{resnet3d_forward.17} parent=0 // pred_check
    _
  $region35: #{resnet3d_forward.17} parent=0 // pred_check_branch
    %33 = sbr.rel (0) target = $region37
  $region36: #{resnet3d_forward.17} parent=0 // pred_region
    _
  $region37: #{resnet3d_forward.17} parent=0 // pred_fallthru
    _
  // Predicated region
  $region38: #{resnet3d_forward.17} parent=0 // pred_check
    _
  $region39: #{resnet3d_forward.17} parent=0 // pred_check_branch
    %35 = sbr.rel (0) target = $region41
  $region40: #{resnet3d_forward.17} parent=0 // pred_region
    _
  $region41: #{resnet3d_forward.17} parent=0 // pred_fallthru
    _
  // Predicated region
  $region42: #{resnet3d_forward.17} parent=0 // pred_check
    _
  $region43: #{resnet3d_forward.17} parent=0 // pred_check_branch
    %37 = sbr.rel (0) target = $region45
  $region44: #{resnet3d_forward.17} parent=0 // pred_region
    _
  $region45: #{resnet3d_forward.17} parent=0 // pred_fallthru
    _
  %v39 = vld [vmem:[%s0] sm:$0xf]
  %v40 = vld [vmem:[%s0 + $0x4] sm:$0xf]
  %v41 = vld [vmem:[%s0 + $0x8] sm:$0xf]
  %v42 = vld [vmem:[%s0 + $0xc] sm:$0xf]
  %v43 = vunpack.c.l.bf16 %v39
  %v44 = vunpack.c.l.bf16 %v40
  %v45 = vunpack.c.l.bf16 %v41
  %v46 = vunpack.c.l.bf16 %v42
  %v47 = vadd.f32 %v43, %v44
  %v48 = vadd.f32 %v47, %v45
  %v49 = vadd.f32 %v48, %v46
  %v50 = vrot.slane %v49, 4
  %v51 = vadd.f32 %v49, %v50
  %v52 = vrot.slane %v51, 2
  %v53 = vadd.f32 %v51, %v52
  %v54 = vrot.slane %v53, 1
  %v55 = vadd.f32 %v53, %v54
  %v56 = vadd.f32 %v55, 0.0
  %v57 = vmul.f32 %v43, %v43
  %v58 = vmul.f32 %v44, %v44
  %v59 = vmul.f32 %v45, %v45
  %v60 = vmul.f32 %v46, %v46
  %v61 = vadd.f32 %v57, %v58
  %v62 = vadd.f32 %v61, %v59
  %v63 = vadd.f32 %v62, %v60
  %v64 = vrot.slane %v63, 4
  %v65 = vadd.f32 %v63, %v64
  %v66 = vrot.slane %v65, 2
  %v67 = vadd.f32 %v65, %v66
  %v68 = vrot.slane %v67, 1
  %v69 = vadd.f32 %v67, %v68
  %v70 = vadd.f32 %v69, 0.0
  %s71 = scalar_lea.vmem %s0, 16
  %v72 = vld [vmem:[%s71] sm:$0xf]
  %v73 = vld [vmem:[%s71 + $0x4] sm:$0xf]
  %v74 = vld [vmem:[%s71 + $0x8] sm:$0xf]
  %v75 = vld [vmem:[%s71 + $0xc] sm:$0xf]
  %v76 = vunpack.c.l.bf16 %v72
  %v77 = vunpack.c.l.bf16 %v73
  %v78 = vunpack.c.l.bf16 %v74
  %v79 = vunpack.c.l.bf16 %v75
  %v80 = vadd.f32 %v76, %v77
  %v81 = vadd.f32 %v80, %v78
  %v82 = vadd.f32 %v81, %v79
  %v83 = vrot.slane %v82, 4
  %v84 = vadd.f32 %v82, %v83
  %v85 = vrot.slane %v84, 2
  %v86 = vadd.f32 %v84, %v85
  %v87 = vrot.slane %v86, 1
  %v88 = vadd.f32 %v86, %v87
  %v89 = vadd.f32 %v56, %v88
  %v90 = vmul.f32 %v76, %v76
  %v91 = vmul.f32 %v77, %v77
  %v92 = vmul.f32 %v78, %v78
  %v93 = vmul.f32 %v79, %v79
  %v94 = vadd.f32 %v90, %v91
  %v95 = vadd.f32 %v94, %v92
  %v96 = vadd.f32 %v95, %v93
  %v97 = vrot.slane %v96, 4
  %v98 = vadd.f32 %v96, %v97
  %v99 = vrot.slane %v98, 2
  %v100 = vadd.f32 %v98, %v99
  %v101 = vrot.slane %v100, 1
  %v102 = vadd.f32 %v100, %v101
  %v103 = vadd.f32 %v70, %v102
  %v104 = vrcp.pop 64.0
  %v105 = vmul.f32 %v89, %v104
  %v106 = vmul.f32 %v103, %v104
  %v107 = vmul.f32 %v105, %v105
  %v108 = vsub.f32 %v106, %v107
  %v109 = vmax.f32 %v108, 0.0
  %v110 = vadd.f32 %v109, 1e-05
  %v111 = vrsqrt.pop %v110
  %v112 = vsub.f32 %v43, %v105
  %v113 = vsub.f32 %v44, %v105
  %v114 = vsub.f32 %v45, %v105
  %v115 = vsub.f32 %v46, %v105
  %v116 = vmul.f32 %v112, %v111
  %v117 = vmul.f32 %v113, %v111
  %v118 = vmul.f32 %v114, %v111
  %v119 = vmul.f32 %v115, %v111
  %v120 = vld [vmem:[%s3] sm:$0x1]
  %v122 = vlaneseq
  %v123 = vshrl.u32 %v122, 7
  %v124 = vsub.s32 0, %v123
  %v125 = vrot.slane %v120, %v124
  %v127 = vmul.f32 %v116, %v125
  %v128 = vmul.f32 %v117, %v125
  %v129 = vmul.f32 %v118, %v125
  %v130 = vmul.f32 %v119, %v125
  %v131 = vld [vmem:[%s4] sm:$0x1]
  %v133 = vlaneseq
  %v134 = vshrl.u32 %v133, 7
  %v135 = vsub.s32 0, %v134
  %v136 = vrot.slane %v131, %v135
  %v138 = vadd.f32 %v127, %v136
  %v139 = vadd.f32 %v128, %v136
  %v140 = vadd.f32 %v129, %v136
  %v141 = vadd.f32 %v130, %v136
  %vm142 = vcmp.gt.f32.partialorder %v138, 0.0
  %vm143 = vcmp.gt.f32.partialorder %v139, 0.0
  %vm144 = vcmp.gt.f32.partialorder %v140, 0.0
  %vm145 = vcmp.gt.f32.partialorder %v141, 0.0
  %v146 = vmul.f32 %v138, 0.25
  %v147 = vmul.f32 %v139, 0.25
  %v148 = vmul.f32 %v140, 0.25
  %v149 = vmul.f32 %v141, 0.25
  %v150 = vsel %vm142, %v138, %v146
  %v151 = vsel %vm143, %v139, %v147
  %v152 = vsel %vm144, %v140, %v148
  %v153 = vsel %vm145, %v141, %v149
  %v154 = vpack.c.bf16 %v151, %v150
  %v155 = vpack.c.bf16 %v153, %v152
  %v156 = vld [vmem:[%s2] sm:$0xf]
  %v157 = vld [vmem:[%s2 + $0x4] sm:$0xf]
  %v158 = vld [vmem:[%s2 + $0x8] sm:$0xf]
  %v159 = vld [vmem:[%s2 + $0xc] sm:$0xf]
  %v160 = vld [vmem:[%s2 + $0x10] sm:$0xf]
  %v161 = vld [vmem:[%s2 + $0x14] sm:$0xf]
  %v162 = vld [vmem:[%s2 + $0x18] sm:$0xf]
  %v163 = vld [vmem:[%s2 + $0x1c] sm:$0xf]
  %v164 = vld [vmem:[%s2 + $0x20] sm:$0xf]
  %v165 = vld [vmem:[%s2 + $0x24] sm:$0xf]
  %v166 = vld [vmem:[%s2 + $0x28] sm:$0xf]
  %v167 = vld [vmem:[%s2 + $0x2c] sm:$0xf]
  %v168 = vld [vmem:[%s2 + $0x30] sm:$0xf]
  %v169 = vld [vmem:[%s2 + $0x34] sm:$0xf]
  %v170 = vld [vmem:[%s2 + $0x38] sm:$0xf]
  %v171 = vld [vmem:[%s2 + $0x3c] sm:$0xf]
  %v188 = vunpack.c.l.b16 %v156
  %v189 = vunpack.c.l.b16 %v157
  %v190 = vunpack.c.l.b16 %v158
  %v191 = vunpack.c.l.b16 %v159
  %v192 = vunpack.c.l.b16 %v160
  %v193 = vunpack.c.l.b16 %v161
  %v194 = vunpack.c.l.b16 %v162
  %v195 = vunpack.c.l.b16 %v163
  %v196 = vunpack.c.l.b16 %v164
  %v197 = vunpack.c.l.b16 %v165
  %v198 = vunpack.c.l.b16 %v166
  %v199 = vunpack.c.l.b16 %v167
  %v200 = vunpack.c.l.b16 %v168
  %v201 = vunpack.c.l.b16 %v169
  %v202 = vunpack.c.l.b16 %v170
  %v203 = vunpack.c.l.b16 %v171
  %v204 = vpack.c.b16 %v189, %v188
  %v205 = vpack.c.b16 %v191, %v190
  %v206 = vpack.c.b16 %v193, %v192
  %v207 = vpack.c.b16 %v195, %v194
  %v208 = vpack.c.b16 %v197, %v196
  %v209 = vpack.c.b16 %v199, %v198
  %v210 = vpack.c.b16 %v201, %v200
  %v211 = vpack.c.b16 %v203, %v202
  %220 = vmatprep.subr.bf16.mxu0 0
  %221 = vmatpush1.bf16.msra.mxu0 %v211
  %222 = vmatprep.subr.bf16.mxu0 0
  %223 = vmatpush1.bf16.msra.mxu0 %v210
  %224 = vmatprep.subr.bf16.mxu0 0
  %225 = vmatpush1.bf16.msra.mxu0 %v209
  %226 = vmatprep.subr.bf16.mxu0 0
  %227 = vmatpush1.bf16.msra.mxu0 %v208
  %228 = vmatprep.subr.bf16.mxu0 0
  %229 = vmatpush1.bf16.msra.mxu0 %v207
  %230 = vmatprep.subr.bf16.mxu0 0
  %231 = vmatpush1.bf16.msra.mxu0 %v206
  %232 = vmatprep.subr.bf16.mxu0 0
  %233 = vmatpush1.bf16.msra.mxu0 %v205
  %234 = vmatprep.subr.bf16.mxu0 0
  %235 = vmatpush1.bf16.msra.mxu0 %v204
  %236 = vmatprep.subr.bf16.mxu0 0
  %237 = vmatpush2.bf16.msra.mxu0 0
  %238 = vmatprep.subr.bf16.mxu0 0
  %239 = vmatpush2.bf16.msra.mxu0 0
  %240 = vmatprep.subr.bf16.mxu0 0
  %241 = vmatpush2.bf16.msra.mxu0 0
  %242 = vmatprep.subr.bf16.mxu0 0
  %243 = vmatpush2.bf16.msra.mxu0 0
  %244 = vmatprep.subr.bf16.mxu0 0
  %245 = vmatpush2.bf16.msra.mxu0 0
  %246 = vmatprep.subr.bf16.mxu0 0
  %247 = vmatpush2.bf16.msra.mxu0 0
  %248 = vmatprep.subr.bf16.mxu0 0
  %249 = vmatpush2.bf16.msra.mxu0 0
  %250 = vmatprep.subr.bf16.mxu0 0
  %251 = vmatpush2.bf16.msra.mxu0 0
  %252 = vmatprep.mubr.bf16.mxu0 0
  %253 = vmatmul.mubr.bf16.gmra.mxu0 %v154
  %v254 = vpop.f32.mrf.mxu0
  %v255 = vadd.f32 0.0, %v254
  %v256 = vpop.f32.mrf.mxu0
  %v257 = vpop.f32.mrf.mxu0
  %v258 = vadd.f32 0.0, %v257
  %v259 = vpop.f32.mrf.mxu0
  %260 = vmatprep.mubr.bf16.mxu0 0
  %261 = vmatmul.mubr.bf16.gmra.mxu0 %v155
  %v262 = vpop.f32.mrf.mxu0
  %v263 = vadd.f32 0.0, %v262
  %v264 = vpop.f32.mrf.mxu0
  %v265 = vpop.f32.mrf.mxu0
  %v266 = vadd.f32 0.0, %v265
  %v267 = vpop.f32.mrf.mxu0
  %268 = vdwg.mxu0
  %269 = vst [vmem:[#allocation2] sm:$0xff] %v255
  %270 = vst [vmem:[#allocation2 + $0x8] sm:$0xff] %v258
  %271 = vst [vmem:[#allocation2 + $0x10] sm:$0xff] %v263
  %272 = vst [vmem:[#allocation2 + $0x18] sm:$0xff] %v266
  %v273 = vadd.f32 %v255, %v258
  %v274 = vadd.f32 %v273, %v263
  %v275 = vadd.f32 %v274, %v266
  %v276 = vrot.slane %v275, 4
  %v277 = vadd.f32 %v275, %v276
  %v278 = vrot.slane %v277, 2
  %v279 = vadd.f32 %v277, %v278
  %v280 = vrot.slane %v279, 1
  %v281 = vadd.f32 %v279, %v280
  %v282 = vadd.f32 %v281, 0.0
  %v283 = vmul.f32 %v255, %v255
  %v284 = vmul.f32 %v258, %v258
  %v285 = vmul.f32 %v263, %v263
  %v286 = vmul.f32 %v266, %v266
  %v287 = vadd.f32 %v283, %v284
  %v288 = vadd.f32 %v287, %v285
  %v289 = vadd.f32 %v288, %v286
  %v290 = vrot.slane %v289, 4
  %v291 = vadd.f32 %v289, %v290
  %v292 = vrot.slane %v291, 2
  %v293 = vadd.f32 %v291, %v292
  %v294 = vrot.slane %v293, 1
  %v295 = vadd.f32 %v293, %v294
  %v296 = vadd.f32 %v295, 0.0
  %v297 = vld [vmem:[%s71] sm:$0xf]
  %v298 = vld [vmem:[%s71 + $0x4] sm:$0xf]
  %v299 = vld [vmem:[%s71 + $0x8] sm:$0xf]
  %v300 = vld [vmem:[%s71 + $0xc] sm:$0xf]
  %v301 = vunpack.c.l.bf16 %v297
  %v302 = vunpack.c.l.bf16 %v298
  %v303 = vunpack.c.l.bf16 %v299
  %v304 = vunpack.c.l.bf16 %v300
  %v305 = vsub.f32 %v301, %v105
  %v306 = vsub.f32 %v302, %v105
  %v307 = vsub.f32 %v303, %v105
  %v308 = vsub.f32 %v304, %v105
  %v309 = vmul.f32 %v305, %v111
  %v310 = vmul.f32 %v306, %v111
  %v311 = vmul.f32 %v307, %v111
  %v312 = vmul.f32 %v308, %v111
  %v313 = vld [vmem:[%s3] sm:$0x1]
  %v315 = vlaneseq
  %v316 = vshrl.u32 %v315, 7
  %v317 = vsub.s32 0, %v316
  %v318 = vrot.slane %v313, %v317
  %v320 = vmul.f32 %v309, %v318
  %v321 = vmul.f32 %v310, %v318
  %v322 = vmul.f32 %v311, %v318
  %v323 = vmul.f32 %v312, %v318
  %v324 = vld [vmem:[%s4] sm:$0x1]
  %v326 = vlaneseq
  %v327 = vshrl.u32 %v326, 7
  %v328 = vsub.s32 0, %v327
  %v329 = vrot.slane %v324, %v328
  %v331 = vadd.f32 %v320, %v329
  %v332 = vadd.f32 %v321, %v329
  %v333 = vadd.f32 %v322, %v329
  %v334 = vadd.f32 %v323, %v329
  %vm335 = vcmp.gt.f32.partialorder %v331, 0.0
  %vm336 = vcmp.gt.f32.partialorder %v332, 0.0
  %vm337 = vcmp.gt.f32.partialorder %v333, 0.0
  %vm338 = vcmp.gt.f32.partialorder %v334, 0.0
  %v339 = vmul.f32 %v331, 0.25
  %v340 = vmul.f32 %v332, 0.25
  %v341 = vmul.f32 %v333, 0.25
  %v342 = vmul.f32 %v334, 0.25
  %v343 = vsel %vm335, %v331, %v339
  %v344 = vsel %vm336, %v332, %v340
  %v345 = vsel %vm337, %v333, %v341
  %v346 = vsel %vm338, %v334, %v342
  %v347 = vpack.c.bf16 %v344, %v343
  %v348 = vpack.c.bf16 %v346, %v345
  %v349 = vld [vmem:[%s2] sm:$0xf]
  %v350 = vld [vmem:[%s2 + $0x4] sm:$0xf]
  %v351 = vld [vmem:[%s2 + $0x8] sm:$0xf]
  %v352 = vld [vmem:[%s2 + $0xc] sm:$0xf]
  %v353 = vld [vmem:[%s2 + $0x10] sm:$0xf]
  %v354 = vld [vmem:[%s2 + $0x14] sm:$0xf]
  %v355 = vld [vmem:[%s2 + $0x18] sm:$0xf]
  %v356 = vld [vmem:[%s2 + $0x1c] sm:$0xf]
  %v357 = vld [vmem:[%s2 + $0x20] sm:$0xf]
  %v358 = vld [vmem:[%s2 + $0x24] sm:$0xf]
  %v359 = vld [vmem:[%s2 + $0x28] sm:$0xf]
  %v360 = vld [vmem:[%s2 + $0x2c] sm:$0xf]
  %v361 = vld [vmem:[%s2 + $0x30] sm:$0xf]
  %v362 = vld [vmem:[%s2 + $0x34] sm:$0xf]
  %v363 = vld [vmem:[%s2 + $0x38] sm:$0xf]
  %v364 = vld [vmem:[%s2 + $0x3c] sm:$0xf]
  %v381 = vunpack.c.l.b16 %v349
  %v382 = vunpack.c.l.b16 %v350
  %v383 = vunpack.c.l.b16 %v351
  %v384 = vunpack.c.l.b16 %v352
  %v385 = vunpack.c.l.b16 %v353
  %v386 = vunpack.c.l.b16 %v354
  %v387 = vunpack.c.l.b16 %v355
  %v388 = vunpack.c.l.b16 %v356
  %v389 = vunpack.c.l.b16 %v357
  %v390 = vunpack.c.l.b16 %v358
  %v391 = vunpack.c.l.b16 %v359
  %v392 = vunpack.c.l.b16 %v360
  %v393 = vunpack.c.l.b16 %v361
  %v394 = vunpack.c.l.b16 %v362
  %v395 = vunpack.c.l.b16 %v363
  %v396 = vunpack.c.l.b16 %v364
  %v397 = vpack.c.b16 %v382, %v381
  %v398 = vpack.c.b16 %v384, %v383
  %v399 = vpack.c.b16 %v386, %v385
  %v400 = vpack.c.b16 %v388, %v387
  %v401 = vpack.c.b16 %v390, %v389
  %v402 = vpack.c.b16 %v392, %v391
  %v403 = vpack.c.b16 %v394, %v393
  %v404 = vpack.c.b16 %v396, %v395
  %413 = vmatprep.subr.bf16.mxu0 0
  %414 = vmatpush1.bf16.msra.mxu0 %v404
  %415 = vmatprep.subr.bf16.mxu0 0
  %416 = vmatpush1.bf16.msra.mxu0 %v403
  %417 = vmatprep.subr.bf16.mxu0 0
  %418 = vmatpush1.bf16.msra.mxu0 %v402
  %419 = vmatprep.subr.bf16.mxu0 0
  %420 = vmatpush1.bf16.msra.mxu0 %v401
  %421 = vmatprep.subr.bf16.mxu0 0
  %422 = vmatpush1.bf16.msra.mxu0 %v400
  %423 = vmatprep.subr.bf16.mxu0 0
  %424 = vmatpush1.bf16.msra.mxu0 %v399
  %425 = vmatprep.subr.bf16.mxu0 0
  %426 = vmatpush1.bf16.msra.mxu0 %v398
  %427 = vmatprep.subr.bf16.mxu0 0
  %428 = vmatpush1.bf16.msra.mxu0 %v397
  %429 = vmatprep.subr.bf16.mxu0 0
  %430 = vmatpush2.bf16.msra.mxu0 0
  %431 = vmatprep.subr.bf16.mxu0 0
  %432 = vmatpush2.bf16.msra.mxu0 0
  %433 = vmatprep.subr.bf16.mxu0 0
  %434 = vmatpush2.bf16.msra.mxu0 0
  %435 = vmatprep.subr.bf16.mxu0 0
  %436 = vmatpush2.bf16.msra.mxu0 0
  %437 = vmatprep.subr.bf16.mxu0 0
  %438 = vmatpush2.bf16.msra.mxu0 0
  %439 = vmatprep.subr.bf16.mxu0 0
  %440 = vmatpush2.bf16.msra.mxu0 0
  %441 = vmatprep.subr.bf16.mxu0 0
  %442 = vmatpush2.bf16.msra.mxu0 0
  %443 = vmatprep.subr.bf16.mxu0 0
  %444 = vmatpush2.bf16.msra.mxu0 0
  %445 = vmatprep.mubr.bf16.mxu0 0
  %446 = vmatmul.mubr.bf16.gmra.mxu0 %v347
  %v447 = vpop.f32.mrf.mxu0
  %v448 = vadd.f32 0.0, %v447
  %v449 = vpop.f32.mrf.mxu0
  %v450 = vpop.f32.mrf.mxu0
  %v451 = vadd.f32 0.0, %v450
  %v452 = vpop.f32.mrf.mxu0
  %453 = vmatprep.mubr.bf16.mxu0 0
  %454 = vmatmul.mubr.bf16.gmra.mxu0 %v348
  %v455 = vpop.f32.mrf.mxu0
  %v456 = vadd.f32 0.0, %v455
  %v457 = vpop.f32.mrf.mxu0
  %v458 = vpop.f32.mrf.mxu0
  %v459 = vadd.f32 0.0, %v458
  %v460 = vpop.f32.mrf.mxu0
  %461 = vdwg.mxu0
  %s462 = scalar_lea.vmem [#allocation2], 32
  %463 = vst [vmem:[%s462] sm:$0xff] %v448
  %464 = vst [vmem:[%s462 + $0x8] sm:$0xff] %v451
  %465 = vst [vmem:[%s462 + $0x10] sm:$0xff] %v456
  %466 = vst [vmem:[%s462 + $0x18] sm:$0xff] %v459
  %v467 = vadd.f32 %v448, %v451
  %v468 = vadd.f32 %v467, %v456
  %v469 = vadd.f32 %v468, %v459
  %v470 = vrot.slane %v469, 4
  %v471 = vadd.f32 %v469, %v470
  %v472 = vrot.slane %v471, 2
  %v473 = vadd.f32 %v471, %v472
  %v474 = vrot.slane %v473, 1
  %v475 = vadd.f32 %v473, %v474
  %v476 = vadd.f32 %v282, %v475
  %v477 = vmul.f32 %v448, %v448
  %v478 = vmul.f32 %v451, %v451
  %v479 = vmul.f32 %v456, %v456
  %v480 = vmul.f32 %v459, %v459
  %v481 = vadd.f32 %v477, %v478
  %v482 = vadd.f32 %v481, %v479
  %v483 = vadd.f32 %v482, %v480
  %v484 = vrot.slane %v483, 4
  %v485 = vadd.f32 %v483, %v484
  %v486 = vrot.slane %v485, 2
  %v487 = vadd.f32 %v485, %v486
  %v488 = vrot.slane %v487, 1
  %v489 = vadd.f32 %v487, %v488
  %v490 = vadd.f32 %v296, %v489
  %v491 = vmul.f32 %v476, %v104
  %v492 = vmul.f32 %v490, %v104
  %v493 = vmul.f32 %v491, %v491
  %v494 = vsub.f32 %v492, %v493
  %v495 = vmax.f32 %v494, 0.0
  %v496 = vadd.f32 %v495, 1e-05
  %v497 = vrsqrt.pop %v496
  %v498 = vld [vmem:[#allocation2] sm:$0xff]
  %v499 = vld [vmem:[#allocation2 + $0x8] sm:$0xff]
  %v500 = vld [vmem:[#allocation2 + $0x10] sm:$0xff]
  %v501 = vld [vmem:[#allocation2 + $0x18] sm:$0xff]
  %v502 = vsub.f32 %v498, %v491
  %v503 = vsub.f32 %v499, %v491
  %v504 = vsub.f32 %v500, %v491
  %v505 = vsub.f32 %v501, %v491
  %v506 = vmul.f32 %v502, %v497
  %v507 = vmul.f32 %v503, %v497
  %v508 = vmul.f32 %v504, %v497
  %v509 = vmul.f32 %v505, %v497
  %v510 = vld [vmem:[%s5] sm:$0x1]
  %v512 = vlaneseq
  %v513 = vshrl.u32 %v512, 7
  %v514 = vsub.s32 0, %v513
  %v515 = vrot.slane %v510, %v514
  %v517 = vmul.f32 %v506, %v515
  %v518 = vmul.f32 %v507, %v515
  %v519 = vmul.f32 %v508, %v515
  %v520 = vmul.f32 %v509, %v515
  %v521 = vld [vmem:[%s6] sm:$0x1]
  %v523 = vlaneseq
  %v524 = vshrl.u32 %v523, 7
  %v525 = vsub.s32 0, %v524
  %v526 = vrot.slane %v521, %v525
  %v528 = vadd.f32 %v517, %v526
  %v529 = vadd.f32 %v518, %v526
  %v530 = vadd.f32 %v519, %v526
  %v531 = vadd.f32 %v520, %v526
  %v532 = vadd.f32 %v528, %v529
  %v533 = vadd.f32 %v532, %v530
  %v534 = vadd.f32 %v533, %v531
  %v535 = vrot.slane %v534, 4
  %v536 = vadd.f32 %v534, %v535
  %v537 = vrot.slane %v536, 2
  %v538 = vadd.f32 %v536, %v537
  %v539 = vrot.slane %v538, 1
  %v540 = vadd.f32 %v538, %v539
  %v541 = vrcp.pop 32.0
  %v542 = vmul.f32 %v540, %v541
  %v543 = vld [vmem:[%s7] sm:$0xff]
  %v544 = vld [vmem:[%s7 + $0x8] sm:$0xff]
  %v545 = vld [vmem:[%s7 + $0x10] sm:$0xff]
  %v546 = vld [vmem:[%s7 + $0x18] sm:$0xff]
  %v547 = vld [vmem:[%s7 + $0x20] sm:$0xff]
  %v548 = vld [vmem:[%s7 + $0x28] sm:$0xff]
  %v549 = vld [vmem:[%s7 + $0x30] sm:$0xff]
  %v550 = vld [vmem:[%s7 + $0x38] sm:$0xff]
  %v551 = vld [vmem:[%s7 + $0x40] sm:$0xff]
  %v552 = vld [vmem:[%s7 + $0x48] sm:$0xff]
  %v553 = vld [vmem:[%s7 + $0x50] sm:$0xff]
  %v554 = vld [vmem:[%s7 + $0x58] sm:$0xff]
  %v555 = vld [vmem:[%s7 + $0x60] sm:$0xff]
  %v556 = vld [vmem:[%s7 + $0x68] sm:$0xff]
  %v557 = vld [vmem:[%s7 + $0x70] sm:$0xff]
  %v558 = vld [vmem:[%s7 + $0x78] sm:$0xff]
  %v559 = vld [vmem:[%s8] sm:$0x1]
  %560 = vmatprep.subr.mxu0 0.0
  %561 = vmatpush1.msra.mxu0 %v558
  %562 = vmatprep.subr.mxu0 0.0
  %563 = vmatpush1.msra.mxu0 %v557
  %564 = vmatprep.subr.mxu0 0.0
  %565 = vmatpush1.msra.mxu0 %v556
  %566 = vmatprep.subr.mxu0 0.0
  %567 = vmatpush1.msra.mxu0 %v555
  %568 = vmatprep.subr.mxu0 0.0
  %569 = vmatpush1.msra.mxu0 %v554
  %570 = vmatprep.subr.mxu0 0.0
  %571 = vmatpush1.msra.mxu0 %v553
  %572 = vmatprep.subr.mxu0 0.0
  %573 = vmatpush1.msra.mxu0 %v552
  %574 = vmatprep.subr.mxu0 0.0
  %575 = vmatpush1.msra.mxu0 %v551
  %576 = vmatprep.subr.mxu0 0.0
  %577 = vmatpush1.msra.mxu0 %v550
  %578 = vmatprep.subr.mxu0 0.0
  %579 = vmatpush1.msra.mxu0 %v549
  %580 = vmatprep.subr.mxu0 0.0
  %581 = vmatpush1.msra.mxu0 %v548
  %582 = vmatprep.subr.mxu0 0.0
  %583 = vmatpush1.msra.mxu0 %v547
  %584 = vmatprep.subr.mxu0 0.0
  %585 = vmatpush1.msra.mxu0 %v546
  %586 = vmatprep.subr.mxu0 0.0
  %587 = vmatpush1.msra.mxu0 %v545
  %588 = vmatprep.subr.mxu0 0.0
  %589 = vmatpush1.msra.mxu0 %v544
  %590 = vmatprep.subr.mxu0 0.0
  %591 = vmatpush1.msra.mxu0 %v543
  %592 = vmatprep.subr.mxu0 0.0
  %593 = vmatpush2.msra.mxu0 0.0
  %594 = vmatprep.subr.mxu0 0.0
  %595 = vmatpush2.msra.mxu0 0.0
  %596 = vmatprep.subr.mxu0 0.0
  %597 = vmatpush2.msra.mxu0 0.0
  %598 = vmatprep.subr.mxu0 0.0
  %599 = vmatpush2.msra.mxu0 0.0
  %600 = vmatprep.subr.mxu0 0.0
  %601 = vmatpush2.msra.mxu0 0.0
  %602 = vmatprep.subr.mxu0 0.0
  %603 = vmatpush2.msra.mxu0 0.0
  %604 = vmatprep.subr.mxu0 0.0
  %605 = vmatpush2.msra.mxu0 0.0
  %606 = vmatprep.subr.mxu0 0.0
  %607 = vmatpush2.msra.mxu0 0.0
  %608 = vmatprep.subr.mxu0 0.0
  %609 = vmatpush2.msra.mxu0 0.0
  %610 = vmatprep.subr.mxu0 0.0
  %611 = vmatpush2.msra.mxu0 0.0
  %612 = vmatprep.subr.mxu0 0.0
  %613 = vmatpush2.msra.mxu0 0.0
  %614 = vmatprep.subr.mxu0 0.0
  %615 = vmatpush2.msra.mxu0 0.0
  %616 = vmatprep.subr.mxu0 0.0
  %617 = vmatpush2.msra.mxu0 0.0
  %618 = vmatprep.subr.mxu0 0.0
  %619 = vmatpush2.msra.mxu0 0.0
  %620 = vmatprep.subr.mxu0 0.0
  %621 = vmatpush2.msra.mxu0 0.0
  %622 = vmatprep.subr.mxu0 0.0
  %623 = vmatpush2.msra.mxu0 0.0
  %624 = vmatprep.mubr.f32.mxu0 0.0
  %625 = vmatmul.mubr.f32.gmra.mxu0 %v542
  %v626 = vpop.f32.mrf.mxu0
  %v627 = vadd.f32 %v559, %v626
  %v628 = vpop.f32.mrf.mxu0
  %629 = vdwg.mxu0
  %v630 = vmax.f32 %v627, 0.0
  %v631 = vld [vmem:[%s9] sm:$0xff]
  %v632 = vld [vmem:[%s9 + $0x8] sm:$0xff]
  %v633 = vld [vmem:[%s9 + $0x10] sm:$0xff]
  %v634 = vld [vmem:[%s9 + $0x18] sm:$0xff]
  %v635 = vld [vmem:[%s9 + $0x20] sm:$0xff]
  %v636 = vld [vmem:[%s9 + $0x28] sm:$0xff]
  %v637 = vld [vmem:[%s9 + $0x30] sm:$0xff]
  %v638 = vld [vmem:[%s9 + $0x38] sm:$0xff]
  %v639 = vld [vmem:[%s9 + $0x40] sm:$0xff]
  %v640 = vld [vmem:[%s9 + $0x48] sm:$0xff]
  %v641 = vld [vmem:[%s9 + $0x50] sm:$0xff]
  %v642 = vld [vmem:[%s9 + $0x58] sm:$0xff]
  %v643 = vld [vmem:[%s9 + $0x60] sm:$0xff]
  %v644 = vld [vmem:[%s9 + $0x68] sm:$0xff]
  %v645 = vld [vmem:[%s9 + $0x70] sm:$0xff]
  %v646 = vld [vmem:[%s9 + $0x78] sm:$0xff]
  %v647 = vld [vmem:[%s10] sm:$0x1]
  %648 = vmatprep.subr.mxu0 0.0
  %649 = vmatpush1.msra.mxu0 %v646
  %650 = vmatprep.subr.mxu0 0.0
  %651 = vmatpush1.msra.mxu0 %v645
  %652 = vmatprep.subr.mxu0 0.0
  %653 = vmatpush1.msra.mxu0 %v644
  %654 = vmatprep.subr.mxu0 0.0
  %655 = vmatpush1.msra.mxu0 %v643
  %656 = vmatprep.subr.mxu0 0.0
  %657 = vmatpush1.msra.mxu0 %v642
  %658 = vmatprep.subr.mxu0 0.0
  %659 = vmatpush1.msra.mxu0 %v641
  %660 = vmatprep.subr.mxu0 0.0
  %661 = vmatpush1.msra.mxu0 %v640
  %662 = vmatprep.subr.mxu0 0.0
  %663 = vmatpush1.msra.mxu0 %v639
  %664 = vmatprep.subr.mxu0 0.0
  %665 = vmatpush1.msra.mxu0 %v638
  %666 = vmatprep.subr.mxu0 0.0
  %667 = vmatpush1.msra.mxu0 %v637
  %668 = vmatprep.subr.mxu0 0.0
  %669 = vmatpush1.msra.mxu0 %v636
  %670 = vmatprep.subr.mxu0 0.0
  %671 = vmatpush1.msra.mxu0 %v635
  %672 = vmatprep.subr.mxu0 0.0
  %673 = vmatpush1.msra.mxu0 %v634
  %674 = vmatprep.subr.mxu0 0.0
  %675 = vmatpush1.msra.mxu0 %v633
  %676 = vmatprep.subr.mxu0 0.0
  %677 = vmatpush1.msra.mxu0 %v632
  %678 = vmatprep.subr.mxu0 0.0
  %679 = vmatpush1.msra.mxu0 %v631
  %680 = vmatprep.subr.mxu0 0.0
  %681 = vmatpush2.msra.mxu0 0.0
  %682 = vmatprep.subr.mxu0 0.0
  %683 = vmatpush2.msra.mxu0 0.0
  %684 = vmatprep.subr.mxu0 0.0
  %685 = vmatpush2.msra.mxu0 0.0
  %686 = vmatprep.subr.mxu0 0.0
  %687 = vmatpush2.msra.mxu0 0.0
  %688 = vmatprep.subr.mxu0 0.0
  %689 = vmatpush2.msra.mxu0 0.0
  %690 = vmatprep.subr.mxu0 0.0
  %691 = vmatpush2.msra.mxu0 0.0
  %692 = vmatprep.subr.mxu0 0.0
  %693 = vmatpush2.msra.mxu0 0.0
  %694 = vmatprep.subr.mxu0 0.0
  %695 = vmatpush2.msra.mxu0 0.0
  %696 = vmatprep.subr.mxu0 0.0
  %697 = vmatpush2.msra.mxu0 0.0
  %698 = vmatprep.subr.mxu0 0.0
  %699 = vmatpush2.msra.mxu0 0.0
  %700 = vmatprep.subr.mxu0 0.0
  %701 = vmatpush2.msra.mxu0 0.0
  %702 = vmatprep.subr.mxu0 0.0
  %703 = vmatpush2.msra.mxu0 0.0
  %704 = vmatprep.subr.mxu0 0.0
  %705 = vmatpush2.msra.mxu0 0.0
  %706 = vmatprep.subr.mxu0 0.0
  %707 = vmatpush2.msra.mxu0 0.0
  %708 = vmatprep.subr.mxu0 0.0
  %709 = vmatpush2.msra.mxu0 0.0
  %710 = vmatprep.subr.mxu0 0.0
  %711 = vmatpush2.msra.mxu0 0.0
  %712 = vmatprep.mubr.f32.mxu0 0.0
  %713 = vmatmul.mubr.f32.gmra.mxu0 %v630
  %v714 = vpop.f32.mrf.mxu0
  %v715 = vadd.f32 %v647, %v714
  %v716 = vpop.f32.mrf.mxu0
  %717 = vdwg.mxu0
  %v718 = vxor.u32 %v715, 2147483648
  %v719 = vmul.f32 %v718, 1.442695
  %v720 = vpow.pop %v719
  %v721 = vadd.f32 %v720, 1.0
  %v722 = vrcp.pop %v721
  %v723 = vmul.f32 1.0, %v722
  %v724 = vlaneseq
  %v725 = vshrl.u32 %v724, 7
  %v726 = vsub.s32 0, %v725
  %v727 = vrot.slane %v723, %v726
  %v728 = vmul.f32 %v528, %v727
  %v729 = vmul.f32 %v529, %v727
  %v730 = vmul.f32 %v530, %v727
  %v731 = vmul.f32 %v531, %v727
  %v732 = vld [vmem:[%s1] sm:$0xf]
  %v733 = vld [vmem:[%s1 + $0x4] sm:$0xf]
  %v734 = vld [vmem:[%s1 + $0x8] sm:$0xf]
  %v735 = vld [vmem:[%s1 + $0xc] sm:$0xf]
  %v736 = vunpack.c.l.bf16 %v732
  %v737 = vunpack.c.l.bf16 %v733
  %v738 = vunpack.c.l.bf16 %v734
  %v739 = vunpack.c.l.bf16 %v735
  %v740 = vadd.f32 %v728, %v736
  %v741 = vadd.f32 %v729, %v737
  %v742 = vadd.f32 %v730, %v738
  %v743 = vadd.f32 %v731, %v739
  %vm744 = vcmp.gt.f32.partialorder %v740, 0.0
  %vm745 = vcmp.gt.f32.partialorder %v741, 0.0
  %vm746 = vcmp.gt.f32.partialorder %v742, 0.0
  %vm747 = vcmp.gt.f32.partialorder %v743, 0.0
  %v748 = vmul.f32 %v740, 0.25
  %v749 = vmul.f32 %v741, 0.25
  %v750 = vmul.f32 %v742, 0.25
  %v751 = vmul.f32 %v743, 0.25
  %v752 = vsel %vm744, %v740, %v748
  %v753 = vsel %vm745, %v741, %v749
  %v754 = vsel %vm746, %v742, %v750
  %v755 = vsel %vm747, %v743, %v751
  %v756 = vpack.c.bf16 %v753, %v752
  %v757 = vpack.c.bf16 %v755, %v754
  %v760 = vunpack.c.l.b16 %v756
  %v761 = vunpack.c.h.b16 %v756
  %v762 = vunpack.c.l.b16 %v757
  %v763 = vunpack.c.h.b16 %v757
  %v764 = vpack.c.b16 %v760, %v760
  %v765 = vpack.c.b16 %v761, %v761
  %v766 = vpack.c.b16 %v762, %v762
  %v767 = vpack.c.b16 %v763, %v763
  %772 = vst [vmem:[%s11] sm:$0xf] %v764
  %773 = vst [vmem:[%s11 + $0x4] sm:$0xf] %v765
  %774 = vst [vmem:[%s11 + $0x8] sm:$0xf] %v766
  %775 = vst [vmem:[%s11 + $0xc] sm:$0xf] %v767
  %v776 = vld [vmem:[%s462] sm:$0xff]
  %v777 = vld [vmem:[%s462 + $0x8] sm:$0xff]
  %v778 = vld [vmem:[%s462 + $0x10] sm:$0xff]
  %v779 = vld [vmem:[%s462 + $0x18] sm:$0xff]
  %v780 = vsub.f32 %v776, %v491
  %v781 = vsub.f32 %v777, %v491
  %v782 = vsub.f32 %v778, %v491
  %v783 = vsub.f32 %v779, %v491
  %v784 = vmul.f32 %v780, %v497
  %v785 = vmul.f32 %v781, %v497
  %v786 = vmul.f32 %v782, %v497
  %v787 = vmul.f32 %v783, %v497
  %v788 = vld [vmem:[%s5] sm:$0x1]
  %v790 = vlaneseq
  %v791 = vshrl.u32 %v790, 7
  %v792 = vsub.s32 0, %v791
  %v793 = vrot.slane %v788, %v792
  %v795 = vmul.f32 %v784, %v793
  %v796 = vmul.f32 %v785, %v793
  %v797 = vmul.f32 %v786, %v793
  %v798 = vmul.f32 %v787, %v793
  %v799 = vld [vmem:[%s6] sm:$0x1]
  %v801 = vlaneseq
  %v802 = vshrl.u32 %v801, 7
  %v803 = vsub.s32 0, %v802
  %v804 = vrot.slane %v799, %v803
  %v806 = vadd.f32 %v795, %v804
  %v807 = vadd.f32 %v796, %v804
  %v808 = vadd.f32 %v797, %v804
  %v809 = vadd.f32 %v798, %v804
  %v810 = vadd.f32 %v806, %v807
  %v811 = vadd.f32 %v810, %v808
  %v812 = vadd.f32 %v811, %v809
  %v813 = vrot.slane %v812, 4
  %v814 = vadd.f32 %v812, %v813
  %v815 = vrot.slane %v814, 2
  %v816 = vadd.f32 %v814, %v815
  %v817 = vrot.slane %v816, 1
  %v818 = vadd.f32 %v816, %v817
  %v819 = vmul.f32 %v818, %v541
  %v820 = vld [vmem:[%s7] sm:$0xff]
  %v821 = vld [vmem:[%s7 + $0x8] sm:$0xff]
  %v822 = vld [vmem:[%s7 + $0x10] sm:$0xff]
  %v823 = vld [vmem:[%s7 + $0x18] sm:$0xff]
  %v824 = vld [vmem:[%s7 + $0x20] sm:$0xff]
  %v825 = vld [vmem:[%s7 + $0x28] sm:$0xff]
  %v826 = vld [vmem:[%s7 + $0x30] sm:$0xff]
  %v827 = vld [vmem:[%s7 + $0x38] sm:$0xff]
  %v828 = vld [vmem:[%s7 + $0x40] sm:$0xff]
  %v829 = vld [vmem:[%s7 + $0x48] sm:$0xff]
  %v830 = vld [vmem:[%s7 + $0x50] sm:$0xff]
  %v831 = vld [vmem:[%s7 + $0x58] sm:$0xff]
  %v832 = vld [vmem:[%s7 + $0x60] sm:$0xff]
  %v833 = vld [vmem:[%s7 + $0x68] sm:$0xff]
  %v834 = vld [vmem:[%s7 + $0x70] sm:$0xff]
  %v835 = vld [vmem:[%s7 + $0x78] sm:$0xff]
  %v836 = vld [vmem:[%s8] sm:$0x1]
  %837 = vmatprep.subr.mxu0 0.0
  %838 = vmatpush1.msra.mxu0 %v835
  %839 = vmatprep.subr.mxu0 0.0
  %840 = vmatpush1.msra.mxu0 %v834
  %841 = vmatprep.subr.mxu0 0.0
  %842 = vmatpush1.msra.mxu0 %v833
  %843 = vmatprep.subr.mxu0 0.0
  %844 = vmatpush1.msra.mxu0 %v832
  %845 = vmatprep.subr.mxu0 0.0
  %846 = vmatpush1.msra.mxu0 %v831
  %847 = vmatprep.subr.mxu0 0.0
  %848 = vmatpush1.msra.mxu0 %v830
  %849 = vmatprep.subr.mxu0 0.0
  %850 = vmatpush1.msra.mxu0 %v829
  %851 = vmatprep.subr.mxu0 0.0
  %852 = vmatpush1.msra.mxu0 %v828
  %853 = vmatprep.subr.mxu0 0.0
  %854 = vmatpush1.msra.mxu0 %v827
  %855 = vmatprep.subr.mxu0 0.0
  %856 = vmatpush1.msra.mxu0 %v826
  %857 = vmatprep.subr.mxu0 0.0
  %858 = vmatpush1.msra.mxu0 %v825
  %859 = vmatprep.subr.mxu0 0.0
  %860 = vmatpush1.msra.mxu0 %v824
  %861 = vmatprep.subr.mxu0 0.0
  %862 = vmatpush1.msra.mxu0 %v823
  %863 = vmatprep.subr.mxu0 0.0
  %864 = vmatpush1.msra.mxu0 %v822
  %865 = vmatprep.subr.mxu0 0.0
  %866 = vmatpush1.msra.mxu0 %v821
  %867 = vmatprep.subr.mxu0 0.0
  %868 = vmatpush1.msra.mxu0 %v820
  %869 = vmatprep.subr.mxu0 0.0
  %870 = vmatpush2.msra.mxu0 0.0
  %871 = vmatprep.subr.mxu0 0.0
  %872 = vmatpush2.msra.mxu0 0.0
  %873 = vmatprep.subr.mxu0 0.0
  %874 = vmatpush2.msra.mxu0 0.0
  %875 = vmatprep.subr.mxu0 0.0
  %876 = vmatpush2.msra.mxu0 0.0
  %877 = vmatprep.subr.mxu0 0.0
  %878 = vmatpush2.msra.mxu0 0.0
  %879 = vmatprep.subr.mxu0 0.0
  %880 = vmatpush2.msra.mxu0 0.0
  %881 = vmatprep.subr.mxu0 0.0
  %882 = vmatpush2.msra.mxu0 0.0
  %883 = vmatprep.subr.mxu0 0.0
  %884 = vmatpush2.msra.mxu0 0.0
  %885 = vmatprep.subr.mxu0 0.0
  %886 = vmatpush2.msra.mxu0 0.0
  %887 = vmatprep.subr.mxu0 0.0
  %888 = vmatpush2.msra.mxu0 0.0
  %889 = vmatprep.subr.mxu0 0.0
  %890 = vmatpush2.msra.mxu0 0.0
  %891 = vmatprep.subr.mxu0 0.0
  %892 = vmatpush2.msra.mxu0 0.0
  %893 = vmatprep.subr.mxu0 0.0
  %894 = vmatpush2.msra.mxu0 0.0
  %895 = vmatprep.subr.mxu0 0.0
  %896 = vmatpush2.msra.mxu0 0.0
  %897 = vmatprep.subr.mxu0 0.0
  %898 = vmatpush2.msra.mxu0 0.0
  %899 = vmatprep.subr.mxu0 0.0
  %900 = vmatpush2.msra.mxu0 0.0
  %901 = vmatprep.mubr.f32.mxu0 0.0
  %902 = vmatmul.mubr.f32.gmra.mxu0 %v819
  %v903 = vpop.f32.mrf.mxu0
  %v904 = vadd.f32 %v836, %v903
  %v905 = vpop.f32.mrf.mxu0
  %906 = vdwg.mxu0
  %v907 = vmax.f32 %v904, 0.0
  %v908 = vld [vmem:[%s9] sm:$0xff]
  %v909 = vld [vmem:[%s9 + $0x8] sm:$0xff]
  %v910 = vld [vmem:[%s9 + $0x10] sm:$0xff]
  %v911 = vld [vmem:[%s9 + $0x18] sm:$0xff]
  %v912 = vld [vmem:[%s9 + $0x20] sm:$0xff]
  %v913 = vld [vmem:[%s9 + $0x28] sm:$0xff]
  %v914 = vld [vmem:[%s9 + $0x30] sm:$0xff]
  %v915 = vld [vmem:[%s9 + $0x38] sm:$0xff]
  %v916 = vld [vmem:[%s9 + $0x40] sm:$0xff]
  %v917 = vld [vmem:[%s9 + $0x48] sm:$0xff]
  %v918 = vld [vmem:[%s9 + $0x50] sm:$0xff]
  %v919 = vld [vmem:[%s9 + $0x58] sm:$0xff]
  %v920 = vld [vmem:[%s9 + $0x60] sm:$0xff]
  %v921 = vld [vmem:[%s9 + $0x68] sm:$0xff]
  %v922 = vld [vmem:[%s9 + $0x70] sm:$0xff]
  %v923 = vld [vmem:[%s9 + $0x78] sm:$0xff]
  %v924 = vld [vmem:[%s10] sm:$0x1]
  %925 = vmatprep.subr.mxu0 0.0
  %926 = vmatpush1.msra.mxu0 %v923
  %927 = vmatprep.subr.mxu0 0.0
  %928 = vmatpush1.msra.mxu0 %v922
  %929 = vmatprep.subr.mxu0 0.0
  %930 = vmatpush1.msra.mxu0 %v921
  %931 = vmatprep.subr.mxu0 0.0
  %932 = vmatpush1.msra.mxu0 %v920
  %933 = vmatprep.subr.mxu0 0.0
  %934 = vmatpush1.msra.mxu0 %v919
  %935 = vmatprep.subr.mxu0 0.0
  %936 = vmatpush1.msra.mxu0 %v918
  %937 = vmatprep.subr.mxu0 0.0
  %938 = vmatpush1.msra.mxu0 %v917
  %939 = vmatprep.subr.mxu0 0.0
  %940 = vmatpush1.msra.mxu0 %v916
  %941 = vmatprep.subr.mxu0 0.0
  %942 = vmatpush1.msra.mxu0 %v915
  %943 = vmatprep.subr.mxu0 0.0
  %944 = vmatpush1.msra.mxu0 %v914
  %945 = vmatprep.subr.mxu0 0.0
  %946 = vmatpush1.msra.mxu0 %v913
  %947 = vmatprep.subr.mxu0 0.0
  %948 = vmatpush1.msra.mxu0 %v912
  %949 = vmatprep.subr.mxu0 0.0
  %950 = vmatpush1.msra.mxu0 %v911
  %951 = vmatprep.subr.mxu0 0.0
  %952 = vmatpush1.msra.mxu0 %v910
  %953 = vmatprep.subr.mxu0 0.0
  %954 = vmatpush1.msra.mxu0 %v909
  %955 = vmatprep.subr.mxu0 0.0
  %956 = vmatpush1.msra.mxu0 %v908
  %957 = vmatprep.subr.mxu0 0.0
  %958 = vmatpush2.msra.mxu0 0.0
  %959 = vmatprep.subr.mxu0 0.0
  %960 = vmatpush2.msra.mxu0 0.0
  %961 = vmatprep.subr.mxu0 0.0
  %962 = vmatpush2.msra.mxu0 0.0
  %963 = vmatprep.subr.mxu0 0.0
  %964 = vmatpush2.msra.mxu0 0.0
  %965 = vmatprep.subr.mxu0 0.0
  %966 = vmatpush2.msra.mxu0 0.0
  %967 = vmatprep.subr.mxu0 0.0
  %968 = vmatpush2.msra.mxu0 0.0
  %969 = vmatprep.subr.mxu0 0.0
  %970 = vmatpush2.msra.mxu0 0.0
  %971 = vmatprep.subr.mxu0 0.0
  %972 = vmatpush2.msra.mxu0 0.0
  %973 = vmatprep.subr.mxu0 0.0
  %974 = vmatpush2.msra.mxu0 0.0
  %975 = vmatprep.subr.mxu0 0.0
  %976 = vmatpush2.msra.mxu0 0.0
  %977 = vmatprep.subr.mxu0 0.0
  %978 = vmatpush2.msra.mxu0 0.0
  %979 = vmatprep.subr.mxu0 0.0
  %980 = vmatpush2.msra.mxu0 0.0
  %981 = vmatprep.subr.mxu0 0.0
  %982 = vmatpush2.msra.mxu0 0.0
  %983 = vmatprep.subr.mxu0 0.0
  %984 = vmatpush2.msra.mxu0 0.0
  %985 = vmatprep.subr.mxu0 0.0
  %986 = vmatpush2.msra.mxu0 0.0
  %987 = vmatprep.subr.mxu0 0.0
  %988 = vmatpush2.msra.mxu0 0.0
  %989 = vmatprep.mubr.f32.mxu0 0.0
  %990 = vmatmul.mubr.f32.gmra.mxu0 %v907
  %v991 = vpop.f32.mrf.mxu0
  %v992 = vadd.f32 %v924, %v991
  %v993 = vpop.f32.mrf.mxu0
  %994 = vdwg.mxu0
  %v995 = vxor.u32 %v992, 2147483648
  %v996 = vmul.f32 %v995, 1.442695
  %v997 = vpow.pop %v996
  %v998 = vadd.f32 %v997, 1.0
  %v999 = vrcp.pop %v998
  %v1000 = vmul.f32 1.0, %v999
  %v1001 = vlaneseq
  %v1002 = vshrl.u32 %v1001, 7
  %v1003 = vsub.s32 0, %v1002
  %v1004 = vrot.slane %v1000, %v1003
  %v1005 = vmul.f32 %v806, %v1004
  %v1006 = vmul.f32 %v807, %v1004
  %v1007 = vmul.f32 %v808, %v1004
  %v1008 = vmul.f32 %v809, %v1004
  %s1009 = scalar_lea.vmem %s1, 16
  %v1010 = vld [vmem:[%s1009] sm:$0xf]
  %v1011 = vld [vmem:[%s1009 + $0x4] sm:$0xf]
  %v1012 = vld [vmem:[%s1009 + $0x8] sm:$0xf]
  %v1013 = vld [vmem:[%s1009 + $0xc] sm:$0xf]
  %v1014 = vunpack.c.l.bf16 %v1010
  %v1015 = vunpack.c.l.bf16 %v1011
  %v1016 = vunpack.c.l.bf16 %v1012
  %v1017 = vunpack.c.l.bf16 %v1013
  %v1018 = vadd.f32 %v1005, %v1014
  %v1019 = vadd.f32 %v1006, %v1015
  %v1020 = vadd.f32 %v1007, %v1016
  %v1021 = vadd.f32 %v1008, %v1017
  %vm1022 = vcmp.gt.f32.partialorder %v1018, 0.0
  %vm1023 = vcmp.gt.f32.partialorder %v1019, 0.0
  %vm1024 = vcmp.gt.f32.partialorder %v1020, 0.0
  %vm1025 = vcmp.gt.f32.partialorder %v1021, 0.0
  %v1026 = vmul.f32 %v1018, 0.25
  %v1027 = vmul.f32 %v1019, 0.25
  %v1028 = vmul.f32 %v1020, 0.25
  %v1029 = vmul.f32 %v1021, 0.25
  %v1030 = vsel %vm1022, %v1018, %v1026
  %v1031 = vsel %vm1023, %v1019, %v1027
  %v1032 = vsel %vm1024, %v1020, %v1028
  %v1033 = vsel %vm1025, %v1021, %v1029
  %v1034 = vpack.c.bf16 %v1031, %v1030
  %v1035 = vpack.c.bf16 %v1033, %v1032
  %v1038 = vunpack.c.l.b16 %v1034
  %v1039 = vunpack.c.h.b16 %v1034
  %v1040 = vunpack.c.l.b16 %v1035
  %v1041 = vunpack.c.h.b16 %v1035
  %v1042 = vpack.c.b16 %v1038, %v1038
  %v1043 = vpack.c.b16 %v1039, %v1039
  %v1044 = vpack.c.b16 %v1040, %v1040
  %v1045 = vpack.c.b16 %v1041, %v1041
  %s1050 = scalar_lea.vmem %s11, 16
  %1051 = vst [vmem:[%s1050] sm:$0xf] %v1042
  %1052 = vst [vmem:[%s1050 + $0x4] sm:$0xf] %v1043
  %1053 = vst [vmem:[%s1050 + $0x8] sm:$0xf] %v1044
  %1054 = vst [vmem:[%s1050 + $0xc] sm:$0xf] %v1045
  // Predicated region
  $region46: #{resnet3d_forward.17} parent=0 // pred_check
    _
  $region47: #{resnet3d_forward.17} parent=0 // pred_check_branch
    %1056 = sbr.rel (0) target = $region49
  $region48: #{resnet3d_forward.17} parent=0 // pred_region
    _
  $region49: #{resnet3d_forward.17} parent=0 // pred_fallthru
    _
  // Predicated region
  $region50: #{resnet3d_forward.17} parent=0 // pred_check
    _
  $region51: #{resnet3d_forward.17} parent=0 // pred_check_branch
    %1058 = sbr.rel (0) target = $region53
  $region52: #{resnet3d_forward.17} parent=0 // pred_region
    _
  $region53: #{resnet3d_forward.17} parent=0 // pred_fallthru
    _

// kernel: resnet3d_forward.27
$region0: #{resnet3d_forward.27}
  #allocation0 [shape = 'u32[]', space=smem, size = 0x4, offset = 0x4, fixed_abs, tag = 'smem constant byte address 0x4 - core index']
  #allocation1 [shape = 'u32[144,128]{1,0:T(1,128)}', space=vmem, size = 0x12000, scoped, tag = 'internal scratch']
  %s0 = inlined_call_operand.vmem [shape: bf16[2,32,128], index: 0, kind: input, shape index: {}]
  %s1 = inlined_call_operand.vmem [shape: f32[128,128], index: 1, kind: input, shape index: {}]
  %s2 = inlined_call_operand.vmem [shape: f32[1,128], index: 2, kind: input, shape index: {}]
  %s3 = inlined_call_operand.hbm [shape: f32[2,128], index: 3, kind: output, shape index: {}]
  %s4 = sld [smem:[#allocation0]]
  $region22: #{resnet3d_forward.27} parent=0
    _
  %s6 = ssub.s32 1, %s4
  %s7 = scalar_select 0, %s6, %s4
  $region1: #{resnet3d_forward.27} parent=0
    #allocation2 [shape = 'u8[1024]{0}', space=vmem, size = 0x400, scoped, tag = 'output window, operand 0, single buffered']
    #allocation3 [shape = 's32[1]{0}', space=sflag, size = 0x4, scoped, tag = 'scoped memory for resnet3d_forward.27']
    %8 = vsyncpa [#allocation3], 0
    // Predicated region
    $region2: #{resnet3d_forward.27} parent=1 // pred_check
      _
    $region3: #{resnet3d_forward.27} parent=1 // pred_check_branch
      %10 = sbr.rel (0) target = $region5
    $region4: #{resnet3d_forward.27} parent=1 // pred_region
      _
    $region5: #{resnet3d_forward.27} parent=1 // pred_fallthru
      _
    // Predicated region
    $region6: #{resnet3d_forward.27} parent=1 // pred_check
      _
    $region7: #{resnet3d_forward.27} parent=1 // pred_check_branch
      %12 = sbr.rel (0) target = $region9
    $region8: #{resnet3d_forward.27} parent=1 // pred_region
      _
    $region9: #{resnet3d_forward.27} parent=1 // pred_fallthru
      _
    // Predicated region
    $region10: #{resnet3d_forward.27} parent=1 // pred_check
      _
    $region11: #{resnet3d_forward.27} parent=1 // pred_check_branch
      %14 = sbr.rel (0) target = $region13
    $region12: #{resnet3d_forward.27} parent=1 // pred_region
      _
    $region13: #{resnet3d_forward.27} parent=1 // pred_fallthru
      _
    %v15 = vld [vmem:[%s0] sm:$0xf]
    %v16 = vld [vmem:[%s0 + $0x4] sm:$0xf]
    %v17 = vld [vmem:[%s0 + $0x8] sm:$0xf]
    %v18 = vld [vmem:[%s0 + $0xc] sm:$0xf]
    %v19 = vunpack.c.l.bf16 %v15
    %v20 = vunpack.c.l.bf16 %v16
    %v21 = vunpack.c.l.bf16 %v17
    %v22 = vunpack.c.l.bf16 %v18
    %v23 = vadd.f32 %v19, %v20
    %v24 = vadd.f32 %v23, %v21
    %v25 = vadd.f32 %v24, %v22
    %v26 = vrot.slane %v25, 4
    %v27 = vadd.f32 %v25, %v26
    %v28 = vrot.slane %v27, 2
    %v29 = vadd.f32 %v27, %v28
    %v30 = vrot.slane %v29, 1
    %v31 = vadd.f32 %v29, %v30
    %v32 = vrcp.pop 32.0
    %v33 = vmul.f32 %v31, %v32
    %v34 = vld [vmem:[%s1] sm:$0xff]
    %v35 = vld [vmem:[%s1 + $0x8] sm:$0xff]
    %v36 = vld [vmem:[%s1 + $0x10] sm:$0xff]
    %v37 = vld [vmem:[%s1 + $0x18] sm:$0xff]
    %v38 = vld [vmem:[%s1 + $0x20] sm:$0xff]
    %v39 = vld [vmem:[%s1 + $0x28] sm:$0xff]
    %v40 = vld [vmem:[%s1 + $0x30] sm:$0xff]
    %v41 = vld [vmem:[%s1 + $0x38] sm:$0xff]
    %v42 = vld [vmem:[%s1 + $0x40] sm:$0xff]
    %v43 = vld [vmem:[%s1 + $0x48] sm:$0xff]
    %v44 = vld [vmem:[%s1 + $0x50] sm:$0xff]
    %v45 = vld [vmem:[%s1 + $0x58] sm:$0xff]
    %v46 = vld [vmem:[%s1 + $0x60] sm:$0xff]
    %v47 = vld [vmem:[%s1 + $0x68] sm:$0xff]
    %v48 = vld [vmem:[%s1 + $0x70] sm:$0xff]
    %v49 = vld [vmem:[%s1 + $0x78] sm:$0xff]
    %v50 = vld [vmem:[%s2] sm:$0x1]
    %51 = vmatprep.subr.mxu0 0.0
    %52 = vmatpush1.msra.mxu0 %v49
    %53 = vmatprep.subr.mxu0 0.0
    %54 = vmatpush1.msra.mxu0 %v48
    %55 = vmatprep.subr.mxu0 0.0
    %56 = vmatpush1.msra.mxu0 %v47
    %57 = vmatprep.subr.mxu0 0.0
    %58 = vmatpush1.msra.mxu0 %v46
    %59 = vmatprep.subr.mxu0 0.0
    %60 = vmatpush1.msra.mxu0 %v45
    %61 = vmatprep.subr.mxu0 0.0
    %62 = vmatpush1.msra.mxu0 %v44
    %63 = vmatprep.subr.mxu0 0.0
    %64 = vmatpush1.msra.mxu0 %v43
    %65 = vmatprep.subr.mxu0 0.0
    %66 = vmatpush1.msra.mxu0 %v42
    %67 = vmatprep.subr.mxu0 0.0
    %68 = vmatpush1.msra.mxu0 %v41
    %69 = vmatprep.subr.mxu0 0.0
    %70 = vmatpush1.msra.mxu0 %v40
    %71 = vmatprep.subr.mxu0 0.0
    %72 = vmatpush1.msra.mxu0 %v39
    %73 = vmatprep.subr.mxu0 0.0
    %74 = vmatpush1.msra.mxu0 %v38
    %75 = vmatprep.subr.mxu0 0.0
    %76 = vmatpush1.msra.mxu0 %v37
    %77 = vmatprep.subr.mxu0 0.0
    %78 = vmatpush1.msra.mxu0 %v36
    %79 = vmatprep.subr.mxu0 0.0
    %80 = vmatpush1.msra.mxu0 %v35
    %81 = vmatprep.subr.mxu0 0.0
    %82 = vmatpush1.msra.mxu0 %v34
    %83 = vmatprep.subr.mxu0 0.0
    %84 = vmatpush2.msra.mxu0 0.0
    %85 = vmatprep.subr.mxu0 0.0
    %86 = vmatpush2.msra.mxu0 0.0
    %87 = vmatprep.subr.mxu0 0.0
    %88 = vmatpush2.msra.mxu0 0.0
    %89 = vmatprep.subr.mxu0 0.0
    %90 = vmatpush2.msra.mxu0 0.0
    %91 = vmatprep.subr.mxu0 0.0
    %92 = vmatpush2.msra.mxu0 0.0
    %93 = vmatprep.subr.mxu0 0.0
    %94 = vmatpush2.msra.mxu0 0.0
    %95 = vmatprep.subr.mxu0 0.0
    %96 = vmatpush2.msra.mxu0 0.0
    %97 = vmatprep.subr.mxu0 0.0
    %98 = vmatpush2.msra.mxu0 0.0
    %99 = vmatprep.subr.mxu0 0.0
    %100 = vmatpush2.msra.mxu0 0.0
    %101 = vmatprep.subr.mxu0 0.0
    %102 = vmatpush2.msra.mxu0 0.0
    %103 = vmatprep.subr.mxu0 0.0
    %104 = vmatpush2.msra.mxu0 0.0
    %105 = vmatprep.subr.mxu0 0.0
    %106 = vmatpush2.msra.mxu0 0.0
    %107 = vmatprep.subr.mxu0 0.0
    %108 = vmatpush2.msra.mxu0 0.0
    %109 = vmatprep.subr.mxu0 0.0
    %110 = vmatpush2.msra.mxu0 0.0
    %111 = vmatprep.subr.mxu0 0.0
    %112 = vmatpush2.msra.mxu0 0.0
    %113 = vmatprep.subr.mxu0 0.0
    %114 = vmatpush2.msra.mxu0 0.0
    %115 = vmatprep.mubr.f32.mxu0 0.0
    %116 = vmatmul.mubr.f32.gmra.mxu0 %v33
    %v117 = vpop.f32.mrf.mxu0
    %v118 = vadd.f32 %v50, %v117
    %v119 = vpop.f32.mrf.mxu0
    %120 = vdwg.mxu0
    %121 = vst [vmem:[#allocation2] sm:$0x1] %v118
    %s122 = scalar_lea.vmem %s0, 16
    %v123 = vld [vmem:[%s122] sm:$0xf]
    %v124 = vld [vmem:[%s122 + $0x4] sm:$0xf]
    %v125 = vld [vmem:[%s122 + $0x8] sm:$0xf]
    %v126 = vld [vmem:[%s122 + $0xc] sm:$0xf]
    %v127 = vunpack.c.l.bf16 %v123
    %v128 = vunpack.c.l.bf16 %v124
    %v129 = vunpack.c.l.bf16 %v125
    %v130 = vunpack.c.l.bf16 %v126
    %v131 = vadd.f32 %v127, %v128
    %v132 = vadd.f32 %v131, %v129
    %v133 = vadd.f32 %v132, %v130
    %v134 = vrot.slane %v133, 4
    %v135 = vadd.f32 %v133, %v134
    %v136 = vrot.slane %v135, 2
    %v137 = vadd.f32 %v135, %v136
    %v138 = vrot.slane %v137, 1
    %v139 = vadd.f32 %v137, %v138
    %v140 = vmul.f32 %v139, %v32
    %v141 = vld [vmem:[%s1] sm:$0xff]
    %v142 = vld [vmem:[%s1 + $0x8] sm:$0xff]
    %v143 = vld [vmem:[%s1 + $0x10] sm:$0xff]
    %v144 = vld [vmem:[%s1 + $0x18] sm:$0xff]
    %v145 = vld [vmem:[%s1 + $0x20] sm:$0xff]
    %v146 = vld [vmem:[%s1 + $0x28] sm:$0xff]
    %v147 = vld [vmem:[%s1 + $0x30] sm:$0xff]
    %v148 = vld [vmem:[%s1 + $0x38] sm:$0xff]
    %v149 = vld [vmem:[%s1 + $0x40] sm:$0xff]
    %v150 = vld [vmem:[%s1 + $0x48] sm:$0xff]
    %v151 = vld [vmem:[%s1 + $0x50] sm:$0xff]
    %v152 = vld [vmem:[%s1 + $0x58] sm:$0xff]
    %v153 = vld [vmem:[%s1 + $0x60] sm:$0xff]
    %v154 = vld [vmem:[%s1 + $0x68] sm:$0xff]
    %v155 = vld [vmem:[%s1 + $0x70] sm:$0xff]
    %v156 = vld [vmem:[%s1 + $0x78] sm:$0xff]
    %v157 = vld [vmem:[%s2] sm:$0x1]
    %158 = vmatprep.subr.mxu0 0.0
    %159 = vmatpush1.msra.mxu0 %v156
    %160 = vmatprep.subr.mxu0 0.0
    %161 = vmatpush1.msra.mxu0 %v155
    %162 = vmatprep.subr.mxu0 0.0
    %163 = vmatpush1.msra.mxu0 %v154
    %164 = vmatprep.subr.mxu0 0.0
    %165 = vmatpush1.msra.mxu0 %v153
    %166 = vmatprep.subr.mxu0 0.0
    %167 = vmatpush1.msra.mxu0 %v152
    %168 = vmatprep.subr.mxu0 0.0
    %169 = vmatpush1.msra.mxu0 %v151
    %170 = vmatprep.subr.mxu0 0.0
    %171 = vmatpush1.msra.mxu0 %v150
    %172 = vmatprep.subr.mxu0 0.0
    %173 = vmatpush1.msra.mxu0 %v149
    %174 = vmatprep.subr.mxu0 0.0
    %175 = vmatpush1.msra.mxu0 %v148
    %176 = vmatprep.subr.mxu0 0.0
    %177 = vmatpush1.msra.mxu0 %v147
    %178 = vmatprep.subr.mxu0 0.0
    %179 = vmatpush1.msra.mxu0 %v146
    %180 = vmatprep.subr.mxu0 0.0
    %181 = vmatpush1.msra.mxu0 %v145
    %182 = vmatprep.subr.mxu0 0.0
    %183 = vmatpush1.msra.mxu0 %v144
    %184 = vmatprep.subr.mxu0 0.0
    %185 = vmatpush1.msra.mxu0 %v143
    %186 = vmatprep.subr.mxu0 0.0
    %187 = vmatpush1.msra.mxu0 %v142
    %188 = vmatprep.subr.mxu0 0.0
    %189 = vmatpush1.msra.mxu0 %v141
    %190 = vmatprep.subr.mxu0 0.0
    %191 = vmatpush2.msra.mxu0 0.0
    %192 = vmatprep.subr.mxu0 0.0
    %193 = vmatpush2.msra.mxu0 0.0
    %194 = vmatprep.subr.mxu0 0.0
    %195 = vmatpush2.msra.mxu0 0.0
    %196 = vmatprep.subr.mxu0 0.0
    %197 = vmatpush2.msra.mxu0 0.0
    %198 = vmatprep.subr.mxu0 0.0
    %199 = vmatpush2.msra.mxu0 0.0
    %200 = vmatprep.subr.mxu0 0.0
    %201 = vmatpush2.msra.mxu0 0.0
    %202 = vmatprep.subr.mxu0 0.0
    %203 = vmatpush2.msra.mxu0 0.0
    %204 = vmatprep.subr.mxu0 0.0
    %205 = vmatpush2.msra.mxu0 0.0
    %206 = vmatprep.subr.mxu0 0.0
    %207 = vmatpush2.msra.mxu0 0.0
    %208 = vmatprep.subr.mxu0 0.0
    %209 = vmatpush2.msra.mxu0 0.0
    %210 = vmatprep.subr.mxu0 0.0
    %211 = vmatpush2.msra.mxu0 0.0
    %212 = vmatprep.subr.mxu0 0.0
    %213 = vmatpush2.msra.mxu0 0.0
    %214 = vmatprep.subr.mxu0 0.0
    %215 = vmatpush2.msra.mxu0 0.0
    %216 = vmatprep.subr.mxu0 0.0
    %217 = vmatpush2.msra.mxu0 0.0
    %218 = vmatprep.subr.mxu0 0.0
    %219 = vmatpush2.msra.mxu0 0.0
    %220 = vmatprep.subr.mxu0 0.0
    %221 = vmatpush2.msra.mxu0 0.0
    %222 = vmatprep.mubr.f32.mxu0 0.0
    %223 = vmatmul.mubr.f32.gmra.mxu0 %v140
    %v224 = vpop.f32.mrf.mxu0
    %v225 = vadd.f32 %v157, %v224
    %v226 = vpop.f32.mrf.mxu0
    %227 = vdwg.mxu0
    %228 = vst [vmem:[#allocation2 + $0x1] sm:$0x1] %v225
    // Predicated region
    $region14: #{resnet3d_forward.27} parent=1 // pred_check
      _
    $region15: #{resnet3d_forward.27} parent=1 // pred_check_branch
      %230 = sbr.rel (0) target = $region17
    $region16: #{resnet3d_forward.27} parent=1 // pred_region
      %s232 = ssub.s32 32, 32
      %233 = vsyncadd [#allocation3], %s232
      %s235 = sshll.u32 [#allocation2], 4
      %s236 = int_to_ptr.vmem [resolvable:$true] %s235
      %238 = dma.vmem_to_hbm [thread:$0]  %s236, 32, %s3, [#allocation3]
    $region17: #{resnet3d_forward.27} parent=1 // pred_fallthru
      _
    // Predicated region
    $region18: #{resnet3d_forward.27} parent=1 // pred_check
      _
    $region19: #{resnet3d_forward.27} parent=1 // pred_check_branch
      %240 = sbr.rel (0) target = $region21
    $region20: #{resnet3d_forward.27} parent=1 // pred_region
      %241 = dma.done [#allocation3], 32
    $region21: #{resnet3d_forward.27} parent=1 // pred_fallthru
      _
    %242 = vsyncpa [#allocation3], 1

// kernel: resnet3d_forward.16
$region0: #{resnet3d_forward.16}
  #allocation0 [shape = 'u32[]', space=smem, size = 0x4, offset = 0x4, fixed_abs, tag = 'smem constant byte address 0x4 - core index']
  #allocation1 [shape = 'u32[144,128]{1,0:T(1,128)}', space=vmem, size = 0x12000, scoped, tag = 'internal scratch']
  #allocation2 [shape = 'bf16[384,128]{1,0:T(8,128)(2,1)}', space=vmem, size = 0x18000, scoped, tag = 'scratch operand']
  %s0 = inlined_call_operand.vmem [shape: bf16[2,32,128], index: 0, kind: input, shape index: {}]
  %s1 = inlined_call_operand.vmem [shape: bf16[27,128,128], index: 1, kind: input, shape index: {}]
  %s2 = inlined_call_operand.vmem [shape: bf16[2,32,128], index: 2, kind: output, shape index: {}]
  %s3 = sld [smem:[#allocation0]]
  $region41: #{resnet3d_forward.16} parent=0
    _
  %s5 = ssub.s32 1, %s3
  %s6 = scalar_select 0, %s5, %s3
  loop: start=0, step=1, limit=4
  $region2: #{resnet3d_forward.16} parent=0 // loop_pre_header
    _
  $region3: #{resnet3d_forward.16} parent=0 // loop_header
    %s8 = sphi 0, %s12
    %p9 = scmp.ge.s32.totalorder %s8, 4
    %s18 = sphi 0, %s20
    %s21 = sphi 0, %s18
    %s22 = sphi 0, %s21
    %s38 = sphi 0, %s22
    %s42 = sphi 0, %s42
    %s44 = sphi 0, %s42
    %s45 = sphi 0, %s44
    %s59 = sphi 0, %s45
    %s65 = sphi 0, %s67
    %s68 = sphi 0, %s65
    %s69 = sphi 0, %s68
    %s85 = sphi 0, %s69
  $region4: #{resnet3d_forward.16} parent=0 // loop_header_branch
    %11 = sbr.rel (%p9) target = $region8
  $region5: #{resnet3d_forward.16} parent=0 // loop_body
    %s13 = ssub.s32 %s8, 1
    %s14 = ssub.s32 %s8, 2
    %s15 = sadd.s32 %s8, 1
    %s16 = ssub.s32 %s8, %s15
    %p17 = scmp.eq.s32.totalorder %s16, 0
    %s19 = sadd.s32 %s18, 1
    %s20 = scalar_select %p17, %s18, %s19
    %p23 = pneg %p17
    %p24 = scmp.eq.s32.totalorder %s8, 1
    %p25 = por %p23, %p24
    %p26 = scmp.ne.s32.totalorder %s18, %s21
    %p27 = scmp.eq.s32.totalorder %s8, 0
    %p28 = por %p26, %p27
    %p29 = scmp.ne.s32.totalorder %s18, %s21
    %p30 = scmp.eq.s32.totalorder %s13, 1
    %p31 = por %p29, %p30
    %p32 = scmp.ne.s32.totalorder %s21, %s22
    %p33 = scmp.eq.s32.totalorder %s13, 0
    %p34 = por %p32, %p33
    %p35 = scmp.ne.s32.totalorder %s21, %s22
    %p36 = scmp.eq.s32.totalorder %s14, 1
    %p37 = por %p35, %p36
    %p39 = scmp.ne.s32.totalorder %s22, %s38
    %p40 = scmp.eq.s32.totalorder %s14, 0
    %p41 = por %p39, %p40
    %s43 = sadd.s32 %s42, 1
    %p46 = scmp.eq.s32.totalorder %s8, 1
    %p47 = scmp.ne.s32.totalorder %s42, %s44
    %p48 = scmp.eq.s32.totalorder %s8, 0
    %p49 = por %p47, %p48
    %p50 = scmp.ne.s32.totalorder %s42, %s44
    %p51 = scmp.eq.s32.totalorder %s13, 1
    %p52 = por %p50, %p51
    %p53 = scmp.ne.s32.totalorder %s44, %s45
    %p54 = scmp.eq.s32.totalorder %s13, 0
    %p55 = por %p53, %p54
    %p56 = scmp.ne.s32.totalorder %s44, %s45
    %p57 = scmp.eq.s32.totalorder %s14, 1
    %p58 = por %p56, %p57
    %p60 = scmp.ne.s32.totalorder %s45, %s59
    %p61 = scmp.eq.s32.totalorder %s14, 0
    %p62 = por %p60, %p61
    %s63 = ssub.s32 %s8, %s15
    %p64 = scmp.eq.s32.totalorder %s63, 0
    %s66 = sadd.s32 %s65, 1
    %s67 = scalar_select %p64, %s65, %s66
    %p70 = pneg %p64
    %p71 = scmp.eq.s32.totalorder %s8, 1
    %p72 = por %p70, %p71
    %p73 = scmp.ne.s32.totalorder %s65, %s68
    %p74 = scmp.eq.s32.totalorder %s8, 0
    %p75 = por %p73, %p74
    %p76 = scmp.ne.s32.totalorder %s65, %s68
    %p77 = scmp.eq.s32.totalorder %s13, 1
    %p78 = por %p76, %p77
    %p79 = scmp.ne.s32.totalorder %s68, %s69
    %p80 = scmp.eq.s32.totalorder %s13, 0
    %p81 = por %p79, %p80
    %p82 = scmp.ne.s32.totalorder %s68, %s69
    %p83 = scmp.eq.s32.totalorder %s14, 1
    %p84 = por %p82, %p83
    %p86 = scmp.ne.s32.totalorder %s69, %s85
    %p87 = scmp.eq.s32.totalorder %s14, 0
    %p88 = por %p86, %p87
    %p89 = scmp.le.s32.totalorder 1, %s8
    %p90 = scmp.lt.s32.totalorder %s8, 3
    %p91 = pnand %p89, %p90
    %p92 = pneg %p91
    // Predicated region
    $region9: #{resnet3d_forward.16} parent=5 // pred_check
      _
    $region10: #{resnet3d_forward.16} parent=5 // pred_check_branch
      %94 = sbr.rel (%p91) target = $region12
    $region11: #{resnet3d_forward.16} parent=5 // pred_region
      %s95 = ssub.s32 %s8, 1
      // Predicated region
      $region13: #{resnet3d_forward.16} parent=11 // pred_check
        %p96 = pneg %p55
      $region14: #{resnet3d_forward.16} parent=11 // pred_check_branch
        %98 = sbr.rel (%p96) target = $region16
      $region15: #{resnet3d_forward.16} parent=11 // pred_region
        _
      $region16: #{resnet3d_forward.16} parent=11 // pred_fallthru
        _
    $region12: #{resnet3d_forward.16} parent=5 // pred_fallthru
      _
    %p99 = scmp.lt.s32.totalorder %s8, 2
    // Predicated region
    $region17: #{resnet3d_forward.16} parent=5 // pred_check
      %p100 = pneg %p99
    $region18: #{resnet3d_forward.16} parent=5 // pred_check_branch
      %102 = sbr.rel (%p100) target = $region20
    $region19: #{resnet3d_forward.16} parent=5 // pred_region
      // Predicated region
      $region21: #{resnet3d_forward.16} parent=19 // pred_check
        %p103 = pneg %p28
      $region22: #{resnet3d_forward.16} parent=19 // pred_check_branch
        %105 = sbr.rel (%p103) target = $region24
      $region23: #{resnet3d_forward.16} parent=19 // pred_region
        %p106 = scmp.lt.s32.totalorder %s8, 1
        %s107 = scalar_select %p106, %s8, 1
        %s108 = smul.addr %s107, 4
        %s109 = smul.addr %s108, 4
        %s110 = scalar_lea.vmem %s0, %s109
      $region24: #{resnet3d_forward.16} parent=19 // pred_fallthru
        _
    $region20: #{resnet3d_forward.16} parent=5 // pred_fallthru
      _
    %p111 = scmp.le.s32.totalorder 1, %s8
    %p112 = scmp.lt.s32.totalorder %s8, 3
    %p113 = pnand %p111, %p112
    %p114 = pneg %p113
    // Predicated region
    $region25: #{resnet3d_forward.16} parent=5 // pred_check
      _
    $region26: #{resnet3d_forward.16} parent=5 // pred_check_branch
      %116 = sbr.rel (%p113) target = $region28
    $region27: #{resnet3d_forward.16} parent=5 // pred_region
      %s117 = ssub.s32 %s8, 1
      %p118 = scmp.lt.s32.totalorder %s13, 1
      %s119 = scalar_select %p118, %s13, 1
      %s120 = smul.addr %s119, 4
      %s121 = smul.addr %s120, 4
      %s122 = scalar_lea.vmem %s0, %s121
      %p123 = pneg %p34
      %p124 = pneg %p31
      %p125 = pneg %p55
      %p126 = pneg %p52
      %p127 = pneg %p81
      %p128 = pneg %p78
      %p129 = scmp.lt.s32.totalorder %s13, 1
      %s130 = scalar_select %p129, %s13, 1
      %s131 = smul.addr %s130, 4
      %s132 = smul.addr %s131, 4
      %s133 = scalar_lea.vmem %s2, %s132
      %p134 = scmp.lt.s32.totalorder %s13, 1
      %s135 = scalar_select %p134, %s13, 1
      %s136 = smul.addr %s135, 4
      %s137 = smul.addr %s136, 4
      %s138 = scalar_lea.vmem %s0, %s137
      %p139 = scmp.lt.s32.totalorder %s13, 1
      %s140 = scalar_select %p139, %s13, 1
      %s141 = smul.addr %s140, 4
      %s142 = smul.addr %s141, 4
      %s143 = scalar_lea.vmem %s2, %s142
      %145 = vst [vmem:[#allocation2] sm:$0xf] 0
      %146 = vst [vmem:[#allocation2 + $0x4] sm:$0xf] 0
      %147 = vst [vmem:[#allocation2 + $0x8] sm:$0xf] 0
      %148 = vst [vmem:[#allocation2 + $0xc] sm:$0xf] 0
      %149 = vst [vmem:[#allocation2 + $0x10] sm:$0xf] 0
      %150 = vst [vmem:[#allocation2 + $0x14] sm:$0xf] 0
      %151 = vst [vmem:[#allocation2 + $0x18] sm:$0xf] 0
      %152 = vst [vmem:[#allocation2 + $0x1c] sm:$0xf] 0
      %153 = vst [vmem:[#allocation2 + $0x20] sm:$0xf] 0
      %154 = vst [vmem:[#allocation2 + $0x24] sm:$0xf] 0
      %155 = vst [vmem:[#allocation2 + $0x28] sm:$0xf] 0
      %156 = vst [vmem:[#allocation2 + $0x2c] sm:$0xf] 0
      %157 = vst [vmem:[#allocation2 + $0x30] sm:$0xf] 0
      %158 = vst [vmem:[#allocation2 + $0x34] sm:$0xf] 0
      %159 = vst [vmem:[#allocation2 + $0x38] sm:$0xf] 0
      %160 = vst [vmem:[#allocation2 + $0x3c] sm:$0xf] 0
      %161 = vst [vmem:[#allocation2 + $0x40] sm:$0xf] 0
      %162 = vst [vmem:[#allocation2 + $0x44] sm:$0xf] 0
      %163 = vst [vmem:[#allocation2 + $0x48] sm:$0xf] 0
      %164 = vst [vmem:[#allocation2 + $0x4c] sm:$0xf] 0
      %165 = vst [vmem:[#allocation2 + $0x50] sm:$0xf] 0
      %166 = vst [vmem:[#allocation2 + $0x54] sm:$0xf] 0
      %167 = vst [vmem:[#allocation2 + $0x58] sm:$0xf] 0
      %168 = vst [vmem:[#allocation2 + $0x5c] sm:$0xf] 0
      %169 = vst [vmem:[#allocation2 + $0x60] sm:$0xf] 0
      %170 = vst [vmem:[#allocation2 + $0x64] sm:$0xf] 0
      %171 = vst [vmem:[#allocation2 + $0x68] sm:$0xf] 0
      %172 = vst [vmem:[#allocation2 + $0x6c] sm:$0xf] 0
      %173 = vst [vmem:[#allocation2 + $0x70] sm:$0xf] 0
      %174 = vst [vmem:[#allocation2 + $0x74] sm:$0xf] 0
      %175 = vst [vmem:[#allocation2 + $0x78] sm:$0xf] 0
      %176 = vst [vmem:[#allocation2 + $0x7c] sm:$0xf] 0
      %177 = vst [vmem:[#allocation2 + $0x80] sm:$0xf] 0
      %178 = vst [vmem:[#allocation2 + $0x84] sm:$0xf] 0
      %179 = vst [vmem:[#allocation2 + $0x88] sm:$0xf] 0
      %180 = vst [vmem:[#allocation2 + $0x8c] sm:$0xf] 0
      %181 = vst [vmem:[#allocation2 + $0x90] sm:$0xf] 0
      %182 = vst [vmem:[#allocation2 + $0x94] sm:$0xf] 0
      %183 = vst [vmem:[#allocation2 + $0x98] sm:$0xf] 0
      %184 = vst [vmem:[#allocation2 + $0x9c] sm:$0xf] 0
      %185 = vst [vmem:[#allocation2 + $0xa0] sm:$0xf] 0
      %186 = vst [vmem:[#allocation2 + $0xa4] sm:$0xf] 0
      %187 = vst [vmem:[#allocation2 + $0xa8] sm:$0xf] 0
      %188 = vst [vmem:[#allocation2 + $0xac] sm:$0xf] 0
      %189 = vst [vmem:[#allocation2 + $0xb0] sm:$0xf] 0
      %190 = vst [vmem:[#allocation2 + $0xb4] sm:$0xf] 0
      %191 = vst [vmem:[#allocation2 + $0xb8] sm:$0xf] 0
      %192 = vst [vmem:[#allocation2 + $0xbc] sm:$0xf] 0
      %v193 = vld [vmem:[%s138] sm:$0x3]
      %v195 = vrot.slane %v193, 7
      %197 = vst [vmem:[#allocation2 + $0x48] sm:$0x6] %v195
      %v198 = vld [vmem:[%s138] sm:$0xc]
      %v200 = vrot.slane %v198, 5
      %v201 = vrot.slane %v200, 4
      %203 = vst [vmem:[#allocation2 + $0x4c] sm:$0x6] %v201
      %v204 = vld [vmem:[%s138 + $0x4] sm:$0x3]
      %v206 = vrot.slane %v204, 7
      %208 = vst [vmem:[#allocation2 + $0x50] sm:$0x6] %v206
      %v209 = vld [vmem:[%s138 + $0x4] sm:$0xc]
      %v211 = vrot.slane %v209, 5
      %v212 = vrot.slane %v211, 4
      %214 = vst [vmem:[#allocation2 + $0x54] sm:$0x6] %v212
      %v215 = vld [vmem:[%s138 + $0x8] sm:$0x3]
      %v217 = vrot.slane %v215, 7
      %219 = vst [vmem:[#allocation2 + $0x68] sm:$0x6] %v217
      %v220 = vld [vmem:[%s138 + $0x8] sm:$0xc]
      %v222 = vrot.slane %v220, 5
      %v223 = vrot.slane %v222, 4
      %225 = vst [vmem:[#allocation2 + $0x6c] sm:$0x6] %v223
      %v226 = vld [vmem:[%s138 + $0xc] sm:$0x3]
      %v228 = vrot.slane %v226, 7
      %230 = vst [vmem:[#allocation2 + $0x70] sm:$0x6] %v228
      %v231 = vld [vmem:[%s138 + $0xc] sm:$0xc]
      %v233 = vrot.slane %v231, 5
      %v234 = vrot.slane %v233, 4
      %236 = vst [vmem:[#allocation2 + $0x74] sm:$0x6] %v234
      %v237 = vld [vmem:[#allocation2] sm:$0xf]
      %v238 = vld [vmem:[#allocation2 + $0x4] sm:$0xf]
      %v239 = vld [vmem:[#allocation2 + $0x8] sm:$0xf]
      %v240 = vld [vmem:[#allocation2 + $0xc] sm:$0xf]
      %v241 = vld [vmem:[#allocation2 + $0x10] sm:$0xf]
      %v242 = vld [vmem:[#allocation2 + $0x14] sm:$0xf]
      %v243 = vld [vmem:[#allocation2 + $0x18] sm:$0xf]
      %v244 = vld [vmem:[#allocation2 + $0x1c] sm:$0xf]
      %v245 = vld [vmem:[#allocation2 + $0x20] sm:$0xf]
      %v246 = vld [vmem:[#allocation2 + $0x24] sm:$0xf]
      %v247 = vld [vmem:[#allocation2 + $0x28] sm:$0xf]
      %v248 = vld [vmem:[#allocation2 + $0x2c] sm:$0x3]
      %v249 = vld [vmem:[%s1] sm:$0xf]
      %v250 = vld [vmem:[%s1 + $0x4] sm:$0xf]
      %v251 = vld [vmem:[%s1 + $0x8] sm:$0xf]
      %v252 = vld [vmem:[%s1 + $0xc] sm:$0xf]
      %v253 = vld [vmem:[%s1 + $0x10] sm:$0xf]
      %v254 = vld [vmem:[%s1 + $0x14] sm:$0xf]
      %v255 = vld [vmem:[%s1 + $0x18] sm:$0xf]
      %v256 = vld [vmem:[%s1 + $0x1c] sm:$0xf]
      %v257 = vld [vmem:[%s1 + $0x20] sm:$0xf]
      %v258 = vld [vmem:[%s1 + $0x24] sm:$0xf]
      %v259 = vld [vmem:[%s1 + $0x28] sm:$0xf]
      %v260 = vld [vmem:[%s1 + $0x2c] sm:$0xf]
      %v261 = vld [vmem:[%s1 + $0x30] sm:$0xf]
      %v262 = vld [vmem:[%s1 + $0x34] sm:$0xf]
      %v263 = vld [vmem:[%s1 + $0x38] sm:$0xf]
      %v264 = vld [vmem:[%s1 + $0x3c] sm:$0xf]
      %v265 = vld [vmem:[#allocation2] sm:$0xe]
      %v266 = vld [vmem:[#allocation2 + $0x2c] sm:$0x7]
      %s267 = scalar_lea.vmem %s1, 64
      %v268 = vld [vmem:[%s267] sm:$0xf]
      %v269 = vld [vmem:[%s267 + $0x4] sm:$0xf]
      %v270 = vld [vmem:[%s267 + $0x8] sm:$0xf]
      %v271 = vld [vmem:[%s267 + $0xc] sm:$0xf]
      %v272 = vld [vmem:[%s267 + $0x10] sm:$0xf]
      %v273 = vld [vmem:[%s267 + $0x14] sm:$0xf]
      %v274 = vld [vmem:[%s267 + $0x18] sm:$0xf]
      %v275 = vld [vmem:[%s267 + $0x1c] sm:$0xf]
      %v276 = vld [vmem:[%s267 + $0x20] sm:$0xf]
      %v277 = vld [vmem:[%s267 + $0x24] sm:$0xf]
      %v278 = vld [vmem:[%s267 + $0x28] sm:$0xf]
      %v279 = vld [vmem:[%s267 + $0x2c] sm:$0xf]
      %v280 = vld [vmem:[%s267 + $0x30] sm:$0xf]
      %v281 = vld [vmem:[%s267 + $0x34] sm:$0xf]
      %v282 = vld [vmem:[%s267 + $0x38] sm:$0xf]
      %v283 = vld [vmem:[%s267 + $0x3c] sm:$0xf]
      %v296 = vunpack.c.l.b16 %v265
      %v297 = vunpack.c.l.b16 %v238
      %v298 = vunpack.c.l.b16 %v239
      %v299 = vunpack.c.l.b16 %v240
      %v300 = vunpack.c.l.b16 %v241
      %v301 = vunpack.c.l.b16 %v242
      %v302 = vunpack.c.l.b16 %v243
      %v303 = vunpack.c.l.b16 %v244
      %v304 = vunpack.c.l.b16 %v245
      %v305 = vunpack.c.l.b16 %v246
      %v306 = vunpack.c.l.b16 %v247
      %v307 = vunpack.c.l.b16 %v266
      %v308 = vpack.c.b16 %v297, %v296
      %v309 = vpack.c.b16 %v299, %v298
      %v310 = vpack.c.b16 %v301, %v300
      %v311 = vpack.c.b16 %v303, %v302
      %v312 = vpack.c.b16 %v305, %v304
      %v313 = vpack.c.b16 %v307, %v306
      %vm314 = vcmask 1046528
      %v315 = vrot.slane %v308, 1
      %v316 = vrot.slane %v309, 1
      %v317 = vsel %vm314, %v315, %v316
      %v318 = vrot.slane %v310, 1
      %v319 = vsel %vm314, %v316, %v318
      %v320 = vrot.slane %v311, 1
      %v321 = vsel %vm314, %v318, %v320
      %v322 = vrot.slane %v312, 1
      %v323 = vsel %vm314, %v320, %v322
      %v324 = vrot.slane %v313, 1
      %v325 = vsel %vm314, %v322, %v324
      %v348 = vunpack.c.l.b16 %v268
      %v349 = vunpack.c.l.b16 %v269
      %v350 = vunpack.c.l.b16 %v270
      %v351 = vunpack.c.l.b16 %v271
      %v352 = vunpack.c.l.b16 %v272
      %v353 = vunpack.c.l.b16 %v273
      %v354 = vunpack.c.l.b16 %v274
      %v355 = vunpack.c.l.b16 %v275
      %v356 = vunpack.c.l.b16 %v276
      %v357 = vunpack.c.l.b16 %v277
      %v358 = vunpack.c.l.b16 %v278
      %v359 = vunpack.c.l.b16 %v279
      %v360 = vunpack.c.l.b16 %v280
      %v361 = vunpack.c.l.b16 %v281
      %v362 = vunpack.c.l.b16 %v282
      %v363 = vunpack.c.l.b16 %v283
      %v364 = vpack.c.b16 %v349, %v348
      %v365 = vpack.c.b16 %v351, %v350
      %v366 = vpack.c.b16 %v353, %v352
      %v367 = vpack.c.b16 %v355, %v354
      %v368 = vpack.c.b16 %v357, %v356
      %v369 = vpack.c.b16 %v359, %v358
      %v370 = vpack.c.b16 %v361, %v360
      %v371 = vpack.c.b16 %v363, %v362
      %380 = vmatprep.subr.bf16.mxu0 0
      %381 = vmatpush1.bf16.msra.mxu0 %v371
      %382 = vmatprep.subr.bf16.mxu0 0
      %383 = vmatpush1.bf16.msra.mxu0 %v370
      %384 = vmatprep.subr.bf16.mxu0 0
      %385 = vmatpush1.bf16.msra.mxu0 %v369
      %386 = vmatprep.subr.bf16.mxu0 0
      %387 = vmatpush1.bf16.msra.mxu0 %v368
      %388 = vmatprep.subr.bf16.mxu0 0
      %389 = vmatpush1.bf16.msra.mxu0 %v367
      %390 = vmatprep.subr.bf16.mxu0 0
      %391 = vmatpush1.bf16.msra.mxu0 %v366
      %392 = vmatprep.subr.bf16.mxu0 0
      %393 = vmatpush1.bf16.msra.mxu0 %v365
      %394 = vmatprep.subr.bf16.mxu0 0
      %395 = vmatpush1.bf16.msra.mxu0 %v364
      %396 = vmatprep.subr.bf16.mxu0 0
      %397 = vmatpush2.bf16.msra.mxu0 0
      %398 = vmatprep.subr.bf16.mxu0 0
      %399 = vmatpush2.bf16.msra.mxu0 0
      %400 = vmatprep.subr.bf16.mxu0 0
      %401 = vmatpush2.bf16.msra.mxu0 0
      %402 = vmatprep.subr.bf16.mxu0 0
      %403 = vmatpush2.bf16.msra.mxu0 0
      %404 = vmatprep.subr.bf16.mxu0 0
      %405 = vmatpush2.bf16.msra.mxu0 0
      %406 = vmatprep.subr.bf16.mxu0 0
      %407 = vmatpush2.bf16.msra.mxu0 0
      %408 = vmatprep.subr.bf16.mxu0 0
      %409 = vmatpush2.bf16.msra.mxu0 0
      %410 = vmatprep.subr.bf16.mxu0 0
      %411 = vmatpush2.bf16.msra.mxu0 0
      %412 = vmatprep.mubr.bf16.mxu0 0
      %413 = vmatmul.mubr.bf16.gmra.mxu0 %v317
      %v414 = vpop.f32.mrf.mxu0
      %v415 = vadd.f32 0.0, %v414
      %v416 = vpop.f32.mrf.mxu0
      %v417 = vpop.f32.mrf.mxu0
      %v418 = vadd.f32 0.0, %v417
      %v419 = vpop.f32.mrf.mxu0
      %420 = vmatprep.mubr.bf16.mxu0 0
      %421 = vmatmul.mubr.bf16.gmra.mxu0 %v319
      %v422 = vpop.f32.mrf.mxu0
      %v423 = vadd.f32 0.0, %v422
      %v424 = vpop.f32.mrf.mxu0
      %v425 = vpop.f32.mrf.mxu0
      %v426 = vadd.f32 0.0, %v425
      %v427 = vpop.f32.mrf.mxu0
      %428 = vmatprep.mubr.bf16.mxu0 0
      %429 = vmatmul.mubr.bf16.gmra.mxu0 %v321
      %v430 = vpop.f32.mrf.mxu0
      %v431 = vpop.f32.mrf.mxu0
      %v432 = vpop.f32.mrf.mxu0
      %v433 = vpop.f32.mrf.mxu0
      %434 = vmatprep.mubr.bf16.mxu0 0
      %435 = vmatmul.mubr.bf16.gmra.mxu0 %v323
      %v436 = vpop.f32.mrf.mxu0
      %v437 = vpop.f32.mrf.mxu0
      %v438 = vpop.f32.mrf.mxu0
      %v439 = vpop.f32.mrf.mxu0
      %440 = vmatprep.mubr.bf16.mxu0 0
      %441 = vmatmul.mubr.bf16.gmra.mxu0 %v325
      %v442 = vpop.f32.mrf.mxu0
      %v443 = vadd.f32 0.0, %v442
      %v444 = vpop.f32.mrf.mxu0
      %v445 = vpop.f32.mrf.mxu0
      %v446 = vadd.f32 0.0, %v445
      %v447 = vpop.f32.mrf.mxu0
      %448 = vmatprep.mubr.bf16.mxu0 0
      %449 = vmatmul.mubr.bf16.gmra.mxu0 %v324
      %v450 = vpop.f32.mrf.mxu0
      %v451 = vadd.f32 0.0, %v450
      %v452 = vpop.f32.mrf.mxu0
      %v453 = vpop.f32.mrf.mxu0
      %v454 = vadd.f32 0.0, %v453
      %v455 = vpop.f32.mrf.mxu0
      %456 = vdwg.mxu0
      %v459 = vunpack.c.l.b16 %v237
      %v460 = vunpack.c.l.b16 %v248
      %v461 = vpack.c.b16 %v297, %v459
      %v462 = vpack.c.b16 %v460, %v306
      %v485 = vunpack.c.l.b16 %v249
      %v486 = vunpack.c.l.b16 %v250
      %v487 = vunpack.c.l.b16 %v251
      %v488 = vunpack.c.l.b16 %v252
      %v489 = vunpack.c.l.b16 %v253
      %v490 = vunpack.c.l.b16 %v254
      %v491 = vunpack.c.l.b16 %v255
      %v492 = vunpack.c.l.b16 %v256
      %v493 = vunpack.c.l.b16 %v257
      %v494 = vunpack.c.l.b16 %v258
      %v495 = vunpack.c.l.b16 %v259
      %v496 = vunpack.c.l.b16 %v260
      %v497 = vunpack.c.l.b16 %v261
      %v498 = vunpack.c.l.b16 %v262
      %v499 = vunpack.c.l.b16 %v263
      %v500 = vunpack.c.l.b16 %v264
      %v501 = vpack.c.b16 %v486, %v485
      %v502 = vpack.c.b16 %v488, %v487
      %v503 = vpack.c.b16 %v490, %v489
      %v504 = vpack.c.b16 %v492, %v491
      %v505 = vpack.c.b16 %v494, %v493
      %v506 = vpack.c.b16 %v496, %v495
      %v507 = vpack.c.b16 %v498, %v497
      %v508 = vpack.c.b16 %v500, %v499
      %517 = vmatprep.subr.bf16.mxu0 0
      %518 = vmatpush1.bf16.msra.mxu0 %v508
      %519 = vmatprep.subr.bf16.mxu0 0
      %520 = vmatpush1.bf16.msra.mxu0 %v507
      %521 = vmatprep.subr.bf16.mxu0 0
      %522 = vmatpush1.bf16.msra.mxu0 %v506
      %523 = vmatprep.subr.bf16.mxu0 0
      %524 = vmatpush1.bf16.msra.mxu0 %v505
      %525 = vmatprep.subr.bf16.mxu0 0
      %526 = vmatpush1.bf16.msra.mxu0 %v504
      %527 = vmatprep.subr.bf16.mxu0 0
      %528 = vmatpush1.bf16.msra.mxu0 %v503
      %529 = vmatprep.subr.bf16.mxu0 0
      %530 = vmatpush1.bf16.msra.mxu0 %v502
      %531 = vmatprep.subr.bf16.mxu0 0
      %532 = vmatpush1.bf16.msra.mxu0 %v501
      %533 = vmatprep.subr.bf16.mxu0 0
      %534 = vmatpush2.bf16.msra.mxu0 0
      %535 = vmatprep.subr.bf16.mxu0 0
      %536 = vmatpush2.bf16.msra.mxu0 0
      %537 = vmatprep.subr.bf16.mxu0 0
      %538 = vmatpush2.bf16.msra.mxu0 0
      %539 = vmatprep.subr.bf16.mxu0 0
      %540 = vmatpush2.bf16.msra.mxu0 0
      %541 = vmatprep.subr.bf16.mxu0 0
      %542 = vmatpush2.bf16.msra.mxu0 0
      %543 = vmatprep.subr.bf16.mxu0 0
      %544 = vmatpush2.bf16.msra.mxu0 0
      %545 = vmatprep.subr.bf16.mxu0 0
      %546 = vmatpush2.bf16.msra.mxu0 0
      %547 = vmatprep.subr.bf16.mxu0 0
      %548 = vmatpush2.bf16.msra.mxu0 0
      %549 = vmatprep.mubr.bf16.mxu0 0
      %550 = vmatmul.mubr.bf16.gmra.mxu0 %v461
      %v551 = vpop.f32.mrf.mxu0
      %v552 = vadd.f32 %v415, %v551
      %v553 = vpop.f32.mrf.mxu0
      %v554 = vpop.f32.mrf.mxu0
      %v555 = vadd.f32 %v418, %v554
      %v556 = vpop.f32.mrf.mxu0
      %557 = vmatprep.mubr.bf16.mxu0 0
      %558 = vmatmul.mubr.bf16.gmra.mxu0 %v309
      %v559 = vpop.f32.mrf.mxu0
      %v560 = vadd.f32 %v423, %v559
      %v561 = vpop.f32.mrf.mxu0
      %v562 = vpop.f32.mrf.mxu0
      %v563 = vadd.f32 %v426, %v562
      %v564 = vpop.f32.mrf.mxu0
      %565 = vmatprep.mubr.bf16.mxu0 0
      %566 = vmatmul.mubr.bf16.gmra.mxu0 %v310
      %v567 = vpop.f32.mrf.mxu0
      %v568 = vpop.f32.mrf.mxu0
      %v569 = vpop.f32.mrf.mxu0
      %v570 = vpop.f32.mrf.mxu0
      %571 = vmatprep.mubr.bf16.mxu0 0
      %572 = vmatmul.mubr.bf16.gmra.mxu0 %v311
      %v573 = vpop.f32.mrf.mxu0
      %v574 = vpop.f32.mrf.mxu0
      %v575 = vpop.f32.mrf.mxu0
      %v576 = vpop.f32.mrf.mxu0
      %577 = vmatprep.mubr.bf16.mxu0 0
      %578 = vmatmul.mubr.bf16.gmra.mxu0 %v312
      %v579 = vpop.f32.mrf.mxu0
      %v580 = vadd.f32 %v443, %v579
      %v581 = vpop.f32.mrf.mxu0
      %v582 = vpop.f32.mrf.mxu0
      %v583 = vadd.f32 %v446, %v582
      %v584 = vpop.f32.mrf.mxu0
      %585 = vmatprep.mubr.bf16.mxu0 0
      %586 = vmatmul.mubr.bf16.gmra.mxu0 %v462
      %v587 = vpop.f32.mrf.mxu0
      %v588 = vadd.f32 %v451, %v587
      %v589 = vpop.f32.mrf.mxu0
      %v590 = vpop.f32.mrf.mxu0
      %v591 = vadd.f32 %v454, %v590
      %v592 = vpop.f32.mrf.mxu0
      %593 = vdwg.mxu0
      %v594 = vld [vmem:[#allocation2] sm:$0xc]
      %v595 = vld [vmem:[#allocation2 + $0x2c] sm:$0xf]
      %s596 = scalar_lea.vmem %s1, 128
      %v597 = vld [vmem:[%s596] sm:$0xf]
      %v598 = vld [vmem:[%s596 + $0x4] sm:$0xf]
      %v599 = vld [vmem:[%s596 + $0x8] sm:$0xf]
      %v600 = vld [vmem:[%s596 + $0xc] sm:$0xf]
      %v601 = vld [vmem:[%s596 + $0x10] sm:$0xf]
      %v602 = vld [vmem:[%s596 + $0x14] sm:$0xf]
      %v603 = vld [vmem:[%s596 + $0x18] sm:$0xf]
      %v604 = vld [vmem:[%s596 + $0x1c] sm:$0xf]
      %v605 = vld [vmem:[%s596 + $0x20] sm:$0xf]
      %v606 = vld [vmem:[%s596 + $0x24] sm:$0xf]
      %v607 = vld [vmem:[%s596 + $0x28] sm:$0xf]
      %v608 = vld [vmem:[%s596 + $0x2c] sm:$0xf]
      %v609 = vld [vmem:[%s596 + $0x30] sm:$0xf]
      %v610 = vld [vmem:[%s596 + $0x34] sm:$0xf]
      %v611 = vld [vmem:[%s596 + $0x38] sm:$0xf]
      %v612 = vld [vmem:[%s596 + $0x3c] sm:$0xf]
      %v615 = vunpack.c.l.b16 %v594
      %v616 = vunpack.c.l.b16 %v595
      %v617 = vpack.c.b16 %v297, %v615
      %v618 = vpack.c.b16 %v616, %v306
      %vm619 = vcmask 1045504
      %v620 = vrot.slane %v617, 2
      %v621 = vrot.slane %v309, 2
      %v622 = vsel %vm619, %v620, %v621
      %v623 = vrot.slane %v310, 2
      %v624 = vsel %vm619, %v621, %v623
      %v625 = vrot.slane %v311, 2
      %v626 = vsel %vm619, %v623, %v625
      %v627 = vrot.slane %v312, 2
      %v628 = vsel %vm619, %v625, %v627
      %v629 = vrot.slane %v618, 2
      %v630 = vsel %vm619, %v627, %v629
      %v653 = vunpack.c.l.b16 %v597
      %v654 = vunpack.c.l.b16 %v598
      %v655 = vunpack.c.l.b16 %v599
      %v656 = vunpack.c.l.b16 %v600
      %v657 = vunpack.c.l.b16 %v601
      %v658 = vunpack.c.l.b16 %v602
      %v659 = vunpack.c.l.b16 %v603
      %v660 = vunpack.c.l.b16 %v604
      %v661 = vunpack.c.l.b16 %v605
      %v662 = vunpack.c.l.b16 %v606
      %v663 = vunpack.c.l.b16 %v607
      %v664 = vunpack.c.l.b16 %v608
      %v665 = vunpack.c.l.b16 %v609
      %v666 = vunpack.c.l.b16 %v610
      %v667 = vunpack.c.l.b16 %v611
      %v668 = vunpack.c.l.b16 %v612
      %v669 = vpack.c.b16 %v654, %v653
      %v670 = vpack.c.b16 %v656, %v655
      %v671 = vpack.c.b16 %v658, %v657
      %v672 = vpack.c.b16 %v660, %v659
      %v673 = vpack.c.b16 %v662, %v661
      %v674 = vpack.c.b16 %v664, %v663
      %v675 = vpack.c.b16 %v666, %v665
      %v676 = vpack.c.b16 %v668, %v667
      %685 = vmatprep.subr.bf16.mxu0 0
      %686 = vmatpush1.bf16.msra.mxu0 %v676
      %687 = vmatprep.subr.bf16.mxu0 0
      %688 = vmatpush1.bf16.msra.mxu0 %v675
      %689 = vmatprep.subr.bf16.mxu0 0
      %690 = vmatpush1.bf16.msra.mxu0 %v674
      %691 = vmatprep.subr.bf16.mxu0 0
      %692 = vmatpush1.bf16.msra.mxu0 %v673
      %693 = vmatprep.subr.bf16.mxu0 0
      %694 = vmatpush1.bf16.msra.mxu0 %v672
      %695 = vmatprep.subr.bf16.mxu0 0
      %696 = vmatpush1.bf16.msra.mxu0 %v671
      %697 = vmatprep.subr.bf16.mxu0 0
      %698 = vmatpush1.bf16.msra.mxu0 %v670
      %699 = vmatprep.subr.bf16.mxu0 0
      %700 = vmatpush1.bf16.msra.mxu0 %v669
      %701 = vmatprep.subr.bf16.mxu0 0
      %702 = vmatpush2.bf16.msra.mxu0 0
      %703 = vmatprep.subr.bf16.mxu0 0
      %704 = vmatpush2.bf16.msra.mxu0 0
      %705 = vmatprep.subr.bf16.mxu0 0
      %706 = vmatpush2.bf16.msra.mxu0 0
      %707 = vmatprep.subr.bf16.mxu0 0
      %708 = vmatpush2.bf16.msra.mxu0 0
      %709 = vmatprep.subr.bf16.mxu0 0
      %710 = vmatpush2.bf16.msra.mxu0 0
      %711 = vmatprep.subr.bf16.mxu0 0
      %712 = vmatpush2.bf16.msra.mxu0 0
      %713 = vmatprep.subr.bf16.mxu0 0
      %714 = vmatpush2.bf16.msra.mxu0 0
      %715 = vmatprep.subr.bf16.mxu0 0
      %716 = vmatpush2.bf16.msra.mxu0 0
      %717 = vmatprep.mubr.bf16.mxu0 0
      %718 = vmatmul.mubr.bf16.gmra.mxu0 %v622
      %v719 = vpop.f32.mrf.mxu0
      %v720 = vadd.f32 0.0, %v719
      %v721 = vpop.f32.mrf.mxu0
      %v722 = vpop.f32.mrf.mxu0
      %v723 = vadd.f32 0.0, %v722
      %v724 = vpop.f32.mrf.mxu0
      %725 = vmatprep.mubr.bf16.mxu0 0
      %726 = vmatmul.mubr.bf16.gmra.mxu0 %v624
      %v727 = vpop.f32.mrf.mxu0
      %v728 = vadd.f32 0.0, %v727
      %v729 = vpop.f32.mrf.mxu0
      %v730 = vpop.f32.mrf.mxu0
      %v731 = vadd.f32 0.0, %v730
      %v732 = vpop.f32.mrf.mxu0
      %733 = vmatprep.mubr.bf16.mxu0 0
      %734 = vmatmul.mubr.bf16.gmra.mxu0 %v626
      %v735 = vpop.f32.mrf.mxu0
      %v736 = vpop.f32.mrf.mxu0
      %v737 = vpop.f32.mrf.mxu0
      %v738 = vpop.f32.mrf.mxu0
      %739 = vmatprep.mubr.bf16.mxu0 0
      %740 = vmatmul.mubr.bf16.gmra.mxu0 %v628
      %v741 = vpop.f32.mrf.mxu0
      %v742 = vpop.f32.mrf.mxu0
      %v743 = vpop.f32.mrf.mxu0
      %v744 = vpop.f32.mrf.mxu0
      %745 = vmatprep.mubr.bf16.mxu0 0
      %746 = vmatmul.mubr.bf16.gmra.mxu0 %v630
      %v747 = vpop.f32.mrf.mxu0
      %v748 = vadd.f32 0.0, %v747
      %v749 = vpop.f32.mrf.mxu0
      %v750 = vpop.f32.mrf.mxu0
      %v751 = vadd.f32 0.0, %v750
      %v752 = vpop.f32.mrf.mxu0
      %753 = vmatprep.mubr.bf16.mxu0 0
      %754 = vmatmul.mubr.bf16.gmra.mxu0 %v629
      %v755 = vpop.f32.mrf.mxu0
      %v756 = vadd.f32 0.0, %v755
      %v757 = vpop.f32.mrf.mxu0
      %v758 = vpop.f32.mrf.mxu0
      %v759 = vadd.f32 0.0, %v758
      %v760 = vpop.f32.mrf.mxu0
      %761 = vdwg.mxu0
      %v762 = vadd.f32 %v552, %v720
      %v763 = vadd.f32 %v555, %v723
      %v764 = vadd.f32 %v560, %v728
      %v765 = vadd.f32 %v563, %v731
      %v766 = vadd.f32 %v580, %v748
      %v767 = vadd.f32 %v583, %v751
      %v768 = vadd.f32 %v588, %v756
      %v769 = vadd.f32 %v591, %v759
      %v770 = vld [vmem:[#allocation2 + $0x8] sm:$0xf]
      %v771 = vld [vmem:[#allocation2 + $0xc] sm:$0xf]
      %v772 = vld [vmem:[#allocation2 + $0x10] sm:$0xf]
      %v773 = vld [vmem:[#allocation2 + $0x14] sm:$0xf]
      %v774 = vld [vmem:[#allocation2 + $0x18] sm:$0xf]
      %v775 = vld [vmem:[#allocation2 + $0x1c] sm:$0xf]
      %v776 = vld [vmem:[#allocation2 + $0x20] sm:$0xf]
      %v777 = vld [vmem:[#allocation2 + $0x24] sm:$0xf]
      %v778 = vld [vmem:[#allocation2 + $0x28] sm:$0xf]
      %v779 = vld [vmem:[#allocation2 + $0x2c] sm:$0xf]
      %v780 = vld [vmem:[#allocation2 + $0x30] sm:$0xf]
      %v781 = vld [vmem:[#allocation2 + $0x34] sm:$0x3]
      %s782 = scalar_lea.vmem %s1, 192
      %v783 = vld [vmem:[%s782] sm:$0xf]
      %v784 = vld [vmem:[%s782 + $0x4] sm:$0xf]
      %v785 = vld [vmem:[%s782 + $0x8] sm:$0xf]
      %v786 = vld [vmem:[%s782 + $0xc] sm:$0xf]
      %v787 = vld [vmem:[%s782 + $0x10] sm:$0xf]
      %v788 = vld [vmem:[%s782 + $0x14] sm:$0xf]
      %v789 = vld [vmem:[%s782 + $0x18] sm:$0xf]
      %v790 = vld [vmem:[%s782 + $0x1c] sm:$0xf]
      %v791 = vld [vmem:[%s782 + $0x20] sm:$0xf]
      %v792 = vld [vmem:[%s782 + $0x24] sm:$0xf]
      %v793 = vld [vmem:[%s782 + $0x28] sm:$0xf]
      %v794 = vld [vmem:[%s782 + $0x2c] sm:$0xf]
      %v795 = vld [vmem:[%s782 + $0x30] sm:$0xf]
      %v796 = vld [vmem:[%s782 + $0x34] sm:$0xf]
      %v797 = vld [vmem:[%s782 + $0x38] sm:$0xf]
      %v798 = vld [vmem:[%s782 + $0x3c] sm:$0xf]
      %v811 = vunpack.c.l.b16 %v770
      %v812 = vunpack.c.l.b16 %v771
      %v813 = vunpack.c.l.b16 %v772
      %v814 = vunpack.c.l.b16 %v773
      %v815 = vunpack.c.l.b16 %v774
      %v816 = vunpack.c.l.b16 %v775
      %v817 = vunpack.c.l.b16 %v776
      %v818 = vunpack.c.l.b16 %v777
      %v819 = vunpack.c.l.b16 %v778
      %v820 = vunpack.c.l.b16 %v779
      %v821 = vunpack.c.l.b16 %v780
      %v822 = vunpack.c.l.b16 %v781
      %v823 = vpack.c.b16 %v812, %v811
      %v824 = vpack.c.b16 %v814, %v813
      %v825 = vpack.c.b16 %v816, %v815
      %v826 = vpack.c.b16 %v818, %v817
      %v827 = vpack.c.b16 %v820, %v819
      %v828 = vpack.c.b16 %v822, %v821
      %v851 = vunpack.c.l.b16 %v783
      %v852 = vunpack.c.l.b16 %v784
      %v853 = vunpack.c.l.b16 %v785
      %v854 = vunpack.c.l.b16 %v786
      %v855 = vunpack.c.l.b16 %v787
      %v856 = vunpack.c.l.b16 %v788
      %v857 = vunpack.c.l.b16 %v789
      %v858 = vunpack.c.l.b16 %v790
      %v859 = vunpack.c.l.b16 %v791
      %v860 = vunpack.c.l.b16 %v792
      %v861 = vunpack.c.l.b16 %v793
      %v862 = vunpack.c.l.b16 %v794
      %v863 = vunpack.c.l.b16 %v795
      %v864 = vunpack.c.l.b16 %v796
      %v865 = vunpack.c.l.b16 %v797
      %v866 = vunpack.c.l.b16 %v798
      %v867 = vpack.c.b16 %v852, %v851
      %v868 = vpack.c.b16 %v854, %v853
      %v869 = vpack.c.b16 %v856, %v855
      %v870 = vpack.c.b16 %v858, %v857
      %v871 = vpack.c.b16 %v860, %v859
      %v872 = vpack.c.b16 %v862, %v861
      %v873 = vpack.c.b16 %v864, %v863
      %v874 = vpack.c.b16 %v866, %v865
      %883 = vmatprep.subr.bf16.mxu0 0
      %884 = vmatpush1.bf16.msra.mxu0 %v874
      %885 = vmatprep.subr.bf16.mxu0 0
      %886 = vmatpush1.bf16.msra.mxu0 %v873
      %887 = vmatprep.subr.bf16.mxu0 0
      %888 = vmatpush1.bf16.msra.mxu0 %v872
      %889 = vmatprep.subr.bf16.mxu0 0
      %890 = vmatpush1.bf16.msra.mxu0 %v871
      %891 = vmatprep.subr.bf16.mxu0 0
      %892 = vmatpush1.bf16.msra.mxu0 %v870
      %893 = vmatprep.subr.bf16.mxu0 0
      %894 = vmatpush1.bf16.msra.mxu0 %v869
      %895 = vmatprep.subr.bf16.mxu0 0
      %896 = vmatpush1.bf16.msra.mxu0 %v868
      %897 = vmatprep.subr.bf16.mxu0 0
      %898 = vmatpush1.bf16.msra.mxu0 %v867
      %899 = vmatprep.subr.bf16.mxu0 0
      %900 = vmatpush2.bf16.msra.mxu0 0
      %901 = vmatprep.subr.bf16.mxu0 0
      %902 = vmatpush2.bf16.msra.mxu0 0
      %903 = vmatprep.subr.bf16.mxu0 0
      %904 = vmatpush2.bf16.msra.mxu0 0
      %905 = vmatprep.subr.bf16.mxu0 0
      %906 = vmatpush2.bf16.msra.mxu0 0
      %907 = vmatprep.subr.bf16.mxu0 0
      %908 = vmatpush2.bf16.msra.mxu0 0
      %909 = vmatprep.subr.bf16.mxu0 0
      %910 = vmatpush2.bf16.msra.mxu0 0
      %911 = vmatprep.subr.bf16.mxu0 0
      %912 = vmatpush2.bf16.msra.mxu0 0
      %913 = vmatprep.subr.bf16.mxu0 0
      %914 = vmatpush2.bf16.msra.mxu0 0
      %915 = vmatprep.mubr.bf16.mxu0 0
      %916 = vmatmul.mubr.bf16.gmra.mxu0 %v823
      %v917 = vpop.f32.mrf.mxu0
      %v918 = vadd.f32 0.0, %v917
      %v919 = vpop.f32.mrf.mxu0
      %v920 = vpop.f32.mrf.mxu0
      %v921 = vadd.f32 0.0, %v920
      %v922 = vpop.f32.mrf.mxu0
      %923 = vmatprep.mubr.bf16.mxu0 0
      %924 = vmatmul.mubr.bf16.gmra.mxu0 %v824
      %v925 = vpop.f32.mrf.mxu0
      %v926 = vadd.f32 0.0, %v925
      %v927 = vpop.f32.mrf.mxu0
      %v928 = vpop.f32.mrf.mxu0
      %v929 = vadd.f32 0.0, %v928
      %v930 = vpop.f32.mrf.mxu0
      %931 = vmatprep.mubr.bf16.mxu0 0
      %932 = vmatmul.mubr.bf16.gmra.mxu0 %v825
      %v933 = vpop.f32.mrf.mxu0
      %v934 = vpop.f32.mrf.mxu0
      %v935 = vpop.f32.mrf.mxu0
      %v936 = vpop.f32.mrf.mxu0
      %937 = vmatprep.mubr.bf16.mxu0 0
      %938 = vmatmul.mubr.bf16.gmra.mxu0 %v826
      %v939 = vpop.f32.mrf.mxu0
      %v940 = vpop.f32.mrf.mxu0
      %v941 = vpop.f32.mrf.mxu0
      %v942 = vpop.f32.mrf.mxu0
      %943 = vmatprep.mubr.bf16.mxu0 0
      %944 = vmatmul.mubr.bf16.gmra.mxu0 %v827
      %v945 = vpop.f32.mrf.mxu0
      %v946 = vadd.f32 0.0, %v945
      %v947 = vpop.f32.mrf.mxu0
      %v948 = vpop.f32.mrf.mxu0
      %v949 = vadd.f32 0.0, %v948
      %v950 = vpop.f32.mrf.mxu0
      %951 = vmatprep.mubr.bf16.mxu0 0
      %952 = vmatmul.mubr.bf16.gmra.mxu0 %v828
      %v953 = vpop.f32.mrf.mxu0
      %v954 = vadd.f32 0.0, %v953
      %v955 = vpop.f32.mrf.mxu0
      %v956 = vpop.f32.mrf.mxu0
      %v957 = vadd.f32 0.0, %v956
      %v958 = vpop.f32.mrf.mxu0
      %959 = vdwg.mxu0
      %v960 = vadd.f32 %v762, %v918
      %v961 = vadd.f32 %v763, %v921
      %v962 = vadd.f32 %v764, %v926
      %v963 = vadd.f32 %v765, %v929
      %v964 = vadd.f32 %v766, %v946
      %v965 = vadd.f32 %v767, %v949
      %v966 = vadd.f32 %v768, %v954
      %v967 = vadd.f32 %v769, %v957
      %v968 = vld [vmem:[#allocation2 + $0x8] sm:$0xe]
      %v969 = vld [vmem:[#allocation2 + $0x34] sm:$0x7]
      %s970 = scalar_lea.vmem %s1, 256
      %v971 = vld [vmem:[%s970] sm:$0xf]
      %v972 = vld [vmem:[%s970 + $0x4] sm:$0xf]
      %v973 = vld [vmem:[%s970 + $0x8] sm:$0xf]
      %v974 = vld [vmem:[%s970 + $0xc] sm:$0xf]
      %v975 = vld [vmem:[%s970 + $0x10] sm:$0xf]
      %v976 = vld [vmem:[%s970 + $0x14] sm:$0xf]
      %v977 = vld [vmem:[%s970 + $0x18] sm:$0xf]
      %v978 = vld [vmem:[%s970 + $0x1c] sm:$0xf]
      %v979 = vld [vmem:[%s970 + $0x20] sm:$0xf]
      %v980 = vld [vmem:[%s970 + $0x24] sm:$0xf]
      %v981 = vld [vmem:[%s970 + $0x28] sm:$0xf]
      %v982 = vld [vmem:[%s970 + $0x2c] sm:$0xf]
      %v983 = vld [vmem:[%s970 + $0x30] sm:$0xf]
      %v984 = vld [vmem:[%s970 + $0x34] sm:$0xf]
      %v985 = vld [vmem:[%s970 + $0x38] sm:$0xf]
      %v986 = vld [vmem:[%s970 + $0x3c] sm:$0xf]
      %v989 = vunpack.c.l.b16 %v968
      %v990 = vunpack.c.l.b16 %v969
      %v991 = vpack.c.b16 %v812, %v989
      %v992 = vpack.c.b16 %v990, %v821
      %v993 = vrot.slane %v991, 1
      %v994 = vrot.slane %v824, 1
      %v995 = vsel %vm314, %v993, %v994
      %v996 = vrot.slane %v825, 1
      %v997 = vsel %vm314, %v994, %v996
      %v998 = vrot.slane %v826, 1
      %v999 = vsel %vm314, %v996, %v998
      %v1000 = vrot.slane %v827, 1
      %v1001 = vsel %vm314, %v998, %v1000
      %v1002 = vrot.slane %v992, 1
      %v1003 = vsel %vm314, %v1000, %v1002
      %v1026 = vunpack.c.l.b16 %v971
      %v1027 = vunpack.c.l.b16 %v972
      %v1028 = vunpack.c.l.b16 %v973
      %v1029 = vunpack.c.l.b16 %v974
      %v1030 = vunpack.c.l.b16 %v975
      %v1031 = vunpack.c.l.b16 %v976
      %v1032 = vunpack.c.l.b16 %v977
      %v1033 = vunpack.c.l.b16 %v978
      %v1034 = vunpack.c.l.b16 %v979
      %v1035 = vunpack.c.l.b16 %v980
      %v1036 = vunpack.c.l.b16 %v981
      %v1037 = vunpack.c.l.b16 %v982
      %v1038 = vunpack.c.l.b16 %v983
      %v1039 = vunpack.c.l.b16 %v984
      %v1040 = vunpack.c.l.b16 %v985
      %v1041 = vunpack.c.l.b16 %v986
      %v1042 = vpack.c.b16 %v1027, %v1026
      %v1043 = vpack.c.b16 %v1029, %v1028
      %v1044 = vpack.c.b16 %v1031, %v1030
      %v1045 = vpack.c.b16 %v1033, %v1032
      %v1046 = vpack.c.b16 %v1035, %v1034
      %v1047 = vpack.c.b16 %v1037, %v1036
      %v1048 = vpack.c.b16 %v1039, %v1038
      %v1049 = vpack.c.b16 %v1041, %v1040
      %1058 = vmatprep.subr.bf16.mxu0 0
      %1059 = vmatpush1.bf16.msra.mxu0 %v1049
      %1060 = vmatprep.subr.bf16.mxu0 0
      %1061 = vmatpush1.bf16.msra.mxu0 %v1048
      %1062 = vmatprep.subr.bf16.mxu0 0
      %1063 = vmatpush1.bf16.msra.mxu0 %v1047
      %1064 = vmatprep.subr.bf16.mxu0 0
      %1065 = vmatpush1.bf16.msra.mxu0 %v1046
      %1066 = vmatprep.subr.bf16.mxu0 0
      %1067 = vmatpush1.bf16.msra.mxu0 %v1045
      %1068 = vmatprep.subr.bf16.mxu0 0
      %1069 = vmatpush1.bf16.msra.mxu0 %v1044
      %1070 = vmatprep.subr.bf16.mxu0 0
      %1071 = vmatpush1.bf16.msra.mxu0 %v1043
      %1072 = vmatprep.subr.bf16.mxu0 0
      %1073 = vmatpush1.bf16.msra.mxu0 %v1042
      %1074 = vmatprep.subr.bf16.mxu0 0
      %1075 = vmatpush2.bf16.msra.mxu0 0
      %1076 = vmatprep.subr.bf16.mxu0 0
      %1077 = vmatpush2.bf16.msra.mxu0 0
      %1078 = vmatprep.subr.bf16.mxu0 0
      %1079 = vmatpush2.bf16.msra.mxu0 0
      %1080 = vmatprep.subr.bf16.mxu0 0
      %1081 = vmatpush2.bf16.msra.mxu0 0
      %1082 = vmatprep.subr.bf16.mxu0 0
      %1083 = vmatpush2.bf16.msra.mxu0 0
      %1084 = vmatprep.subr.bf16.mxu0 0
      %1085 = vmatpush2.bf16.msra.mxu0 0
      %1086 = vmatprep.subr.bf16.mxu0 0
      %1087 = vmatpush2.bf16.msra.mxu0 0
      %1088 = vmatprep.subr.bf16.mxu0 0
      %1089 = vmatpush2.bf16.msra.mxu0 0
      %1090 = vmatprep.mubr.bf16.mxu0 0
      %1091 = vmatmul.mubr.bf16.gmra.mxu0 %v995
      %v1092 = vpop.f32.mrf.mxu0
      %v1093 = vadd.f32 0.0, %v1092
      %v1094 = vpop.f32.mrf.mxu0
      %v1095 = vpop.f32.mrf.mxu0
      %v1096 = vadd.f32 0.0, %v1095
      %v1097 = vpop.f32.mrf.mxu0
      %1098 = vmatprep.mubr.bf16.mxu0 0
      %1099 = vmatmul.mubr.bf16.gmra.mxu0 %v997
      %v1100 = vpop.f32.mrf.mxu0
      %v1101 = vadd.f32 0.0, %v1100
      %v1102 = vpop.f32.mrf.mxu0
      %v1103 = vpop.f32.mrf.mxu0
      %v1104 = vadd.f32 0.0, %v1103
      %v1105 = vpop.f32.mrf.mxu0
      %1106 = vmatprep.mubr.bf16.mxu0 0
      %1107 = vmatmul.mubr.bf16.gmra.mxu0 %v999
      %v1108 = vpop.f32.mrf.mxu0
      %v1109 = vpop.f32.mrf.mxu0
      %v1110 = vpop.f32.mrf.mxu0
      %v1111 = vpop.f32.mrf.mxu0
      %1112 = vmatprep.mubr.bf16.mxu0 0
      %1113 = vmatmul.mubr.bf16.gmra.mxu0 %v1001
      %v1114 = vpop.f32.mrf.mxu0
      %v1115 = vpop.f32.mrf.mxu0
      %v1116 = vpop.f32.mrf.mxu0
      %v1117 = vpop.f32.mrf.mxu0
      %1118 = vmatprep.mubr.bf16.mxu0 0
      %1119 = vmatmul.mubr.bf16.gmra.mxu0 %v1003
      %v1120 = vpop.f32.mrf.mxu0
      %v1121 = vadd.f32 0.0, %v1120
      %v1122 = vpop.f32.mrf.mxu0
      %v1123 = vpop.f32.mrf.mxu0
      %v1124 = vadd.f32 0.0, %v1123
      %v1125 = vpop.f32.mrf.mxu0
      %1126 = vmatprep.mubr.bf16.mxu0 0
      %1127 = vmatmul.mubr.bf16.gmra.mxu0 %v1002
      %v1128 = vpop.f32.mrf.mxu0
      %v1129 = vadd.f32 0.0, %v1128
      %v1130 = vpop.f32.mrf.mxu0
      %v1131 = vpop.f32.mrf.mxu0
      %v1132 = vadd.f32 0.0, %v1131
      %v1133 = vpop.f32.mrf.mxu0
      %1134 = vdwg.mxu0
      %v1135 = vadd.f32 %v960, %v1093
      %v1136 = vadd.f32 %v961, %v1096
      %v1137 = vadd.f32 %v962, %v1101
      %v1138 = vadd.f32 %v963, %v1104
      %v1139 = vadd.f32 %v964, %v1121
      %v1140 = vadd.f32 %v965, %v1124
      %v1141 = vadd.f32 %v966, %v1129
      %v1142 = vadd.f32 %v967, %v1132
      %v1143 = vld [vmem:[#allocation2 + $0x8] sm:$0xc]
      %v1144 = vld [vmem:[#allocation2 + $0x34] sm:$0xf]
      %s1145 = scalar_lea.vmem %s1, 320
      %v1146 = vld [vmem:[%s1145] sm:$0xf]
      %v1147 = vld [vmem:[%s1145 + $0x4] sm:$0xf]
      %v1148 = vld [vmem:[%s1145 + $0x8] sm:$0xf]
      %v1149 = vld [vmem:[%s1145 + $0xc] sm:$0xf]
      %v1150 = vld [vmem:[%s1145 + $0x10] sm:$0xf]
      %v1151 = vld [vmem:[%s1145 + $0x14] sm:$0xf]
      %v1152 = vld [vmem:[%s1145 + $0x18] sm:$0xf]
      %v1153 = vld [vmem:[%s1145 + $0x1c] sm:$0xf]
      %v1154 = vld [vmem:[%s1145 + $0x20] sm:$0xf]
      %v1155 = vld [vmem:[%s1145 + $0x24] sm:$0xf]
      %v1156 = vld [vmem:[%s1145 + $0x28] sm:$0xf]
      %v1157 = vld [vmem:[%s1145 + $0x2c] sm:$0xf]
      %v1158 = vld [vmem:[%s1145 + $0x30] sm:$0xf]
      %v1159 = vld [vmem:[%s1145 + $0x34] sm:$0xf]
      %v1160 = vld [vmem:[%s1145 + $0x38] sm:$0xf]
      %v1161 = vld [vmem:[%s1145 + $0x3c] sm:$0xf]
      %v1164 = vunpack.c.l.b16 %v1143
      %v1165 = vunpack.c.l.b16 %v1144
      %v1166 = vpack.c.b16 %v812, %v1164
      %v1167 = vpack.c.b16 %v1165, %v821
      %v1168 = vrot.slane %v1166, 2
      %v1169 = vrot.slane %v824, 2
      %v1170 = vsel %vm619, %v1168, %v1169
      %v1171 = vrot.slane %v825, 2
      %v1172 = vsel %vm619, %v1169, %v1171
      %v1173 = vrot.slane %v826, 2
      %v1174 = vsel %vm619, %v1171, %v1173
      %v1175 = vrot.slane %v827, 2
      %v1176 = vsel %vm619, %v1173, %v1175
      %v1177 = vrot.slane %v1167, 2
      %v1178 = vsel %vm619, %v1175, %v1177
      %v1201 = vunpack.c.l.b16 %v1146
      %v1202 = vunpack.c.l.b16 %v1147
      %v1203 = vunpack.c.l.b16 %v1148
      %v1204 = vunpack.c.l.b16 %v1149
      %v1205 = vunpack.c.l.b16 %v1150
      %v1206 = vunpack.c.l.b16 %v1151
      %v1207 = vunpack.c.l.b16 %v1152
      %v1208 = vunpack.c.l.b16 %v1153
      %v1209 = vunpack.c.l.b16 %v1154
      %v1210 = vunpack.c.l.b16 %v1155
      %v1211 = vunpack.c.l.b16 %v1156
      %v1212 = vunpack.c.l.b16 %v1157
      %v1213 = vunpack.c.l.b16 %v1158
      %v1214 = vunpack.c.l.b16 %v1159
      %v1215 = vunpack.c.l.b16 %v1160
      %v1216 = vunpack.c.l.b16 %v1161
      %v1217 = vpack.c.b16 %v1202, %v1201
      %v1218 = vpack.c.b16 %v1204, %v1203
      %v1219 = vpack.c.b16 %v1206, %v1205
      %v1220 = vpack.c.b16 %v1208, %v1207
      %v1221 = vpack.c.b16 %v1210, %v1209
      %v1222 = vpack.c.b16 %v1212, %v1211
      %v1223 = vpack.c.b16 %v1214, %v1213
      %v1224 = vpack.c.b16 %v1216, %v1215
      %1233 = vmatprep.subr.bf16.mxu0 0
      %1234 = vmatpush1.bf16.msra.mxu0 %v1224
      %1235 = vmatprep.subr.bf16.mxu0 0
      %1236 = vmatpush1.bf16.msra.mxu0 %v1223
      %1237 = vmatprep.subr.bf16.mxu0 0
      %1238 = vmatpush1.bf16.msra.mxu0 %v1222
      %1239 = vmatprep.subr.bf16.mxu0 0
      %1240 = vmatpush1.bf16.msra.mxu0 %v1221
      %1241 = vmatprep.subr.bf16.mxu0 0
      %1242 = vmatpush1.bf16.msra.mxu0 %v1220
      %1243 = vmatprep.subr.bf16.mxu0 0
      %1244 = vmatpush1.bf16.msra.mxu0 %v1219
      %1245 = vmatprep.subr.bf16.mxu0 0
      %1246 = vmatpush1.bf16.msra.mxu0 %v1218
      %1247 = vmatprep.subr.bf16.mxu0 0
      %1248 = vmatpush1.bf16.msra.mxu0 %v1217
      %1249 = vmatprep.subr.bf16.mxu0 0
      %1250 = vmatpush2.bf16.msra.mxu0 0
      %1251 = vmatprep.subr.bf16.mxu0 0
      %1252 = vmatpush2.bf16.msra.mxu0 0
      %1253 = vmatprep.subr.bf16.mxu0 0
      %1254 = vmatpush2.bf16.msra.mxu0 0
      %1255 = vmatprep.subr.bf16.mxu0 0
      %1256 = vmatpush2.bf16.msra.mxu0 0
      %1257 = vmatprep.subr.bf16.mxu0 0
      %1258 = vmatpush2.bf16.msra.mxu0 0
      %1259 = vmatprep.subr.bf16.mxu0 0
      %1260 = vmatpush2.bf16.msra.mxu0 0
      %1261 = vmatprep.subr.bf16.mxu0 0
      %1262 = vmatpush2.bf16.msra.mxu0 0
      %1263 = vmatprep.subr.bf16.mxu0 0
      %1264 = vmatpush2.bf16.msra.mxu0 0
      %1265 = vmatprep.mubr.bf16.mxu0 0
      %1266 = vmatmul.mubr.bf16.gmra.mxu0 %v1170
      %v1267 = vpop.f32.mrf.mxu0
      %v1268 = vadd.f32 0.0, %v1267
      %v1269 = vpop.f32.mrf.mxu0
      %v1270 = vpop.f32.mrf.mxu0
      %v1271 = vadd.f32 0.0, %v1270
      %v1272 = vpop.f32.mrf.mxu0
      %1273 = vmatprep.mubr.bf16.mxu0 0
      %1274 = vmatmul.mubr.bf16.gmra.mxu0 %v1172
      %v1275 = vpop.f32.mrf.mxu0
      %v1276 = vadd.f32 0.0, %v1275
      %v1277 = vpop.f32.mrf.mxu0
      %v1278 = vpop.f32.mrf.mxu0
      %v1279 = vadd.f32 0.0, %v1278
      %v1280 = vpop.f32.mrf.mxu0
      %1281 = vmatprep.mubr.bf16.mxu0 0
      %1282 = vmatmul.mubr.bf16.gmra.mxu0 %v1174
      %v1283 = vpop.f32.mrf.mxu0
      %v1284 = vpop.f32.mrf.mxu0
      %v1285 = vpop.f32.mrf.mxu0
      %v1286 = vpop.f32.mrf.mxu0
      %1287 = vmatprep.mubr.bf16.mxu0 0
      %1288 = vmatmul.mubr.bf16.gmra.mxu0 %v1176
      %v1289 = vpop.f32.mrf.mxu0
      %v1290 = vpop.f32.mrf.mxu0
      %v1291 = vpop.f32.mrf.mxu0
      %v1292 = vpop.f32.mrf.mxu0
      %1293 = vmatprep.mubr.bf16.mxu0 0
      %1294 = vmatmul.mubr.bf16.gmra.mxu0 %v1178
      %v1295 = vpop.f32.mrf.mxu0
      %v1296 = vadd.f32 0.0, %v1295
      %v1297 = vpop.f32.mrf.mxu0
      %v1298 = vpop.f32.mrf.mxu0
      %v1299 = vadd.f32 0.0, %v1298
      %v1300 = vpop.f32.mrf.mxu0
      %1301 = vmatprep.mubr.bf16.mxu0 0
      %1302 = vmatmul.mubr.bf16.gmra.mxu0 %v1177
      %v1303 = vpop.f32.mrf.mxu0
      %v1304 = vadd.f32 0.0, %v1303
      %v1305 = vpop.f32.mrf.mxu0
      %v1306 = vpop.f32.mrf.mxu0
      %v1307 = vadd.f32 0.0, %v1306
      %v1308 = vpop.f32.mrf.mxu0
      %1309 = vdwg.mxu0
      %v1310 = vadd.f32 %v1135, %v1268
      %v1311 = vadd.f32 %v1136, %v1271
      %v1312 = vadd.f32 %v1137, %v1276
      %v1313 = vadd.f32 %v1138, %v1279
      %v1314 = vadd.f32 %v1139, %v1296
      %v1315 = vadd.f32 %v1140, %v1299
      %v1316 = vadd.f32 %v1141, %v1304
      %v1317 = vadd.f32 %v1142, %v1307
      %v1318 = vld [vmem:[#allocation2 + $0x10] sm:$0xf]
      %v1319 = vld [vmem:[#allocation2 + $0x14] sm:$0xf]
      %v1320 = vld [vmem:[#allocation2 + $0x18] sm:$0xf]
      %v1321 = vld [vmem:[#allocation2 + $0x1c] sm:$0xf]
      %v1322 = vld [vmem:[#allocation2 + $0x20] sm:$0xf]
      %v1323 = vld [vmem:[#allocation2 + $0x24] sm:$0xf]
      %v1324 = vld [vmem:[#allocation2 + $0x28] sm:$0xf]
      %v1325 = vld [vmem:[#allocation2 + $0x2c] sm:$0xf]
      %v1326 = vld [vmem:[#allocation2 + $0x30] sm:$0xf]
      %v1327 = vld [vmem:[#allocation2 + $0x34] sm:$0xf]
      %v1328 = vld [vmem:[#allocation2 + $0x38] sm:$0xf]
      %v1329 = vld [vmem:[#allocation2 + $0x3c] sm:$0x3]
      %s1330 = scalar_lea.vmem %s1, 384
      %v1331 = vld [vmem:[%s1330] sm:$0xf]
      %v1332 = vld [vmem:[%s1330 + $0x4] sm:$0xf]
      %v1333 = vld [vmem:[%s1330 + $0x8] sm:$0xf]
      %v1334 = vld [vmem:[%s1330 + $0xc] sm:$0xf]
      %v1335 = vld [vmem:[%s1330 + $0x10] sm:$0xf]
      %v1336 = vld [vmem:[%s1330 + $0x14] sm:$0xf]
      %v1337 = vld [vmem:[%s1330 + $0x18] sm:$0xf]
      %v1338 = vld [vmem:[%s1330 + $0x1c] sm:$0xf]
      %v1339 = vld [vmem:[%s1330 + $0x20] sm:$0xf]
      %v1340 = vld [vmem:[%s1330 + $0x24] sm:$0xf]
      %v1341 = vld [vmem:[%s1330 + $0x28] sm:$0xf]
      %v1342 = vld [vmem:[%s1330 + $0x2c] sm:$0xf]
      %v1343 = vld [vmem:[%s1330 + $0x30] sm:$0xf]
      %v1344 = vld [vmem:[%s1330 + $0x34] sm:$0xf]
      %v1345 = vld [vmem:[%s1330 + $0x38] sm:$0xf]
      %v1346 = vld [vmem:[%s1330 + $0x3c] sm:$0xf]
      %v1359 = vunpack.c.l.b16 %v1318
      %v1360 = vunpack.c.l.b16 %v1319
      %v1361 = vunpack.c.l.b16 %v1320
      %v1362 = vunpack.c.l.b16 %v1321
      %v1363 = vunpack.c.l.b16 %v1322
      %v1364 = vunpack.c.l.b16 %v1323
      %v1365 = vunpack.c.l.b16 %v1324
      %v1366 = vunpack.c.l.b16 %v1325
      %v1367 = vunpack.c.l.b16 %v1326
      %v1368 = vunpack.c.l.b16 %v1327
      %v1369 = vunpack.c.l.b16 %v1328
      %v1370 = vunpack.c.l.b16 %v1329
      %v1371 = vpack.c.b16 %v1360, %v1359
      %v1372 = vpack.c.b16 %v1362, %v1361
      %v1373 = vpack.c.b16 %v1364, %v1363
      %v1374 = vpack.c.b16 %v1366, %v1365
      %v1375 = vpack.c.b16 %v1368, %v1367
      %v1376 = vpack.c.b16 %v1370, %v1369
      %v1399 = vunpack.c.l.b16 %v1331
      %v1400 = vunpack.c.l.b16 %v1332
      %v1401 = vunpack.c.l.b16 %v1333
      %v1402 = vunpack.c.l.b16 %v1334
      %v1403 = vunpack.c.l.b16 %v1335
      %v1404 = vunpack.c.l.b16 %v1336
      %v1405 = vunpack.c.l.b16 %v1337
      %v1406 = vunpack.c.l.b16 %v1338
      %v1407 = vunpack.c.l.b16 %v1339
      %v1408 = vunpack.c.l.b16 %v1340
      %v1409 = vunpack.c.l.b16 %v1341
      %v1410 = vunpack.c.l.b16 %v1342
      %v1411 = vunpack.c.l.b16 %v1343
      %v1412 = vunpack.c.l.b16 %v1344
      %v1413 = vunpack.c.l.b16 %v1345
      %v1414 = vunpack.c.l.b16 %v1346
      %v1415 = vpack.c.b16 %v1400, %v1399
      %v1416 = vpack.c.b16 %v1402, %v1401
      %v1417 = vpack.c.b16 %v1404, %v1403
      %v1418 = vpack.c.b16 %v1406, %v1405
      %v1419 = vpack.c.b16 %v1408, %v1407
      %v1420 = vpack.c.b16 %v1410, %v1409
      %v1421 = vpack.c.b16 %v1412, %v1411
      %v1422 = vpack.c.b16 %v1414, %v1413
      %1431 = vmatprep.subr.bf16.mxu0 0
      %1432 = vmatpush1.bf16.msra.mxu0 %v1422
      %1433 = vmatprep.subr.bf16.mxu0 0
      %1434 = vmatpush1.bf16.msra.mxu0 %v1421
      %1435 = vmatprep.subr.bf16.mxu0 0
      %1436 = vmatpush1.bf16.msra.mxu0 %v1420
      %1437 = vmatprep.subr.bf16.mxu0 0
      %1438 = vmatpush1.bf16.msra.mxu0 %v1419
      %1439 = vmatprep.subr.bf16.mxu0 0
      %1440 = vmatpush1.bf16.msra.mxu0 %v1418
      %1441 = vmatprep.subr.bf16.mxu0 0
      %1442 = vmatpush1.bf16.msra.mxu0 %v1417
      %1443 = vmatprep.subr.bf16.mxu0 0
      %1444 = vmatpush1.bf16.msra.mxu0 %v1416
      %1445 = vmatprep.subr.bf16.mxu0 0
      %1446 = vmatpush1.bf16.msra.mxu0 %v1415
      %1447 = vmatprep.subr.bf16.mxu0 0
      %1448 = vmatpush2.bf16.msra.mxu0 0
      %1449 = vmatprep.subr.bf16.mxu0 0
      %1450 = vmatpush2.bf16.msra.mxu0 0
      %1451 = vmatprep.subr.bf16.mxu0 0
      %1452 = vmatpush2.bf16.msra.mxu0 0
      %1453 = vmatprep.subr.bf16.mxu0 0
      %1454 = vmatpush2.bf16.msra.mxu0 0
      %1455 = vmatprep.subr.bf16.mxu0 0
      %1456 = vmatpush2.bf16.msra.mxu0 0
      %1457 = vmatprep.subr.bf16.mxu0 0
      %1458 = vmatpush2.bf16.msra.mxu0 0
      %1459 = vmatprep.subr.bf16.mxu0 0
      %1460 = vmatpush2.bf16.msra.mxu0 0
      %1461 = vmatprep.subr.bf16.mxu0 0
      %1462 = vmatpush2.bf16.msra.mxu0 0
      %1463 = vmatprep.mubr.bf16.mxu0 0
      %1464 = vmatmul.mubr.bf16.gmra.mxu0 %v1371
      %v1465 = vpop.f32.mrf.mxu0
      %v1466 = vadd.f32 0.0, %v1465
      %v1467 = vpop.f32.mrf.mxu0
      %v1468 = vpop.f32.mrf.mxu0
      %v1469 = vadd.f32 0.0, %v1468
      %v1470 = vpop.f32.mrf.mxu0
      %1471 = vmatprep.mubr.bf16.mxu0 0
      %1472 = vmatmul.mubr.bf16.gmra.mxu0 %v1372
      %v1473 = vpop.f32.mrf.mxu0
      %v1474 = vadd.f32 0.0, %v1473
      %v1475 = vpop.f32.mrf.mxu0
      %v1476 = vpop.f32.mrf.mxu0
      %v1477 = vadd.f32 0.0, %v1476
      %v1478 = vpop.f32.mrf.mxu0
      %1479 = vmatprep.mubr.bf16.mxu0 0
      %1480 = vmatmul.mubr.bf16.gmra.mxu0 %v1373
      %v1481 = vpop.f32.mrf.mxu0
      %v1482 = vpop.f32.mrf.mxu0
      %v1483 = vpop.f32.mrf.mxu0
      %v1484 = vpop.f32.mrf.mxu0
      %1485 = vmatprep.mubr.bf16.mxu0 0
      %1486 = vmatmul.mubr.bf16.gmra.mxu0 %v1374
      %v1487 = vpop.f32.mrf.mxu0
      %v1488 = vpop.f32.mrf.mxu0
      %v1489 = vpop.f32.mrf.mxu0
      %v1490 = vpop.f32.mrf.mxu0
      %1491 = vmatprep.mubr.bf16.mxu0 0
      %1492 = vmatmul.mubr.bf16.gmra.mxu0 %v1375
      %v1493 = vpop.f32.mrf.mxu0
      %v1494 = vadd.f32 0.0, %v1493
      %v1495 = vpop.f32.mrf.mxu0
      %v1496 = vpop.f32.mrf.mxu0
      %v1497 = vadd.f32 0.0, %v1496
      %v1498 = vpop.f32.mrf.mxu0
      %1499 = vmatprep.mubr.bf16.mxu0 0
      %1500 = vmatmul.mubr.bf16.gmra.mxu0 %v1376
      %v1501 = vpop.f32.mrf.mxu0
      %v1502 = vadd.f32 0.0, %v1501
      %v1503 = vpop.f32.mrf.mxu0
      %v1504 = vpop.f32.mrf.mxu0
      %v1505 = vadd.f32 0.0, %v1504
      %v1506 = vpop.f32.mrf.mxu0
      %1507 = vdwg.mxu0
      %v1508 = vadd.f32 %v1310, %v1466
      %v1509 = vadd.f32 %v1311, %v1469
      %v1510 = vadd.f32 %v1312, %v1474
      %v1511 = vadd.f32 %v1313, %v1477
      %v1512 = vadd.f32 %v1314, %v1494
      %v1513 = vadd.f32 %v1315, %v1497
      %v1514 = vadd.f32 %v1316, %v1502
      %v1515 = vadd.f32 %v1317, %v1505
      %v1516 = vld [vmem:[#allocation2 + $0x10] sm:$0xe]
      %v1517 = vld [vmem:[#allocation2 + $0x3c] sm:$0x7]
      %s1518 = scalar_lea.vmem %s1, 448
      %v1519 = vld [vmem:[%s1518] sm:$0xf]
      %v1520 = vld [vmem:[%s1518 + $0x4] sm:$0xf]
      %v1521 = vld [vmem:[%s1518 + $0x8] sm:$0xf]
      %v1522 = vld [vmem:[%s1518 + $0xc] sm:$0xf]
      %v1523 = vld [vmem:[%s1518 + $0x10] sm:$0xf]
      %v1524 = vld [vmem:[%s1518 + $0x14] sm:$0xf]
      %v1525 = vld [vmem:[%s1518 + $0x18] sm:$0xf]
      %v1526 = vld [vmem:[%s1518 + $0x1c] sm:$0xf]
      %v1527 = vld [vmem:[%s1518 + $0x20] sm:$0xf]
      %v1528 = vld [vmem:[%s1518 + $0x24] sm:$0xf]
      %v1529 = vld [vmem:[%s1518 + $0x28] sm:$0xf]
      %v1530 = vld [vmem:[%s1518 + $0x2c] sm:$0xf]
      %v1531 = vld [vmem:[%s1518 + $0x30] sm:$0xf]
      %v1532 = vld [vmem:[%s1518 + $0x34] sm:$0xf]
      %v1533 = vld [vmem:[%s1518 + $0x38] sm:$0xf]
      %v1534 = vld [vmem:[%s1518 + $0x3c] sm:$0xf]
      %v1537 = vunpack.c.l.b16 %v1516
      %v1538 = vunpack.c.l.b16 %v1517
      %v1539 = vpack.c.b16 %v1360, %v1537
      %v1540 = vpack.c.b16 %v1538, %v1369
      %v1541 = vrot.slane %v1539, 1
      %v1542 = vrot.slane %v1372, 1
      %v1543 = vsel %vm314, %v1541, %v1542
      %v1544 = vrot.slane %v1373, 1
      %v1545 = vsel %vm314, %v1542, %v1544
      %v1546 = vrot.slane %v1374, 1
      %v1547 = vsel %vm314, %v1544, %v1546
      %v1548 = vrot.slane %v1375, 1
      %v1549 = vsel %vm314, %v1546, %v1548
      %v1550 = vrot.slane %v1540, 1
      %v1551 = vsel %vm314, %v1548, %v1550
      %v1574 = vunpack.c.l.b16 %v1519
      %v1575 = vunpack.c.l.b16 %v1520
      %v1576 = vunpack.c.l.b16 %v1521
      %v1577 = vunpack.c.l.b16 %v1522
      %v1578 = vunpack.c.l.b16 %v1523
      %v1579 = vunpack.c.l.b16 %v1524
      %v1580 = vunpack.c.l.b16 %v1525
      %v1581 = vunpack.c.l.b16 %v1526
      %v1582 = vunpack.c.l.b16 %v1527
      %v1583 = vunpack.c.l.b16 %v1528
      %v1584 = vunpack.c.l.b16 %v1529
      %v1585 = vunpack.c.l.b16 %v1530
      %v1586 = vunpack.c.l.b16 %v1531
      %v1587 = vunpack.c.l.b16 %v1532
      %v1588 = vunpack.c.l.b16 %v1533
      %v1589 = vunpack.c.l.b16 %v1534
      %v1590 = vpack.c.b16 %v1575, %v1574
      %v1591 = vpack.c.b16 %v1577, %v1576
      %v1592 = vpack.c.b16 %v1579, %v1578
      %v1593 = vpack.c.b16 %v1581, %v1580
      %v1594 = vpack.c.b16 %v1583, %v1582
      %v1595 = vpack.c.b16 %v1585, %v1584
      %v1596 = vpack.c.b16 %v1587, %v1586
      %v1597 = vpack.c.b16 %v1589, %v1588
      %1606 = vmatprep.subr.bf16.mxu0 0
      %1607 = vmatpush1.bf16.msra.mxu0 %v1597
      %1608 = vmatprep.subr.bf16.mxu0 0
      %1609 = vmatpush1.bf16.msra.mxu0 %v1596
      %1610 = vmatprep.subr.bf16.mxu0 0
      %1611 = vmatpush1.bf16.msra.mxu0 %v1595
      %1612 = vmatprep.subr.bf16.mxu0 0
      %1613 = vmatpush1.bf16.msra.mxu0 %v1594
      %1614 = vmatprep.subr.bf16.mxu0 0
      %1615 = vmatpush1.bf16.msra.mxu0 %v1593
      %1616 = vmatprep.subr.bf16.mxu0 0
      %1617 = vmatpush1.bf16.msra.mxu0 %v1592
      %1618 = vmatprep.subr.bf16.mxu0 0
      %1619 = vmatpush1.bf16.msra.mxu0 %v1591
      %1620 = vmatprep.subr.bf16.mxu0 0
      %1621 = vmatpush1.bf16.msra.mxu0 %v1590
      %1622 = vmatprep.subr.bf16.mxu0 0
      %1623 = vmatpush2.bf16.msra.mxu0 0
      %1624 = vmatprep.subr.bf16.mxu0 0
      %1625 = vmatpush2.bf16.msra.mxu0 0
      %1626 = vmatprep.subr.bf16.mxu0 0
      %1627 = vmatpush2.bf16.msra.mxu0 0
      %1628 = vmatprep.subr.bf16.mxu0 0
      %1629 = vmatpush2.bf16.msra.mxu0 0
      %1630 = vmatprep.subr.bf16.mxu0 0
      %1631 = vmatpush2.bf16.msra.mxu0 0
      %1632 = vmatprep.subr.bf16.mxu0 0
      %1633 = vmatpush2.bf16.msra.mxu0 0
      %1634 = vmatprep.subr.bf16.mxu0 0
      %1635 = vmatpush2.bf16.msra.mxu0 0
      %1636 = vmatprep.subr.bf16.mxu0 0
      %1637 = vmatpush2.bf16.msra.mxu0 0
      %1638 = vmatprep.mubr.bf16.mxu0 0
      %1639 = vmatmul.mubr.bf16.gmra.mxu0 %v1543
      %v1640 = vpop.f32.mrf.mxu0
      %v1641 = vadd.f32 0.0, %v1640
      %v1642 = vpop.f32.mrf.mxu0
      %v1643 = vpop.f32.mrf.mxu0
      %v1644 = vadd.f32 0.0, %v1643
      %v1645 = vpop.f32.mrf.mxu0
      %1646 = vmatprep.mubr.bf16.mxu0 0
      %1647 = vmatmul.mubr.bf16.gmra.mxu0 %v1545
      %v1648 = vpop.f32.mrf.mxu0
      %v1649 = vadd.f32 0.0, %v1648
      %v1650 = vpop.f32.mrf.mxu0
      %v1651 = vpop.f32.mrf.mxu0
      %v1652 = vadd.f32 0.0, %v1651
      %v1653 = vpop.f32.mrf.mxu0
      %1654 = vmatprep.mubr.bf16.mxu0 0
      %1655 = vmatmul.mubr.bf16.gmra.mxu0 %v1547
      %v1656 = vpop.f32.mrf.mxu0
      %v1657 = vpop.f32.mrf.mxu0
      %v1658 = vpop.f32.mrf.mxu0
      %v1659 = vpop.f32.mrf.mxu0
      %1660 = vmatprep.mubr.bf16.mxu0 0
      %1661 = vmatmul.mubr.bf16.gmra.mxu0 %v1549
      %v1662 = vpop.f32.mrf.mxu0
      %v1663 = vpop.f32.mrf.mxu0
      %v1664 = vpop.f32.mrf.mxu0
      %v1665 = vpop.f32.mrf.mxu0
      %1666 = vmatprep.mubr.bf16.mxu0 0
      %1667 = vmatmul.mubr.bf16.gmra.mxu0 %v1551
      %v1668 = vpop.f32.mrf.mxu0
      %v1669 = vadd.f32 0.0, %v1668
      %v1670 = vpop.f32.mrf.mxu0
      %v1671 = vpop.f32.mrf.mxu0
      %v1672 = vadd.f32 0.0, %v1671
      %v1673 = vpop.f32.mrf.mxu0
      %1674 = vmatprep.mubr.bf16.mxu0 0
      %1675 = vmatmul.mubr.bf16.gmra.mxu0 %v1550
      %v1676 = vpop.f32.mrf.mxu0
      %v1677 = vadd.f32 0.0, %v1676
      %v1678 = vpop.f32.mrf.mxu0
      %v1679 = vpop.f32.mrf.mxu0
      %v1680 = vadd.f32 0.0, %v1679
      %v1681 = vpop.f32.mrf.mxu0
      %1682 = vdwg.mxu0
      %v1683 = vadd.f32 %v1508, %v1641
      %v1684 = vadd.f32 %v1509, %v1644
      %v1685 = vadd.f32 %v1510, %v1649
      %v1686 = vadd.f32 %v1511, %v1652
      %v1687 = vadd.f32 %v1512, %v1669
      %v1688 = vadd.f32 %v1513, %v1672
      %v1689 = vadd.f32 %v1514, %v1677
      %v1690 = vadd.f32 %v1515, %v1680
      %v1691 = vld [vmem:[#allocation2 + $0x10] sm:$0xc]
      %v1692 = vld [vmem:[#allocation2 + $0x3c] sm:$0xf]
      %s1693 = scalar_lea.vmem %s1, 512
      %v1694 = vld [vmem:[%s1693] sm:$0xf]
      %v1695 = vld [vmem:[%s1693 + $0x4] sm:$0xf]
      %v1696 = vld [vmem:[%s1693 + $0x8] sm:$0xf]
      %v1697 = vld [vmem:[%s1693 + $0xc] sm:$0xf]
      %v1698 = vld [vmem:[%s1693 + $0x10] sm:$0xf]
      %v1699 = vld [vmem:[%s1693 + $0x14] sm:$0xf]
      %v1700 = vld [vmem:[%s1693 + $0x18] sm:$0xf]
      %v1701 = vld [vmem:[%s1693 + $0x1c] sm:$0xf]
      %v1702 = vld [vmem:[%s1693 + $0x20] sm:$0xf]
      %v1703 = vld [vmem:[%s1693 + $0x24] sm:$0xf]
      %v1704 = vld [vmem:[%s1693 + $0x28] sm:$0xf]
      %v1705 = vld [vmem:[%s1693 + $0x2c] sm:$0xf]
      %v1706 = vld [vmem:[%s1693 + $0x30] sm:$0xf]
      %v1707 = vld [vmem:[%s1693 + $0x34] sm:$0xf]
      %v1708 = vld [vmem:[%s1693 + $0x38] sm:$0xf]
      %v1709 = vld [vmem:[%s1693 + $0x3c] sm:$0xf]
      %v1712 = vunpack.c.l.b16 %v1691
      %v1713 = vunpack.c.l.b16 %v1692
      %v1714 = vpack.c.b16 %v1360, %v1712
      %v1715 = vpack.c.b16 %v1713, %v1369
      %v1716 = vrot.slane %v1714, 2
      %v1717 = vrot.slane %v1372, 2
      %v1718 = vsel %vm619, %v1716, %v1717
      %v1719 = vrot.slane %v1373, 2
      %v1720 = vsel %vm619, %v1717, %v1719
      %v1721 = vrot.slane %v1374, 2
      %v1722 = vsel %vm619, %v1719, %v1721
      %v1723 = vrot.slane %v1375, 2
      %v1724 = vsel %vm619, %v1721, %v1723
      %v1725 = vrot.slane %v1715, 2
      %v1726 = vsel %vm619, %v1723, %v1725
      %v1749 = vunpack.c.l.b16 %v1694
      %v1750 = vunpack.c.l.b16 %v1695
      %v1751 = vunpack.c.l.b16 %v1696
      %v1752 = vunpack.c.l.b16 %v1697
      %v1753 = vunpack.c.l.b16 %v1698
      %v1754 = vunpack.c.l.b16 %v1699
      %v1755 = vunpack.c.l.b16 %v1700
      %v1756 = vunpack.c.l.b16 %v1701
      %v1757 = vunpack.c.l.b16 %v1702
      %v1758 = vunpack.c.l.b16 %v1703
      %v1759 = vunpack.c.l.b16 %v1704
      %v1760 = vunpack.c.l.b16 %v1705
      %v1761 = vunpack.c.l.b16 %v1706
      %v1762 = vunpack.c.l.b16 %v1707
      %v1763 = vunpack.c.l.b16 %v1708
      %v1764 = vunpack.c.l.b16 %v1709
      %v1765 = vpack.c.b16 %v1750, %v1749
      %v1766 = vpack.c.b16 %v1752, %v1751
      %v1767 = vpack.c.b16 %v1754, %v1753
      %v1768 = vpack.c.b16 %v1756, %v1755
      %v1769 = vpack.c.b16 %v1758, %v1757
      %v1770 = vpack.c.b16 %v1760, %v1759
      %v1771 = vpack.c.b16 %v1762, %v1761
      %v1772 = vpack.c.b16 %v1764, %v1763
      %1781 = vmatprep.subr.bf16.mxu0 0
      %1782 = vmatpush1.bf16.msra.mxu0 %v1772
      %1783 = vmatprep.subr.bf16.mxu0 0
      %1784 = vmatpush1.bf16.msra.mxu0 %v1771
      %1785 = vmatprep.subr.bf16.mxu0 0
      %1786 = vmatpush1.bf16.msra.mxu0 %v1770
      %1787 = vmatprep.subr.bf16.mxu0 0
      %1788 = vmatpush1.bf16.msra.mxu0 %v1769
      %1789 = vmatprep.subr.bf16.mxu0 0
      %1790 = vmatpush1.bf16.msra.mxu0 %v1768
      %1791 = vmatprep.subr.bf16.mxu0 0
      %1792 = vmatpush1.bf16.msra.mxu0 %v1767
      %1793 = vmatprep.subr.bf16.mxu0 0
      %1794 = vmatpush1.bf16.msra.mxu0 %v1766
      %1795 = vmatprep.subr.bf16.mxu0 0
      %1796 = vmatpush1.bf16.msra.mxu0 %v1765
      %1797 = vmatprep.subr.bf16.mxu0 0
      %1798 = vmatpush2.bf16.msra.mxu0 0
      %1799 = vmatprep.subr.bf16.mxu0 0
      %1800 = vmatpush2.bf16.msra.mxu0 0
      %1801 = vmatprep.subr.bf16.mxu0 0
      %1802 = vmatpush2.bf16.msra.mxu0 0
      %1803 = vmatprep.subr.bf16.mxu0 0
      %1804 = vmatpush2.bf16.msra.mxu0 0
      %1805 = vmatprep.subr.bf16.mxu0 0
      %1806 = vmatpush2.bf16.msra.mxu0 0
      %1807 = vmatprep.subr.bf16.mxu0 0
      %1808 = vmatpush2.bf16.msra.mxu0 0
      %1809 = vmatprep.subr.bf16.mxu0 0
      %1810 = vmatpush2.bf16.msra.mxu0 0
      %1811 = vmatprep.subr.bf16.mxu0 0
      %1812 = vmatpush2.bf16.msra.mxu0 0
      %1813 = vmatprep.mubr.bf16.mxu0 0
      %1814 = vmatmul.mubr.bf16.gmra.mxu0 %v1718
      %v1815 = vpop.f32.mrf.mxu0
      %v1816 = vadd.f32 0.0, %v1815
      %v1817 = vpop.f32.mrf.mxu0
      %v1818 = vpop.f32.mrf.mxu0
      %v1819 = vadd.f32 0.0, %v1818
      %v1820 = vpop.f32.mrf.mxu0
      %1821 = vmatprep.mubr.bf16.mxu0 0
      %1822 = vmatmul.mubr.bf16.gmra.mxu0 %v1720
      %v1823 = vpop.f32.mrf.mxu0
      %v1824 = vadd.f32 0.0, %v1823
      %v1825 = vpop.f32.mrf.mxu0
      %v1826 = vpop.f32.mrf.mxu0
      %v1827 = vadd.f32 0.0, %v1826
      %v1828 = vpop.f32.mrf.mxu0
      %1829 = vmatprep.mubr.bf16.mxu0 0
      %1830 = vmatmul.mubr.bf16.gmra.mxu0 %v1722
      %v1831 = vpop.f32.mrf.mxu0
      %v1832 = vpop.f32.mrf.mxu0
      %v1833 = vpop.f32.mrf.mxu0
      %v1834 = vpop.f32.mrf.mxu0
      %1835 = vmatprep.mubr.bf16.mxu0 0
      %1836 = vmatmul.mubr.bf16.gmra.mxu0 %v1724
      %v1837 = vpop.f32.mrf.mxu0
      %v1838 = vpop.f32.mrf.mxu0
      %v1839 = vpop.f32.mrf.mxu0
      %v1840 = vpop.f32.mrf.mxu0
      %1841 = vmatprep.mubr.bf16.mxu0 0
      %1842 = vmatmul.mubr.bf16.gmra.mxu0 %v1726
      %v1843 = vpop.f32.mrf.mxu0
      %v1844 = vadd.f32 0.0, %v1843
      %v1845 = vpop.f32.mrf.mxu0
      %v1846 = vpop.f32.mrf.mxu0
      %v1847 = vadd.f32 0.0, %v1846
      %v1848 = vpop.f32.mrf.mxu0
      %1849 = vmatprep.mubr.bf16.mxu0 0
      %1850 = vmatmul.mubr.bf16.gmra.mxu0 %v1725
      %v1851 = vpop.f32.mrf.mxu0
      %v1852 = vadd.f32 0.0, %v1851
      %v1853 = vpop.f32.mrf.mxu0
      %v1854 = vpop.f32.mrf.mxu0
      %v1855 = vadd.f32 0.0, %v1854
      %v1856 = vpop.f32.mrf.mxu0
      %1857 = vdwg.mxu0
      %v1858 = vadd.f32 %v1683, %v1816
      %v1859 = vadd.f32 %v1684, %v1819
      %v1860 = vadd.f32 %v1685, %v1824
      %v1861 = vadd.f32 %v1686, %v1827
      %v1862 = vadd.f32 %v1687, %v1844
      %v1863 = vadd.f32 %v1688, %v1847
      %v1864 = vadd.f32 %v1689, %v1852
      %v1865 = vadd.f32 %v1690, %v1855
      %v1866 = vld [vmem:[#allocation2 + $0x40] sm:$0xf]
      %v1867 = vld [vmem:[#allocation2 + $0x44] sm:$0xf]
      %v1868 = vld [vmem:[#allocation2 + $0x48] sm:$0xf]
      %v1869 = vld [vmem:[#allocation2 + $0x4c] sm:$0xf]
      %v1870 = vld [vmem:[#allocation2 + $0x50] sm:$0xf]
      %v1871 = vld [vmem:[#allocation2 + $0x54] sm:$0xf]
      %v1872 = vld [vmem:[#allocation2 + $0x58] sm:$0xf]
      %v1873 = vld [vmem:[#allocation2 + $0x5c] sm:$0xf]
      %v1874 = vld [vmem:[#allocation2 + $0x60] sm:$0xf]
      %v1875 = vld [vmem:[#allocation2 + $0x64] sm:$0xf]
      %v1876 = vld [vmem:[#allocation2 + $0x68] sm:$0xf]
      %v1877 = vld [vmem:[#allocation2 + $0x6c] sm:$0x3]
      %s1878 = scalar_lea.vmem %s1, 576
      %v1879 = vld [vmem:[%s1878] sm:$0xf]
      %v1880 = vld [vmem:[%s1878 + $0x4] sm:$0xf]
      %v1881 = vld [vmem:[%s1878 + $0x8] sm:$0xf]
      %v1882 = vld [vmem:[%s1878 + $0xc] sm:$0xf]
      %v1883 = vld [vmem:[%s1878 + $0x10] sm:$0xf]
      %v1884 = vld [vmem:[%s1878 + $0x14] sm:$0xf]
      %v1885 = vld [vmem:[%s1878 + $0x18] sm:$0xf]
      %v1886 = vld [vmem:[%s1878 + $0x1c] sm:$0xf]
      %v1887 = vld [vmem:[%s1878 + $0x20] sm:$0xf]
      %v1888 = vld [vmem:[%s1878 + $0x24] sm:$0xf]
      %v1889 = vld [vmem:[%s1878 + $0x28] sm:$0xf]
      %v1890 = vld [vmem:[%s1878 + $0x2c] sm:$0xf]
      %v1891 = vld [vmem:[%s1878 + $0x30] sm:$0xf]
      %v1892 = vld [vmem:[%s1878 + $0x34] sm:$0xf]
      %v1893 = vld [vmem:[%s1878 + $0x38] sm:$0xf]
      %v1894 = vld [vmem:[%s1878 + $0x3c] sm:$0xf]
      %v1907 = vunpack.c.l.b16 %v1866
      %v1908 = vunpack.c.l.b16 %v1867
      %v1909 = vunpack.c.l.b16 %v1868
      %v1910 = vunpack.c.l.b16 %v1869
      %v1911 = vunpack.c.l.b16 %v1870
      %v1912 = vunpack.c.l.b16 %v1871
      %v1913 = vunpack.c.l.b16 %v1872
      %v1914 = vunpack.c.l.b16 %v1873
      %v1915 = vunpack.c.l.b16 %v1874
      %v1916 = vunpack.c.l.b16 %v1875
      %v1917 = vunpack.c.l.b16 %v1876
      %v1918 = vunpack.c.l.b16 %v1877
      %v1919 = vpack.c.b16 %v1908, %v1907
      %v1920 = vpack.c.b16 %v1910, %v1909
      %v1921 = vpack.c.b16 %v1912, %v1911
      %v1922 = vpack.c.b16 %v1914, %v1913
      %v1923 = vpack.c.b16 %v1916, %v1915
      %v1924 = vpack.c.b16 %v1918, %v1917
      %v1947 = vunpack.c.l.b16 %v1879
      %v1948 = vunpack.c.l.b16 %v1880
      %v1949 = vunpack.c.l.b16 %v1881
      %v1950 = vunpack.c.l.b16 %v1882
      %v1951 = vunpack.c.l.b16 %v1883
      %v1952 = vunpack.c.l.b16 %v1884
      %v1953 = vunpack.c.l.b16 %v1885
      %v1954 = vunpack.c.l.b16 %v1886
      %v1955 = vunpack.c.l.b16 %v1887
      %v1956 = vunpack.c.l.b16 %v1888
      %v1957 = vunpack.c.l.b16 %v1889
      %v1958 = vunpack.c.l.b16 %v1890
      %v1959 = vunpack.c.l.b16 %v1891
      %v1960 = vunpack.c.l.b16 %v1892
      %v1961 = vunpack.c.l.b16 %v1893
      %v1962 = vunpack.c.l.b16 %v1894
      %v1963 = vpack.c.b16 %v1948, %v1947
      %v1964 = vpack.c.b16 %v1950, %v1949
      %v1965 = vpack.c.b16 %v1952, %v1951
      %v1966 = vpack.c.b16 %v1954, %v1953
      %v1967 = vpack.c.b16 %v1956, %v1955
      %v1968 = vpack.c.b16 %v1958, %v1957
      %v1969 = vpack.c.b16 %v1960, %v1959
      %v1970 = vpack.c.b16 %v1962, %v1961
      %1979 = vmatprep.subr.bf16.mxu0 0
      %1980 = vmatpush1.bf16.msra.mxu0 %v1970
      %1981 = vmatprep.subr.bf16.mxu0 0
      %1982 = vmatpush1.bf16.msra.mxu0 %v1969
      %1983 = vmatprep.subr.bf16.mxu0 0
      %1984 = vmatpush1.bf16.msra.mxu0 %v1968
      %1985 = vmatprep.subr.bf16.mxu0 0
      %1986 = vmatpush1.bf16.msra.mxu0 %v1967
      %1987 = vmatprep.subr.bf16.mxu0 0
      %1988 = vmatpush1.bf16.msra.mxu0 %v1966
      %1989 = vmatprep.subr.bf16.mxu0 0
      %1990 = vmatpush1.bf16.msra.mxu0 %v1965
      %1991 = vmatprep.subr.bf16.mxu0 0
      %1992 = vmatpush1.bf16.msra.mxu0 %v1964
      %1993 = vmatprep.subr.bf16.mxu0 0
      %1994 = vmatpush1.bf16.msra.mxu0 %v1963
      %1995 = vmatprep.subr.bf16.mxu0 0
      %1996 = vmatpush2.bf16.msra.mxu0 0
      %1997 = vmatprep.subr.bf16.mxu0 0
      %1998 = vmatpush2.bf16.msra.mxu0 0
      %1999 = vmatprep.subr.bf16.mxu0 0
      %2000 = vmatpush2.bf16.msra.mxu0 0
      %2001 = vmatprep.subr.bf16.mxu0 0
      %2002 = vmatpush2.bf16.msra.mxu0 0
      %2003 = vmatprep.subr.bf16.mxu0 0
      %2004 = vmatpush2.bf16.msra.mxu0 0
      %2005 = vmatprep.subr.bf16.mxu0 0
      %2006 = vmatpush2.bf16.msra.mxu0 0
      %2007 = vmatprep.subr.bf16.mxu0 0
      %2008 = vmatpush2.bf16.msra.mxu0 0
      %2009 = vmatprep.subr.bf16.mxu0 0
      %2010 = vmatpush2.bf16.msra.mxu0 0
      %2011 = vmatprep.mubr.bf16.mxu0 0
      %2012 = vmatmul.mubr.bf16.gmra.mxu0 %v1919
      %v2013 = vpop.f32.mrf.mxu0
      %v2014 = vadd.f32 0.0, %v2013
      %v2015 = vpop.f32.mrf.mxu0
      %v2016 = vpop.f32.mrf.mxu0
      %v2017 = vadd.f32 0.0, %v2016
      %v2018 = vpop.f32.mrf.mxu0
      %2019 = vmatprep.mubr.bf16.mxu0 0
      %2020 = vmatmul.mubr.bf16.gmra.mxu0 %v1920
      %v2021 = vpop.f32.mrf.mxu0
      %v2022 = vadd.f32 0.0, %v2021
      %v2023 = vpop.f32.mrf.mxu0
      %v2024 = vpop.f32.mrf.mxu0
      %v2025 = vadd.f32 0.0, %v2024
      %v2026 = vpop.f32.mrf.mxu0
      %2027 = vmatprep.mubr.bf16.mxu0 0
      %2028 = vmatmul.mubr.bf16.gmra.mxu0 %v1921
      %v2029 = vpop.f32.mrf.mxu0
      %v2030 = vpop.f32.mrf.mxu0
      %v2031 = vpop.f32.mrf.mxu0
      %v2032 = vpop.f32.mrf.mxu0
      %2033 = vmatprep.mubr.bf16.mxu0 0
      %2034 = vmatmul.mubr.bf16.gmra.mxu0 %v1922
      %v2035 = vpop.f32.mrf.mxu0
      %v2036 = vpop.f32.mrf.mxu0
      %v2037 = vpop.f32.mrf.mxu0
      %v2038 = vpop.f32.mrf.mxu0
      %2039 = vmatprep.mubr.bf16.mxu0 0
      %2040 = vmatmul.mubr.bf16.gmra.mxu0 %v1923
      %v2041 = vpop.f32.mrf.mxu0
      %v2042 = vadd.f32 0.0, %v2041
      %v2043 = vpop.f32.mrf.mxu0
      %v2044 = vpop.f32.mrf.mxu0
      %v2045 = vadd.f32 0.0, %v2044
      %v2046 = vpop.f32.mrf.mxu0
      %2047 = vmatprep.mubr.bf16.mxu0 0
      %2048 = vmatmul.mubr.bf16.gmra.mxu0 %v1924
      %v2049 = vpop.f32.mrf.mxu0
      %v2050 = vadd.f32 0.0, %v2049
      %v2051 = vpop.f32.mrf.mxu0
      %v2052 = vpop.f32.mrf.mxu0
      %v2053 = vadd.f32 0.0, %v2052
      %v2054 = vpop.f32.mrf.mxu0
      %2055 = vdwg.mxu0
      %v2056 = vadd.f32 %v1858, %v2014
      %v2057 = vadd.f32 %v1859, %v2017
      %v2058 = vadd.f32 %v1860, %v2022
      %v2059 = vadd.f32 %v1861, %v2025
      %v2060 = vadd.f32 %v1862, %v2042
      %v2061 = vadd.f32 %v1863, %v2045
      %v2062 = vadd.f32 %v1864, %v2050
      %v2063 = vadd.f32 %v1865, %v2053
      %v2064 = vld [vmem:[#allocation2 + $0x40] sm:$0xe]
      %v2065 = vld [vmem:[#allocation2 + $0x6c] sm:$0x7]
      %s2066 = scalar_lea.vmem %s1, 640
      %v2067 = vld [vmem:[%s2066] sm:$0xf]
      %v2068 = vld [vmem:[%s2066 + $0x4] sm:$0xf]
      %v2069 = vld [vmem:[%s2066 + $0x8] sm:$0xf]
      %v2070 = vld [vmem:[%s2066 + $0xc] sm:$0xf]
      %v2071 = vld [vmem:[%s2066 + $0x10] sm:$0xf]
      %v2072 = vld [vmem:[%s2066 + $0x14] sm:$0xf]
      %v2073 = vld [vmem:[%s2066 + $0x18] sm:$0xf]
      %v2074 = vld [vmem:[%s2066 + $0x1c] sm:$0xf]
      %v2075 = vld [vmem:[%s2066 + $0x20] sm:$0xf]
      %v2076 = vld [vmem:[%s2066 + $0x24] sm:$0xf]
      %v2077 = vld [vmem:[%s2066 + $0x28] sm:$0xf]
      %v2078 = vld [vmem:[%s2066 + $0x2c] sm:$0xf]
      %v2079 = vld [vmem:[%s2066 + $0x30] sm:$0xf]
      %v2080 = vld [vmem:[%s2066 + $0x34] sm:$0xf]
      %v2081 = vld [vmem:[%s2066 + $0x38] sm:$0xf]
      %v2082 = vld [vmem:[%s2066 + $0x3c] sm:$0xf]
      %v2085 = vunpack.c.l.b16 %v2064
      %v2086 = vunpack.c.l.b16 %v2065
      %v2087 = vpack.c.b16 %v1908, %v2085
      %v2088 = vpack.c.b16 %v2086, %v1917
      %v2089 = vrot.slane %v2087, 1
      %v2090 = vrot.slane %v1920, 1
      %v2091 = vsel %vm314, %v2089, %v2090
      %v2092 = vrot.slane %v1921, 1
      %v2093 = vsel %vm314, %v2090, %v2092
      %v2094 = vrot.slane %v1922, 1
      %v2095 = vsel %vm314, %v2092, %v2094
      %v2096 = vrot.slane %v1923, 1
      %v2097 = vsel %vm314, %v2094, %v2096
      %v2098 = vrot.slane %v2088, 1
      %v2099 = vsel %vm314, %v2096, %v2098
      %v2122 = vunpack.c.l.b16 %v2067
      %v2123 = vunpack.c.l.b16 %v2068
      %v2124 = vunpack.c.l.b16 %v2069
      %v2125 = vunpack.c.l.b16 %v2070
      %v2126 = vunpack.c.l.b16 %v2071
      %v2127 = vunpack.c.l.b16 %v2072
      %v2128 = vunpack.c.l.b16 %v2073
      %v2129 = vunpack.c.l.b16 %v2074
      %v2130 = vunpack.c.l.b16 %v2075
      %v2131 = vunpack.c.l.b16 %v2076
      %v2132 = vunpack.c.l.b16 %v2077
      %v2133 = vunpack.c.l.b16 %v2078
      %v2134 = vunpack.c.l.b16 %v2079
      %v2135 = vunpack.c.l.b16 %v2080
      %v2136 = vunpack.c.l.b16 %v2081
      %v2137 = vunpack.c.l.b16 %v2082
      %v2138 = vpack.c.b16 %v2123, %v2122
      %v2139 = vpack.c.b16 %v2125, %v2124
      %v2140 = vpack.c.b16 %v2127, %v2126
      %v2141 = vpack.c.b16 %v2129, %v2128
      %v2142 = vpack.c.b16 %v2131, %v2130
      %v2143 = vpack.c.b16 %v2133, %v2132
      %v2144 = vpack.c.b16 %v2135, %v2134
      %v2145 = vpack.c.b16 %v2137, %v2136
      %2154 = vmatprep.subr.bf16.mxu0 0
      %2155 = vmatpush1.bf16.msra.mxu0 %v2145
      %2156 = vmatprep.subr.bf16.mxu0 0
      %2157 = vmatpush1.bf16.msra.mxu0 %v2144
      %2158 = vmatprep.subr.bf16.mxu0 0
      %2159 = vmatpush1.bf16.msra.mxu0 %v2143
      %2160 = vmatprep.subr.bf16.mxu0 0
      %2161 = vmatpush1.bf16.msra.mxu0 %v2142
      %2162 = vmatprep.subr.bf16.mxu0 0
      %2163 = vmatpush1.bf16.msra.mxu0 %v2141
      %2164 = vmatprep.subr.bf16.mxu0 0
      %2165 = vmatpush1.bf16.msra.mxu0 %v2140
      %2166 = vmatprep.subr.bf16.mxu0 0
      %2167 = vmatpush1.bf16.msra.mxu0 %v2139
      %2168 = vmatprep.subr.bf16.mxu0 0
      %2169 = vmatpush1.bf16.msra.mxu0 %v2138
      %2170 = vmatprep.subr.bf16.mxu0 0
      %2171 = vmatpush2.bf16.msra.mxu0 0
      %2172 = vmatprep.subr.bf16.mxu0 0
      %2173 = vmatpush2.bf16.msra.mxu0 0
      %2174 = vmatprep.subr.bf16.mxu0 0
      %2175 = vmatpush2.bf16.msra.mxu0 0
      %2176 = vmatprep.subr.bf16.mxu0 0
      %2177 = vmatpush2.bf16.msra.mxu0 0
      %2178 = vmatprep.subr.bf16.mxu0 0
      %2179 = vmatpush2.bf16.msra.mxu0 0
      %2180 = vmatprep.subr.bf16.mxu0 0
      %2181 = vmatpush2.bf16.msra.mxu0 0
      %2182 = vmatprep.subr.bf16.mxu0 0
      %2183 = vmatpush2.bf16.msra.mxu0 0
      %2184 = vmatprep.subr.bf16.mxu0 0
      %2185 = vmatpush2.bf16.msra.mxu0 0
      %2186 = vmatprep.mubr.bf16.mxu0 0
      %2187 = vmatmul.mubr.bf16.gmra.mxu0 %v2091
      %v2188 = vpop.f32.mrf.mxu0
      %v2189 = vadd.f32 0.0, %v2188
      %v2190 = vpop.f32.mrf.mxu0
      %v2191 = vpop.f32.mrf.mxu0
      %v2192 = vadd.f32 0.0, %v2191
      %v2193 = vpop.f32.mrf.mxu0
      %2194 = vmatprep.mubr.bf16.mxu0 0
      %2195 = vmatmul.mubr.bf16.gmra.mxu0 %v2093
      %v2196 = vpop.f32.mrf.mxu0
      %v2197 = vadd.f32 0.0, %v2196
      %v2198 = vpop.f32.mrf.mxu0
      %v2199 = vpop.f32.mrf.mxu0
      %v2200 = vadd.f32 0.0, %v2199
      %v2201 = vpop.f32.mrf.mxu0
      %2202 = vmatprep.mubr.bf16.mxu0 0
      %2203 = vmatmul.mubr.bf16.gmra.mxu0 %v2095
      %v2204 = vpop.f32.mrf.mxu0
      %v2205 = vpop.f32.mrf.mxu0
      %v2206 = vpop.f32.mrf.mxu0
      %v2207 = vpop.f32.mrf.mxu0
      %2208 = vmatprep.mubr.bf16.mxu0 0
      %2209 = vmatmul.mubr.bf16.gmra.mxu0 %v2097
      %v2210 = vpop.f32.mrf.mxu0
      %v2211 = vpop.f32.mrf.mxu0
      %v2212 = vpop.f32.mrf.mxu0
      %v2213 = vpop.f32.mrf.mxu0
      %2214 = vmatprep.mubr.bf16.mxu0 0
      %2215 = vmatmul.mubr.bf16.gmra.mxu0 %v2099
      %v2216 = vpop.f32.mrf.mxu0
      %v2217 = vadd.f32 0.0, %v2216
      %v2218 = vpop.f32.mrf.mxu0
      %v2219 = vpop.f32.mrf.mxu0
      %v2220 = vadd.f32 0.0, %v2219
      %v2221 = vpop.f32.mrf.mxu0
      %2222 = vmatprep.mubr.bf16.mxu0 0
      %2223 = vmatmul.mubr.bf16.gmra.mxu0 %v2098
      %v2224 = vpop.f32.mrf.mxu0
      %v2225 = vadd.f32 0.0, %v2224
      %v2226 = vpop.f32.mrf.mxu0
      %v2227 = vpop.f32.mrf.mxu0
      %v2228 = vadd.f32 0.0, %v2227
      %v2229 = vpop.f32.mrf.mxu0
      %2230 = vdwg.mxu0
      %v2231 = vadd.f32 %v2056, %v2189
      %v2232 = vadd.f32 %v2057, %v2192
      %v2233 = vadd.f32 %v2058, %v2197
      %v2234 = vadd.f32 %v2059, %v2200
      %v2235 = vadd.f32 %v2060, %v2217
      %v2236 = vadd.f32 %v2061, %v2220
      %v2237 = vadd.f32 %v2062, %v2225
      %v2238 = vadd.f32 %v2063, %v2228
      %v2239 = vld [vmem:[#allocation2 + $0x40] sm:$0xc]
      %v2240 = vld [vmem:[#allocation2 + $0x6c] sm:$0xf]
      %s2241 = scalar_lea.vmem %s1, 704
      %v2242 = vld [vmem:[%s2241] sm:$0xf]
      %v2243 = vld [vmem:[%s2241 + $0x4] sm:$0xf]
      %v2244 = vld [vmem:[%s2241 + $0x8] sm:$0xf]
      %v2245 = vld [vmem:[%s2241 + $0xc] sm:$0xf]
      %v2246 = vld [vmem:[%s2241 + $0x10] sm:$0xf]
      %v2247 = vld [vmem:[%s2241 + $0x14] sm:$0xf]
      %v2248 = vld [vmem:[%s2241 + $0x18] sm:$0xf]
      %v2249 = vld [vmem:[%s2241 + $0x1c] sm:$0xf]
      %v2250 = vld [vmem:[%s2241 + $0x20] sm:$0xf]
      %v2251 = vld [vmem:[%s2241 + $0x24] sm:$0xf]
      %v2252 = vld [vmem:[%s2241 + $0x28] sm:$0xf]
      %v2253 = vld [vmem:[%s2241 + $0x2c] sm:$0xf]
      %v2254 = vld [vmem:[%s2241 + $0x30] sm:$0xf]
      %v2255 = vld [vmem:[%s2241 + $0x34] sm:$0xf]
      %v2256 = vld [vmem:[%s2241 + $0x38] sm:$0xf]
      %v2257 = vld [vmem:[%s2241 + $0x3c] sm:$0xf]
      %v2260 = vunpack.c.l.b16 %v2239
      %v2261 = vunpack.c.l.b16 %v2240
      %v2262 = vpack.c.b16 %v1908, %v2260
      %v2263 = vpack.c.b16 %v2261, %v1917
      %v2264 = vrot.slane %v2262, 2
      %v2265 = vrot.slane %v1920, 2
      %v2266 = vsel %vm619, %v2264, %v2265
      %v2267 = vrot.slane %v1921, 2
      %v2268 = vsel %vm619, %v2265, %v2267
      %v2269 = vrot.slane %v1922, 2
      %v2270 = vsel %vm619, %v2267, %v2269
      %v2271 = vrot.slane %v1923, 2
      %v2272 = vsel %vm619, %v2269, %v2271
      %v2273 = vrot.slane %v2263, 2
      %v2274 = vsel %vm619, %v2271, %v2273
      %v2297 = vunpack.c.l.b16 %v2242
      %v2298 = vunpack.c.l.b16 %v2243
      %v2299 = vunpack.c.l.b16 %v2244
      %v2300 = vunpack.c.l.b16 %v2245
      %v2301 = vunpack.c.l.b16 %v2246
      %v2302 = vunpack.c.l.b16 %v2247
      %v2303 = vunpack.c.l.b16 %v2248
      %v2304 = vunpack.c.l.b16 %v2249
      %v2305 = vunpack.c.l.b16 %v2250
      %v2306 = vunpack.c.l.b16 %v2251
      %v2307 = vunpack.c.l.b16 %v2252
      %v2308 = vunpack.c.l.b16 %v2253
      %v2309 = vunpack.c.l.b16 %v2254
      %v2310 = vunpack.c.l.b16 %v2255
      %v2311 = vunpack.c.l.b16 %v2256
      %v2312 = vunpack.c.l.b16 %v2257
      %v2313 = vpack.c.b16 %v2298, %v2297
      %v2314 = vpack.c.b16 %v2300, %v2299
      %v2315 = vpack.c.b16 %v2302, %v2301
      %v2316 = vpack.c.b16 %v2304, %v2303
      %v2317 = vpack.c.b16 %v2306, %v2305
      %v2318 = vpack.c.b16 %v2308, %v2307
      %v2319 = vpack.c.b16 %v2310, %v2309
      %v2320 = vpack.c.b16 %v2312, %v2311
      %2329 = vmatprep.subr.bf16.mxu0 0
      %2330 = vmatpush1.bf16.msra.mxu0 %v2320
      %2331 = vmatprep.subr.bf16.mxu0 0
      %2332 = vmatpush1.bf16.msra.mxu0 %v2319
      %2333 = vmatprep.subr.bf16.mxu0 0
      %2334 = vmatpush1.bf16.msra.mxu0 %v2318
      %2335 = vmatprep.subr.bf16.mxu0 0
      %2336 = vmatpush1.bf16.msra.mxu0 %v2317
      %2337 = vmatprep.subr.bf16.mxu0 0
      %2338 = vmatpush1.bf16.msra.mxu0 %v2316
      %2339 = vmatprep.subr.bf16.mxu0 0
      %2340 = vmatpush1.bf16.msra.mxu0 %v2315
      %2341 = vmatprep.subr.bf16.mxu0 0
      %2342 = vmatpush1.bf16.msra.mxu0 %v2314
      %2343 = vmatprep.subr.bf16.mxu0 0
      %2344 = vmatpush1.bf16.msra.mxu0 %v2313
      %2345 = vmatprep.subr.bf16.mxu0 0
      %2346 = vmatpush2.bf16.msra.mxu0 0
      %2347 = vmatprep.subr.bf16.mxu0 0
      %2348 = vmatpush2.bf16.msra.mxu0 0
      %2349 = vmatprep.subr.bf16.mxu0 0
      %2350 = vmatpush2.bf16.msra.mxu0 0
      %2351 = vmatprep.subr.bf16.mxu0 0
      %2352 = vmatpush2.bf16.msra.mxu0 0
      %2353 = vmatprep.subr.bf16.mxu0 0
      %2354 = vmatpush2.bf16.msra.mxu0 0
      %2355 = vmatprep.subr.bf16.mxu0 0
      %2356 = vmatpush2.bf16.msra.mxu0 0
      %2357 = vmatprep.subr.bf16.mxu0 0
      %2358 = vmatpush2.bf16.msra.mxu0 0
      %2359 = vmatprep.subr.bf16.mxu0 0
      %2360 = vmatpush2.bf16.msra.mxu0 0
      %2361 = vmatprep.mubr.bf16.mxu0 0
      %2362 = vmatmul.mubr.bf16.gmra.mxu0 %v2266
      %v2363 = vpop.f32.mrf.mxu0
      %v2364 = vadd.f32 0.0, %v2363
      %v2365 = vpop.f32.mrf.mxu0
      %v2366 = vpop.f32.mrf.mxu0
      %v2367 = vadd.f32 0.0, %v2366
      %v2368 = vpop.f32.mrf.mxu0
      %2369 = vmatprep.mubr.bf16.mxu0 0
      %2370 = vmatmul.mubr.bf16.gmra.mxu0 %v2268
      %v2371 = vpop.f32.mrf.mxu0
      %v2372 = vadd.f32 0.0, %v2371
      %v2373 = vpop.f32.mrf.mxu0
      %v2374 = vpop.f32.mrf.mxu0
      %v2375 = vadd.f32 0.0, %v2374
      %v2376 = vpop.f32.mrf.mxu0
      %2377 = vmatprep.mubr.bf16.mxu0 0
      %2378 = vmatmul.mubr.bf16.gmra.mxu0 %v2270
      %v2379 = vpop.f32.mrf.mxu0
      %v2380 = vpop.f32.mrf.mxu0
      %v2381 = vpop.f32.mrf.mxu0
      %v2382 = vpop.f32.mrf.mxu0
      %2383 = vmatprep.mubr.bf16.mxu0 0
      %2384 = vmatmul.mubr.bf16.gmra.mxu0 %v2272
      %v2385 = vpop.f32.mrf.mxu0
      %v2386 = vpop.f32.mrf.mxu0
      %v2387 = vpop.f32.mrf.mxu0
      %v2388 = vpop.f32.mrf.mxu0
      %2389 = vmatprep.mubr.bf16.mxu0 0
      %2390 = vmatmul.mubr.bf16.gmra.mxu0 %v2274
      %v2391 = vpop.f32.mrf.mxu0
      %v2392 = vadd.f32 0.0, %v2391
      %v2393 = vpop.f32.mrf.mxu0
      %v2394 = vpop.f32.mrf.mxu0
      %v2395 = vadd.f32 0.0, %v2394
      %v2396 = vpop.f32.mrf.mxu0
      %2397 = vmatprep.mubr.bf16.mxu0 0
      %2398 = vmatmul.mubr.bf16.gmra.mxu0 %v2273
      %v2399 = vpop.f32.mrf.mxu0
      %v2400 = vadd.f32 0.0, %v2399
      %v2401 = vpop.f32.mrf.mxu0
      %v2402 = vpop.f32.mrf.mxu0
      %v2403 = vadd.f32 0.0, %v2402
      %v2404 = vpop.f32.mrf.mxu0
      %2405 = vdwg.mxu0
      %v2406 = vadd.f32 %v2231, %v2364
      %v2407 = vadd.f32 %v2232, %v2367
      %v2408 = vadd.f32 %v2233, %v2372
      %v2409 = vadd.f32 %v2234, %v2375
      %v2410 = vadd.f32 %v2235, %v2392
      %v2411 = vadd.f32 %v2236, %v2395
      %v2412 = vadd.f32 %v2237, %v2400
      %v2413 = vadd.f32 %v2238, %v2403
      %v2414 = vld [vmem:[#allocation2 + $0x48] sm:$0xf]
      %v2415 = vld [vmem:[#allocation2 + $0x4c] sm:$0xf]
      %v2416 = vld [vmem:[#allocation2 + $0x50] sm:$0xf]
      %v2417 = vld [vmem:[#allocation2 + $0x54] sm:$0xf]
      %v2418 = vld [vmem:[#allocation2 + $0x58] sm:$0xf]
      %v2419 = vld [vmem:[#allocation2 + $0x5c] sm:$0xf]
      %v2420 = vld [vmem:[#allocation2 + $0x60] sm:$0xf]
      %v2421 = vld [vmem:[#allocation2 + $0x64] sm:$0xf]
      %v2422 = vld [vmem:[#allocation2 + $0x68] sm:$0xf]
      %v2423 = vld [vmem:[#allocation2 + $0x6c] sm:$0xf]
      %v2424 = vld [vmem:[#allocation2 + $0x70] sm:$0xf]
      %v2425 = vld [vmem:[#allocation2 + $0x74] sm:$0x3]
      %s2426 = scalar_lea.vmem %s1, 768
      %v2427 = vld [vmem:[%s2426] sm:$0xf]
      %v2428 = vld [vmem:[%s2426 + $0x4] sm:$0xf]
      %v2429 = vld [vmem:[%s2426 + $0x8] sm:$0xf]
      %v2430 = vld [vmem:[%s2426 + $0xc] sm:$0xf]
      %v2431 = vld [vmem:[%s2426 + $0x10] sm:$0xf]
      %v2432 = vld [vmem:[%s2426 + $0x14] sm:$0xf]
      %v2433 = vld [vmem:[%s2426 + $0x18] sm:$0xf]
      %v2434 = vld [vmem:[%s2426 + $0x1c] sm:$0xf]
      %v2435 = vld [vmem:[%s2426 + $0x20] sm:$0xf]
      %v2436 = vld [vmem:[%s2426 + $0x24] sm:$0xf]
      %v2437 = vld [vmem:[%s2426 + $0x28] sm:$0xf]
      %v2438 = vld [vmem:[%s2426 + $0x2c] sm:$0xf]
      %v2439 = vld [vmem:[%s2426 + $0x30] sm:$0xf]
      %v2440 = vld [vmem:[%s2426 + $0x34] sm:$0xf]
      %v2441 = vld [vmem:[%s2426 + $0x38] sm:$0xf]
      %v2442 = vld [vmem:[%s2426 + $0x3c] sm:$0xf]
      %v2455 = vunpack.c.l.b16 %v2414
      %v2456 = vunpack.c.l.b16 %v2415
      %v2457 = vunpack.c.l.b16 %v2416
      %v2458 = vunpack.c.l.b16 %v2417
      %v2459 = vunpack.c.l.b16 %v2418
      %v2460 = vunpack.c.l.b16 %v2419
      %v2461 = vunpack.c.l.b16 %v2420
      %v2462 = vunpack.c.l.b16 %v2421
      %v2463 = vunpack.c.l.b16 %v2422
      %v2464 = vunpack.c.l.b16 %v2423
      %v2465 = vunpack.c.l.b16 %v2424
      %v2466 = vunpack.c.l.b16 %v2425
      %v2467 = vpack.c.b16 %v2456, %v2455
      %v2468 = vpack.c.b16 %v2458, %v2457
      %v2469 = vpack.c.b16 %v2460, %v2459
      %v2470 = vpack.c.b16 %v2462, %v2461
      %v2471 = vpack.c.b16 %v2464, %v2463
      %v2472 = vpack.c.b16 %v2466, %v2465
      %v2495 = vunpack.c.l.b16 %v2427
      %v2496 = vunpack.c.l.b16 %v2428
      %v2497 = vunpack.c.l.b16 %v2429
      %v2498 = vunpack.c.l.b16 %v2430
      %v2499 = vunpack.c.l.b16 %v2431
      %v2500 = vunpack.c.l.b16 %v2432
      %v2501 = vunpack.c.l.b16 %v2433
      %v2502 = vunpack.c.l.b16 %v2434
      %v2503 = vunpack.c.l.b16 %v2435
      %v2504 = vunpack.c.l.b16 %v2436
      %v2505 = vunpack.c.l.b16 %v2437
      %v2506 = vunpack.c.l.b16 %v2438
      %v2507 = vunpack.c.l.b16 %v2439
      %v2508 = vunpack.c.l.b16 %v2440
      %v2509 = vunpack.c.l.b16 %v2441
      %v2510 = vunpack.c.l.b16 %v2442
      %v2511 = vpack.c.b16 %v2496, %v2495
      %v2512 = vpack.c.b16 %v2498, %v2497
      %v2513 = vpack.c.b16 %v2500, %v2499
      %v2514 = vpack.c.b16 %v2502, %v2501
      %v2515 = vpack.c.b16 %v2504, %v2503
      %v2516 = vpack.c.b16 %v2506, %v2505
      %v2517 = vpack.c.b16 %v2508, %v2507
      %v2518 = vpack.c.b16 %v2510, %v2509
      %2527 = vmatprep.subr.bf16.mxu0 0
      %2528 = vmatpush1.bf16.msra.mxu0 %v2518
      %2529 = vmatprep.subr.bf16.mxu0 0
      %2530 = vmatpush1.bf16.msra.mxu0 %v2517
      %2531 = vmatprep.subr.bf16.mxu0 0
      %2532 = vmatpush1.bf16.msra.mxu0 %v2516
      %2533 = vmatprep.subr.bf16.mxu0 0
      %2534 = vmatpush1.bf16.msra.mxu0 %v2515
      %2535 = vmatprep.subr.bf16.mxu0 0
      %2536 = vmatpush1.bf16.msra.mxu0 %v2514
      %2537 = vmatprep.subr.bf16.mxu0 0
      %2538 = vmatpush1.bf16.msra.mxu0 %v2513
      %2539 = vmatprep.subr.bf16.mxu0 0
      %2540 = vmatpush1.bf16.msra.mxu0 %v2512
      %2541 = vmatprep.subr.bf16.mxu0 0
      %2542 = vmatpush1.bf16.msra.mxu0 %v2511
      %2543 = vmatprep.subr.bf16.mxu0 0
      %2544 = vmatpush2.bf16.msra.mxu0 0
      %2545 = vmatprep.subr.bf16.mxu0 0
      %2546 = vmatpush2.bf16.msra.mxu0 0
      %2547 = vmatprep.subr.bf16.mxu0 0
      %2548 = vmatpush2.bf16.msra.mxu0 0
      %2549 = vmatprep.subr.bf16.mxu0 0
      %2550 = vmatpush2.bf16.msra.mxu0 0
      %2551 = vmatprep.subr.bf16.mxu0 0
      %2552 = vmatpush2.bf16.msra.mxu0 0
      %2553 = vmatprep.subr.bf16.mxu0 0
      %2554 = vmatpush2.bf16.msra.mxu0 0
      %2555 = vmatprep.subr.bf16.mxu0 0
      %2556 = vmatpush2.bf16.msra.mxu0 0
      %2557 = vmatprep.subr.bf16.mxu0 0
      %2558 = vmatpush2.bf16.msra.mxu0 0
      %2559 = vmatprep.mubr.bf16.mxu0 0
      %2560 = vmatmul.mubr.bf16.gmra.mxu0 %v2467
      %v2561 = vpop.f32.mrf.mxu0
      %v2562 = vadd.f32 0.0, %v2561
      %v2563 = vpop.f32.mrf.mxu0
      %v2564 = vpop.f32.mrf.mxu0
      %v2565 = vadd.f32 0.0, %v2564
      %v2566 = vpop.f32.mrf.mxu0
      %2567 = vmatprep.mubr.bf16.mxu0 0
      %2568 = vmatmul.mubr.bf16.gmra.mxu0 %v2468
      %v2569 = vpop.f32.mrf.mxu0
      %v2570 = vadd.f32 0.0, %v2569
      %v2571 = vpop.f32.mrf.mxu0
      %v2572 = vpop.f32.mrf.mxu0
      %v2573 = vadd.f32 0.0, %v2572
      %v2574 = vpop.f32.mrf.mxu0
      %2575 = vmatprep.mubr.bf16.mxu0 0
      %2576 = vmatmul.mubr.bf16.gmra.mxu0 %v2469
      %v2577 = vpop.f32.mrf.mxu0
      %v2578 = vpop.f32.mrf.mxu0
      %v2579 = vpop.f32.mrf.mxu0
      %v2580 = vpop.f32.mrf.mxu0
      %2581 = vmatprep.mubr.bf16.mxu0 0
      %2582 = vmatmul.mubr.bf16.gmra.mxu0 %v2470
      %v2583 = vpop.f32.mrf.mxu0
      %v2584 = vpop.f32.mrf.mxu0
      %v2585 = vpop.f32.mrf.mxu0
      %v2586 = vpop.f32.mrf.mxu0
      %2587 = vmatprep.mubr.bf16.mxu0 0
      %2588 = vmatmul.mubr.bf16.gmra.mxu0 %v2471
      %v2589 = vpop.f32.mrf.mxu0
      %v2590 = vadd.f32 0.0, %v2589
      %v2591 = vpop.f32.mrf.mxu0
      %v2592 = vpop.f32.mrf.mxu0
      %v2593 = vadd.f32 0.0, %v2592
      %v2594 = vpop.f32.mrf.mxu0
      %2595 = vmatprep.mubr.bf16.mxu0 0
      %2596 = vmatmul.mubr.bf16.gmra.mxu0 %v2472
      %v2597 = vpop.f32.mrf.mxu0
      %v2598 = vadd.f32 0.0, %v2597
      %v2599 = vpop.f32.mrf.mxu0
      %v2600 = vpop.f32.mrf.mxu0
      %v2601 = vadd.f32 0.0, %v2600
      %v2602 = vpop.f32.mrf.mxu0
      %2603 = vdwg.mxu0
      %v2604 = vadd.f32 %v2406, %v2562
      %v2605 = vadd.f32 %v2407, %v2565
      %v2606 = vadd.f32 %v2408, %v2570
      %v2607 = vadd.f32 %v2409, %v2573
      %v2608 = vadd.f32 %v2410, %v2590
      %v2609 = vadd.f32 %v2411, %v2593
      %v2610 = vadd.f32 %v2412, %v2598
      %v2611 = vadd.f32 %v2413, %v2601
      %v2612 = vld [vmem:[#allocation2 + $0x48] sm:$0xe]
      %v2613 = vld [vmem:[#allocation2 + $0x74] sm:$0x7]
      %s2614 = scalar_lea.vmem %s1, 832
      %v2615 = vld [vmem:[%s2614] sm:$0xf]
      %v2616 = vld [vmem:[%s2614 + $0x4] sm:$0xf]
      %v2617 = vld [vmem:[%s2614 + $0x8] sm:$0xf]
      %v2618 = vld [vmem:[%s2614 + $0xc] sm:$0xf]
      %v2619 = vld [vmem:[%s2614 + $0x10] sm:$0xf]
      %v2620 = vld [vmem:[%s2614 + $0x14] sm:$0xf]
      %v2621 = vld [vmem:[%s2614 + $0x18] sm:$0xf]
      %v2622 = vld [vmem:[%s2614 + $0x1c] sm:$0xf]
      %v2623 = vld [vmem:[%s2614 + $0x20] sm:$0xf]
      %v2624 = vld [vmem:[%s2614 + $0x24] sm:$0xf]
      %v2625 = vld [vmem:[%s2614 + $0x28] sm:$0xf]
      %v2626 = vld [vmem:[%s2614 + $0x2c] sm:$0xf]
      %v2627 = vld [vmem:[%s2614 + $0x30] sm:$0xf]
      %v2628 = vld [vmem:[%s2614 + $0x34] sm:$0xf]
      %v2629 = vld [vmem:[%s2614 + $0x38] sm:$0xf]
      %v2630 = vld [vmem:[%s2614 + $0x3c] sm:$0xf]
      %v2633 = vunpack.c.l.b16 %v2612
      %v2634 = vunpack.c.l.b16 %v2613
      %v2635 = vpack.c.b16 %v2456, %v2633
      %v2636 = vpack.c.b16 %v2634, %v2465
      %v2637 = vrot.slane %v2635, 1
      %v2638 = vrot.slane %v2468, 1
      %v2639 = vsel %vm314, %v2637, %v2638
      %v2640 = vrot.slane %v2469, 1
      %v2641 = vsel %vm314, %v2638, %v2640
      %v2642 = vrot.slane %v2470, 1
      %v2643 = vsel %vm314, %v2640, %v2642
      %v2644 = vrot.slane %v2471, 1
      %v2645 = vsel %vm314, %v2642, %v2644
      %v2646 = vrot.slane %v2636, 1
      %v2647 = vsel %vm314, %v2644, %v2646
      %v2670 = vunpack.c.l.b16 %v2615
      %v2671 = vunpack.c.l.b16 %v2616
      %v2672 = vunpack.c.l.b16 %v2617
      %v2673 = vunpack.c.l.b16 %v2618
      %v2674 = vunpack.c.l.b16 %v2619
      %v2675 = vunpack.c.l.b16 %v2620
      %v2676 = vunpack.c.l.b16 %v2621
      %v2677 = vunpack.c.l.b16 %v2622
      %v2678 = vunpack.c.l.b16 %v2623
      %v2679 = vunpack.c.l.b16 %v2624
      %v2680 = vunpack.c.l.b16 %v2625
      %v2681 = vunpack.c.l.b16 %v2626
      %v2682 = vunpack.c.l.b16 %v2627
      %v2683 = vunpack.c.l.b16 %v2628
      %v2684 = vunpack.c.l.b16 %v2629
      %v2685 = vunpack.c.l.b16 %v2630
      %v2686 = vpack.c.b16 %v2671, %v2670
      %v2687 = vpack.c.b16 %v2673, %v2672
      %v2688 = vpack.c.b16 %v2675, %v2674
      %v2689 = vpack.c.b16 %v2677, %v2676
      %v2690 = vpack.c.b16 %v2679, %v2678
      %v2691 = vpack.c.b16 %v2681, %v2680
      %v2692 = vpack.c.b16 %v2683, %v2682
      %v2693 = vpack.c.b16 %v2685, %v2684
      %2702 = vmatprep.subr.bf16.mxu0 0
      %2703 = vmatpush1.bf16.msra.mxu0 %v2693
      %2704 = vmatprep.subr.bf16.mxu0 0
      %2705 = vmatpush1.bf16.msra.mxu0 %v2692
      %2706 = vmatprep.subr.bf16.mxu0 0
      %2707 = vmatpush1.bf16.msra.mxu0 %v2691
      %2708 = vmatprep.subr.bf16.mxu0 0
      %2709 = vmatpush1.bf16.msra.mxu0 %v2690
      %2710 = vmatprep.subr.bf16.mxu0 0
      %2711 = vmatpush1.bf16.msra.mxu0 %v2689
      %2712 = vmatprep.subr.bf16.mxu0 0
      %2713 = vmatpush1.bf16.msra.mxu0 %v2688
      %2714 = vmatprep.subr.bf16.mxu0 0
      %2715 = vmatpush1.bf16.msra.mxu0 %v2687
      %2716 = vmatprep.subr.bf16.mxu0 0
      %2717 = vmatpush1.bf16.msra.mxu0 %v2686
      %2718 = vmatprep.subr.bf16.mxu0 0
      %2719 = vmatpush2.bf16.msra.mxu0 0
      %2720 = vmatprep.subr.bf16.mxu0 0
      %2721 = vmatpush2.bf16.msra.mxu0 0
      %2722 = vmatprep.subr.bf16.mxu0 0
      %2723 = vmatpush2.bf16.msra.mxu0 0
      %2724 = vmatprep.subr.bf16.mxu0 0
      %2725 = vmatpush2.bf16.msra.mxu0 0
      %2726 = vmatprep.subr.bf16.mxu0 0
      %2727 = vmatpush2.bf16.msra.mxu0 0
      %2728 = vmatprep.subr.bf16.mxu0 0
      %2729 = vmatpush2.bf16.msra.mxu0 0
      %2730 = vmatprep.subr.bf16.mxu0 0
      %2731 = vmatpush2.bf16.msra.mxu0 0
      %2732 = vmatprep.subr.bf16.mxu0 0
      %2733 = vmatpush2.bf16.msra.mxu0 0
      %2734 = vmatprep.mubr.bf16.mxu0 0
      %2735 = vmatmul.mubr.bf16.gmra.mxu0 %v2639
      %v2736 = vpop.f32.mrf.mxu0
      %v2737 = vadd.f32 0.0, %v2736
      %v2738 = vpop.f32.mrf.mxu0
      %v2739 = vpop.f32.mrf.mxu0
      %v2740 = vadd.f32 0.0, %v2739
      %v2741 = vpop.f32.mrf.mxu0
      %2742 = vmatprep.mubr.bf16.mxu0 0
      %2743 = vmatmul.mubr.bf16.gmra.mxu0 %v2641
      %v2744 = vpop.f32.mrf.mxu0
      %v2745 = vadd.f32 0.0, %v2744
      %v2746 = vpop.f32.mrf.mxu0
      %v2747 = vpop.f32.mrf.mxu0
      %v2748 = vadd.f32 0.0, %v2747
      %v2749 = vpop.f32.mrf.mxu0
      %2750 = vmatprep.mubr.bf16.mxu0 0
      %2751 = vmatmul.mubr.bf16.gmra.mxu0 %v2643
      %v2752 = vpop.f32.mrf.mxu0
      %v2753 = vpop.f32.mrf.mxu0
      %v2754 = vpop.f32.mrf.mxu0
      %v2755 = vpop.f32.mrf.mxu0
      %2756 = vmatprep.mubr.bf16.mxu0 0
      %2757 = vmatmul.mubr.bf16.gmra.mxu0 %v2645
      %v2758 = vpop.f32.mrf.mxu0
      %v2759 = vpop.f32.mrf.mxu0
      %v2760 = vpop.f32.mrf.mxu0
      %v2761 = vpop.f32.mrf.mxu0
      %2762 = vmatprep.mubr.bf16.mxu0 0
      %2763 = vmatmul.mubr.bf16.gmra.mxu0 %v2647
      %v2764 = vpop.f32.mrf.mxu0
      %v2765 = vadd.f32 0.0, %v2764
      %v2766 = vpop.f32.mrf.mxu0
      %v2767 = vpop.f32.mrf.mxu0
      %v2768 = vadd.f32 0.0, %v2767
      %v2769 = vpop.f32.mrf.mxu0
      %2770 = vmatprep.mubr.bf16.mxu0 0
      %2771 = vmatmul.mubr.bf16.gmra.mxu0 %v2646
      %v2772 = vpop.f32.mrf.mxu0
      %v2773 = vadd.f32 0.0, %v2772
      %v2774 = vpop.f32.mrf.mxu0
      %v2775 = vpop.f32.mrf.mxu0
      %v2776 = vadd.f32 0.0, %v2775
      %v2777 = vpop.f32.mrf.mxu0
      %2778 = vdwg.mxu0
      %v2779 = vadd.f32 %v2604, %v2737
      %v2780 = vadd.f32 %v2605, %v2740
      %v2781 = vadd.f32 %v2606, %v2745
      %v2782 = vadd.f32 %v2607, %v2748
      %v2783 = vadd.f32 %v2608, %v2765
      %v2784 = vadd.f32 %v2609, %v2768
      %v2785 = vadd.f32 %v2610, %v2773
      %v2786 = vadd.f32 %v2611, %v2776
      %v2787 = vld [vmem:[#allocation2 + $0x48] sm:$0xc]
      %v2788 = vld [vmem:[#allocation2 + $0x74] sm:$0xf]
      %s2789 = scalar_lea.vmem %s1, 896
      %v2790 = vld [vmem:[%s2789] sm:$0xf]
      %v2791 = vld [vmem:[%s2789 + $0x4] sm:$0xf]
      %v2792 = vld [vmem:[%s2789 + $0x8] sm:$0xf]
      %v2793 = vld [vmem:[%s2789 + $0xc] sm:$0xf]
      %v2794 = vld [vmem:[%s2789 + $0x10] sm:$0xf]
      %v2795 = vld [vmem:[%s2789 + $0x14] sm:$0xf]
      %v2796 = vld [vmem:[%s2789 + $0x18] sm:$0xf]
      %v2797 = vld [vmem:[%s2789 + $0x1c] sm:$0xf]
      %v2798 = vld [vmem:[%s2789 + $0x20] sm:$0xf]
      %v2799 = vld [vmem:[%s2789 + $0x24] sm:$0xf]
      %v2800 = vld [vmem:[%s2789 + $0x28] sm:$0xf]
      %v2801 = vld [vmem:[%s2789 + $0x2c] sm:$0xf]
      %v2802 = vld [vmem:[%s2789 + $0x30] sm:$0xf]
      %v2803 = vld [vmem:[%s2789 + $0x34] sm:$0xf]
      %v2804 = vld [vmem:[%s2789 + $0x38] sm:$0xf]
      %v2805 = vld [vmem:[%s2789 + $0x3c] sm:$0xf]
      %v2808 = vunpack.c.l.b16 %v2787
      %v2809 = vunpack.c.l.b16 %v2788
      %v2810 = vpack.c.b16 %v2456, %v2808
      %v2811 = vpack.c.b16 %v2809, %v2465
      %v2812 = vrot.slane %v2810, 2
      %v2813 = vrot.slane %v2468, 2
      %v2814 = vsel %vm619, %v2812, %v2813
      %v2815 = vrot.slane %v2469, 2
      %v2816 = vsel %vm619, %v2813, %v2815
      %v2817 = vrot.slane %v2470, 2
      %v2818 = vsel %vm619, %v2815, %v2817
      %v2819 = vrot.slane %v2471, 2
      %v2820 = vsel %vm619, %v2817, %v2819
      %v2821 = vrot.slane %v2811, 2
      %v2822 = vsel %vm619, %v2819, %v2821
      %v2845 = vunpack.c.l.b16 %v2790
      %v2846 = vunpack.c.l.b16 %v2791
      %v2847 = vunpack.c.l.b16 %v2792
      %v2848 = vunpack.c.l.b16 %v2793
      %v2849 = vunpack.c.l.b16 %v2794
      %v2850 = vunpack.c.l.b16 %v2795
      %v2851 = vunpack.c.l.b16 %v2796
      %v2852 = vunpack.c.l.b16 %v2797
      %v2853 = vunpack.c.l.b16 %v2798
      %v2854 = vunpack.c.l.b16 %v2799
      %v2855 = vunpack.c.l.b16 %v2800
      %v2856 = vunpack.c.l.b16 %v2801
      %v2857 = vunpack.c.l.b16 %v2802
      %v2858 = vunpack.c.l.b16 %v2803
      %v2859 = vunpack.c.l.b16 %v2804
      %v2860 = vunpack.c.l.b16 %v2805
      %v2861 = vpack.c.b16 %v2846, %v2845
      %v2862 = vpack.c.b16 %v2848, %v2847
      %v2863 = vpack.c.b16 %v2850, %v2849
      %v2864 = vpack.c.b16 %v2852, %v2851
      %v2865 = vpack.c.b16 %v2854, %v2853
      %v2866 = vpack.c.b16 %v2856, %v2855
      %v2867 = vpack.c.b16 %v2858, %v2857
      %v2868 = vpack.c.b16 %v2860, %v2859
      %2877 = vmatprep.subr.bf16.mxu0 0
      %2878 = vmatpush1.bf16.msra.mxu0 %v2868
      %2879 = vmatprep.subr.bf16.mxu0 0
      %2880 = vmatpush1.bf16.msra.mxu0 %v2867
      %2881 = vmatprep.subr.bf16.mxu0 0
      %2882 = vmatpush1.bf16.msra.mxu0 %v2866
      %2883 = vmatprep.subr.bf16.mxu0 0
      %2884 = vmatpush1.bf16.msra.mxu0 %v2865
      %2885 = vmatprep.subr.bf16.mxu0 0
      %2886 = vmatpush1.bf16.msra.mxu0 %v2864
      %2887 = vmatprep.subr.bf16.mxu0 0
      %2888 = vmatpush1.bf16.msra.mxu0 %v2863
      %2889 = vmatprep.subr.bf16.mxu0 0
      %2890 = vmatpush1.bf16.msra.mxu0 %v2862
      %2891 = vmatprep.subr.bf16.mxu0 0
      %2892 = vmatpush1.bf16.msra.mxu0 %v2861
      %2893 = vmatprep.subr.bf16.mxu0 0
      %2894 = vmatpush2.bf16.msra.mxu0 0
      %2895 = vmatprep.subr.bf16.mxu0 0
      %2896 = vmatpush2.bf16.msra.mxu0 0
      %2897 = vmatprep.subr.bf16.mxu0 0
      %2898 = vmatpush2.bf16.msra.mxu0 0
      %2899 = vmatprep.subr.bf16.mxu0 0
      %2900 = vmatpush2.bf16.msra.mxu0 0
      %2901 = vmatprep.subr.bf16.mxu0 0
      %2902 = vmatpush2.bf16.msra.mxu0 0
      %2903 = vmatprep.subr.bf16.mxu0 0
      %2904 = vmatpush2.bf16.msra.mxu0 0
      %2905 = vmatprep.subr.bf16.mxu0 0
      %2906 = vmatpush2.bf16.msra.mxu0 0
      %2907 = vmatprep.subr.bf16.mxu0 0
      %2908 = vmatpush2.bf16.msra.mxu0 0
      %2909 = vmatprep.mubr.bf16.mxu0 0
      %2910 = vmatmul.mubr.bf16.gmra.mxu0 %v2814
      %v2911 = vpop.f32.mrf.mxu0
      %v2912 = vadd.f32 0.0, %v2911
      %v2913 = vpop.f32.mrf.mxu0
      %v2914 = vpop.f32.mrf.mxu0
      %v2915 = vadd.f32 0.0, %v2914
      %v2916 = vpop.f32.mrf.mxu0
      %2917 = vmatprep.mubr.bf16.mxu0 0
      %2918 = vmatmul.mubr.bf16.gmra.mxu0 %v2816
      %v2919 = vpop.f32.mrf.mxu0
      %v2920 = vadd.f32 0.0, %v2919
      %v2921 = vpop.f32.mrf.mxu0
      %v2922 = vpop.f32.mrf.mxu0
      %v2923 = vadd.f32 0.0, %v2922
      %v2924 = vpop.f32.mrf.mxu0
      %2925 = vmatprep.mubr.bf16.mxu0 0
      %2926 = vmatmul.mubr.bf16.gmra.mxu0 %v2818
      %v2927 = vpop.f32.mrf.mxu0
      %v2928 = vpop.f32.mrf.mxu0
      %v2929 = vpop.f32.mrf.mxu0
      %v2930 = vpop.f32.mrf.mxu0
      %2931 = vmatprep.mubr.bf16.mxu0 0
      %2932 = vmatmul.mubr.bf16.gmra.mxu0 %v2820
      %v2933 = vpop.f32.mrf.mxu0
      %v2934 = vpop.f32.mrf.mxu0
      %v2935 = vpop.f32.mrf.mxu0
      %v2936 = vpop.f32.mrf.mxu0
      %2937 = vmatprep.mubr.bf16.mxu0 0
      %2938 = vmatmul.mubr.bf16.gmra.mxu0 %v2822
      %v2939 = vpop.f32.mrf.mxu0
      %v2940 = vadd.f32 0.0, %v2939
      %v2941 = vpop.f32.mrf.mxu0
      %v2942 = vpop.f32.mrf.mxu0
      %v2943 = vadd.f32 0.0, %v2942
      %v2944 = vpop.f32.mrf.mxu0
      %2945 = vmatprep.mubr.bf16.mxu0 0
      %2946 = vmatmul.mubr.bf16.gmra.mxu0 %v2821
      %v2947 = vpop.f32.mrf.mxu0
      %v2948 = vadd.f32 0.0, %v2947
      %v2949 = vpop.f32.mrf.mxu0
      %v2950 = vpop.f32.mrf.mxu0
      %v2951 = vadd.f32 0.0, %v2950
      %v2952 = vpop.f32.mrf.mxu0
      %2953 = vdwg.mxu0
      %v2954 = vadd.f32 %v2779, %v2912
      %v2955 = vadd.f32 %v2780, %v2915
      %v2956 = vadd.f32 %v2781, %v2920
      %v2957 = vadd.f32 %v2782, %v2923
      %v2958 = vadd.f32 %v2783, %v2940
      %v2959 = vadd.f32 %v2784, %v2943
      %v2960 = vadd.f32 %v2785, %v2948
      %v2961 = vadd.f32 %v2786, %v2951
      %v2962 = vld [vmem:[#allocation2 + $0x50] sm:$0xf]
      %v2963 = vld [vmem:[#allocation2 + $0x54] sm:$0xf]
      %v2964 = vld [vmem:[#allocation2 + $0x58] sm:$0xf]
      %v2965 = vld [vmem:[#allocation2 + $0x5c] sm:$0xf]
      %v2966 = vld [vmem:[#allocation2 + $0x60] sm:$0xf]
      %v2967 = vld [vmem:[#allocation2 + $0x64] sm:$0xf]
      %v2968 = vld [vmem:[#allocation2 + $0x68] sm:$0xf]
      %v2969 = vld [vmem:[#allocation2 + $0x6c] sm:$0xf]
      %v2970 = vld [vmem:[#allocation2 + $0x70] sm:$0xf]
      %v2971 = vld [vmem:[#allocation2 + $0x74] sm:$0xf]
      %v2972 = vld [vmem:[#allocation2 + $0x78] sm:$0xf]
      %v2973 = vld [vmem:[#allocation2 + $0x7c] sm:$0x3]
      %s2974 = scalar_lea.vmem %s1, 960
      %v2975 = vld [vmem:[%s2974] sm:$0xf]
      %v2976 = vld [vmem:[%s2974 + $0x4] sm:$0xf]
      %v2977 = vld [vmem:[%s2974 + $0x8] sm:$0xf]
      %v2978 = vld [vmem:[%s2974 + $0xc] sm:$0xf]
      %v2979 = vld [vmem:[%s2974 + $0x10] sm:$0xf]
      %v2980 = vld [vmem:[%s2974 + $0x14] sm:$0xf]
      %v2981 = vld [vmem:[%s2974 + $0x18] sm:$0xf]
      %v2982 = vld [vmem:[%s2974 + $0x1c] sm:$0xf]
      %v2983 = vld [vmem:[%s2974 + $0x20] sm:$0xf]
      %v2984 = vld [vmem:[%s2974 + $0x24] sm:$0xf]
      %v2985 = vld [vmem:[%s2974 + $0x28] sm:$0xf]
      %v2986 = vld [vmem:[%s2974 + $0x2c] sm:$0xf]
      %v2987 = vld [vmem:[%s2974 + $0x30] sm:$0xf]
      %v2988 = vld [vmem:[%s2974 + $0x34] sm:$0xf]
      %v2989 = vld [vmem:[%s2974 + $0x38] sm:$0xf]
      %v2990 = vld [vmem:[%s2974 + $0x3c] sm:$0xf]
      %v3003 = vunpack.c.l.b16 %v2962
      %v3004 = vunpack.c.l.b16 %v2963
      %v3005 = vunpack.c.l.b16 %v2964
      %v3006 = vunpack.c.l.b16 %v2965
      %v3007 = vunpack.c.l.b16 %v2966
      %v3008 = vunpack.c.l.b16 %v2967
      %v3009 = vunpack.c.l.b16 %v2968
      %v3010 = vunpack.c.l.b16 %v2969
      %v3011 = vunpack.c.l.b16 %v2970
      %v3012 = vunpack.c.l.b16 %v2971
      %v3013 = vunpack.c.l.b16 %v2972
      %v3014 = vunpack.c.l.b16 %v2973
      %v3015 = vpack.c.b16 %v3004, %v3003
      %v3016 = vpack.c.b16 %v3006, %v3005
      %v3017 = vpack.c.b16 %v3008, %v3007
      %v3018 = vpack.c.b16 %v3010, %v3009
      %v3019 = vpack.c.b16 %v3012, %v3011
      %v3020 = vpack.c.b16 %v3014, %v3013
      %v3043 = vunpack.c.l.b16 %v2975
      %v3044 = vunpack.c.l.b16 %v2976
      %v3045 = vunpack.c.l.b16 %v2977
      %v3046 = vunpack.c.l.b16 %v2978
      %v3047 = vunpack.c.l.b16 %v2979
      %v3048 = vunpack.c.l.b16 %v2980
      %v3049 = vunpack.c.l.b16 %v2981
      %v3050 = vunpack.c.l.b16 %v2982
      %v3051 = vunpack.c.l.b16 %v2983
      %v3052 = vunpack.c.l.b16 %v2984
      %v3053 = vunpack.c.l.b16 %v2985
      %v3054 = vunpack.c.l.b16 %v2986
      %v3055 = vunpack.c.l.b16 %v2987
      %v3056 = vunpack.c.l.b16 %v2988
      %v3057 = vunpack.c.l.b16 %v2989
      %v3058 = vunpack.c.l.b16 %v2990
      %v3059 = vpack.c.b16 %v3044, %v3043
      %v3060 = vpack.c.b16 %v3046, %v3045
      %v3061 = vpack.c.b16 %v3048, %v3047
      %v3062 = vpack.c.b16 %v3050, %v3049
      %v3063 = vpack.c.b16 %v3052, %v3051
      %v3064 = vpack.c.b16 %v3054, %v3053
      %v3065 = vpack.c.b16 %v3056, %v3055
      %v3066 = vpack.c.b16 %v3058, %v3057
      %3075 = vmatprep.subr.bf16.mxu0 0
      %3076 = vmatpush1.bf16.msra.mxu0 %v3066
      %3077 = vmatprep.subr.bf16.mxu0 0
      %3078 = vmatpush1.bf16.msra.mxu0 %v3065
      %3079 = vmatprep.subr.bf16.mxu0 0
      %3080 = vmatpush1.bf16.msra.mxu0 %v3064
      %3081 = vmatprep.subr.bf16.mxu0 0
      %3082 = vmatpush1.bf16.msra.mxu0 %v3063
      %3083 = vmatprep.subr.bf16.mxu0 0
      %3084 = vmatpush1.bf16.msra.mxu0 %v3062
      %3085 = vmatprep.subr.bf16.mxu0 0
      %3086 = vmatpush1.bf16.msra.mxu0 %v3061
      %3087 = vmatprep.subr.bf16.mxu0 0
      %3088 = vmatpush1.bf16.msra.mxu0 %v3060
      %3089 = vmatprep.subr.bf16.mxu0 0
      %3090 = vmatpush1.bf16.msra.mxu0 %v3059
      %3091 = vmatprep.subr.bf16.mxu0 0
      %3092 = vmatpush2.bf16.msra.mxu0 0
      %3093 = vmatprep.subr.bf16.mxu0 0
      %3094 = vmatpush2.bf16.msra.mxu0 0
      %3095 = vmatprep.subr.bf16.mxu0 0
      %3096 = vmatpush2.bf16.msra.mxu0 0
      %3097 = vmatprep.subr.bf16.mxu0 0
      %3098 = vmatpush2.bf16.msra.mxu0 0
      %3099 = vmatprep.subr.bf16.mxu0 0
      %3100 = vmatpush2.bf16.msra.mxu0 0
      %3101 = vmatprep.subr.bf16.mxu0 0
      %3102 = vmatpush2.bf16.msra.mxu0 0
      %3103 = vmatprep.subr.bf16.mxu0 0
      %3104 = vmatpush2.bf16.msra.mxu0 0
      %3105 = vmatprep.subr.bf16.mxu0 0
      %3106 = vmatpush2.bf16.msra.mxu0 0
      %3107 = vmatprep.mubr.bf16.mxu0 0
      %3108 = vmatmul.mubr.bf16.gmra.mxu0 %v3015
      %v3109 = vpop.f32.mrf.mxu0
      %v3110 = vadd.f32 0.0, %v3109
      %v3111 = vpop.f32.mrf.mxu0
      %v3112 = vpop.f32.mrf.mxu0
      %v3113 = vadd.f32 0.0, %v3112
      %v3114 = vpop.f32.mrf.mxu0
      %3115 = vmatprep.mubr.bf16.mxu0 0
      %3116 = vmatmul.mubr.bf16.gmra.mxu0 %v3016
      %v3117 = vpop.f32.mrf.mxu0
      %v3118 = vadd.f32 0.0, %v3117
      %v3119 = vpop.f32.mrf.mxu0
      %v3120 = vpop.f32.mrf.mxu0
      %v3121 = vadd.f32 0.0, %v3120
      %v3122 = vpop.f32.mrf.mxu0
      %3123 = vmatprep.mubr.bf16.mxu0 0
      %3124 = vmatmul.mubr.bf16.gmra.mxu0 %v3017
      %v3125 = vpop.f32.mrf.mxu0
      %v3126 = vpop.f32.mrf.mxu0
      %v3127 = vpop.f32.mrf.mxu0
      %v3128 = vpop.f32.mrf.mxu0
      %3129 = vmatprep.mubr.bf16.mxu0 0
      %3130 = vmatmul.mubr.bf16.gmra.mxu0 %v3018
      %v3131 = vpop.f32.mrf.mxu0
      %v3132 = vpop.f32.mrf.mxu0
      %v3133 = vpop.f32.mrf.mxu0
      %v3134 = vpop.f32.mrf.mxu0
      %3135 = vmatprep.mubr.bf16.mxu0 0
      %3136 = vmatmul.mubr.bf16.gmra.mxu0 %v3019
      %v3137 = vpop.f32.mrf.mxu0
      %v3138 = vadd.f32 0.0, %v3137
      %v3139 = vpop.f32.mrf.mxu0
      %v3140 = vpop.f32.mrf.mxu0
      %v3141 = vadd.f32 0.0, %v3140
      %v3142 = vpop.f32.mrf.mxu0
      %3143 = vmatprep.mubr.bf16.mxu0 0
      %3144 = vmatmul.mubr.bf16.gmra.mxu0 %v3020
      %v3145 = vpop.f32.mrf.mxu0
      %v3146 = vadd.f32 0.0, %v3145
      %v3147 = vpop.f32.mrf.mxu0
      %v3148 = vpop.f32.mrf.mxu0
      %v3149 = vadd.f32 0.0, %v3148
      %v3150 = vpop.f32.mrf.mxu0
      %3151 = vdwg.mxu0
      %v3152 = vadd.f32 %v2954, %v3110
      %v3153 = vadd.f32 %v2955, %v3113
      %v3154 = vadd.f32 %v2956, %v3118
      %v3155 = vadd.f32 %v2957, %v3121
      %v3156 = vadd.f32 %v2958, %v3138
      %v3157 = vadd.f32 %v2959, %v3141
      %v3158 = vadd.f32 %v2960, %v3146
      %v3159 = vadd.f32 %v2961, %v3149
      %v3160 = vld [vmem:[#allocation2 + $0x50] sm:$0xe]
      %v3161 = vld [vmem:[#allocation2 + $0x7c] sm:$0x7]
      %s3162 = scalar_lea.vmem %s1, 1024
      %v3163 = vld [vmem:[%s3162] sm:$0xf]
      %v3164 = vld [vmem:[%s3162 + $0x4] sm:$0xf]
      %v3165 = vld [vmem:[%s3162 + $0x8] sm:$0xf]
      %v3166 = vld [vmem:[%s3162 + $0xc] sm:$0xf]
      %v3167 = vld [vmem:[%s3162 + $0x10] sm:$0xf]
      %v3168 = vld [vmem:[%s3162 + $0x14] sm:$0xf]
      %v3169 = vld [vmem:[%s3162 + $0x18] sm:$0xf]
      %v3170 = vld [vmem:[%s3162 + $0x1c] sm:$0xf]
      %v3171 = vld [vmem:[%s3162 + $0x20] sm:$0xf]
      %v3172 = vld [vmem:[%s3162 + $0x24] sm:$0xf]
      %v3173 = vld [vmem:[%s3162 + $0x28] sm:$0xf]
      %v3174 = vld [vmem:[%s3162 + $0x2c] sm:$0xf]
      %v3175 = vld [vmem:[%s3162 + $0x30] sm:$0xf]
      %v3176 = vld [vmem:[%s3162 + $0x34] sm:$0xf]
      %v3177 = vld [vmem:[%s3162 + $0x38] sm:$0xf]
      %v3178 = vld [vmem:[%s3162 + $0x3c] sm:$0xf]
      %v3181 = vunpack.c.l.b16 %v3160
      %v3182 = vunpack.c.l.b16 %v3161
      %v3183 = vpack.c.b16 %v3004, %v3181
      %v3184 = vpack.c.b16 %v3182, %v3013
      %v3185 = vrot.slane %v3183, 1
      %v3186 = vrot.slane %v3016, 1
      %v3187 = vsel %vm314, %v3185, %v3186
      %v3188 = vrot.slane %v3017, 1
      %v3189 = vsel %vm314, %v3186, %v3188
      %v3190 = vrot.slane %v3018, 1
      %v3191 = vsel %vm314, %v3188, %v3190
      %v3192 = vrot.slane %v3019, 1
      %v3193 = vsel %vm314, %v3190, %v3192
      %v3194 = vrot.slane %v3184, 1
      %v3195 = vsel %vm314, %v3192, %v3194
      %v3218 = vunpack.c.l.b16 %v3163
      %v3219 = vunpack.c.l.b16 %v3164
      %v3220 = vunpack.c.l.b16 %v3165
      %v3221 = vunpack.c.l.b16 %v3166
      %v3222 = vunpack.c.l.b16 %v3167
      %v3223 = vunpack.c.l.b16 %v3168
      %v3224 = vunpack.c.l.b16 %v3169
      %v3225 = vunpack.c.l.b16 %v3170
      %v3226 = vunpack.c.l.b16 %v3171
      %v3227 = vunpack.c.l.b16 %v3172
      %v3228 = vunpack.c.l.b16 %v3173
      %v3229 = vunpack.c.l.b16 %v3174
      %v3230 = vunpack.c.l.b16 %v3175
      %v3231 = vunpack.c.l.b16 %v3176
      %v3232 = vunpack.c.l.b16 %v3177
      %v3233 = vunpack.c.l.b16 %v3178
      %v3234 = vpack.c.b16 %v3219, %v3218
      %v3235 = vpack.c.b16 %v3221, %v3220
      %v3236 = vpack.c.b16 %v3223, %v3222
      %v3237 = vpack.c.b16 %v3225, %v3224
      %v3238 = vpack.c.b16 %v3227, %v3226
      %v3239 = vpack.c.b16 %v3229, %v3228
      %v3240 = vpack.c.b16 %v3231, %v3230
      %v3241 = vpack.c.b16 %v3233, %v3232
      %3250 = vmatprep.subr.bf16.mxu0 0
      %3251 = vmatpush1.bf16.msra.mxu0 %v3241
      %3252 = vmatprep.subr.bf16.mxu0 0
      %3253 = vmatpush1.bf16.msra.mxu0 %v3240
      %3254 = vmatprep.subr.bf16.mxu0 0
      %3255 = vmatpush1.bf16.msra.mxu0 %v3239
      %3256 = vmatprep.subr.bf16.mxu0 0
      %3257 = vmatpush1.bf16.msra.mxu0 %v3238
      %3258 = vmatprep.subr.bf16.mxu0 0
      %3259 = vmatpush1.bf16.msra.mxu0 %v3237
      %3260 = vmatprep.subr.bf16.mxu0 0
      %3261 = vmatpush1.bf16.msra.mxu0 %v3236
      %3262 = vmatprep.subr.bf16.mxu0 0
      %3263 = vmatpush1.bf16.msra.mxu0 %v3235
      %3264 = vmatprep.subr.bf16.mxu0 0
      %3265 = vmatpush1.bf16.msra.mxu0 %v3234
      %3266 = vmatprep.subr.bf16.mxu0 0
      %3267 = vmatpush2.bf16.msra.mxu0 0
      %3268 = vmatprep.subr.bf16.mxu0 0
      %3269 = vmatpush2.bf16.msra.mxu0 0
      %3270 = vmatprep.subr.bf16.mxu0 0
      %3271 = vmatpush2.bf16.msra.mxu0 0
      %3272 = vmatprep.subr.bf16.mxu0 0
      %3273 = vmatpush2.bf16.msra.mxu0 0
      %3274 = vmatprep.subr.bf16.mxu0 0
      %3275 = vmatpush2.bf16.msra.mxu0 0
      %3276 = vmatprep.subr.bf16.mxu0 0
      %3277 = vmatpush2.bf16.msra.mxu0 0
      %3278 = vmatprep.subr.bf16.mxu0 0
      %3279 = vmatpush2.bf16.msra.mxu0 0
      %3280 = vmatprep.subr.bf16.mxu0 0
      %3281 = vmatpush2.bf16.msra.mxu0 0
      %3282 = vmatprep.mubr.bf16.mxu0 0
      %3283 = vmatmul.mubr.bf16.gmra.mxu0 %v3187
      %v3284 = vpop.f32.mrf.mxu0
      %v3285 = vadd.f32 0.0, %v3284
      %v3286 = vpop.f32.mrf.mxu0
      %v3287 = vpop.f32.mrf.mxu0
      %v3288 = vadd.f32 0.0, %v3287
      %v3289 = vpop.f32.mrf.mxu0
      %3290 = vmatprep.mubr.bf16.mxu0 0
      %3291 = vmatmul.mubr.bf16.gmra.mxu0 %v3189
      %v3292 = vpop.f32.mrf.mxu0
      %v3293 = vadd.f32 0.0, %v3292
      %v3294 = vpop.f32.mrf.mxu0
      %v3295 = vpop.f32.mrf.mxu0
      %v3296 = vadd.f32 0.0, %v3295
      %v3297 = vpop.f32.mrf.mxu0
      %3298 = vmatprep.mubr.bf16.mxu0 0
      %3299 = vmatmul.mubr.bf16.gmra.mxu0 %v3191
      %v3300 = vpop.f32.mrf.mxu0
      %v3301 = vpop.f32.mrf.mxu0
      %v3302 = vpop.f32.mrf.mxu0
      %v3303 = vpop.f32.mrf.mxu0
      %3304 = vmatprep.mubr.bf16.mxu0 0
      %3305 = vmatmul.mubr.bf16.gmra.mxu0 %v3193
      %v3306 = vpop.f32.mrf.mxu0
      %v3307 = vpop.f32.mrf.mxu0
      %v3308 = vpop.f32.mrf.mxu0
      %v3309 = vpop.f32.mrf.mxu0
      %3310 = vmatprep.mubr.bf16.mxu0 0
      %3311 = vmatmul.mubr.bf16.gmra.mxu0 %v3195
      %v3312 = vpop.f32.mrf.mxu0
      %v3313 = vadd.f32 0.0, %v3312
      %v3314 = vpop.f32.mrf.mxu0
      %v3315 = vpop.f32.mrf.mxu0
      %v3316 = vadd.f32 0.0, %v3315
      %v3317 = vpop.f32.mrf.mxu0
      %3318 = vmatprep.mubr.bf16.mxu0 0
      %3319 = vmatmul.mubr.bf16.gmra.mxu0 %v3194
      %v3320 = vpop.f32.mrf.mxu0
      %v3321 = vadd.f32 0.0, %v3320
      %v3322 = vpop.f32.mrf.mxu0
      %v3323 = vpop.f32.mrf.mxu0
      %v3324 = vadd.f32 0.0, %v3323
      %v3325 = vpop.f32.mrf.mxu0
      %3326 = vdwg.mxu0
      %v3327 = vadd.f32 %v3152, %v3285
      %v3328 = vadd.f32 %v3153, %v3288
      %v3329 = vadd.f32 %v3154, %v3293
      %v3330 = vadd.f32 %v3155, %v3296
      %v3331 = vadd.f32 %v3156, %v3313
      %v3332 = vadd.f32 %v3157, %v3316
      %v3333 = vadd.f32 %v3158, %v3321
      %v3334 = vadd.f32 %v3159, %v3324
      %v3335 = vld [vmem:[#allocation2 + $0x50] sm:$0xc]
      %v3336 = vld [vmem:[#allocation2 + $0x7c] sm:$0xf]
      %s3337 = scalar_lea.vmem %s1, 1088
      %v3338 = vld [vmem:[%s3337] sm:$0xf]
      %v3339 = vld [vmem:[%s3337 + $0x4] sm:$0xf]
      %v3340 = vld [vmem:[%s3337 + $0x8] sm:$0xf]
      %v3341 = vld [vmem:[%s3337 + $0xc] sm:$0xf]
      %v3342 = vld [vmem:[%s3337 + $0x10] sm:$0xf]
      %v3343 = vld [vmem:[%s3337 + $0x14] sm:$0xf]
      %v3344 = vld [vmem:[%s3337 + $0x18] sm:$0xf]
      %v3345 = vld [vmem:[%s3337 + $0x1c] sm:$0xf]
      %v3346 = vld [vmem:[%s3337 + $0x20] sm:$0xf]
      %v3347 = vld [vmem:[%s3337 + $0x24] sm:$0xf]
      %v3348 = vld [vmem:[%s3337 + $0x28] sm:$0xf]
      %v3349 = vld [vmem:[%s3337 + $0x2c] sm:$0xf]
      %v3350 = vld [vmem:[%s3337 + $0x30] sm:$0xf]
      %v3351 = vld [vmem:[%s3337 + $0x34] sm:$0xf]
      %v3352 = vld [vmem:[%s3337 + $0x38] sm:$0xf]
      %v3353 = vld [vmem:[%s3337 + $0x3c] sm:$0xf]
      %v3356 = vunpack.c.l.b16 %v3335
      %v3357 = vunpack.c.l.b16 %v3336
      %v3358 = vpack.c.b16 %v3004, %v3356
      %v3359 = vpack.c.b16 %v3357, %v3013
      %v3360 = vrot.slane %v3358, 2
      %v3361 = vrot.slane %v3016, 2
      %v3362 = vsel %vm619, %v3360, %v3361
      %v3363 = vrot.slane %v3017, 2
      %v3364 = vsel %vm619, %v3361, %v3363
      %v3365 = vrot.slane %v3018, 2
      %v3366 = vsel %vm619, %v3363, %v3365
      %v3367 = vrot.slane %v3019, 2
      %v3368 = vsel %vm619, %v3365, %v3367
      %v3369 = vrot.slane %v3359, 2
      %v3370 = vsel %vm619, %v3367, %v3369
      %v3393 = vunpack.c.l.b16 %v3338
      %v3394 = vunpack.c.l.b16 %v3339
      %v3395 = vunpack.c.l.b16 %v3340
      %v3396 = vunpack.c.l.b16 %v3341
      %v3397 = vunpack.c.l.b16 %v3342
      %v3398 = vunpack.c.l.b16 %v3343
      %v3399 = vunpack.c.l.b16 %v3344
      %v3400 = vunpack.c.l.b16 %v3345
      %v3401 = vunpack.c.l.b16 %v3346
      %v3402 = vunpack.c.l.b16 %v3347
      %v3403 = vunpack.c.l.b16 %v3348
      %v3404 = vunpack.c.l.b16 %v3349
      %v3405 = vunpack.c.l.b16 %v3350
      %v3406 = vunpack.c.l.b16 %v3351
      %v3407 = vunpack.c.l.b16 %v3352
      %v3408 = vunpack.c.l.b16 %v3353
      %v3409 = vpack.c.b16 %v3394, %v3393
      %v3410 = vpack.c.b16 %v3396, %v3395
      %v3411 = vpack.c.b16 %v3398, %v3397
      %v3412 = vpack.c.b16 %v3400, %v3399
      %v3413 = vpack.c.b16 %v3402, %v3401
      %v3414 = vpack.c.b16 %v3404, %v3403
      %v3415 = vpack.c.b16 %v3406, %v3405
      %v3416 = vpack.c.b16 %v3408, %v3407
      %3425 = vmatprep.subr.bf16.mxu0 0
      %3426 = vmatpush1.bf16.msra.mxu0 %v3416
      %3427 = vmatprep.subr.bf16.mxu0 0
      %3428 = vmatpush1.bf16.msra.mxu0 %v3415
      %3429 = vmatprep.subr.bf16.mxu0 0
      %3430 = vmatpush1.bf16.msra.mxu0 %v3414
      %3431 = vmatprep.subr.bf16.mxu0 0
      %3432 = vmatpush1.bf16.msra.mxu0 %v3413
      %3433 = vmatprep.subr.bf16.mxu0 0
      %3434 = vmatpush1.bf16.msra.mxu0 %v3412
      %3435 = vmatprep.subr.bf16.mxu0 0
      %3436 = vmatpush1.bf16.msra.mxu0 %v3411
      %3437 = vmatprep.subr.bf16.mxu0 0
      %3438 = vmatpush1.bf16.msra.mxu0 %v3410
      %3439 = vmatprep.subr.bf16.mxu0 0
      %3440 = vmatpush1.bf16.msra.mxu0 %v3409
      %3441 = vmatprep.subr.bf16.mxu0 0
      %3442 = vmatpush2.bf16.msra.mxu0 0
      %3443 = vmatprep.subr.bf16.mxu0 0
      %3444 = vmatpush2.bf16.msra.mxu0 0
      %3445 = vmatprep.subr.bf16.mxu0 0
      %3446 = vmatpush2.bf16.msra.mxu0 0
      %3447 = vmatprep.subr.bf16.mxu0 0
      %3448 = vmatpush2.bf16.msra.mxu0 0
      %3449 = vmatprep.subr.bf16.mxu0 0
      %3450 = vmatpush2.bf16.msra.mxu0 0
      %3451 = vmatprep.subr.bf16.mxu0 0
      %3452 = vmatpush2.bf16.msra.mxu0 0
      %3453 = vmatprep.subr.bf16.mxu0 0
      %3454 = vmatpush2.bf16.msra.mxu0 0
      %3455 = vmatprep.subr.bf16.mxu0 0
      %3456 = vmatpush2.bf16.msra.mxu0 0
      %3457 = vmatprep.mubr.bf16.mxu0 0
      %3458 = vmatmul.mubr.bf16.gmra.mxu0 %v3362
      %v3459 = vpop.f32.mrf.mxu0
      %v3460 = vadd.f32 0.0, %v3459
      %v3461 = vpop.f32.mrf.mxu0
      %v3462 = vpop.f32.mrf.mxu0
      %v3463 = vadd.f32 0.0, %v3462
      %v3464 = vpop.f32.mrf.mxu0
      %3465 = vmatprep.mubr.bf16.mxu0 0
      %3466 = vmatmul.mubr.bf16.gmra.mxu0 %v3364
      %v3467 = vpop.f32.mrf.mxu0
      %v3468 = vadd.f32 0.0, %v3467
      %v3469 = vpop.f32.mrf.mxu0
      %v3470 = vpop.f32.mrf.mxu0
      %v3471 = vadd.f32 0.0, %v3470
      %v3472 = vpop.f32.mrf.mxu0
      %3473 = vmatprep.mubr.bf16.mxu0 0
      %3474 = vmatmul.mubr.bf16.gmra.mxu0 %v3366
      %v3475 = vpop.f32.mrf.mxu0
      %v3476 = vpop.f32.mrf.mxu0
      %v3477 = vpop.f32.mrf.mxu0
      %v3478 = vpop.f32.mrf.mxu0
      %3479 = vmatprep.mubr.bf16.mxu0 0
      %3480 = vmatmul.mubr.bf16.gmra.mxu0 %v3368
      %v3481 = vpop.f32.mrf.mxu0
      %v3482 = vpop.f32.mrf.mxu0
      %v3483 = vpop.f32.mrf.mxu0
      %v3484 = vpop.f32.mrf.mxu0
      %3485 = vmatprep.mubr.bf16.mxu0 0
      %3486 = vmatmul.mubr.bf16.gmra.mxu0 %v3370
      %v3487 = vpop.f32.mrf.mxu0
      %v3488 = vadd.f32 0.0, %v3487
      %v3489 = vpop.f32.mrf.mxu0
      %v3490 = vpop.f32.mrf.mxu0
      %v3491 = vadd.f32 0.0, %v3490
      %v3492 = vpop.f32.mrf.mxu0
      %3493 = vmatprep.mubr.bf16.mxu0 0
      %3494 = vmatmul.mubr.bf16.gmra.mxu0 %v3369
      %v3495 = vpop.f32.mrf.mxu0
      %v3496 = vadd.f32 0.0, %v3495
      %v3497 = vpop.f32.mrf.mxu0
      %v3498 = vpop.f32.mrf.mxu0
      %v3499 = vadd.f32 0.0, %v3498
      %v3500 = vpop.f32.mrf.mxu0
      %3501 = vdwg.mxu0
      %v3502 = vadd.f32 %v3327, %v3460
      %v3503 = vadd.f32 %v3328, %v3463
      %v3504 = vadd.f32 %v3329, %v3468
      %v3505 = vadd.f32 %v3330, %v3471
      %v3506 = vadd.f32 %v3331, %v3488
      %v3507 = vadd.f32 %v3332, %v3491
      %v3508 = vadd.f32 %v3333, %v3496
      %v3509 = vadd.f32 %v3334, %v3499
      %v3510 = vld [vmem:[#allocation2 + $0x80] sm:$0xf]
      %v3511 = vld [vmem:[#allocation2 + $0x84] sm:$0xf]
      %v3512 = vld [vmem:[#allocation2 + $0x88] sm:$0xf]
      %v3513 = vld [vmem:[#allocation2 + $0x8c] sm:$0xf]
      %v3514 = vld [vmem:[#allocation2 + $0x90] sm:$0xf]
      %v3515 = vld [vmem:[#allocation2 + $0x94] sm:$0xf]
      %v3516 = vld [vmem:[#allocation2 + $0x98] sm:$0xf]
      %v3517 = vld [vmem:[#allocation2 + $0x9c] sm:$0xf]
      %v3518 = vld [vmem:[#allocation2 + $0xa0] sm:$0xf]
      %v3519 = vld [vmem:[#allocation2 + $0xa4] sm:$0xf]
      %v3520 = vld [vmem:[#allocation2 + $0xa8] sm:$0xf]
      %v3521 = vld [vmem:[#allocation2 + $0xac] sm:$0x3]
      %s3522 = scalar_lea.vmem %s1, 1152
      %v3523 = vld [vmem:[%s3522] sm:$0xf]
      %v3524 = vld [vmem:[%s3522 + $0x4] sm:$0xf]
      %v3525 = vld [vmem:[%s3522 + $0x8] sm:$0xf]
      %v3526 = vld [vmem:[%s3522 + $0xc] sm:$0xf]
      %v3527 = vld [vmem:[%s3522 + $0x10] sm:$0xf]
      %v3528 = vld [vmem:[%s3522 + $0x14] sm:$0xf]
      %v3529 = vld [vmem:[%s3522 + $0x18] sm:$0xf]
      %v3530 = vld [vmem:[%s3522 + $0x1c] sm:$0xf]
      %v3531 = vld [vmem:[%s3522 + $0x20] sm:$0xf]
      %v3532 = vld [vmem:[%s3522 + $0x24] sm:$0xf]
      %v3533 = vld [vmem:[%s3522 + $0x28] sm:$0xf]
      %v3534 = vld [vmem:[%s3522 + $0x2c] sm:$0xf]
      %v3535 = vld [vmem:[%s3522 + $0x30] sm:$0xf]
      %v3536 = vld [vmem:[%s3522 + $0x34] sm:$0xf]
      %v3537 = vld [vmem:[%s3522 + $0x38] sm:$0xf]
      %v3538 = vld [vmem:[%s3522 + $0x3c] sm:$0xf]
      %v3551 = vunpack.c.l.b16 %v3510
      %v3552 = vunpack.c.l.b16 %v3511
      %v3553 = vunpack.c.l.b16 %v3512
      %v3554 = vunpack.c.l.b16 %v3513
      %v3555 = vunpack.c.l.b16 %v3514
      %v3556 = vunpack.c.l.b16 %v3515
      %v3557 = vunpack.c.l.b16 %v3516
      %v3558 = vunpack.c.l.b16 %v3517
      %v3559 = vunpack.c.l.b16 %v3518
      %v3560 = vunpack.c.l.b16 %v3519
      %v3561 = vunpack.c.l.b16 %v3520
      %v3562 = vunpack.c.l.b16 %v3521
      %v3563 = vpack.c.b16 %v3552, %v3551
      %v3564 = vpack.c.b16 %v3554, %v3553
      %v3565 = vpack.c.b16 %v3556, %v3555
      %v3566 = vpack.c.b16 %v3558, %v3557
      %v3567 = vpack.c.b16 %v3560, %v3559
      %v3568 = vpack.c.b16 %v3562, %v3561
      %v3591 = vunpack.c.l.b16 %v3523
      %v3592 = vunpack.c.l.b16 %v3524
      %v3593 = vunpack.c.l.b16 %v3525
      %v3594 = vunpack.c.l.b16 %v3526
      %v3595 = vunpack.c.l.b16 %v3527
      %v3596 = vunpack.c.l.b16 %v3528
      %v3597 = vunpack.c.l.b16 %v3529
      %v3598 = vunpack.c.l.b16 %v3530
      %v3599 = vunpack.c.l.b16 %v3531
      %v3600 = vunpack.c.l.b16 %v3532
      %v3601 = vunpack.c.l.b16 %v3533
      %v3602 = vunpack.c.l.b16 %v3534
      %v3603 = vunpack.c.l.b16 %v3535
      %v3604 = vunpack.c.l.b16 %v3536
      %v3605 = vunpack.c.l.b16 %v3537
      %v3606 = vunpack.c.l.b16 %v3538
      %v3607 = vpack.c.b16 %v3592, %v3591
      %v3608 = vpack.c.b16 %v3594, %v3593
      %v3609 = vpack.c.b16 %v3596, %v3595
      %v3610 = vpack.c.b16 %v3598, %v3597
      %v3611 = vpack.c.b16 %v3600, %v3599
      %v3612 = vpack.c.b16 %v3602, %v3601
      %v3613 = vpack.c.b16 %v3604, %v3603
      %v3614 = vpack.c.b16 %v3606, %v3605
      %3623 = vmatprep.subr.bf16.mxu0 0
      %3624 = vmatpush1.bf16.msra.mxu0 %v3614
      %3625 = vmatprep.subr.bf16.mxu0 0
      %3626 = vmatpush1.bf16.msra.mxu0 %v3613
      %3627 = vmatprep.subr.bf16.mxu0 0
      %3628 = vmatpush1.bf16.msra.mxu0 %v3612
      %3629 = vmatprep.subr.bf16.mxu0 0
      %3630 = vmatpush1.bf16.msra.mxu0 %v3611
      %3631 = vmatprep.subr.bf16.mxu0 0
      %3632 = vmatpush1.bf16.msra.mxu0 %v3610
      %3633 = vmatprep.subr.bf16.mxu0 0
      %3634 = vmatpush1.bf16.msra.mxu0 %v3609
      %3635 = vmatprep.subr.bf16.mxu0 0
      %3636 = vmatpush1.bf16.msra.mxu0 %v3608
      %3637 = vmatprep.subr.bf16.mxu0 0
      %3638 = vmatpush1.bf16.msra.mxu0 %v3607
      %3639 = vmatprep.subr.bf16.mxu0 0
      %3640 = vmatpush2.bf16.msra.mxu0 0
      %3641 = vmatprep.subr.bf16.mxu0 0
      %3642 = vmatpush2.bf16.msra.mxu0 0
      %3643 = vmatprep.subr.bf16.mxu0 0
      %3644 = vmatpush2.bf16.msra.mxu0 0
      %3645 = vmatprep.subr.bf16.mxu0 0
      %3646 = vmatpush2.bf16.msra.mxu0 0
      %3647 = vmatprep.subr.bf16.mxu0 0
      %3648 = vmatpush2.bf16.msra.mxu0 0
      %3649 = vmatprep.subr.bf16.mxu0 0
      %3650 = vmatpush2.bf16.msra.mxu0 0
      %3651 = vmatprep.subr.bf16.mxu0 0
      %3652 = vmatpush2.bf16.msra.mxu0 0
      %3653 = vmatprep.subr.bf16.mxu0 0
      %3654 = vmatpush2.bf16.msra.mxu0 0
      %3655 = vmatprep.mubr.bf16.mxu0 0
      %3656 = vmatmul.mubr.bf16.gmra.mxu0 %v3563
      %v3657 = vpop.f32.mrf.mxu0
      %v3658 = vadd.f32 0.0, %v3657
      %v3659 = vpop.f32.mrf.mxu0
      %v3660 = vpop.f32.mrf.mxu0
      %v3661 = vadd.f32 0.0, %v3660
      %v3662 = vpop.f32.mrf.mxu0
      %3663 = vmatprep.mubr.bf16.mxu0 0
      %3664 = vmatmul.mubr.bf16.gmra.mxu0 %v3564
      %v3665 = vpop.f32.mrf.mxu0
      %v3666 = vadd.f32 0.0, %v3665
      %v3667 = vpop.f32.mrf.mxu0
      %v3668 = vpop.f32.mrf.mxu0
      %v3669 = vadd.f32 0.0, %v3668
      %v3670 = vpop.f32.mrf.mxu0
      %3671 = vmatprep.mubr.bf16.mxu0 0
      %3672 = vmatmul.mubr.bf16.gmra.mxu0 %v3565
      %v3673 = vpop.f32.mrf.mxu0
      %v3674 = vpop.f32.mrf.mxu0
      %v3675 = vpop.f32.mrf.mxu0
      %v3676 = vpop.f32.mrf.mxu0
      %3677 = vmatprep.mubr.bf16.mxu0 0
      %3678 = vmatmul.mubr.bf16.gmra.mxu0 %v3566
      %v3679 = vpop.f32.mrf.mxu0
      %v3680 = vpop.f32.mrf.mxu0
      %v3681 = vpop.f32.mrf.mxu0
      %v3682 = vpop.f32.mrf.mxu0
      %3683 = vmatprep.mubr.bf16.mxu0 0
      %3684 = vmatmul.mubr.bf16.gmra.mxu0 %v3567
      %v3685 = vpop.f32.mrf.mxu0
      %v3686 = vadd.f32 0.0, %v3685
      %v3687 = vpop.f32.mrf.mxu0
      %v3688 = vpop.f32.mrf.mxu0
      %v3689 = vadd.f32 0.0, %v3688
      %v3690 = vpop.f32.mrf.mxu0
      %3691 = vmatprep.mubr.bf16.mxu0 0
      %3692 = vmatmul.mubr.bf16.gmra.mxu0 %v3568
      %v3693 = vpop.f32.mrf.mxu0
      %v3694 = vadd.f32 0.0, %v3693
      %v3695 = vpop.f32.mrf.mxu0
      %v3696 = vpop.f32.mrf.mxu0
      %v3697 = vadd.f32 0.0, %v3696
      %v3698 = vpop.f32.mrf.mxu0
      %3699 = vdwg.mxu0
      %v3700 = vadd.f32 %v3502, %v3658
      %v3701 = vadd.f32 %v3503, %v3661
      %v3702 = vadd.f32 %v3504, %v3666
      %v3703 = vadd.f32 %v3505, %v3669
      %v3704 = vadd.f32 %v3506, %v3686
      %v3705 = vadd.f32 %v3507, %v3689
      %v3706 = vadd.f32 %v3508, %v3694
      %v3707 = vadd.f32 %v3509, %v3697
      %v3708 = vld [vmem:[#allocation2 + $0x80] sm:$0xe]
      %v3709 = vld [vmem:[#allocation2 + $0xac] sm:$0x7]
      %s3710 = scalar_lea.vmem %s1, 1216
      %v3711 = vld [vmem:[%s3710] sm:$0xf]
      %v3712 = vld [vmem:[%s3710 + $0x4] sm:$0xf]
      %v3713 = vld [vmem:[%s3710 + $0x8] sm:$0xf]
      %v3714 = vld [vmem:[%s3710 + $0xc] sm:$0xf]
      %v3715 = vld [vmem:[%s3710 + $0x10] sm:$0xf]
      %v3716 = vld [vmem:[%s3710 + $0x14] sm:$0xf]
      %v3717 = vld [vmem:[%s3710 + $0x18] sm:$0xf]
      %v3718 = vld [vmem:[%s3710 + $0x1c] sm:$0xf]
      %v3719 = vld [vmem:[%s3710 + $0x20] sm:$0xf]
      %v3720 = vld [vmem:[%s3710 + $0x24] sm:$0xf]
      %v3721 = vld [vmem:[%s3710 + $0x28] sm:$0xf]
      %v3722 = vld [vmem:[%s3710 + $0x2c] sm:$0xf]
      %v3723 = vld [vmem:[%s3710 + $0x30] sm:$0xf]
      %v3724 = vld [vmem:[%s3710 + $0x34] sm:$0xf]
      %v3725 = vld [vmem:[%s3710 + $0x38] sm:$0xf]
      %v3726 = vld [vmem:[%s3710 + $0x3c] sm:$0xf]
      %v3729 = vunpack.c.l.b16 %v3708
      %v3730 = vunpack.c.l.b16 %v3709
      %v3731 = vpack.c.b16 %v3552, %v3729
      %v3732 = vpack.c.b16 %v3730, %v3561
      %v3733 = vrot.slane %v3731, 1
      %v3734 = vrot.slane %v3564, 1
      %v3735 = vsel %vm314, %v3733, %v3734
      %v3736 = vrot.slane %v3565, 1
      %v3737 = vsel %vm314, %v3734, %v3736
      %v3738 = vrot.slane %v3566, 1
      %v3739 = vsel %vm314, %v3736, %v3738
      %v3740 = vrot.slane %v3567, 1
      %v3741 = vsel %vm314, %v3738, %v3740
      %v3742 = vrot.slane %v3732, 1
      %v3743 = vsel %vm314, %v3740, %v3742
      %v3766 = vunpack.c.l.b16 %v3711
      %v3767 = vunpack.c.l.b16 %v3712
      %v3768 = vunpack.c.l.b16 %v3713
      %v3769 = vunpack.c.l.b16 %v3714
      %v3770 = vunpack.c.l.b16 %v3715
      %v3771 = vunpack.c.l.b16 %v3716
      %v3772 = vunpack.c.l.b16 %v3717
      %v3773 = vunpack.c.l.b16 %v3718
      %v3774 = vunpack.c.l.b16 %v3719
      %v3775 = vunpack.c.l.b16 %v3720
      %v3776 = vunpack.c.l.b16 %v3721
      %v3777 = vunpack.c.l.b16 %v3722
      %v3778 = vunpack.c.l.b16 %v3723
      %v3779 = vunpack.c.l.b16 %v3724
      %v3780 = vunpack.c.l.b16 %v3725
      %v3781 = vunpack.c.l.b16 %v3726
      %v3782 = vpack.c.b16 %v3767, %v3766
      %v3783 = vpack.c.b16 %v3769, %v3768
      %v3784 = vpack.c.b16 %v3771, %v3770
      %v3785 = vpack.c.b16 %v3773, %v3772
      %v3786 = vpack.c.b16 %v3775, %v3774
      %v3787 = vpack.c.b16 %v3777, %v3776
      %v3788 = vpack.c.b16 %v3779, %v3778
      %v3789 = vpack.c.b16 %v3781, %v3780
      %3798 = vmatprep.subr.bf16.mxu0 0
      %3799 = vmatpush1.bf16.msra.mxu0 %v3789
      %3800 = vmatprep.subr.bf16.mxu0 0
      %3801 = vmatpush1.bf16.msra.mxu0 %v3788
      %3802 = vmatprep.subr.bf16.mxu0 0
      %3803 = vmatpush1.bf16.msra.mxu0 %v3787
      %3804 = vmatprep.subr.bf16.mxu0 0
      %3805 = vmatpush1.bf16.msra.mxu0 %v3786
      %3806 = vmatprep.subr.bf16.mxu0 0
      %3807 = vmatpush1.bf16.msra.mxu0 %v3785
      %3808 = vmatprep.subr.bf16.mxu0 0
      %3809 = vmatpush1.bf16.msra.mxu0 %v3784
      %3810 = vmatprep.subr.bf16.mxu0 0
      %3811 = vmatpush1.bf16.msra.mxu0 %v3783
      %3812 = vmatprep.subr.bf16.mxu0 0
      %3813 = vmatpush1.bf16.msra.mxu0 %v3782
      %3814 = vmatprep.subr.bf16.mxu0 0
      %3815 = vmatpush2.bf16.msra.mxu0 0
      %3816 = vmatprep.subr.bf16.mxu0 0
      %3817 = vmatpush2.bf16.msra.mxu0 0
      %3818 = vmatprep.subr.bf16.mxu0 0
      %3819 = vmatpush2.bf16.msra.mxu0 0
      %3820 = vmatprep.subr.bf16.mxu0 0
      %3821 = vmatpush2.bf16.msra.mxu0 0
      %3822 = vmatprep.subr.bf16.mxu0 0
      %3823 = vmatpush2.bf16.msra.mxu0 0
      %3824 = vmatprep.subr.bf16.mxu0 0
      %3825 = vmatpush2.bf16.msra.mxu0 0
      %3826 = vmatprep.subr.bf16.mxu0 0
      %3827 = vmatpush2.bf16.msra.mxu0 0
      %3828 = vmatprep.subr.bf16.mxu0 0
      %3829 = vmatpush2.bf16.msra.mxu0 0
      %3830 = vmatprep.mubr.bf16.mxu0 0
      %3831 = vmatmul.mubr.bf16.gmra.mxu0 %v3735
      %v3832 = vpop.f32.mrf.mxu0
      %v3833 = vadd.f32 0.0, %v3832
      %v3834 = vpop.f32.mrf.mxu0
      %v3835 = vpop.f32.mrf.mxu0
      %v3836 = vadd.f32 0.0, %v3835
      %v3837 = vpop.f32.mrf.mxu0
      %3838 = vmatprep.mubr.bf16.mxu0 0
      %3839 = vmatmul.mubr.bf16.gmra.mxu0 %v3737
      %v3840 = vpop.f32.mrf.mxu0
      %v3841 = vadd.f32 0.0, %v3840
      %v3842 = vpop.f32.mrf.mxu0
      %v3843 = vpop.f32.mrf.mxu0
      %v3844 = vadd.f32 0.0, %v3843
      %v3845 = vpop.f32.mrf.mxu0
      %3846 = vmatprep.mubr.bf16.mxu0 0
      %3847 = vmatmul.mubr.bf16.gmra.mxu0 %v3739
      %v3848 = vpop.f32.mrf.mxu0
      %v3849 = vpop.f32.mrf.mxu0
      %v3850 = vpop.f32.mrf.mxu0
      %v3851 = vpop.f32.mrf.mxu0
      %3852 = vmatprep.mubr.bf16.mxu0 0
      %3853 = vmatmul.mubr.bf16.gmra.mxu0 %v3741
      %v3854 = vpop.f32.mrf.mxu0
      %v3855 = vpop.f32.mrf.mxu0
      %v3856 = vpop.f32.mrf.mxu0
      %v3857 = vpop.f32.mrf.mxu0
      %3858 = vmatprep.mubr.bf16.mxu0 0
      %3859 = vmatmul.mubr.bf16.gmra.mxu0 %v3743
      %v3860 = vpop.f32.mrf.mxu0
      %v3861 = vadd.f32 0.0, %v3860
      %v3862 = vpop.f32.mrf.mxu0
      %v3863 = vpop.f32.mrf.mxu0
      %v3864 = vadd.f32 0.0, %v3863
      %v3865 = vpop.f32.mrf.mxu0
      %3866 = vmatprep.mubr.bf16.mxu0 0
      %3867 = vmatmul.mubr.bf16.gmra.mxu0 %v3742
      %v3868 = vpop.f32.mrf.mxu0
      %v3869 = vadd.f32 0.0, %v3868
      %v3870 = vpop.f32.mrf.mxu0
      %v3871 = vpop.f32.mrf.mxu0
      %v3872 = vadd.f32 0.0, %v3871
      %v3873 = vpop.f32.mrf.mxu0
      %3874 = vdwg.mxu0
      %v3875 = vadd.f32 %v3700, %v3833
      %v3876 = vadd.f32 %v3701, %v3836
      %v3877 = vadd.f32 %v3702, %v3841
      %v3878 = vadd.f32 %v3703, %v3844
      %v3879 = vadd.f32 %v3704, %v3861
      %v3880 = vadd.f32 %v3705, %v3864
      %v3881 = vadd.f32 %v3706, %v3869
      %v3882 = vadd.f32 %v3707, %v3872
      %v3883 = vld [vmem:[#allocation2 + $0x80] sm:$0xc]
      %v3884 = vld [vmem:[#allocation2 + $0xac] sm:$0xf]
      %s3885 = scalar_lea.vmem %s1, 1280
      %v3886 = vld [vmem:[%s3885] sm:$0xf]
      %v3887 = vld [vmem:[%s3885 + $0x4] sm:$0xf]
      %v3888 = vld [vmem:[%s3885 + $0x8] sm:$0xf]
      %v3889 = vld [vmem:[%s3885 + $0xc] sm:$0xf]
      %v3890 = vld [vmem:[%s3885 + $0x10] sm:$0xf]
      %v3891 = vld [vmem:[%s3885 + $0x14] sm:$0xf]
      %v3892 = vld [vmem:[%s3885 + $0x18] sm:$0xf]
      %v3893 = vld [vmem:[%s3885 + $0x1c] sm:$0xf]
      %v3894 = vld [vmem:[%s3885 + $0x20] sm:$0xf]
      %v3895 = vld [vmem:[%s3885 + $0x24] sm:$0xf]
      %v3896 = vld [vmem:[%s3885 + $0x28] sm:$0xf]
      %v3897 = vld [vmem:[%s3885 + $0x2c] sm:$0xf]
      %v3898 = vld [vmem:[%s3885 + $0x30] sm:$0xf]
      %v3899 = vld [vmem:[%s3885 + $0x34] sm:$0xf]
      %v3900 = vld [vmem:[%s3885 + $0x38] sm:$0xf]
      %v3901 = vld [vmem:[%s3885 + $0x3c] sm:$0xf]
      %v3904 = vunpack.c.l.b16 %v3883
      %v3905 = vunpack.c.l.b16 %v3884
      %v3906 = vpack.c.b16 %v3552, %v3904
      %v3907 = vpack.c.b16 %v3905, %v3561
      %v3908 = vrot.slane %v3906, 2
      %v3909 = vrot.slane %v3564, 2
      %v3910 = vsel %vm619, %v3908, %v3909
      %v3911 = vrot.slane %v3565, 2
      %v3912 = vsel %vm619, %v3909, %v3911
      %v3913 = vrot.slane %v3566, 2
      %v3914 = vsel %vm619, %v3911, %v3913
      %v3915 = vrot.slane %v3567, 2
      %v3916 = vsel %vm619, %v3913, %v3915
      %v3917 = vrot.slane %v3907, 2
      %v3918 = vsel %vm619, %v3915, %v3917
      %v3941 = vunpack.c.l.b16 %v3886
      %v3942 = vunpack.c.l.b16 %v3887
      %v3943 = vunpack.c.l.b16 %v3888
      %v3944 = vunpack.c.l.b16 %v3889
      %v3945 = vunpack.c.l.b16 %v3890
      %v3946 = vunpack.c.l.b16 %v3891
      %v3947 = vunpack.c.l.b16 %v3892
      %v3948 = vunpack.c.l.b16 %v3893
      %v3949 = vunpack.c.l.b16 %v3894
      %v3950 = vunpack.c.l.b16 %v3895
      %v3951 = vunpack.c.l.b16 %v3896
      %v3952 = vunpack.c.l.b16 %v3897
      %v3953 = vunpack.c.l.b16 %v3898
      %v3954 = vunpack.c.l.b16 %v3899
      %v3955 = vunpack.c.l.b16 %v3900
      %v3956 = vunpack.c.l.b16 %v3901
      %v3957 = vpack.c.b16 %v3942, %v3941
      %v3958 = vpack.c.b16 %v3944, %v3943
      %v3959 = vpack.c.b16 %v3946, %v3945
      %v3960 = vpack.c.b16 %v3948, %v3947
      %v3961 = vpack.c.b16 %v3950, %v3949
      %v3962 = vpack.c.b16 %v3952, %v3951
      %v3963 = vpack.c.b16 %v3954, %v3953
      %v3964 = vpack.c.b16 %v3956, %v3955
      %3973 = vmatprep.subr.bf16.mxu0 0
      %3974 = vmatpush1.bf16.msra.mxu0 %v3964
      %3975 = vmatprep.subr.bf16.mxu0 0
      %3976 = vmatpush1.bf16.msra.mxu0 %v3963
      %3977 = vmatprep.subr.bf16.mxu0 0
      %3978 = vmatpush1.bf16.msra.mxu0 %v3962
      %3979 = vmatprep.subr.bf16.mxu0 0
      %3980 = vmatpush1.bf16.msra.mxu0 %v3961
      %3981 = vmatprep.subr.bf16.mxu0 0
      %3982 = vmatpush1.bf16.msra.mxu0 %v3960
      %3983 = vmatprep.subr.bf16.mxu0 0
      %3984 = vmatpush1.bf16.msra.mxu0 %v3959
      %3985 = vmatprep.subr.bf16.mxu0 0
      %3986 = vmatpush1.bf16.msra.mxu0 %v3958
      %3987 = vmatprep.subr.bf16.mxu0 0
      %3988 = vmatpush1.bf16.msra.mxu0 %v3957
      %3989 = vmatprep.subr.bf16.mxu0 0
      %3990 = vmatpush2.bf16.msra.mxu0 0
      %3991 = vmatprep.subr.bf16.mxu0 0
      %3992 = vmatpush2.bf16.msra.mxu0 0
      %3993 = vmatprep.subr.bf16.mxu0 0
      %3994 = vmatpush2.bf16.msra.mxu0 0
      %3995 = vmatprep.subr.bf16.mxu0 0
      %3996 = vmatpush2.bf16.msra.mxu0 0
      %3997 = vmatprep.subr.bf16.mxu0 0
      %3998 = vmatpush2.bf16.msra.mxu0 0
      %3999 = vmatprep.subr.bf16.mxu0 0
      %4000 = vmatpush2.bf16.msra.mxu0 0
      %4001 = vmatprep.subr.bf16.mxu0 0
      %4002 = vmatpush2.bf16.msra.mxu0 0
      %4003 = vmatprep.subr.bf16.mxu0 0
      %4004 = vmatpush2.bf16.msra.mxu0 0
      %4005 = vmatprep.mubr.bf16.mxu0 0
      %4006 = vmatmul.mubr.bf16.gmra.mxu0 %v3910
      %v4007 = vpop.f32.mrf.mxu0
      %v4008 = vadd.f32 0.0, %v4007
      %v4009 = vpop.f32.mrf.mxu0
      %v4010 = vpop.f32.mrf.mxu0
      %v4011 = vadd.f32 0.0, %v4010
      %v4012 = vpop.f32.mrf.mxu0
      %4013 = vmatprep.mubr.bf16.mxu0 0
      %4014 = vmatmul.mubr.bf16.gmra.mxu0 %v3912
      %v4015 = vpop.f32.mrf.mxu0
      %v4016 = vadd.f32 0.0, %v4015
      %v4017 = vpop.f32.mrf.mxu0
      %v4018 = vpop.f32.mrf.mxu0
      %v4019 = vadd.f32 0.0, %v4018
      %v4020 = vpop.f32.mrf.mxu0
      %4021 = vmatprep.mubr.bf16.mxu0 0
      %4022 = vmatmul.mubr.bf16.gmra.mxu0 %v3914
      %v4023 = vpop.f32.mrf.mxu0
      %v4024 = vpop.f32.mrf.mxu0
      %v4025 = vpop.f32.mrf.mxu0
      %v4026 = vpop.f32.mrf.mxu0
      %4027 = vmatprep.mubr.bf16.mxu0 0
      %4028 = vmatmul.mubr.bf16.gmra.mxu0 %v3916
      %v4029 = vpop.f32.mrf.mxu0
      %v4030 = vpop.f32.mrf.mxu0
      %v4031 = vpop.f32.mrf.mxu0
      %v4032 = vpop.f32.mrf.mxu0
      %4033 = vmatprep.mubr.bf16.mxu0 0
      %4034 = vmatmul.mubr.bf16.gmra.mxu0 %v3918
      %v4035 = vpop.f32.mrf.mxu0
      %v4036 = vadd.f32 0.0, %v4035
      %v4037 = vpop.f32.mrf.mxu0
      %v4038 = vpop.f32.mrf.mxu0
      %v4039 = vadd.f32 0.0, %v4038
      %v4040 = vpop.f32.mrf.mxu0
      %4041 = vmatprep.mubr.bf16.mxu0 0
      %4042 = vmatmul.mubr.bf16.gmra.mxu0 %v3917
      %v4043 = vpop.f32.mrf.mxu0
      %v4044 = vadd.f32 0.0, %v4043
      %v4045 = vpop.f32.mrf.mxu0
      %v4046 = vpop.f32.mrf.mxu0
      %v4047 = vadd.f32 0.0, %v4046
      %v4048 = vpop.f32.mrf.mxu0
      %4049 = vdwg.mxu0
      %v4050 = vadd.f32 %v3875, %v4008
      %v4051 = vadd.f32 %v3876, %v4011
      %v4052 = vadd.f32 %v3877, %v4016
      %v4053 = vadd.f32 %v3878, %v4019
      %v4054 = vadd.f32 %v3879, %v4036
      %v4055 = vadd.f32 %v3880, %v4039
      %v4056 = vadd.f32 %v3881, %v4044
      %v4057 = vadd.f32 %v3882, %v4047
      %v4058 = vld [vmem:[#allocation2 + $0x88] sm:$0xf]
      %v4059 = vld [vmem:[#allocation2 + $0x8c] sm:$0xf]
      %v4060 = vld [vmem:[#allocation2 + $0x90] sm:$0xf]
      %v4061 = vld [vmem:[#allocation2 + $0x94] sm:$0xf]
      %v4062 = vld [vmem:[#allocation2 + $0x98] sm:$0xf]
      %v4063 = vld [vmem:[#allocation2 + $0x9c] sm:$0xf]
      %v4064 = vld [vmem:[#allocation2 + $0xa0] sm:$0xf]
      %v4065 = vld [vmem:[#allocation2 + $0xa4] sm:$0xf]
      %v4066 = vld [vmem:[#allocation2 + $0xa8] sm:$0xf]
      %v4067 = vld [vmem:[#allocation2 + $0xac] sm:$0xf]
      %v4068 = vld [vmem:[#allocation2 + $0xb0] sm:$0xf]
      %v4069 = vld [vmem:[#allocation2 + $0xb4] sm:$0x3]
      %s4070 = scalar_lea.vmem %s1, 1344
      %v4071 = vld [vmem:[%s4070] sm:$0xf]
      %v4072 = vld [vmem:[%s4070 + $0x4] sm:$0xf]
      %v4073 = vld [vmem:[%s4070 + $0x8] sm:$0xf]
      %v4074 = vld [vmem:[%s4070 + $0xc] sm:$0xf]
      %v4075 = vld [vmem:[%s4070 + $0x10] sm:$0xf]
      %v4076 = vld [vmem:[%s4070 + $0x14] sm:$0xf]
      %v4077 = vld [vmem:[%s4070 + $0x18] sm:$0xf]
      %v4078 = vld [vmem:[%s4070 + $0x1c] sm:$0xf]
      %v4079 = vld [vmem:[%s4070 + $0x20] sm:$0xf]
      %v4080 = vld [vmem:[%s4070 + $0x24] sm:$0xf]
      %v4081 = vld [vmem:[%s4070 + $0x28] sm:$0xf]
      %v4082 = vld [vmem:[%s4070 + $0x2c] sm:$0xf]
      %v4083 = vld [vmem:[%s4070 + $0x30] sm:$0xf]
      %v4084 = vld [vmem:[%s4070 + $0x34] sm:$0xf]
      %v4085 = vld [vmem:[%s4070 + $0x38] sm:$0xf]
      %v4086 = vld [vmem:[%s4070 + $0x3c] sm:$0xf]
      %v4099 = vunpack.c.l.b16 %v4058
      %v4100 = vunpack.c.l.b16 %v4059
      %v4101 = vunpack.c.l.b16 %v4060
      %v4102 = vunpack.c.l.b16 %v4061
      %v4103 = vunpack.c.l.b16 %v4062
      %v4104 = vunpack.c.l.b16 %v4063
      %v4105 = vunpack.c.l.b16 %v4064
      %v4106 = vunpack.c.l.b16 %v4065
      %v4107 = vunpack.c.l.b16 %v4066
      %v4108 = vunpack.c.l.b16 %v4067
      %v4109 = vunpack.c.l.b16 %v4068
      %v4110 = vunpack.c.l.b16 %v4069
      %v4111 = vpack.c.b16 %v4100, %v4099
      %v4112 = vpack.c.b16 %v4102, %v4101
      %v4113 = vpack.c.b16 %v4104, %v4103
      %v4114 = vpack.c.b16 %v4106, %v4105
      %v4115 = vpack.c.b16 %v4108, %v4107
      %v4116 = vpack.c.b16 %v4110, %v4109
      %v4139 = vunpack.c.l.b16 %v4071
      %v4140 = vunpack.c.l.b16 %v4072
      %v4141 = vunpack.c.l.b16 %v4073
      %v4142 = vunpack.c.l.b16 %v4074
      %v4143 = vunpack.c.l.b16 %v4075
      %v4144 = vunpack.c.l.b16 %v4076
      %v4145 = vunpack.c.l.b16 %v4077
      %v4146 = vunpack.c.l.b16 %v4078
      %v4147 = vunpack.c.l.b16 %v4079
      %v4148 = vunpack.c.l.b16 %v4080
      %v4149 = vunpack.c.l.b16 %v4081
      %v4150 = vunpack.c.l.b16 %v4082
      %v4151 = vunpack.c.l.b16 %v4083
      %v4152 = vunpack.c.l.b16 %v4084
      %v4153 = vunpack.c.l.b16 %v4085
      %v4154 = vunpack.c.l.b16 %v4086
      %v4155 = vpack.c.b16 %v4140, %v4139
      %v4156 = vpack.c.b16 %v4142, %v4141
      %v4157 = vpack.c.b16 %v4144, %v4143
      %v4158 = vpack.c.b16 %v4146, %v4145
      %v4159 = vpack.c.b16 %v4148, %v4147
      %v4160 = vpack.c.b16 %v4150, %v4149
      %v4161 = vpack.c.b16 %v4152, %v4151
      %v4162 = vpack.c.b16 %v4154, %v4153
      %4171 = vmatprep.subr.bf16.mxu0 0
      %4172 = vmatpush1.bf16.msra.mxu0 %v4162
      %4173 = vmatprep.subr.bf16.mxu0 0
      %4174 = vmatpush1.bf16.msra.mxu0 %v4161
      %4175 = vmatprep.subr.bf16.mxu0 0
      %4176 = vmatpush1.bf16.msra.mxu0 %v4160
      %4177 = vmatprep.subr.bf16.mxu0 0
      %4178 = vmatpush1.bf16.msra.mxu0 %v4159
      %4179 = vmatprep.subr.bf16.mxu0 0
      %4180 = vmatpush1.bf16.msra.mxu0 %v4158
      %4181 = vmatprep.subr.bf16.mxu0 0
      %4182 = vmatpush1.bf16.msra.mxu0 %v4157
      %4183 = vmatprep.subr.bf16.mxu0 0
      %4184 = vmatpush1.bf16.msra.mxu0 %v4156
      %4185 = vmatprep.subr.bf16.mxu0 0
      %4186 = vmatpush1.bf16.msra.mxu0 %v4155
      %4187 = vmatprep.subr.bf16.mxu0 0
      %4188 = vmatpush2.bf16.msra.mxu0 0
      %4189 = vmatprep.subr.bf16.mxu0 0
      %4190 = vmatpush2.bf16.msra.mxu0 0
      %4191 = vmatprep.subr.bf16.mxu0 0
      %4192 = vmatpush2.bf16.msra.mxu0 0
      %4193 = vmatprep.subr.bf16.mxu0 0
      %4194 = vmatpush2.bf16.msra.mxu0 0
      %4195 = vmatprep.subr.bf16.mxu0 0
      %4196 = vmatpush2.bf16.msra.mxu0 0
      %4197 = vmatprep.subr.bf16.mxu0 0
      %4198 = vmatpush2.bf16.msra.mxu0 0
      %4199 = vmatprep.subr.bf16.mxu0 0
      %4200 = vmatpush2.bf16.msra.mxu0 0
      %4201 = vmatprep.subr.bf16.mxu0 0
      %4202 = vmatpush2.bf16.msra.mxu0 0
      %4203 = vmatprep.mubr.bf16.mxu0 0
      %4204 = vmatmul.mubr.bf16.gmra.mxu0 %v4111
      %v4205 = vpop.f32.mrf.mxu0
      %v4206 = vadd.f32 0.0, %v4205
      %v4207 = vpop.f32.mrf.mxu0
      %v4208 = vpop.f32.mrf.mxu0
      %v4209 = vadd.f32 0.0, %v4208
      %v4210 = vpop.f32.mrf.mxu0
      %4211 = vmatprep.mubr.bf16.mxu0 0
      %4212 = vmatmul.mubr.bf16.gmra.mxu0 %v4112
      %v4213 = vpop.f32.mrf.mxu0
      %v4214 = vadd.f32 0.0, %v4213
      %v4215 = vpop.f32.mrf.mxu0
      %v4216 = vpop.f32.mrf.mxu0
      %v4217 = vadd.f32 0.0, %v4216
      %v4218 = vpop.f32.mrf.mxu0
      %4219 = vmatprep.mubr.bf16.mxu0 0
      %4220 = vmatmul.mubr.bf16.gmra.mxu0 %v4113
      %v4221 = vpop.f32.mrf.mxu0
      %v4222 = vpop.f32.mrf.mxu0
      %v4223 = vpop.f32.mrf.mxu0
      %v4224 = vpop.f32.mrf.mxu0
      %4225 = vmatprep.mubr.bf16.mxu0 0
      %4226 = vmatmul.mubr.bf16.gmra.mxu0 %v4114
      %v4227 = vpop.f32.mrf.mxu0
      %v4228 = vpop.f32.mrf.mxu0
      %v4229 = vpop.f32.mrf.mxu0
      %v4230 = vpop.f32.mrf.mxu0
      %4231 = vmatprep.mubr.bf16.mxu0 0
      %4232 = vmatmul.mubr.bf16.gmra.mxu0 %v4115
      %v4233 = vpop.f32.mrf.mxu0
      %v4234 = vadd.f32 0.0, %v4233
      %v4235 = vpop.f32.mrf.mxu0
      %v4236 = vpop.f32.mrf.mxu0
      %v4237 = vadd.f32 0.0, %v4236
      %v4238 = vpop.f32.mrf.mxu0
      %4239 = vmatprep.mubr.bf16.mxu0 0
      %4240 = vmatmul.mubr.bf16.gmra.mxu0 %v4116
      %v4241 = vpop.f32.mrf.mxu0
      %v4242 = vadd.f32 0.0, %v4241
      %v4243 = vpop.f32.mrf.mxu0
      %v4244 = vpop.f32.mrf.mxu0
      %v4245 = vadd.f32 0.0, %v4244
      %v4246 = vpop.f32.mrf.mxu0
      %4247 = vdwg.mxu0
      %v4248 = vadd.f32 %v4050, %v4206
      %v4249 = vadd.f32 %v4051, %v4209
      %v4250 = vadd.f32 %v4052, %v4214
      %v4251 = vadd.f32 %v4053, %v4217
      %v4252 = vadd.f32 %v4054, %v4234
      %v4253 = vadd.f32 %v4055, %v4237
      %v4254 = vadd.f32 %v4056, %v4242
      %v4255 = vadd.f32 %v4057, %v4245
      %v4256 = vld [vmem:[#allocation2 + $0x88] sm:$0xe]
      %v4257 = vld [vmem:[#allocation2 + $0xb4] sm:$0x7]
      %s4258 = scalar_lea.vmem %s1, 1408
      %v4259 = vld [vmem:[%s4258] sm:$0xf]
      %v4260 = vld [vmem:[%s4258 + $0x4] sm:$0xf]
      %v4261 = vld [vmem:[%s4258 + $0x8] sm:$0xf]
      %v4262 = vld [vmem:[%s4258 + $0xc] sm:$0xf]
      %v4263 = vld [vmem:[%s4258 + $0x10] sm:$0xf]
      %v4264 = vld [vmem:[%s4258 + $0x14] sm:$0xf]
      %v4265 = vld [vmem:[%s4258 + $0x18] sm:$0xf]
      %v4266 = vld [vmem:[%s4258 + $0x1c] sm:$0xf]
      %v4267 = vld [vmem:[%s4258 + $0x20] sm:$0xf]
      %v4268 = vld [vmem:[%s4258 + $0x24] sm:$0xf]
      %v4269 = vld [vmem:[%s4258 + $0x28] sm:$0xf]
      %v4270 = vld [vmem:[%s4258 + $0x2c] sm:$0xf]
      %v4271 = vld [vmem:[%s4258 + $0x30] sm:$0xf]
      %v4272 = vld [vmem:[%s4258 + $0x34] sm:$0xf]
      %v4273 = vld [vmem:[%s4258 + $0x38] sm:$0xf]
      %v4274 = vld [vmem:[%s4258 + $0x3c] sm:$0xf]
      %v4277 = vunpack.c.l.b16 %v4256
      %v4278 = vunpack.c.l.b16 %v4257
      %v4279 = vpack.c.b16 %v4100, %v4277
      %v4280 = vpack.c.b16 %v4278, %v4109
      %v4281 = vrot.slane %v4279, 1
      %v4282 = vrot.slane %v4112, 1
      %v4283 = vsel %vm314, %v4281, %v4282
      %v4284 = vrot.slane %v4113, 1
      %v4285 = vsel %vm314, %v4282, %v4284
      %v4286 = vrot.slane %v4114, 1
      %v4287 = vsel %vm314, %v4284, %v4286
      %v4288 = vrot.slane %v4115, 1
      %v4289 = vsel %vm314, %v4286, %v4288
      %v4290 = vrot.slane %v4280, 1
      %v4291 = vsel %vm314, %v4288, %v4290
      %v4314 = vunpack.c.l.b16 %v4259
      %v4315 = vunpack.c.l.b16 %v4260
      %v4316 = vunpack.c.l.b16 %v4261
      %v4317 = vunpack.c.l.b16 %v4262
      %v4318 = vunpack.c.l.b16 %v4263
      %v4319 = vunpack.c.l.b16 %v4264
      %v4320 = vunpack.c.l.b16 %v4265
      %v4321 = vunpack.c.l.b16 %v4266
      %v4322 = vunpack.c.l.b16 %v4267
      %v4323 = vunpack.c.l.b16 %v4268
      %v4324 = vunpack.c.l.b16 %v4269
      %v4325 = vunpack.c.l.b16 %v4270
      %v4326 = vunpack.c.l.b16 %v4271
      %v4327 = vunpack.c.l.b16 %v4272
      %v4328 = vunpack.c.l.b16 %v4273
      %v4329 = vunpack.c.l.b16 %v4274
      %v4330 = vpack.c.b16 %v4315, %v4314
      %v4331 = vpack.c.b16 %v4317, %v4316
      %v4332 = vpack.c.b16 %v4319, %v4318
      %v4333 = vpack.c.b16 %v4321, %v4320
      %v4334 = vpack.c.b16 %v4323, %v4322
      %v4335 = vpack.c.b16 %v4325, %v4324
      %v4336 = vpack.c.b16 %v4327, %v4326
      %v4337 = vpack.c.b16 %v4329, %v4328
      %4346 = vmatprep.subr.bf16.mxu0 0
      %4347 = vmatpush1.bf16.msra.mxu0 %v4337
      %4348 = vmatprep.subr.bf16.mxu0 0
      %4349 = vmatpush1.bf16.msra.mxu0 %v4336
      %4350 = vmatprep.subr.bf16.mxu0 0
      %4351 = vmatpush1.bf16.msra.mxu0 %v4335
      %4352 = vmatprep.subr.bf16.mxu0 0
      %4353 = vmatpush1.bf16.msra.mxu0 %v4334
      %4354 = vmatprep.subr.bf16.mxu0 0
      %4355 = vmatpush1.bf16.msra.mxu0 %v4333
      %4356 = vmatprep.subr.bf16.mxu0 0
      %4357 = vmatpush1.bf16.msra.mxu0 %v4332
      %4358 = vmatprep.subr.bf16.mxu0 0
      %4359 = vmatpush1.bf16.msra.mxu0 %v4331
      %4360 = vmatprep.subr.bf16.mxu0 0
      %4361 = vmatpush1.bf16.msra.mxu0 %v4330
      %4362 = vmatprep.subr.bf16.mxu0 0
      %4363 = vmatpush2.bf16.msra.mxu0 0
      %4364 = vmatprep.subr.bf16.mxu0 0
      %4365 = vmatpush2.bf16.msra.mxu0 0
      %4366 = vmatprep.subr.bf16.mxu0 0
      %4367 = vmatpush2.bf16.msra.mxu0 0
      %4368 = vmatprep.subr.bf16.mxu0 0
      %4369 = vmatpush2.bf16.msra.mxu0 0
      %4370 = vmatprep.subr.bf16.mxu0 0
      %4371 = vmatpush2.bf16.msra.mxu0 0
      %4372 = vmatprep.subr.bf16.mxu0 0
      %4373 = vmatpush2.bf16.msra.mxu0 0
      %4374 = vmatprep.subr.bf16.mxu0 0
      %4375 = vmatpush2.bf16.msra.mxu0 0
      %4376 = vmatprep.subr.bf16.mxu0 0
      %4377 = vmatpush2.bf16.msra.mxu0 0
      %4378 = vmatprep.mubr.bf16.mxu0 0
      %4379 = vmatmul.mubr.bf16.gmra.mxu0 %v4283
      %v4380 = vpop.f32.mrf.mxu0
      %v4381 = vadd.f32 0.0, %v4380
      %v4382 = vpop.f32.mrf.mxu0
      %v4383 = vpop.f32.mrf.mxu0
      %v4384 = vadd.f32 0.0, %v4383
      %v4385 = vpop.f32.mrf.mxu0
      %4386 = vmatprep.mubr.bf16.mxu0 0
      %4387 = vmatmul.mubr.bf16.gmra.mxu0 %v4285
      %v4388 = vpop.f32.mrf.mxu0
      %v4389 = vadd.f32 0.0, %v4388
      %v4390 = vpop.f32.mrf.mxu0
      %v4391 = vpop.f32.mrf.mxu0
      %v4392 = vadd.f32 0.0, %v4391
      %v4393 = vpop.f32.mrf.mxu0
      %4394 = vmatprep.mubr.bf16.mxu0 0
      %4395 = vmatmul.mubr.bf16.gmra.mxu0 %v4287
      %v4396 = vpop.f32.mrf.mxu0
      %v4397 = vpop.f32.mrf.mxu0
      %v4398 = vpop.f32.mrf.mxu0
      %v4399 = vpop.f32.mrf.mxu0
      %4400 = vmatprep.mubr.bf16.mxu0 0
      %4401 = vmatmul.mubr.bf16.gmra.mxu0 %v4289
      %v4402 = vpop.f32.mrf.mxu0
      %v4403 = vpop.f32.mrf.mxu0
      %v4404 = vpop.f32.mrf.mxu0
      %v4405 = vpop.f32.mrf.mxu0
      %4406 = vmatprep.mubr.bf16.mxu0 0
      %4407 = vmatmul.mubr.bf16.gmra.mxu0 %v4291
      %v4408 = vpop.f32.mrf.mxu0
      %v4409 = vadd.f32 0.0, %v4408
      %v4410 = vpop.f32.mrf.mxu0
      %v4411 = vpop.f32.mrf.mxu0
      %v4412 = vadd.f32 0.0, %v4411
      %v4413 = vpop.f32.mrf.mxu0
      %4414 = vmatprep.mubr.bf16.mxu0 0
      %4415 = vmatmul.mubr.bf16.gmra.mxu0 %v4290
      %v4416 = vpop.f32.mrf.mxu0
      %v4417 = vadd.f32 0.0, %v4416
      %v4418 = vpop.f32.mrf.mxu0
      %v4419 = vpop.f32.mrf.mxu0
      %v4420 = vadd.f32 0.0, %v4419
      %v4421 = vpop.f32.mrf.mxu0
      %4422 = vdwg.mxu0
      %v4423 = vadd.f32 %v4248, %v4381
      %v4424 = vadd.f32 %v4249, %v4384
      %v4425 = vadd.f32 %v4250, %v4389
      %v4426 = vadd.f32 %v4251, %v4392
      %v4427 = vadd.f32 %v4252, %v4409
      %v4428 = vadd.f32 %v4253, %v4412
      %v4429 = vadd.f32 %v4254, %v4417
      %v4430 = vadd.f32 %v4255, %v4420
      %v4431 = vld [vmem:[#allocation2 + $0x88] sm:$0xc]
      %v4432 = vld [vmem:[#allocation2 + $0xb4] sm:$0xf]
      %s4433 = scalar_lea.vmem %s1, 1472
      %v4434 = vld [vmem:[%s4433] sm:$0xf]
      %v4435 = vld [vmem:[%s4433 + $0x4] sm:$0xf]
      %v4436 = vld [vmem:[%s4433 + $0x8] sm:$0xf]
      %v4437 = vld [vmem:[%s4433 + $0xc] sm:$0xf]
      %v4438 = vld [vmem:[%s4433 + $0x10] sm:$0xf]
      %v4439 = vld [vmem:[%s4433 + $0x14] sm:$0xf]
      %v4440 = vld [vmem:[%s4433 + $0x18] sm:$0xf]
      %v4441 = vld [vmem:[%s4433 + $0x1c] sm:$0xf]
      %v4442 = vld [vmem:[%s4433 + $0x20] sm:$0xf]
      %v4443 = vld [vmem:[%s4433 + $0x24] sm:$0xf]
      %v4444 = vld [vmem:[%s4433 + $0x28] sm:$0xf]
      %v4445 = vld [vmem:[%s4433 + $0x2c] sm:$0xf]
      %v4446 = vld [vmem:[%s4433 + $0x30] sm:$0xf]
      %v4447 = vld [vmem:[%s4433 + $0x34] sm:$0xf]
      %v4448 = vld [vmem:[%s4433 + $0x38] sm:$0xf]
      %v4449 = vld [vmem:[%s4433 + $0x3c] sm:$0xf]
      %v4452 = vunpack.c.l.b16 %v4431
      %v4453 = vunpack.c.l.b16 %v4432
      %v4454 = vpack.c.b16 %v4100, %v4452
      %v4455 = vpack.c.b16 %v4453, %v4109
      %v4456 = vrot.slane %v4454, 2
      %v4457 = vrot.slane %v4112, 2
      %v4458 = vsel %vm619, %v4456, %v4457
      %v4459 = vrot.slane %v4113, 2
      %v4460 = vsel %vm619, %v4457, %v4459
      %v4461 = vrot.slane %v4114, 2
      %v4462 = vsel %vm619, %v4459, %v4461
      %v4463 = vrot.slane %v4115, 2
      %v4464 = vsel %vm619, %v4461, %v4463
      %v4465 = vrot.slane %v4455, 2
      %v4466 = vsel %vm619, %v4463, %v4465
      %v4489 = vunpack.c.l.b16 %v4434
      %v4490 = vunpack.c.l.b16 %v4435
      %v4491 = vunpack.c.l.b16 %v4436
      %v4492 = vunpack.c.l.b16 %v4437
      %v4493 = vunpack.c.l.b16 %v4438
      %v4494 = vunpack.c.l.b16 %v4439
      %v4495 = vunpack.c.l.b16 %v4440
      %v4496 = vunpack.c.l.b16 %v4441
      %v4497 = vunpack.c.l.b16 %v4442
      %v4498 = vunpack.c.l.b16 %v4443
      %v4499 = vunpack.c.l.b16 %v4444
      %v4500 = vunpack.c.l.b16 %v4445
      %v4501 = vunpack.c.l.b16 %v4446
      %v4502 = vunpack.c.l.b16 %v4447
      %v4503 = vunpack.c.l.b16 %v4448
      %v4504 = vunpack.c.l.b16 %v4449
      %v4505 = vpack.c.b16 %v4490, %v4489
      %v4506 = vpack.c.b16 %v4492, %v4491
      %v4507 = vpack.c.b16 %v4494, %v4493
      %v4508 = vpack.c.b16 %v4496, %v4495
      %v4509 = vpack.c.b16 %v4498, %v4497
      %v4510 = vpack.c.b16 %v4500, %v4499
      %v4511 = vpack.c.b16 %v4502, %v4501
      %v4512 = vpack.c.b16 %v4504, %v4503
      %4521 = vmatprep.subr.bf16.mxu0 0
      %4522 = vmatpush1.bf16.msra.mxu0 %v4512
      %4523 = vmatprep.subr.bf16.mxu0 0
      %4524 = vmatpush1.bf16.msra.mxu0 %v4511
      %4525 = vmatprep.subr.bf16.mxu0 0
      %4526 = vmatpush1.bf16.msra.mxu0 %v4510
      %4527 = vmatprep.subr.bf16.mxu0 0
      %4528 = vmatpush1.bf16.msra.mxu0 %v4509
      %4529 = vmatprep.subr.bf16.mxu0 0
      %4530 = vmatpush1.bf16.msra.mxu0 %v4508
      %4531 = vmatprep.subr.bf16.mxu0 0
      %4532 = vmatpush1.bf16.msra.mxu0 %v4507
      %4533 = vmatprep.subr.bf16.mxu0 0
      %4534 = vmatpush1.bf16.msra.mxu0 %v4506
      %4535 = vmatprep.subr.bf16.mxu0 0
      %4536 = vmatpush1.bf16.msra.mxu0 %v4505
      %4537 = vmatprep.subr.bf16.mxu0 0
      %4538 = vmatpush2.bf16.msra.mxu0 0
      %4539 = vmatprep.subr.bf16.mxu0 0
      %4540 = vmatpush2.bf16.msra.mxu0 0
      %4541 = vmatprep.subr.bf16.mxu0 0
      %4542 = vmatpush2.bf16.msra.mxu0 0
      %4543 = vmatprep.subr.bf16.mxu0 0
      %4544 = vmatpush2.bf16.msra.mxu0 0
      %4545 = vmatprep.subr.bf16.mxu0 0
      %4546 = vmatpush2.bf16.msra.mxu0 0
      %4547 = vmatprep.subr.bf16.mxu0 0
      %4548 = vmatpush2.bf16.msra.mxu0 0
      %4549 = vmatprep.subr.bf16.mxu0 0
      %4550 = vmatpush2.bf16.msra.mxu0 0
      %4551 = vmatprep.subr.bf16.mxu0 0
      %4552 = vmatpush2.bf16.msra.mxu0 0
      %4553 = vmatprep.mubr.bf16.mxu0 0
      %4554 = vmatmul.mubr.bf16.gmra.mxu0 %v4458
      %v4555 = vpop.f32.mrf.mxu0
      %v4556 = vadd.f32 0.0, %v4555
      %v4557 = vpop.f32.mrf.mxu0
      %v4558 = vpop.f32.mrf.mxu0
      %v4559 = vadd.f32 0.0, %v4558
      %v4560 = vpop.f32.mrf.mxu0
      %4561 = vmatprep.mubr.bf16.mxu0 0
      %4562 = vmatmul.mubr.bf16.gmra.mxu0 %v4460
      %v4563 = vpop.f32.mrf.mxu0
      %v4564 = vadd.f32 0.0, %v4563
      %v4565 = vpop.f32.mrf.mxu0
      %v4566 = vpop.f32.mrf.mxu0
      %v4567 = vadd.f32 0.0, %v4566
      %v4568 = vpop.f32.mrf.mxu0
      %4569 = vmatprep.mubr.bf16.mxu0 0
      %4570 = vmatmul.mubr.bf16.gmra.mxu0 %v4462
      %v4571 = vpop.f32.mrf.mxu0
      %v4572 = vpop.f32.mrf.mxu0
      %v4573 = vpop.f32.mrf.mxu0
      %v4574 = vpop.f32.mrf.mxu0
      %4575 = vmatprep.mubr.bf16.mxu0 0
      %4576 = vmatmul.mubr.bf16.gmra.mxu0 %v4464
      %v4577 = vpop.f32.mrf.mxu0
      %v4578 = vpop.f32.mrf.mxu0
      %v4579 = vpop.f32.mrf.mxu0
      %v4580 = vpop.f32.mrf.mxu0
      %4581 = vmatprep.mubr.bf16.mxu0 0
      %4582 = vmatmul.mubr.bf16.gmra.mxu0 %v4466
      %v4583 = vpop.f32.mrf.mxu0
      %v4584 = vadd.f32 0.0, %v4583
      %v4585 = vpop.f32.mrf.mxu0
      %v4586 = vpop.f32.mrf.mxu0
      %v4587 = vadd.f32 0.0, %v4586
      %v4588 = vpop.f32.mrf.mxu0
      %4589 = vmatprep.mubr.bf16.mxu0 0
      %4590 = vmatmul.mubr.bf16.gmra.mxu0 %v4465
      %v4591 = vpop.f32.mrf.mxu0
      %v4592 = vadd.f32 0.0, %v4591
      %v4593 = vpop.f32.mrf.mxu0
      %v4594 = vpop.f32.mrf.mxu0
      %v4595 = vadd.f32 0.0, %v4594
      %v4596 = vpop.f32.mrf.mxu0
      %4597 = vdwg.mxu0
      %v4598 = vadd.f32 %v4423, %v4556
      %v4599 = vadd.f32 %v4424, %v4559
      %v4600 = vadd.f32 %v4425, %v4564
      %v4601 = vadd.f32 %v4426, %v4567
      %v4602 = vadd.f32 %v4427, %v4584
      %v4603 = vadd.f32 %v4428, %v4587
      %v4604 = vadd.f32 %v4429, %v4592
      %v4605 = vadd.f32 %v4430, %v4595
      %v4606 = vld [vmem:[#allocation2 + $0x90] sm:$0xf]
      %v4607 = vld [vmem:[#allocation2 + $0x94] sm:$0xf]
      %v4608 = vld [vmem:[#allocation2 + $0x98] sm:$0xf]
      %v4609 = vld [vmem:[#allocation2 + $0x9c] sm:$0xf]
      %v4610 = vld [vmem:[#allocation2 + $0xa0] sm:$0xf]
      %v4611 = vld [vmem:[#allocation2 + $0xa4] sm:$0xf]
      %v4612 = vld [vmem:[#allocation2 + $0xa8] sm:$0xf]
      %v4613 = vld [vmem:[#allocation2 + $0xac] sm:$0xf]
      %v4614 = vld [vmem:[#allocation2 + $0xb0] sm:$0xf]
      %v4615 = vld [vmem:[#allocation2 + $0xb4] sm:$0xf]
      %v4616 = vld [vmem:[#allocation2 + $0xb8] sm:$0xf]
      %v4617 = vld [vmem:[#allocation2 + $0xbc] sm:$0x3]
      %s4618 = scalar_lea.vmem %s1, 1536
      %v4619 = vld [vmem:[%s4618] sm:$0xf]
      %v4620 = vld [vmem:[%s4618 + $0x4] sm:$0xf]
      %v4621 = vld [vmem:[%s4618 + $0x8] sm:$0xf]
      %v4622 = vld [vmem:[%s4618 + $0xc] sm:$0xf]
      %v4623 = vld [vmem:[%s4618 + $0x10] sm:$0xf]
      %v4624 = vld [vmem:[%s4618 + $0x14] sm:$0xf]
      %v4625 = vld [vmem:[%s4618 + $0x18] sm:$0xf]
      %v4626 = vld [vmem:[%s4618 + $0x1c] sm:$0xf]
      %v4627 = vld [vmem:[%s4618 + $0x20] sm:$0xf]
      %v4628 = vld [vmem:[%s4618 + $0x24] sm:$0xf]
      %v4629 = vld [vmem:[%s4618 + $0x28] sm:$0xf]
      %v4630 = vld [vmem:[%s4618 + $0x2c] sm:$0xf]
      %v4631 = vld [vmem:[%s4618 + $0x30] sm:$0xf]
      %v4632 = vld [vmem:[%s4618 + $0x34] sm:$0xf]
      %v4633 = vld [vmem:[%s4618 + $0x38] sm:$0xf]
      %v4634 = vld [vmem:[%s4618 + $0x3c] sm:$0xf]
      %v4647 = vunpack.c.l.b16 %v4606
      %v4648 = vunpack.c.l.b16 %v4607
      %v4649 = vunpack.c.l.b16 %v4608
      %v4650 = vunpack.c.l.b16 %v4609
      %v4651 = vunpack.c.l.b16 %v4610
      %v4652 = vunpack.c.l.b16 %v4611
      %v4653 = vunpack.c.l.b16 %v4612
      %v4654 = vunpack.c.l.b16 %v4613
      %v4655 = vunpack.c.l.b16 %v4614
      %v4656 = vunpack.c.l.b16 %v4615
      %v4657 = vunpack.c.l.b16 %v4616
      %v4658 = vunpack.c.l.b16 %v4617
      %v4659 = vpack.c.b16 %v4648, %v4647
      %v4660 = vpack.c.b16 %v4650, %v4649
      %v4661 = vpack.c.b16 %v4652, %v4651
      %v4662 = vpack.c.b16 %v4654, %v4653
      %v4663 = vpack.c.b16 %v4656, %v4655
      %v4664 = vpack.c.b16 %v4658, %v4657
      %v4687 = vunpack.c.l.b16 %v4619
      %v4688 = vunpack.c.l.b16 %v4620
      %v4689 = vunpack.c.l.b16 %v4621
      %v4690 = vunpack.c.l.b16 %v4622
      %v4691 = vunpack.c.l.b16 %v4623
      %v4692 = vunpack.c.l.b16 %v4624
      %v4693 = vunpack.c.l.b16 %v4625
      %v4694 = vunpack.c.l.b16 %v4626
      %v4695 = vunpack.c.l.b16 %v4627
      %v4696 = vunpack.c.l.b16 %v4628
      %v4697 = vunpack.c.l.b16 %v4629
      %v4698 = vunpack.c.l.b16 %v4630
      %v4699 = vunpack.c.l.b16 %v4631
      %v4700 = vunpack.c.l.b16 %v4632
      %v4701 = vunpack.c.l.b16 %v4633
      %v4702 = vunpack.c.l.b16 %v4634
      %v4703 = vpack.c.b16 %v4688, %v4687
      %v4704 = vpack.c.b16 %v4690, %v4689
      %v4705 = vpack.c.b16 %v4692, %v4691
      %v4706 = vpack.c.b16 %v4694, %v4693
      %v4707 = vpack.c.b16 %v4696, %v4695
      %v4708 = vpack.c.b16 %v4698, %v4697
      %v4709 = vpack.c.b16 %v4700, %v4699
      %v4710 = vpack.c.b16 %v4702, %v4701
      %4719 = vmatprep.subr.bf16.mxu0 0
      %4720 = vmatpush1.bf16.msra.mxu0 %v4710
      %4721 = vmatprep.subr.bf16.mxu0 0
      %4722 = vmatpush1.bf16.msra.mxu0 %v4709
      %4723 = vmatprep.subr.bf16.mxu0 0
      %4724 = vmatpush1.bf16.msra.mxu0 %v4708
      %4725 = vmatprep.subr.bf16.mxu0 0
      %4726 = vmatpush1.bf16.msra.mxu0 %v4707
      %4727 = vmatprep.subr.bf16.mxu0 0
      %4728 = vmatpush1.bf16.msra.mxu0 %v4706
      %4729 = vmatprep.subr.bf16.mxu0 0
      %4730 = vmatpush1.bf16.msra.mxu0 %v4705
      %4731 = vmatprep.subr.bf16.mxu0 0
      %4732 = vmatpush1.bf16.msra.mxu0 %v4704
      %4733 = vmatprep.subr.bf16.mxu0 0
      %4734 = vmatpush1.bf16.msra.mxu0 %v4703
      %4735 = vmatprep.subr.bf16.mxu0 0
      %4736 = vmatpush2.bf16.msra.mxu0 0
      %4737 = vmatprep.subr.bf16.mxu0 0
      %4738 = vmatpush2.bf16.msra.mxu0 0
      %4739 = vmatprep.subr.bf16.mxu0 0
      %4740 = vmatpush2.bf16.msra.mxu0 0
      %4741 = vmatprep.subr.bf16.mxu0 0
      %4742 = vmatpush2.bf16.msra.mxu0 0
      %4743 = vmatprep.subr.bf16.mxu0 0
      %4744 = vmatpush2.bf16.msra.mxu0 0
      %4745 = vmatprep.subr.bf16.mxu0 0
      %4746 = vmatpush2.bf16.msra.mxu0 0
      %4747 = vmatprep.subr.bf16.mxu0 0
      %4748 = vmatpush2.bf16.msra.mxu0 0
      %4749 = vmatprep.subr.bf16.mxu0 0
      %4750 = vmatpush2.bf16.msra.mxu0 0
      %4751 = vmatprep.mubr.bf16.mxu0 0
      %4752 = vmatmul.mubr.bf16.gmra.mxu0 %v4659
      %v4753 = vpop.f32.mrf.mxu0
      %v4754 = vadd.f32 0.0, %v4753
      %v4755 = vpop.f32.mrf.mxu0
      %v4756 = vpop.f32.mrf.mxu0
      %v4757 = vadd.f32 0.0, %v4756
      %v4758 = vpop.f32.mrf.mxu0
      %4759 = vmatprep.mubr.bf16.mxu0 0
      %4760 = vmatmul.mubr.bf16.gmra.mxu0 %v4660
      %v4761 = vpop.f32.mrf.mxu0
      %v4762 = vadd.f32 0.0, %v4761
      %v4763 = vpop.f32.mrf.mxu0
      %v4764 = vpop.f32.mrf.mxu0
      %v4765 = vadd.f32 0.0, %v4764
      %v4766 = vpop.f32.mrf.mxu0
      %4767 = vmatprep.mubr.bf16.mxu0 0
      %4768 = vmatmul.mubr.bf16.gmra.mxu0 %v4661
      %v4769 = vpop.f32.mrf.mxu0
      %v4770 = vpop.f32.mrf.mxu0
      %v4771 = vpop.f32.mrf.mxu0
      %v4772 = vpop.f32.mrf.mxu0
      %4773 = vmatprep.mubr.bf16.mxu0 0
      %4774 = vmatmul.mubr.bf16.gmra.mxu0 %v4662
      %v4775 = vpop.f32.mrf.mxu0
      %v4776 = vpop.f32.mrf.mxu0
      %v4777 = vpop.f32.mrf.mxu0
      %v4778 = vpop.f32.mrf.mxu0
      %4779 = vmatprep.mubr.bf16.mxu0 0
      %4780 = vmatmul.mubr.bf16.gmra.mxu0 %v4663
      %v4781 = vpop.f32.mrf.mxu0
      %v4782 = vadd.f32 0.0, %v4781
      %v4783 = vpop.f32.mrf.mxu0
      %v4784 = vpop.f32.mrf.mxu0
      %v4785 = vadd.f32 0.0, %v4784
      %v4786 = vpop.f32.mrf.mxu0
      %4787 = vmatprep.mubr.bf16.mxu0 0
      %4788 = vmatmul.mubr.bf16.gmra.mxu0 %v4664
      %v4789 = vpop.f32.mrf.mxu0
      %v4790 = vadd.f32 0.0, %v4789
      %v4791 = vpop.f32.mrf.mxu0
      %v4792 = vpop.f32.mrf.mxu0
      %v4793 = vadd.f32 0.0, %v4792
      %v4794 = vpop.f32.mrf.mxu0
      %4795 = vdwg.mxu0
      %v4796 = vadd.f32 %v4598, %v4754
      %v4797 = vadd.f32 %v4599, %v4757
      %v4798 = vadd.f32 %v4600, %v4762
      %v4799 = vadd.f32 %v4601, %v4765
      %v4800 = vadd.f32 %v4602, %v4782
      %v4801 = vadd.f32 %v4603, %v4785
      %v4802 = vadd.f32 %v4604, %v4790
      %v4803 = vadd.f32 %v4605, %v4793
      %v4804 = vld [vmem:[#allocation2 + $0x90] sm:$0xe]
      %v4805 = vld [vmem:[#allocation2 + $0xbc] sm:$0x7]
      %s4806 = scalar_lea.vmem %s1, 1600
      %v4807 = vld [vmem:[%s4806] sm:$0xf]
      %v4808 = vld [vmem:[%s4806 + $0x4] sm:$0xf]
      %v4809 = vld [vmem:[%s4806 + $0x8] sm:$0xf]
      %v4810 = vld [vmem:[%s4806 + $0xc] sm:$0xf]
      %v4811 = vld [vmem:[%s4806 + $0x10] sm:$0xf]
      %v4812 = vld [vmem:[%s4806 + $0x14] sm:$0xf]
      %v4813 = vld [vmem:[%s4806 + $0x18] sm:$0xf]
      %v4814 = vld [vmem:[%s4806 + $0x1c] sm:$0xf]
      %v4815 = vld [vmem:[%s4806 + $0x20] sm:$0xf]
      %v4816 = vld [vmem:[%s4806 + $0x24] sm:$0xf]
      %v4817 = vld [vmem:[%s4806 + $0x28] sm:$0xf]
      %v4818 = vld [vmem:[%s4806 + $0x2c] sm:$0xf]
      %v4819 = vld [vmem:[%s4806 + $0x30] sm:$0xf]
      %v4820 = vld [vmem:[%s4806 + $0x34] sm:$0xf]
      %v4821 = vld [vmem:[%s4806 + $0x38] sm:$0xf]
      %v4822 = vld [vmem:[%s4806 + $0x3c] sm:$0xf]
      %v4825 = vunpack.c.l.b16 %v4804
      %v4826 = vunpack.c.l.b16 %v4805
      %v4827 = vpack.c.b16 %v4648, %v4825
      %v4828 = vpack.c.b16 %v4826, %v4657
      %v4829 = vrot.slane %v4827, 1
      %v4830 = vrot.slane %v4660, 1
      %v4831 = vsel %vm314, %v4829, %v4830
      %v4832 = vrot.slane %v4661, 1
      %v4833 = vsel %vm314, %v4830, %v4832
      %v4834 = vrot.slane %v4662, 1
      %v4835 = vsel %vm314, %v4832, %v4834
      %v4836 = vrot.slane %v4663, 1
      %v4837 = vsel %vm314, %v4834, %v4836
      %v4838 = vrot.slane %v4828, 1
      %v4839 = vsel %vm314, %v4836, %v4838
      %v4862 = vunpack.c.l.b16 %v4807
      %v4863 = vunpack.c.l.b16 %v4808
      %v4864 = vunpack.c.l.b16 %v4809
      %v4865 = vunpack.c.l.b16 %v4810
      %v4866 = vunpack.c.l.b16 %v4811
      %v4867 = vunpack.c.l.b16 %v4812
      %v4868 = vunpack.c.l.b16 %v4813
      %v4869 = vunpack.c.l.b16 %v4814
      %v4870 = vunpack.c.l.b16 %v4815
      %v4871 = vunpack.c.l.b16 %v4816
      %v4872 = vunpack.c.l.b16 %v4817
      %v4873 = vunpack.c.l.b16 %v4818
      %v4874 = vunpack.c.l.b16 %v4819
      %v4875 = vunpack.c.l.b16 %v4820
      %v4876 = vunpack.c.l.b16 %v4821
      %v4877 = vunpack.c.l.b16 %v4822
      %v4878 = vpack.c.b16 %v4863, %v4862
      %v4879 = vpack.c.b16 %v4865, %v4864
      %v4880 = vpack.c.b16 %v4867, %v4866
      %v4881 = vpack.c.b16 %v4869, %v4868
      %v4882 = vpack.c.b16 %v4871, %v4870
      %v4883 = vpack.c.b16 %v4873, %v4872
      %v4884 = vpack.c.b16 %v4875, %v4874
      %v4885 = vpack.c.b16 %v4877, %v4876
      %4894 = vmatprep.subr.bf16.mxu0 0
      %4895 = vmatpush1.bf16.msra.mxu0 %v4885
      %4896 = vmatprep.subr.bf16.mxu0 0
      %4897 = vmatpush1.bf16.msra.mxu0 %v4884
      %4898 = vmatprep.subr.bf16.mxu0 0
      %4899 = vmatpush1.bf16.msra.mxu0 %v4883
      %4900 = vmatprep.subr.bf16.mxu0 0
      %4901 = vmatpush1.bf16.msra.mxu0 %v4882
      %4902 = vmatprep.subr.bf16.mxu0 0
      %4903 = vmatpush1.bf16.msra.mxu0 %v4881
      %4904 = vmatprep.subr.bf16.mxu0 0
      %4905 = vmatpush1.bf16.msra.mxu0 %v4880
      %4906 = vmatprep.subr.bf16.mxu0 0
      %4907 = vmatpush1.bf16.msra.mxu0 %v4879
      %4908 = vmatprep.subr.bf16.mxu0 0
      %4909 = vmatpush1.bf16.msra.mxu0 %v4878
      %4910 = vmatprep.subr.bf16.mxu0 0
      %4911 = vmatpush2.bf16.msra.mxu0 0
      %4912 = vmatprep.subr.bf16.mxu0 0
      %4913 = vmatpush2.bf16.msra.mxu0 0
      %4914 = vmatprep.subr.bf16.mxu0 0
      %4915 = vmatpush2.bf16.msra.mxu0 0
      %4916 = vmatprep.subr.bf16.mxu0 0
      %4917 = vmatpush2.bf16.msra.mxu0 0
      %4918 = vmatprep.subr.bf16.mxu0 0
      %4919 = vmatpush2.bf16.msra.mxu0 0
      %4920 = vmatprep.subr.bf16.mxu0 0
      %4921 = vmatpush2.bf16.msra.mxu0 0
      %4922 = vmatprep.subr.bf16.mxu0 0
      %4923 = vmatpush2.bf16.msra.mxu0 0
      %4924 = vmatprep.subr.bf16.mxu0 0
      %4925 = vmatpush2.bf16.msra.mxu0 0
      %4926 = vmatprep.mubr.bf16.mxu0 0
      %4927 = vmatmul.mubr.bf16.gmra.mxu0 %v4831
      %v4928 = vpop.f32.mrf.mxu0
      %v4929 = vadd.f32 0.0, %v4928
      %v4930 = vpop.f32.mrf.mxu0
      %v4931 = vpop.f32.mrf.mxu0
      %v4932 = vadd.f32 0.0, %v4931
      %v4933 = vpop.f32.mrf.mxu0
      %4934 = vmatprep.mubr.bf16.mxu0 0
      %4935 = vmatmul.mubr.bf16.gmra.mxu0 %v4833
      %v4936 = vpop.f32.mrf.mxu0
      %v4937 = vadd.f32 0.0, %v4936
      %v4938 = vpop.f32.mrf.mxu0
      %v4939 = vpop.f32.mrf.mxu0
      %v4940 = vadd.f32 0.0, %v4939
      %v4941 = vpop.f32.mrf.mxu0
      %4942 = vmatprep.mubr.bf16.mxu0 0
      %4943 = vmatmul.mubr.bf16.gmra.mxu0 %v4835
      %v4944 = vpop.f32.mrf.mxu0
      %v4945 = vpop.f32.mrf.mxu0
      %v4946 = vpop.f32.mrf.mxu0
      %v4947 = vpop.f32.mrf.mxu0
      %4948 = vmatprep.mubr.bf16.mxu0 0
      %4949 = vmatmul.mubr.bf16.gmra.mxu0 %v4837
      %v4950 = vpop.f32.mrf.mxu0
      %v4951 = vpop.f32.mrf.mxu0
      %v4952 = vpop.f32.mrf.mxu0
      %v4953 = vpop.f32.mrf.mxu0
      %4954 = vmatprep.mubr.bf16.mxu0 0
      %4955 = vmatmul.mubr.bf16.gmra.mxu0 %v4839
      %v4956 = vpop.f32.mrf.mxu0
      %v4957 = vadd.f32 0.0, %v4956
      %v4958 = vpop.f32.mrf.mxu0
      %v4959 = vpop.f32.mrf.mxu0
      %v4960 = vadd.f32 0.0, %v4959
      %v4961 = vpop.f32.mrf.mxu0
      %4962 = vmatprep.mubr.bf16.mxu0 0
      %4963 = vmatmul.mubr.bf16.gmra.mxu0 %v4838
      %v4964 = vpop.f32.mrf.mxu0
      %v4965 = vadd.f32 0.0, %v4964
      %v4966 = vpop.f32.mrf.mxu0
      %v4967 = vpop.f32.mrf.mxu0
      %v4968 = vadd.f32 0.0, %v4967
      %v4969 = vpop.f32.mrf.mxu0
      %4970 = vdwg.mxu0
      %v4971 = vadd.f32 %v4796, %v4929
      %v4972 = vadd.f32 %v4797, %v4932
      %v4973 = vadd.f32 %v4798, %v4937
      %v4974 = vadd.f32 %v4799, %v4940
      %v4975 = vadd.f32 %v4800, %v4957
      %v4976 = vadd.f32 %v4801, %v4960
      %v4977 = vadd.f32 %v4802, %v4965
      %v4978 = vadd.f32 %v4803, %v4968
      %v4979 = vld [vmem:[#allocation2 + $0x90] sm:$0xc]
      %v4980 = vld [vmem:[#allocation2 + $0xbc] sm:$0xf]
      %s4981 = scalar_lea.vmem %s1, 1664
      %v4982 = vld [vmem:[%s4981] sm:$0xf]
      %v4983 = vld [vmem:[%s4981 + $0x4] sm:$0xf]
      %v4984 = vld [vmem:[%s4981 + $0x8] sm:$0xf]
      %v4985 = vld [vmem:[%s4981 + $0xc] sm:$0xf]
      %v4986 = vld [vmem:[%s4981 + $0x10] sm:$0xf]
      %v4987 = vld [vmem:[%s4981 + $0x14] sm:$0xf]
      %v4988 = vld [vmem:[%s4981 + $0x18] sm:$0xf]
      %v4989 = vld [vmem:[%s4981 + $0x1c] sm:$0xf]
      %v4990 = vld [vmem:[%s4981 + $0x20] sm:$0xf]
      %v4991 = vld [vmem:[%s4981 + $0x24] sm:$0xf]
      %v4992 = vld [vmem:[%s4981 + $0x28] sm:$0xf]
      %v4993 = vld [vmem:[%s4981 + $0x2c] sm:$0xf]
      %v4994 = vld [vmem:[%s4981 + $0x30] sm:$0xf]
      %v4995 = vld [vmem:[%s4981 + $0x34] sm:$0xf]
      %v4996 = vld [vmem:[%s4981 + $0x38] sm:$0xf]
      %v4997 = vld [vmem:[%s4981 + $0x3c] sm:$0xf]
      %v5000 = vunpack.c.l.b16 %v4979
      %v5001 = vunpack.c.l.b16 %v4980
      %v5002 = vpack.c.b16 %v4648, %v5000
      %v5003 = vpack.c.b16 %v5001, %v4657
      %v5004 = vrot.slane %v5002, 2
      %v5005 = vrot.slane %v4660, 2
      %v5006 = vsel %vm619, %v5004, %v5005
      %v5007 = vrot.slane %v4661, 2
      %v5008 = vsel %vm619, %v5005, %v5007
      %v5009 = vrot.slane %v4662, 2
      %v5010 = vsel %vm619, %v5007, %v5009
      %v5011 = vrot.slane %v4663, 2
      %v5012 = vsel %vm619, %v5009, %v5011
      %v5013 = vrot.slane %v5003, 2
      %v5014 = vsel %vm619, %v5011, %v5013
      %v5037 = vunpack.c.l.b16 %v4982
      %v5038 = vunpack.c.l.b16 %v4983
      %v5039 = vunpack.c.l.b16 %v4984
      %v5040 = vunpack.c.l.b16 %v4985
      %v5041 = vunpack.c.l.b16 %v4986
      %v5042 = vunpack.c.l.b16 %v4987
      %v5043 = vunpack.c.l.b16 %v4988
      %v5044 = vunpack.c.l.b16 %v4989
      %v5045 = vunpack.c.l.b16 %v4990
      %v5046 = vunpack.c.l.b16 %v4991
      %v5047 = vunpack.c.l.b16 %v4992
      %v5048 = vunpack.c.l.b16 %v4993
      %v5049 = vunpack.c.l.b16 %v4994
      %v5050 = vunpack.c.l.b16 %v4995
      %v5051 = vunpack.c.l.b16 %v4996
      %v5052 = vunpack.c.l.b16 %v4997
      %v5053 = vpack.c.b16 %v5038, %v5037
      %v5054 = vpack.c.b16 %v5040, %v5039
      %v5055 = vpack.c.b16 %v5042, %v5041
      %v5056 = vpack.c.b16 %v5044, %v5043
      %v5057 = vpack.c.b16 %v5046, %v5045
      %v5058 = vpack.c.b16 %v5048, %v5047
      %v5059 = vpack.c.b16 %v5050, %v5049
      %v5060 = vpack.c.b16 %v5052, %v5051
      %5069 = vmatprep.subr.bf16.mxu0 0
      %5070 = vmatpush1.bf16.msra.mxu0 %v5060
      %5071 = vmatprep.subr.bf16.mxu0 0
      %5072 = vmatpush1.bf16.msra.mxu0 %v5059
      %5073 = vmatprep.subr.bf16.mxu0 0
      %5074 = vmatpush1.bf16.msra.mxu0 %v5058
      %5075 = vmatprep.subr.bf16.mxu0 0
      %5076 = vmatpush1.bf16.msra.mxu0 %v5057
      %5077 = vmatprep.subr.bf16.mxu0 0
      %5078 = vmatpush1.bf16.msra.mxu0 %v5056
      %5079 = vmatprep.subr.bf16.mxu0 0
      %5080 = vmatpush1.bf16.msra.mxu0 %v5055
      %5081 = vmatprep.subr.bf16.mxu0 0
      %5082 = vmatpush1.bf16.msra.mxu0 %v5054
      %5083 = vmatprep.subr.bf16.mxu0 0
      %5084 = vmatpush1.bf16.msra.mxu0 %v5053
      %5085 = vmatprep.subr.bf16.mxu0 0
      %5086 = vmatpush2.bf16.msra.mxu0 0
      %5087 = vmatprep.subr.bf16.mxu0 0
      %5088 = vmatpush2.bf16.msra.mxu0 0
      %5089 = vmatprep.subr.bf16.mxu0 0
      %5090 = vmatpush2.bf16.msra.mxu0 0
      %5091 = vmatprep.subr.bf16.mxu0 0
      %5092 = vmatpush2.bf16.msra.mxu0 0
      %5093 = vmatprep.subr.bf16.mxu0 0
      %5094 = vmatpush2.bf16.msra.mxu0 0
      %5095 = vmatprep.subr.bf16.mxu0 0
      %5096 = vmatpush2.bf16.msra.mxu0 0
      %5097 = vmatprep.subr.bf16.mxu0 0
      %5098 = vmatpush2.bf16.msra.mxu0 0
      %5099 = vmatprep.subr.bf16.mxu0 0
      %5100 = vmatpush2.bf16.msra.mxu0 0
      %5101 = vmatprep.mubr.bf16.mxu0 0
      %5102 = vmatmul.mubr.bf16.gmra.mxu0 %v5006
      %v5103 = vpop.f32.mrf.mxu0
      %v5104 = vadd.f32 0.0, %v5103
      %v5105 = vpop.f32.mrf.mxu0
      %v5106 = vpop.f32.mrf.mxu0
      %v5107 = vadd.f32 0.0, %v5106
      %v5108 = vpop.f32.mrf.mxu0
      %5109 = vmatprep.mubr.bf16.mxu0 0
      %5110 = vmatmul.mubr.bf16.gmra.mxu0 %v5008
      %v5111 = vpop.f32.mrf.mxu0
      %v5112 = vadd.f32 0.0, %v5111
      %v5113 = vpop.f32.mrf.mxu0
      %v5114 = vpop.f32.mrf.mxu0
      %v5115 = vadd.f32 0.0, %v5114
      %v5116 = vpop.f32.mrf.mxu0
      %5117 = vmatprep.mubr.bf16.mxu0 0
      %5118 = vmatmul.mubr.bf16.gmra.mxu0 %v5010
      %v5119 = vpop.f32.mrf.mxu0
      %v5120 = vpop.f32.mrf.mxu0
      %v5121 = vpop.f32.mrf.mxu0
      %v5122 = vpop.f32.mrf.mxu0
      %5123 = vmatprep.mubr.bf16.mxu0 0
      %5124 = vmatmul.mubr.bf16.gmra.mxu0 %v5012
      %v5125 = vpop.f32.mrf.mxu0
      %v5126 = vpop.f32.mrf.mxu0
      %v5127 = vpop.f32.mrf.mxu0
      %v5128 = vpop.f32.mrf.mxu0
      %5129 = vmatprep.mubr.bf16.mxu0 0
      %5130 = vmatmul.mubr.bf16.gmra.mxu0 %v5014
      %v5131 = vpop.f32.mrf.mxu0
      %v5132 = vadd.f32 0.0, %v5131
      %v5133 = vpop.f32.mrf.mxu0
      %v5134 = vpop.f32.mrf.mxu0
      %v5135 = vadd.f32 0.0, %v5134
      %v5136 = vpop.f32.mrf.mxu0
      %5137 = vmatprep.mubr.bf16.mxu0 0
      %5138 = vmatmul.mubr.bf16.gmra.mxu0 %v5013
      %v5139 = vpop.f32.mrf.mxu0
      %v5140 = vadd.f32 0.0, %v5139
      %v5141 = vpop.f32.mrf.mxu0
      %v5142 = vpop.f32.mrf.mxu0
      %v5143 = vadd.f32 0.0, %v5142
      %v5144 = vpop.f32.mrf.mxu0
      %5145 = vdwg.mxu0
      %v5146 = vadd.f32 %v4971, %v5104
      %v5147 = vadd.f32 %v4972, %v5107
      %v5148 = vadd.f32 %v4973, %v5112
      %v5149 = vadd.f32 %v4974, %v5115
      %v5150 = vadd.f32 %v4975, %v5132
      %v5151 = vadd.f32 %v4976, %v5135
      %v5152 = vadd.f32 %v4977, %v5140
      %v5153 = vadd.f32 %v4978, %v5143
      %v5154 = vpack.c.bf16 %v5146, %v5146
      %5155 = vst [vmem:[%s143] sm:$0x3] %v5154
      %v5156 = vpack.c.bf16 %v5147, %v5147
      %v5158 = vunpack.c.l.b16 %v5156
      %v5159 = vpack.c.b16 %v5158, %v5158
      %v5160 = vrot.slane %v5159, 6
      %5162 = vst [vmem:[%s143] sm:$0xc] %v5160
      %v5163 = vpack.c.bf16 %v5148, %v5148
      %5164 = vst [vmem:[%s143 + $0x4] sm:$0x3] %v5163
      %v5165 = vpack.c.bf16 %v5149, %v5149
      %v5167 = vunpack.c.l.b16 %v5165
      %v5168 = vpack.c.b16 %v5167, %v5167
      %v5169 = vrot.slane %v5168, 6
      %5171 = vst [vmem:[%s143 + $0x4] sm:$0xc] %v5169
      %v5172 = vpack.c.bf16 %v5150, %v5150
      %5173 = vst [vmem:[%s143 + $0x8] sm:$0x3] %v5172
      %v5174 = vpack.c.bf16 %v5151, %v5151
      %v5176 = vunpack.c.l.b16 %v5174
      %v5177 = vpack.c.b16 %v5176, %v5176
      %v5178 = vrot.slane %v5177, 6
      %5180 = vst [vmem:[%s143 + $0x8] sm:$0xc] %v5178
      %v5181 = vpack.c.bf16 %v5152, %v5152
      %5182 = vst [vmem:[%s143 + $0xc] sm:$0x3] %v5181
      %v5183 = vpack.c.bf16 %v5153, %v5153
      %v5185 = vunpack.c.l.b16 %v5183
      %v5186 = vpack.c.b16 %v5185, %v5185
      %v5187 = vrot.slane %v5186, 6
      %5189 = vst [vmem:[%s143 + $0xc] sm:$0xc] %v5187
      %p5190 = scmp.lt.s32.totalorder %s13, 1
      %s5191 = scalar_select %p5190, %s13, 1
      %s5192 = smul.addr %s5191, 4
      %s5193 = smul.addr %s5192, 4
      %s5194 = scalar_lea.vmem %s2, %s5193
      // Predicated region
      $region29: #{resnet3d_forward.16} parent=27 // pred_check
        %p5195 = pneg %p78
      $region30: #{resnet3d_forward.16} parent=27 // pred_check_branch
        %5197 = sbr.rel (%p5195) target = $region32
      $region31: #{resnet3d_forward.16} parent=27 // pred_region
        _
      $region32: #{resnet3d_forward.16} parent=27 // pred_fallthru
        _
    $region28: #{resnet3d_forward.16} parent=5 // pred_fallthru
      _
    %p5198 = scmp.le.s32.totalorder 2, %s8
    // Predicated region
    $region33: #{resnet3d_forward.16} parent=5 // pred_check
      %p5199 = pneg %p5198
    $region34: #{resnet3d_forward.16} parent=5 // pred_check_branch
      %5201 = sbr.rel (%p5199) target = $region36
    $region35: #{resnet3d_forward.16} parent=5 // pred_region
      %s5202 = ssub.s32 %s8, 2
      // Predicated region
      $region37: #{resnet3d_forward.16} parent=35 // pred_check
        %p5203 = pneg %p84
      $region38: #{resnet3d_forward.16} parent=35 // pred_check_branch
        %5205 = sbr.rel (%p5203) target = $region40
      $region39: #{resnet3d_forward.16} parent=35 // pred_region
        %p5206 = scmp.lt.s32.totalorder %s14, 1
        %s5207 = scalar_select %p5206, %s14, 1
        %s5208 = smul.addr %s5207, 4
        %s5209 = smul.addr %s5208, 4
        %s5210 = scalar_lea.vmem %s2, %s5209
      $region40: #{resnet3d_forward.16} parent=35 // pred_fallthru
        _
    $region36: #{resnet3d_forward.16} parent=5 // pred_fallthru
      _
  $region6: #{resnet3d_forward.16} parent=0 // loop_footer
    %s12 = sadd.s32 1, %s8
  $region7: #{resnet3d_forward.16} parent=0 // loop_footer_branch
    %7 = sbr.rel target = $region3
  $region8: #{resnet3d_forward.16} parent=0 // loop_exit
    _

</llo_original>
